<compile_context>
chip_gen: v7x
topology: tpu7x:2x2x1
jax: 0.10.0
libtpu: 0.0.40
codegen_flags: <defaults>
</compile_context>

<pallas_src>
import jax
import jax.numpy as jnp
from jax import lax
from jax.experimental import pallas as pl
from jax.experimental.pallas import tpu as pltpu

# Module constants (from Encoder_1D_CNN.__init__)
K1, K2, K3 = 9, 5, 5          # conv kernel sizes
P1, P2, P3 = 4, 2, 2          # conv paddings
C1, C2, C3 = 32, 16, 1        # layer1/2/3 output channels
BN_EPS = 1e-5
HALO = 8                      # left zero halo per batch segment (>= max dilated tap reach = 8)


def _encoder_kernel(x_ref,
                    w1_ref, t1_ref,
                    w2_ref, t2_ref,
                    w3_ref, t3_ref,
                    mseg_ref, base_ref, blin_ref,
                    out_ref):
    f32 = jnp.float32
    c_in, n = x_ref.shape[1], x_ref.shape[2]
    seg = base_ref.shape[0]           # per-batch segment width S (multiple of 128)
    bt = out_ref.shape[1]             # batch elements handled by this grid step

    def shifted(x, s):
        # shifted(x, s)[:, g] == x[:, (g + s) % n]; the per-segment zero halos plus the data
        # mask guarantee every wrapped / cross-segment lane that a conv tap reads is zero.
        if s % n == 0:
            return x
        return pltpu.roll(x, (-s) % n, 1)

    def relu_shift(acc, shift):
        # BN scale is pre-folded into the conv weights; only the shift remains (VPU add + max).
        return jnp.maximum(acc + shift, 0.0)

    def maxpool2(y, d):
        # MaxPool1d(2,2) on a lane lattice of stride d: valid results live on stride-2d lanes.
        return jnp.maximum(y, shifted(y, d))

    def conv_im2col(x, w_flat, k_size, pad, dil):
        # One (C_out, K*C_in) @ (K*C_in, N) MXU matmul (taps stacked on the sublane axis).
        # NOTE(v5e): if vst saturates (concat slab round-trips VMEM), switch to per-tap
        # accumulating matmuls like conv_per_tap below.
        taps = [shifted(x, (k - pad) * dil) for k in range(k_size)]
        slab = jnp.concatenate(taps, axis=0)
        return jnp.dot(w_flat, slab, preferred_element_type=f32)

    def conv_per_tap(x, w_all, k_size, pad, dil):
        # K accumulated (C_out, C_in) @ (C_in, N) MXU matmuls.  Used when C_in is not a
        # sublane-tile multiple (layer 1, C_in == 1): keeps the multiplies on the MXU without
        # concatenating 1-row taps on the sublane axis.
        ci = x.shape[0]
        acc = None
        for k in range(k_size):
            wk = w_all[:, k * ci:(k + 1) * ci]
            term = jnp.dot(wk, shifted(x, (k - pad) * dil), preferred_element_type=f32)
            acc = term if acc is None else acc + term
        return acc

    mseg = mseg_ref[...]                            # (1, N): 1 on data lanes, 0 on halo lanes
    x1 = x_ref[0].astype(f32)                       # (C_in, N); halos already zero

    # ---- layer1: Conv1d(C_in->32, k=9, p=4) + BN + ReLU + [Dropout=id] + MaxPool(2) ----
    w1v = w1_ref[...]
    if c_in % 8 == 0:
        acc1 = conv_im2col(x1, w1v, K1, P1, 1)
    else:
        acc1 = conv_per_tap(x1, w1v, K1, P1, 1)
    p1 = maxpool2(relu_shift(acc1, t1_ref[...]), 1)           # valid @ stride-2 lanes

    # ---- layer2: Conv1d(32->16, k=5, p=2) + BN + ReLU + MaxPool(2), stride-2 lattice ----
    acc2 = conv_im2col(p1 * mseg, w2_ref[...], K2, P2, 2)
    p2 = maxpool2(relu_shift(acc2, t2_ref[...]), 2)           # valid @ stride-4 lanes

    # ---- layer3: Conv1d(16->1, k=5, p=2) + BN + ReLU + MaxPool(2), stride-4 lattice ----
    acc3 = conv_im2col(p2 * mseg, w3_ref[...], K3, P3, 4)
    p3 = maxpool2(relu_shift(acc3, t3_ref[...]), 4)           # (1, N), valid @ HALO + 8j

    # ---- stride-8 gather + nn.Linear: bt tiny per-segment (1,S)@(S,ld) MXU matmuls ----
    base = base_ref[...]                                      # (S, ld); zero off-lattice rows
    bl = blin_ref[...]                                        # (1, ld)
    for b in range(bt):
        row = jnp.dot(p3[:, b * seg:(b + 1) * seg], base,
                      preferred_element_type=f32) + bl
        out_ref[:, b, :] = row.astype(out_ref.dtype)


def encoder_forward(x, params, *, batch_tile=None):
    """x: (B, tseq_len) [or (B, C_in, tseq_len)] float32 -> (B, embedding_dim) float32."""
    if x.ndim == 2:
        x = x[:, None, :]                        # torch.unsqueeze(x, dim=1)
    B, c_in, L = x.shape
    assert L % 8 == 0, "tseq_len must be divisible by 8 (three MaxPool(2) stages)"
    ld, l8 = params["wl"].shape
    assert l8 == L // 8
    f32 = jnp.float32

    # Grid sizing: at most 2 big steps by default -> both TensorCores busy on dual-TC chips
    # (v7x); on single-TC chips the second step costs only ~0.35 us of pipeline overhead.
    if batch_tile is None:
        batch_tile = -(-B // min(B, 2))
    bt = max(1, min(batch_tile, B))
    n_steps = -(-B // bt)
    b_pad = n_steps * bt

    # Per-batch segment: [HALO zeros | L data | right-halo zeros], rounded to 128 lanes so
    # bt*S is a 128-multiple and every per-segment slice is vreg-aligned.
    max_reach = max(P1 * 1, P2 * 2, P3 * 4)      # max dilated conv tap reach per side (= 8)
    S = ((L + 2 * HALO + 127) // 128) * 128
    halo_l, halo_r = HALO, S - L - HALO
    assert halo_l >= max_reach and halo_r >= max_reach, (halo_l, halo_r, max_reach)
    n_lanes = bt * S

    # ---- input slab: (n_steps, C_in, bt*S), batch folded into lanes, zero halos ----
    xp = jnp.pad(x.astype(f32), ((0, b_pad - B), (0, 0), (halo_l, halo_r)))
    x_slab = xp.reshape(n_steps, bt, c_in, S).transpose(0, 2, 1, 3).reshape(
        n_steps, c_in, n_lanes)

    # ---- fold conv bias + BatchNorm (running stats): scale -> weights, rest -> shift ----
    def fold(w, b, g, be, m, v):
        scale = (g / jnp.sqrt(v + BN_EPS)).astype(f32)               # (C_out,)
        shift = (be + scale * (b - m)).reshape(-1, 1).astype(f32)    # (C_out, 1)
        co, ci, k = w.shape
        wf = jnp.transpose(w.astype(f32), (0, 2, 1)).reshape(co, k * ci)   # [o, k*ci + c]
        return wf * scale[:, None], shift

    w1, t1 = fold(params["w1"], params["b1"], params["g1"], params["be1"],
                  params["m1"], params["v1"])
    w2, t2 = fold(params["w2"], params["b2"], params["g2"], params["be2"],
                  params["m2"], params["v2"])
    w3, t3 = fold(params["w3"], params["b3"], params["g3"], params["be3"],
                  params["m3"], params["v3"])

    # ---- per-segment data mask (re-zeroes halo lanes between layers) ----
    pos = jnp.arange(S)
    mseg = jnp.tile(((pos >= halo_l) & (pos < halo_l + L)).astype(f32), bt)[None, :]

    # ---- stride-8 gather + Linear: lattice-embedded (S, ld) weight, applied per segment ----
    wl = params["wl"].astype(f32)                                    # (ld, L//8)
    base = jnp.zeros((S, ld), f32).at[halo_l + 8 * jnp.arange(l8), :].set(wl.T)
    blin = params["bl"].astype(f32)[None, :]                         # (1, ld)

    def rep(a):
        nd = a.ndim
        return pl.BlockSpec(a.shape, lambda i, _nd=nd: (0,) * _nd)

    grid_spec = pltpu.PrefetchScalarGridSpec(
        num_scalar_prefetch=0,
        grid=(n_steps,),
        in_specs=[
            pl.BlockSpec((1, c_in, n_lanes), lambda i: (i, 0, 0)),
            rep(w1), rep(t1), rep(w2), rep(t2), rep(w3), rep(t3),
            rep(mseg), rep(base), rep(blin),
        ],
        out_specs=pl.BlockSpec((1, bt, ld), lambda i: (i, 0, 0)),
    )

    flops = n_steps * 2 * n_lanes * (C1 * K1 * c_in + C2 * K2 * C1 + C3 * K3 * C2 + ld)
    bytes_accessed = 4 * int(x_slab.size + n_steps * bt * ld
                             + w1.size + w2.size + w3.size + t1.size + t2.size + t3.size
                             + mseg.size + base.size + blin.size)

    # Rough per-step VMEM live set (double-buffered input + im2col slabs + activations).
    # Only raise the scoped-VMEM limit when the default (~32 MiB) would not suffice; this is
    # the v7x-relevant knob (64 MiB physical) once L or bt is scaled up.
    vmem_est = 4 * n_lanes * (2 * c_in + K1 * c_in + 3 * C1 + K2 * C1 + 2 * C2 + K3 * C2 + 8)
    compiler_kwargs = dict(dimension_semantics=("parallel",))
    if vmem_est > (24 << 20):
        compiler_kwargs["vmem_limit_bytes"] = int(min(vmem_est + (8 << 20), 112 << 20))

    out = pl.pallas_call(
        _encoder_kernel,
        out_shape=jax.ShapeDtypeStruct((n_steps, bt, ld), f32),
        grid_spec=grid_spec,
        compiler_params=pltpu.CompilerParams(**compiler_kwargs),
        cost_estimate=pl.CostEstimate(flops=flops, transcendentals=0,
                                      bytes_accessed=bytes_accessed),
    )(x_slab, w1, t1, w2, t2, w3, t3, mseg, base, blin)

    return out.reshape(b_pad, ld)[:B]


def reference_forward(x, p):
    """Pure-JAX reference (eval-mode PyTorch semantics)."""
    def block(h, w, b, g, be, m, v, pad):
        y = lax.conv_general_dilated(h, w, (1,), [(pad, pad)],
                                     dimension_numbers=("NCH", "OIH", "NCH"))
        y = y + b[None, :, None]
        y = g[None, :, None] * (y - m[None, :, None]) / jnp.sqrt(v[None, :, None] + BN_EPS) \
            + be[None, :, None]
        y = jnp.maximum(y, 0.0)
        B, C, L = y.shape
        return jnp.max(y.reshape(B, C, L // 2, 2), axis=-1)

    h = x[:, None, :]
    h = block(h, p["w1"], p["b1"], p["g1"], p["be1"], p["m1"], p["v1"], P1)
    h = block(h, p["w2"], p["b2"], p["g2"], p["be2"], p["m2"], p["v2"], P2)
    h = block(h, p["w3"], p["b3"], p["g3"], p["be3"], p["m3"], p["v3"], P3)
    h = h @ p["wl"].T + p["bl"]
    return h[:, 0, :]


def init_params(key, embedding_dim, tseq_len, in_channels):
    ks = jax.random.split(key, 20)
    f = jnp.float32

    def bn(k, c):
        k1, k2, k3, k4 = jax.random.split(k, 4)
        return (jax.random.uniform(k1, (c,), f, 0.5, 1.5),   # gamma
                0.1 * jax.random.normal(k2, (c,), f),        # beta
                0.1 * jax.random.normal(k3, (c,), f),        # running mean
                jax.random.uniform(k4, (c,), f, 0.5, 1.5))   # running var

    g1, be1, m1, v1 = bn(ks[0], C1)
    g2, be2, m2, v2 = bn(ks[1], C2)
    g3, be3, m3, v3 = bn(ks[2], C3)
    return dict(
        w1=0.1 * jax.random.normal(ks[3], (C1, in_channels, K1), f),
        b1=0.1 * jax.random.normal(ks[4], (C1,), f),
        g1=g1, be1=be1, m1=m1, v1=v1,
        w2=0.1 * jax.random.normal(ks[5], (C2, C1, K2), f),
        b2=0.1 * jax.random.normal(ks[6], (C2,), f),
        g2=g2, be2=be2, m2=m2, v2=v2,
        w3=0.1 * jax.random.normal(ks[7], (C3, C2, K3), f),
        b3=0.1 * jax.random.normal(ks[8], (C3,), f),
        g3=g3, be3=be3, m3=m3, v3=v3,
        wl=0.1 * jax.random.normal(ks[9], (embedding_dim, tseq_len // 8), f),
        bl=0.1 * jax.random.normal(ks[10], (embedding_dim,), f),
    )


if __name__ == "__main__":
    # Small shapes; default tiling -> 2 grid steps x 8 batch elements, 1024-lane slabs.
    B, tseq_len, embedding_dim, in_channels = 16, 64, 32, 1
    key = jax.random.PRNGKey(0)
    pkey, xkey = jax.random.split(key)
    params = init_params(pkey, embedding_dim, tseq_len, in_channels)
    x = jax.random.normal(xkey, (B, tseq_len), jnp.float32)

    out = jax.block_until_ready(encoder_forward(x, params))
    ref = reference_forward(x, params)

    assert out.shape == (B, embedding_dim), out.shape
    max_err = jnp.max(jnp.abs(out - ref))
    assert jnp.allclose(out, ref, atol=1e-3, rtol=1e-3), f"mismatch: max abs err {max_err}"
    print("KERNEL_OK")
</pallas_src>

<mosaic_0001>
module attributes {stable_mosaic.version = 11 : i64} {
  func.func @_encoder_kernel(%arg0: i32, %arg1: memref<1x1x1024xf32, #tpu.memory_space<vmem>>, %arg2: memref<32x9xf32, #tpu.memory_space<vmem>>, %arg3: memref<32x1xf32, #tpu.memory_space<vmem>>, %arg4: memref<16x160xf32, #tpu.memory_space<vmem>>, %arg5: memref<16x1xf32, #tpu.memory_space<vmem>>, %arg6: memref<1x80xf32, #tpu.memory_space<vmem>>, %arg7: memref<1x1xf32, #tpu.memory_space<vmem>>, %arg8: memref<1x1024xf32, #tpu.memory_space<vmem>>, %arg9: memref<128x32xf32, #tpu.memory_space<vmem>>, %arg10: memref<1x32xf32, #tpu.memory_space<vmem>>, %arg11: memref<1x8x32xf32, #tpu.memory_space<vmem>>) attributes {dimension_semantics = [#tpu.dimension_semantics<parallel>], iteration_bounds = array<i64: 2>, scalar_prefetch = 0 : i64, scratch_operands = 0 : i64, tpu.core_type = #tpu.core_type<tc>, window_params = [{transform_indices = @transform_0, window_bounds = array<i64: 1, 1, 1024>}, {pipeline_mode = #tpu.pipeline_mode<synchronous>, transform_indices = @transform_1, window_bounds = array<i64: 32, 9>}, {pipeline_mode = #tpu.pipeline_mode<synchronous>, transform_indices = @transform_2, window_bounds = array<i64: 32, 1>}, {pipeline_mode = #tpu.pipeline_mode<synchronous>, transform_indices = @transform_3, window_bounds = array<i64: 16, 160>}, {pipeline_mode = #tpu.pipeline_mode<synchronous>, transform_indices = @transform_4, window_bounds = array<i64: 16, 1>}, {pipeline_mode = #tpu.pipeline_mode<synchronous>, transform_indices = @transform_5, window_bounds = array<i64: 1, 80>}, {pipeline_mode = #tpu.pipeline_mode<synchronous>, transform_indices = @transform_6, window_bounds = array<i64: 1, 1>}, {pipeline_mode = #tpu.pipeline_mode<synchronous>, transform_indices = @transform_7, window_bounds = array<i64: 1, 1024>}, {pipeline_mode = #tpu.pipeline_mode<synchronous>, transform_indices = @transform_8, window_bounds = array<i64: 128, 32>}, {pipeline_mode = #tpu.pipeline_mode<synchronous>, transform_indices = @transform_9, window_bounds = array<i64: 1, 32>}, {transform_indices = @transform_10, window_bounds = array<i64: 1, 8, 32>}]} {
    %c0 = arith.constant 0 : index
    %c0_0 = arith.constant 0 : index
    %0 = vector.load %arg8[%c0, %c0_0] : memref<1x1024xf32, #tpu.memory_space<vmem>>, vector<1x1024xf32>
    %c0_1 = arith.constant 0 : index
    %c0_2 = arith.constant 0 : index
    %c0_3 = arith.constant 0 : index
    %1 = vector.load %arg1[%c0_1, %c0_2, %c0_3] : memref<1x1x1024xf32, #tpu.memory_space<vmem>>, vector<1x1x1024xf32>
    %2 = vector.shape_cast %1 : vector<1x1x1024xf32> to vector<1x1024xf32>
    %c0_4 = arith.constant 0 : index
    %c0_5 = arith.constant 0 : index
    %3 = vector.load %arg2[%c0_4, %c0_5] : memref<32x9xf32, #tpu.memory_space<vmem>>, vector<32x9xf32>
    %4 = vector.extract_strided_slice %3 {offsets = [0, 0], sizes = [32, 1], strides = [1, 1]} : vector<32x9xf32> to vector<32x1xf32>
    %c4_i32 = arith.constant 4 : i32
    %5 = tpu.dynamic_rotate %2 by %c4_i32 dim 1 : vector<1x1024xf32>, i32 -> vector<1x1024xf32>
    %cst = arith.constant dense<0.000000e+00> : vector<32x1024xf32>
    %6 = tpu.matmul %4, %5, %cst {dimension_numbers = #tpu.dot_dimension_numbers<[1], [0], [0], [1], [0, 0, 1, 1], [], []>} : vector<32x1xf32>, vector<1x1024xf32>, vector<32x1024xf32> -> vector<32x1024xf32>
    %7 = vector.extract_strided_slice %3 {offsets = [0, 1], sizes = [32, 1], strides = [1, 1]} : vector<32x9xf32> to vector<32x1xf32>
    %c3_i32 = arith.constant 3 : i32
    %8 = tpu.dynamic_rotate %2 by %c3_i32 dim 1 : vector<1x1024xf32>, i32 -> vector<1x1024xf32>
    %cst_6 = arith.constant dense<0.000000e+00> : vector<32x1024xf32>
    %9 = tpu.matmul %7, %8, %cst_6 {dimension_numbers = #tpu.dot_dimension_numbers<[1], [0], [0], [1], [0, 0, 1, 1], [], []>} : vector<32x1xf32>, vector<1x1024xf32>, vector<32x1024xf32> -> vector<32x1024xf32>
    %10 = arith.addf %6, %9 : vector<32x1024xf32>
    %11 = vector.extract_strided_slice %3 {offsets = [0, 2], sizes = [32, 1], strides = [1, 1]} : vector<32x9xf32> to vector<32x1xf32>
    %c2_i32 = arith.constant 2 : i32
    %12 = tpu.dynamic_rotate %2 by %c2_i32 dim 1 : vector<1x1024xf32>, i32 -> vector<1x1024xf32>
    %cst_7 = arith.constant dense<0.000000e+00> : vector<32x1024xf32>
    %13 = tpu.matmul %11, %12, %cst_7 {dimension_numbers = #tpu.dot_dimension_numbers<[1], [0], [0], [1], [0, 0, 1, 1], [], []>} : vector<32x1xf32>, vector<1x1024xf32>, vector<32x1024xf32> -> vector<32x1024xf32>
    %14 = arith.addf %10, %13 : vector<32x1024xf32>
    %15 = vector.extract_strided_slice %3 {offsets = [0, 3], sizes = [32, 1], strides = [1, 1]} : vector<32x9xf32> to vector<32x1xf32>
    %c1_i32 = arith.constant 1 : i32
    %16 = tpu.dynamic_rotate %2 by %c1_i32 dim 1 : vector<1x1024xf32>, i32 -> vector<1x1024xf32>
    %cst_8 = arith.constant dense<0.000000e+00> : vector<32x1024xf32>
    %17 = tpu.matmul %15, %16, %cst_8 {dimension_numbers = #tpu.dot_dimension_numbers<[1], [0], [0], [1], [0, 0, 1, 1], [], []>} : vector<32x1xf32>, vector<1x1024xf32>, vector<32x1024xf32> -> vector<32x1024xf32>
    %18 = arith.addf %14, %17 : vector<32x1024xf32>
    %19 = vector.extract_strided_slice %3 {offsets = [0, 4], sizes = [32, 1], strides = [1, 1]} : vector<32x9xf32> to vector<32x1xf32>
    %cst_9 = arith.constant dense<0.000000e+00> : vector<32x1024xf32>
    %20 = tpu.matmul %19, %2, %cst_9 {dimension_numbers = #tpu.dot_dimension_numbers<[1], [0], [0], [1], [0, 0, 1, 1], [], []>} : vector<32x1xf32>, vector<1x1024xf32>, vector<32x1024xf32> -> vector<32x1024xf32>
    %21 = arith.addf %18, %20 : vector<32x1024xf32>
    %22 = vector.extract_strided_slice %3 {offsets = [0, 5], sizes = [32, 1], strides = [1, 1]} : vector<32x9xf32> to vector<32x1xf32>
    %c1023_i32 = arith.constant 1023 : i32
    %23 = tpu.dynamic_rotate %2 by %c1023_i32 dim 1 : vector<1x1024xf32>, i32 -> vector<1x1024xf32>
    %cst_10 = arith.constant dense<0.000000e+00> : vector<32x1024xf32>
    %24 = tpu.matmul %22, %23, %cst_10 {dimension_numbers = #tpu.dot_dimension_numbers<[1], [0], [0], [1], [0, 0, 1, 1], [], []>} : vector<32x1xf32>, vector<1x1024xf32>, vector<32x1024xf32> -> vector<32x1024xf32>
    %25 = arith.addf %21, %24 : vector<32x1024xf32>
    %26 = vector.extract_strided_slice %3 {offsets = [0, 6], sizes = [32, 1], strides = [1, 1]} : vector<32x9xf32> to vector<32x1xf32>
    %c1022_i32 = arith.constant 1022 : i32
    %27 = tpu.dynamic_rotate %2 by %c1022_i32 dim 1 : vector<1x1024xf32>, i32 -> vector<1x1024xf32>
    %cst_11 = arith.constant dense<0.000000e+00> : vector<32x1024xf32>
    %28 = tpu.matmul %26, %27, %cst_11 {dimension_numbers = #tpu.dot_dimension_numbers<[1], [0], [0], [1], [0, 0, 1, 1], [], []>} : vector<32x1xf32>, vector<1x1024xf32>, vector<32x1024xf32> -> vector<32x1024xf32>
    %29 = arith.addf %25, %28 : vector<32x1024xf32>
    %30 = vector.extract_strided_slice %3 {offsets = [0, 7], sizes = [32, 1], strides = [1, 1]} : vector<32x9xf32> to vector<32x1xf32>
    %c1021_i32 = arith.constant 1021 : i32
    %31 = tpu.dynamic_rotate %2 by %c1021_i32 dim 1 : vector<1x1024xf32>, i32 -> vector<1x1024xf32>
    %cst_12 = arith.constant dense<0.000000e+00> : vector<32x1024xf32>
    %32 = tpu.matmul %30, %31, %cst_12 {dimension_numbers = #tpu.dot_dimension_numbers<[1], [0], [0], [1], [0, 0, 1, 1], [], []>} : vector<32x1xf32>, vector<1x1024xf32>, vector<32x1024xf32> -> vector<32x1024xf32>
    %33 = arith.addf %29, %32 : vector<32x1024xf32>
    %34 = vector.extract_strided_slice %3 {offsets = [0, 8], sizes = [32, 1], strides = [1, 1]} : vector<32x9xf32> to vector<32x1xf32>
    %c1020_i32 = arith.constant 1020 : i32
    %35 = tpu.dynamic_rotate %2 by %c1020_i32 dim 1 : vector<1x1024xf32>, i32 -> vector<1x1024xf32>
    %cst_13 = arith.constant dense<0.000000e+00> : vector<32x1024xf32>
    %36 = tpu.matmul %34, %35, %cst_13 {dimension_numbers = #tpu.dot_dimension_numbers<[1], [0], [0], [1], [0, 0, 1, 1], [], []>} : vector<32x1xf32>, vector<1x1024xf32>, vector<32x1024xf32> -> vector<32x1024xf32>
    %37 = arith.addf %33, %36 : vector<32x1024xf32>
    %c0_14 = arith.constant 0 : index
    %c0_15 = arith.constant 0 : index
    %38 = vector.load %arg3[%c0_14, %c0_15] : memref<32x1xf32, #tpu.memory_space<vmem>>, vector<32x1xf32>
    %39 = vector.broadcast %38 : vector<32x1xf32> to vector<32x1024xf32>
    %40 = arith.addf %37, %39 : vector<32x1024xf32>
    %cst_16 = arith.constant 0.000000e+00 : f32
    %41 = vector.broadcast %cst_16 : f32 to vector<32x1024xf32>
    %42 = arith.maximumf %40, %41 : vector<32x1024xf32>
    %c1023_i32_17 = arith.constant 1023 : i32
    %43 = tpu.dynamic_rotate %42 by %c1023_i32_17 dim 1 : vector<32x1024xf32>, i32 -> vector<32x1024xf32>
    %44 = arith.maximumf %42, %43 : vector<32x1024xf32>
    %45 = vector.broadcast %0 : vector<1x1024xf32> to vector<32x1024xf32>
    %46 = arith.mulf %44, %45 : vector<32x1024xf32>
    %c0_18 = arith.constant 0 : index
    %c0_19 = arith.constant 0 : index
    %47 = vector.load %arg4[%c0_18, %c0_19] : memref<16x160xf32, #tpu.memory_space<vmem>>, vector<16x160xf32>
    %c4_i32_20 = arith.constant 4 : i32
    %48 = tpu.dynamic_rotate %46 by %c4_i32_20 dim 1 : vector<32x1024xf32>, i32 -> vector<32x1024xf32>
    %c2_i32_21 = arith.constant 2 : i32
    %49 = tpu.dynamic_rotate %46 by %c2_i32_21 dim 1 : vector<32x1024xf32>, i32 -> vector<32x1024xf32>
    %c1022_i32_22 = arith.constant 1022 : i32
    %50 = tpu.dynamic_rotate %46 by %c1022_i32_22 dim 1 : vector<32x1024xf32>, i32 -> vector<32x1024xf32>
    %c1020_i32_23 = arith.constant 1020 : i32
    %51 = tpu.dynamic_rotate %46 by %c1020_i32_23 dim 1 : vector<32x1024xf32>, i32 -> vector<32x1024xf32>
    %52 = tpu.concatenate %48, %49, %46, %50, %51 in 0 : vector<32x1024xf32>, vector<32x1024xf32>, vector<32x1024xf32>, vector<32x1024xf32>, vector<32x1024xf32> -> vector<160x1024xf32>
    %cst_24 = arith.constant dense<0.000000e+00> : vector<16x1024xf32>
    %53 = tpu.matmul %47, %52, %cst_24 {dimension_numbers = #tpu.dot_dimension_numbers<[1], [0], [0], [1], [0, 0, 1, 1], [], []>} : vector<16x160xf32>, vector<160x1024xf32>, vector<16x1024xf32> -> vector<16x1024xf32>
    %c0_25 = arith.constant 0 : index
    %c0_26 = arith.constant 0 : index
    %54 = vector.load %arg5[%c0_25, %c0_26] : memref<16x1xf32, #tpu.memory_space<vmem>>, vector<16x1xf32>
    %55 = vector.broadcast %54 : vector<16x1xf32> to vector<16x1024xf32>
    %56 = arith.addf %53, %55 : vector<16x1024xf32>
    %cst_27 = arith.constant 0.000000e+00 : f32
    %57 = vector.broadcast %cst_27 : f32 to vector<16x1024xf32>
    %58 = arith.maximumf %56, %57 : vector<16x1024xf32>
    %c1022_i32_28 = arith.constant 1022 : i32
    %59 = tpu.dynamic_rotate %58 by %c1022_i32_28 dim 1 : vector<16x1024xf32>, i32 -> vector<16x1024xf32>
    %60 = arith.maximumf %58, %59 : vector<16x1024xf32>
    %61 = vector.broadcast %0 : vector<1x1024xf32> to vector<16x1024xf32>
    %62 = arith.mulf %60, %61 : vector<16x1024xf32>
    %c0_29 = arith.constant 0 : index
    %c0_30 = arith.constant 0 : index
    %63 = vector.load %arg6[%c0_29, %c0_30] : memref<1x80xf32, #tpu.memory_space<vmem>>, vector<1x80xf32>
    %c8_i32 = arith.constant 8 : i32
    %64 = tpu.dynamic_rotate %62 by %c8_i32 dim 1 : vector<16x1024xf32>, i32 -> vector<16x1024xf32>
    %c4_i32_31 = arith.constant 4 : i32
    %65 = tpu.dynamic_rotate %62 by %c4_i32_31 dim 1 : vector<16x1024xf32>, i32 -> vector<16x1024xf32>
    %c1020_i32_32 = arith.constant 1020 : i32
    %66 = tpu.dynamic_rotate %62 by %c1020_i32_32 dim 1 : vector<16x1024xf32>, i32 -> vector<16x1024xf32>
    %c1016_i32 = arith.constant 1016 : i32
    %67 = tpu.dynamic_rotate %62 by %c1016_i32 dim 1 : vector<16x1024xf32>, i32 -> vector<16x1024xf32>
    %68 = tpu.concatenate %64, %65, %62, %66, %67 in 0 : vector<16x1024xf32>, vector<16x1024xf32>, vector<16x1024xf32>, vector<16x1024xf32>, vector<16x1024xf32> -> vector<80x1024xf32>
    %cst_33 = arith.constant dense<0.000000e+00> : vector<1x1024xf32>
    %69 = tpu.matmul %63, %68, %cst_33 {dimension_numbers = #tpu.dot_dimension_numbers<[1], [0], [0], [1], [0, 0, 1, 1], [], []>} : vector<1x80xf32>, vector<80x1024xf32>, vector<1x1024xf32> -> vector<1x1024xf32>
    %c0_34 = arith.constant 0 : index
    %c0_35 = arith.constant 0 : index
    %70 = vector.load %arg7[%c0_34, %c0_35] : memref<1x1xf32, #tpu.memory_space<vmem>>, vector<1x1xf32>
    %71 = vector.broadcast %70 : vector<1x1xf32> to vector<1x1024xf32>
    %72 = arith.addf %69, %71 : vector<1x1024xf32>
    %cst_36 = arith.constant 0.000000e+00 : f32
    %73 = vector.broadcast %cst_36 : f32 to vector<1x1024xf32>
    %74 = arith.maximumf %72, %73 : vector<1x1024xf32>
    %c1020_i32_37 = arith.constant 1020 : i32
    %75 = tpu.dynamic_rotate %74 by %c1020_i32_37 dim 1 : vector<1x1024xf32>, i32 -> vector<1x1024xf32>
    %76 = arith.maximumf %74, %75 : vector<1x1024xf32>
    %c0_38 = arith.constant 0 : index
    %c0_39 = arith.constant 0 : index
    %77 = vector.load %arg9[%c0_38, %c0_39] : memref<128x32xf32, #tpu.memory_space<vmem>>, vector<128x32xf32>
    %c0_40 = arith.constant 0 : index
    %c0_41 = arith.constant 0 : index
    %78 = vector.load %arg10[%c0_40, %c0_41] : memref<1x32xf32, #tpu.memory_space<vmem>>, vector<1x32xf32>
    %79 = vector.extract_strided_slice %76 {offsets = [0, 0], sizes = [1, 128], strides = [1, 1]} : vector<1x1024xf32> to vector<1x128xf32>
    %cst_42 = arith.constant dense<0.000000e+00> : vector<1x32xf32>
    %80 = tpu.matmul %79, %77, %cst_42 {dimension_numbers = #tpu.dot_dimension_numbers<[1], [0], [0], [1], [0, 0, 1, 1], [], []>} : vector<1x128xf32>, vector<128x32xf32>, vector<1x32xf32> -> vector<1x32xf32>
    %81 = arith.addf %80, %78 : vector<1x32xf32>
    %c0_43 = arith.constant 0 : index
    %c0_44 = arith.constant 0 : index
    %c0_45 = arith.constant 0 : index
    %82 = vector.load %arg11[%c0_43, %c0_44, %c0_45] : memref<1x8x32xf32, #tpu.memory_space<vmem>>, vector<1x1x32xf32>
    %83 = vector.shape_cast %82 : vector<1x1x32xf32> to vector<1x32xf32>
    %84 = vector.shape_cast %81 : vector<1x32xf32> to vector<1x1x32xf32>
    tpu.vector_store %arg11[%c0_43, %c0_44, %c0_45], %84 {strides = array<i32>} : memref<1x8x32xf32, #tpu.memory_space<vmem>>, vector<1x1x32xf32>,
    %85 = vector.extract_strided_slice %76 {offsets = [0, 128], sizes = [1, 128], strides = [1, 1]} : vector<1x1024xf32> to vector<1x128xf32>
    %cst_46 = arith.constant dense<0.000000e+00> : vector<1x32xf32>
    %86 = tpu.matmul %85, %77, %cst_46 {dimension_numbers = #tpu.dot_dimension_numbers<[1], [0], [0], [1], [0, 0, 1, 1], [], []>} : vector<1x128xf32>, vector<128x32xf32>, vector<1x32xf32> -> vector<1x32xf32>
    %87 = arith.addf %86, %78 : vector<1x32xf32>
    %c0_47 = arith.constant 0 : index
    %c1 = arith.constant 1 : index
    %c0_48 = arith.constant 0 : index
    %88 = vector.load %arg11[%c0_47, %c1, %c0_48] : memref<1x8x32xf32, #tpu.memory_space<vmem>>, vector<1x1x32xf32>
    %89 = vector.shape_cast %88 : vector<1x1x32xf32> to vector<1x32xf32>
    %90 = vector.shape_cast %87 : vector<1x32xf32> to vector<1x1x32xf32>
    tpu.vector_store %arg11[%c0_47, %c1, %c0_48], %90 {strides = array<i32>} : memref<1x8x32xf32, #tpu.memory_space<vmem>>, vector<1x1x32xf32>,
    %91 = vector.extract_strided_slice %76 {offsets = [0, 256], sizes = [1, 128], strides = [1, 1]} : vector<1x1024xf32> to vector<1x128xf32>
    %cst_49 = arith.constant dense<0.000000e+00> : vector<1x32xf32>
    %92 = tpu.matmul %91, %77, %cst_49 {dimension_numbers = #tpu.dot_dimension_numbers<[1], [0], [0], [1], [0, 0, 1, 1], [], []>} : vector<1x128xf32>, vector<128x32xf32>, vector<1x32xf32> -> vector<1x32xf32>
    %93 = arith.addf %92, %78 : vector<1x32xf32>
    %c0_50 = arith.constant 0 : index
    %c2 = arith.constant 2 : index
    %c0_51 = arith.constant 0 : index
    %94 = vector.load %arg11[%c0_50, %c2, %c0_51] : memref<1x8x32xf32, #tpu.memory_space<vmem>>, vector<1x1x32xf32>
    %95 = vector.shape_cast %94 : vector<1x1x32xf32> to vector<1x32xf32>
    %96 = vector.shape_cast %93 : vector<1x32xf32> to vector<1x1x32xf32>
    tpu.vector_store %arg11[%c0_50, %c2, %c0_51], %96 {strides = array<i32>} : memref<1x8x32xf32, #tpu.memory_space<vmem>>, vector<1x1x32xf32>,
    %97 = vector.extract_strided_slice %76 {offsets = [0, 384], sizes = [1, 128], strides = [1, 1]} : vector<1x1024xf32> to vector<1x128xf32>
    %cst_52 = arith.constant dense<0.000000e+00> : vector<1x32xf32>
    %98 = tpu.matmul %97, %77, %cst_52 {dimension_numbers = #tpu.dot_dimension_numbers<[1], [0], [0], [1], [0, 0, 1, 1], [], []>} : vector<1x128xf32>, vector<128x32xf32>, vector<1x32xf32> -> vector<1x32xf32>
    %99 = arith.addf %98, %78 : vector<1x32xf32>
    %c0_53 = arith.constant 0 : index
    %c3 = arith.constant 3 : index
    %c0_54 = arith.constant 0 : index
    %100 = vector.load %arg11[%c0_53, %c3, %c0_54] : memref<1x8x32xf32, #tpu.memory_space<vmem>>, vector<1x1x32xf32>
    %101 = vector.shape_cast %100 : vector<1x1x32xf32> to vector<1x32xf32>
    %102 = vector.shape_cast %99 : vector<1x32xf32> to vector<1x1x32xf32>
    tpu.vector_store %arg11[%c0_53, %c3, %c0_54], %102 {strides = array<i32>} : memref<1x8x32xf32, #tpu.memory_space<vmem>>, vector<1x1x32xf32>,
    %103 = vector.extract_strided_slice %76 {offsets = [0, 512], sizes = [1, 128], strides = [1, 1]} : vector<1x1024xf32> to vector<1x128xf32>
    %cst_55 = arith.constant dense<0.000000e+00> : vector<1x32xf32>
    %104 = tpu.matmul %103, %77, %cst_55 {dimension_numbers = #tpu.dot_dimension_numbers<[1], [0], [0], [1], [0, 0, 1, 1], [], []>} : vector<1x128xf32>, vector<128x32xf32>, vector<1x32xf32> -> vector<1x32xf32>
    %105 = arith.addf %104, %78 : vector<1x32xf32>
    %c0_56 = arith.constant 0 : index
    %c4 = arith.constant 4 : index
    %c0_57 = arith.constant 0 : index
    %106 = vector.load %arg11[%c0_56, %c4, %c0_57] : memref<1x8x32xf32, #tpu.memory_space<vmem>>, vector<1x1x32xf32>
    %107 = vector.shape_cast %106 : vector<1x1x32xf32> to vector<1x32xf32>
    %108 = vector.shape_cast %105 : vector<1x32xf32> to vector<1x1x32xf32>
    tpu.vector_store %arg11[%c0_56, %c4, %c0_57], %108 {strides = array<i32>} : memref<1x8x32xf32, #tpu.memory_space<vmem>>, vector<1x1x32xf32>,
    %109 = vector.extract_strided_slice %76 {offsets = [0, 640], sizes = [1, 128], strides = [1, 1]} : vector<1x1024xf32> to vector<1x128xf32>
    %cst_58 = arith.constant dense<0.000000e+00> : vector<1x32xf32>
    %110 = tpu.matmul %109, %77, %cst_58 {dimension_numbers = #tpu.dot_dimension_numbers<[1], [0], [0], [1], [0, 0, 1, 1], [], []>} : vector<1x128xf32>, vector<128x32xf32>, vector<1x32xf32> -> vector<1x32xf32>
    %111 = arith.addf %110, %78 : vector<1x32xf32>
    %c0_59 = arith.constant 0 : index
    %c5 = arith.constant 5 : index
    %c0_60 = arith.constant 0 : index
    %112 = vector.load %arg11[%c0_59, %c5, %c0_60] : memref<1x8x32xf32, #tpu.memory_space<vmem>>, vector<1x1x32xf32>
    %113 = vector.shape_cast %112 : vector<1x1x32xf32> to vector<1x32xf32>
    %114 = vector.shape_cast %111 : vector<1x32xf32> to vector<1x1x32xf32>
    tpu.vector_store %arg11[%c0_59, %c5, %c0_60], %114 {strides = array<i32>} : memref<1x8x32xf32, #tpu.memory_space<vmem>>, vector<1x1x32xf32>,
    %115 = vector.extract_strided_slice %76 {offsets = [0, 768], sizes = [1, 128], strides = [1, 1]} : vector<1x1024xf32> to vector<1x128xf32>
    %cst_61 = arith.constant dense<0.000000e+00> : vector<1x32xf32>
    %116 = tpu.matmul %115, %77, %cst_61 {dimension_numbers = #tpu.dot_dimension_numbers<[1], [0], [0], [1], [0, 0, 1, 1], [], []>} : vector<1x128xf32>, vector<128x32xf32>, vector<1x32xf32> -> vector<1x32xf32>
    %117 = arith.addf %116, %78 : vector<1x32xf32>
    %c0_62 = arith.constant 0 : index
    %c6 = arith.constant 6 : index
    %c0_63 = arith.constant 0 : index
    %118 = vector.load %arg11[%c0_62, %c6, %c0_63] : memref<1x8x32xf32, #tpu.memory_space<vmem>>, vector<1x1x32xf32>
    %119 = vector.shape_cast %118 : vector<1x1x32xf32> to vector<1x32xf32>
    %120 = vector.shape_cast %117 : vector<1x32xf32> to vector<1x1x32xf32>
    tpu.vector_store %arg11[%c0_62, %c6, %c0_63], %120 {strides = array<i32>} : memref<1x8x32xf32, #tpu.memory_space<vmem>>, vector<1x1x32xf32>,
    %121 = vector.extract_strided_slice %76 {offsets = [0, 896], sizes = [1, 128], strides = [1, 1]} : vector<1x1024xf32> to vector<1x128xf32>
    %cst_64 = arith.constant dense<0.000000e+00> : vector<1x32xf32>
    %122 = tpu.matmul %121, %77, %cst_64 {dimension_numbers = #tpu.dot_dimension_numbers<[1], [0], [0], [1], [0, 0, 1, 1], [], []>} : vector<1x128xf32>, vector<128x32xf32>, vector<1x32xf32> -> vector<1x32xf32>
    %123 = arith.addf %122, %78 : vector<1x32xf32>
    %c0_65 = arith.constant 0 : index
    %c7 = arith.constant 7 : index
    %c0_66 = arith.constant 0 : index
    %124 = vector.load %arg11[%c0_65, %c7, %c0_66] : memref<1x8x32xf32, #tpu.memory_space<vmem>>, vector<1x1x32xf32>
    %125 = vector.shape_cast %124 : vector<1x1x32xf32> to vector<1x32xf32>
    %126 = vector.shape_cast %123 : vector<1x32xf32> to vector<1x1x32xf32>
    tpu.vector_store %arg11[%c0_65, %c7, %c0_66], %126 {strides = array<i32>} : memref<1x8x32xf32, #tpu.memory_space<vmem>>, vector<1x1x32xf32>,
    return
  }
  func.func @transform_0(%arg0: i32) -> (i32, i32, i32) {
    %c0_i32 = arith.constant 0 : i32
    %c0_i32_0 = arith.constant 0 : i32
    %c0_i32_1 = arith.constant 0 : i32
    return %arg0, %c0_i32, %c0_i32_0 : i32, i32, i32
  }
  func.func @transform_1(%arg0: i32) -> (i32, i32) {
    %c0_i32 = arith.constant 0 : i32
    %c0_i32_0 = arith.constant 0 : i32
    %c0_i32_1 = arith.constant 0 : i32
    return %c0_i32, %c0_i32_0 : i32, i32
  }
  func.func @transform_2(%arg0: i32) -> (i32, i32) {
    %c0_i32 = arith.constant 0 : i32
    %c0_i32_0 = arith.constant 0 : i32
    %c0_i32_1 = arith.constant 0 : i32
    return %c0_i32, %c0_i32_0 : i32, i32
  }
  func.func @transform_3(%arg0: i32) -> (i32, i32) {
    %c0_i32 = arith.constant 0 : i32
    %c0_i32_0 = arith.constant 0 : i32
    %c0_i32_1 = arith.constant 0 : i32
    return %c0_i32, %c0_i32_0 : i32, i32
  }
  func.func @transform_4(%arg0: i32) -> (i32, i32) {
    %c0_i32 = arith.constant 0 : i32
    %c0_i32_0 = arith.constant 0 : i32
    %c0_i32_1 = arith.constant 0 : i32
    return %c0_i32, %c0_i32_0 : i32, i32
  }
  func.func @transform_5(%arg0: i32) -> (i32, i32) {
    %c0_i32 = arith.constant 0 : i32
    %c0_i32_0 = arith.constant 0 : i32
    %c0_i32_1 = arith.constant 0 : i32
    return %c0_i32, %c0_i32_0 : i32, i32
  }
  func.func @transform_6(%arg0: i32) -> (i32, i32) {
    %c0_i32 = arith.constant 0 : i32
    %c0_i32_0 = arith.constant 0 : i32
    %c0_i32_1 = arith.constant 0 : i32
    return %c0_i32, %c0_i32_0 : i32, i32
  }
  func.func @transform_7(%arg0: i32) -> (i32, i32) {
    %c0_i32 = arith.constant 0 : i32
    %c0_i32_0 = arith.constant 0 : i32
    %c0_i32_1 = arith.constant 0 : i32
    return %c0_i32, %c0_i32_0 : i32, i32
  }
  func.func @transform_8(%arg0: i32) -> (i32, i32) {
    %c0_i32 = arith.constant 0 : i32
    %c0_i32_0 = arith.constant 0 : i32
    %c0_i32_1 = arith.constant 0 : i32
    return %c0_i32, %c0_i32_0 : i32, i32
  }
  func.func @transform_9(%arg0: i32) -> (i32, i32) {
    %c0_i32 = arith.constant 0 : i32
    %c0_i32_0 = arith.constant 0 : i32
    %c0_i32_1 = arith.constant 0 : i32
    return %c0_i32, %c0_i32_0 : i32, i32
  }
  func.func @transform_10(%arg0: i32) -> (i32, i32, i32) {
    %c0_i32 = arith.constant 0 : i32
    %c0_i32_0 = arith.constant 0 : i32
    %c0_i32_1 = arith.constant 0 : i32
    return %arg0, %c0_i32, %c0_i32_0 : i32, i32, i32
  }
}

</mosaic_0001>

<llo_original>
// kernel: tpu_custom_call.1
$region0: #{tpu_custom_call.1}
  #allocation0 [shape = 'u32[]', space=smem, size = 0x4, offset = 0x4, fixed_abs, tag = 'smem constant byte address 0x4 - core index']
  #allocation1 [shape = 'u32[144,128]{1,0:T(1,128)}', space=vmem, size = 0x12000, scoped, tag = 'internal scratch']
  #allocation2 [shape = 'f32[1,1]{1,0:T(1,128)S(1)}', space=vmem, size = 0x200, scoped, tag = 'scoped memory for tpu_custom_call.1']
  %s0 = inlined_call_operand.vmem [shape: f32[2,1,1024], index: 0, kind: input, shape index: {}]
  %s1 = inlined_call_operand.vmem [shape: f32[32,9], index: 1, kind: input, shape index: {}]
  %s2 = inlined_call_operand.vmem [shape: f32[32,1], index: 2, kind: input, shape index: {}]
  %s3 = inlined_call_operand.vmem [shape: f32[16,160], index: 3, kind: input, shape index: {}]
  %s4 = inlined_call_operand.vmem [shape: f32[16,1], index: 4, kind: input, shape index: {}]
  %s5 = inlined_call_operand.vmem [shape: f32[1,80], index: 5, kind: input, shape index: {}]
  %s6 = inlined_call_operand.<no memory space> [shape: f32[1,1], index: 6, kind: input, shape index: {}]
  %s7 = inlined_call_operand.vmem [shape: f32[1,1024], index: 7, kind: input, shape index: {}]
  %s8 = inlined_call_operand.vmem [shape: f32[128,32], index: 8, kind: input, shape index: {}]
  %s9 = inlined_call_operand.vmem [shape: f32[1,32], index: 9, kind: input, shape index: {}]
  %s10 = inlined_call_operand.hbm [shape: f32[2,8,32], index: 10, kind: output, shape index: {}]
  %s11 = sld [smem:[#allocation0]]
  $region73: #{tpu_custom_call.1} parent=0
    _
  %s13 = ssub.s32 1, %s11
  %s14 = scalar_select 0, %s13, %s11
  %v15 = vstv %s6
  %16 = vst [vmem:[#allocation2] sm:$0x1] %v15
  $region1: #{tpu_custom_call.1} parent=0
    #allocation3 [shape = 'u8[8192]{0}', space=vmem, size = 0x2000, scoped, tag = 'output window, operand 0']
    #allocation4 [shape = 's32[2]{0}', space=sflag, size = 0x8, scoped, tag = 'scoped memory for tpu_custom_call.1']
    %17 = vsyncpa [#allocation4], 0
    %s18 = scalar_lea.sflag [#allocation4], 1
    %19 = vsyncpa %s18, 0
    loop: start=0, step=1, limit=4
    $region2: #{tpu_custom_call.1} parent=1 // loop_pre_header
      _
    $region3: #{tpu_custom_call.1} parent=1 // loop_header
      %s21 = sphi 0, %s25
      %p22 = scmp.ge.s32.totalorder %s21, 4
      %s31 = sphi 0, %s33
      %s34 = sphi 0, %s31
      %s35 = sphi 0, %s34
      %s51 = sphi 0, %s35
      %s55 = sphi 0, %s55
      %s57 = sphi 0, %s55
      %s58 = sphi 0, %s57
      %s72 = sphi 0, %s58
      %s76 = sphi 0, %s76
      %s78 = sphi 0, %s76
      %s79 = sphi 0, %s78
      %s93 = sphi 0, %s79
      %s97 = sphi 0, %s97
      %s99 = sphi 0, %s97
      %s100 = sphi 0, %s99
      %s114 = sphi 0, %s100
      %s118 = sphi 0, %s118
      %s120 = sphi 0, %s118
      %s121 = sphi 0, %s120
      %s135 = sphi 0, %s121
      %s139 = sphi 0, %s139
      %s141 = sphi 0, %s139
      %s142 = sphi 0, %s141
      %s156 = sphi 0, %s142
      %s160 = sphi 0, %s160
      %s162 = sphi 0, %s160
      %s163 = sphi 0, %s162
      %s177 = sphi 0, %s163
      %s181 = sphi 0, %s181
      %s183 = sphi 0, %s181
      %s184 = sphi 0, %s183
      %s198 = sphi 0, %s184
      %s202 = sphi 0, %s202
      %s204 = sphi 0, %s202
      %s205 = sphi 0, %s204
      %s219 = sphi 0, %s205
      %s223 = sphi 0, %s223
      %s225 = sphi 0, %s223
      %s226 = sphi 0, %s225
      %s240 = sphi 0, %s226
      %s246 = sphi 0, %s248
      %s249 = sphi 0, %s246
      %s250 = sphi 0, %s249
      %s266 = sphi 0, %s250
    $region4: #{tpu_custom_call.1} parent=1 // loop_header_branch
      %24 = sbr.rel (%p22) target = $region8
    $region5: #{tpu_custom_call.1} parent=1 // loop_body
      %s26 = ssub.s32 %s21, 1
      %s27 = ssub.s32 %s21, 2
      %s28 = sadd.s32 %s21, 1
      %s29 = ssub.s32 %s21, %s28
      %p30 = scmp.eq.s32.totalorder %s29, 0
      %s32 = sadd.s32 %s31, 1
      %s33 = scalar_select %p30, %s31, %s32
      %p36 = pneg %p30
      %p37 = scmp.eq.s32.totalorder %s21, 1
      %p38 = por %p36, %p37
      %p39 = scmp.ne.s32.totalorder %s31, %s34
      %p40 = scmp.eq.s32.totalorder %s21, 0
      %p41 = por %p39, %p40
      %p42 = scmp.ne.s32.totalorder %s31, %s34
      %p43 = scmp.eq.s32.totalorder %s26, 1
      %p44 = por %p42, %p43
      %p45 = scmp.ne.s32.totalorder %s34, %s35
      %p46 = scmp.eq.s32.totalorder %s26, 0
      %p47 = por %p45, %p46
      %p48 = scmp.ne.s32.totalorder %s34, %s35
      %p49 = scmp.eq.s32.totalorder %s27, 1
      %p50 = por %p48, %p49
      %p52 = scmp.ne.s32.totalorder %s35, %s51
      %p53 = scmp.eq.s32.totalorder %s27, 0
      %p54 = por %p52, %p53
      %s56 = sadd.s32 %s55, 1
      %p59 = scmp.eq.s32.totalorder %s21, 1
      %p60 = scmp.ne.s32.totalorder %s55, %s57
      %p61 = scmp.eq.s32.totalorder %s21, 0
      %p62 = por %p60, %p61
      %p63 = scmp.ne.s32.totalorder %s55, %s57
      %p64 = scmp.eq.s32.totalorder %s26, 1
      %p65 = por %p63, %p64
      %p66 = scmp.ne.s32.totalorder %s57, %s58
      %p67 = scmp.eq.s32.totalorder %s26, 0
      %p68 = por %p66, %p67
      %p69 = scmp.ne.s32.totalorder %s57, %s58
      %p70 = scmp.eq.s32.totalorder %s27, 1
      %p71 = por %p69, %p70
      %p73 = scmp.ne.s32.totalorder %s58, %s72
      %p74 = scmp.eq.s32.totalorder %s27, 0
      %p75 = por %p73, %p74
      %s77 = sadd.s32 %s76, 1
      %p80 = scmp.eq.s32.totalorder %s21, 1
      %p81 = scmp.ne.s32.totalorder %s76, %s78
      %p82 = scmp.eq.s32.totalorder %s21, 0
      %p83 = por %p81, %p82
      %p84 = scmp.ne.s32.totalorder %s76, %s78
      %p85 = scmp.eq.s32.totalorder %s26, 1
      %p86 = por %p84, %p85
      %p87 = scmp.ne.s32.totalorder %s78, %s79
      %p88 = scmp.eq.s32.totalorder %s26, 0
      %p89 = por %p87, %p88
      %p90 = scmp.ne.s32.totalorder %s78, %s79
      %p91 = scmp.eq.s32.totalorder %s27, 1
      %p92 = por %p90, %p91
      %p94 = scmp.ne.s32.totalorder %s79, %s93
      %p95 = scmp.eq.s32.totalorder %s27, 0
      %p96 = por %p94, %p95
      %s98 = sadd.s32 %s97, 1
      %p101 = scmp.eq.s32.totalorder %s21, 1
      %p102 = scmp.ne.s32.totalorder %s97, %s99
      %p103 = scmp.eq.s32.totalorder %s21, 0
      %p104 = por %p102, %p103
      %p105 = scmp.ne.s32.totalorder %s97, %s99
      %p106 = scmp.eq.s32.totalorder %s26, 1
      %p107 = por %p105, %p106
      %p108 = scmp.ne.s32.totalorder %s99, %s100
      %p109 = scmp.eq.s32.totalorder %s26, 0
      %p110 = por %p108, %p109
      %p111 = scmp.ne.s32.totalorder %s99, %s100
      %p112 = scmp.eq.s32.totalorder %s27, 1
      %p113 = por %p111, %p112
      %p115 = scmp.ne.s32.totalorder %s100, %s114
      %p116 = scmp.eq.s32.totalorder %s27, 0
      %p117 = por %p115, %p116
      %s119 = sadd.s32 %s118, 1
      %p122 = scmp.eq.s32.totalorder %s21, 1
      %p123 = scmp.ne.s32.totalorder %s118, %s120
      %p124 = scmp.eq.s32.totalorder %s21, 0
      %p125 = por %p123, %p124
      %p126 = scmp.ne.s32.totalorder %s118, %s120
      %p127 = scmp.eq.s32.totalorder %s26, 1
      %p128 = por %p126, %p127
      %p129 = scmp.ne.s32.totalorder %s120, %s121
      %p130 = scmp.eq.s32.totalorder %s26, 0
      %p131 = por %p129, %p130
      %p132 = scmp.ne.s32.totalorder %s120, %s121
      %p133 = scmp.eq.s32.totalorder %s27, 1
      %p134 = por %p132, %p133
      %p136 = scmp.ne.s32.totalorder %s121, %s135
      %p137 = scmp.eq.s32.totalorder %s27, 0
      %p138 = por %p136, %p137
      %s140 = sadd.s32 %s139, 1
      %p143 = scmp.eq.s32.totalorder %s21, 1
      %p144 = scmp.ne.s32.totalorder %s139, %s141
      %p145 = scmp.eq.s32.totalorder %s21, 0
      %p146 = por %p144, %p145
      %p147 = scmp.ne.s32.totalorder %s139, %s141
      %p148 = scmp.eq.s32.totalorder %s26, 1
      %p149 = por %p147, %p148
      %p150 = scmp.ne.s32.totalorder %s141, %s142
      %p151 = scmp.eq.s32.totalorder %s26, 0
      %p152 = por %p150, %p151
      %p153 = scmp.ne.s32.totalorder %s141, %s142
      %p154 = scmp.eq.s32.totalorder %s27, 1
      %p155 = por %p153, %p154
      %p157 = scmp.ne.s32.totalorder %s142, %s156
      %p158 = scmp.eq.s32.totalorder %s27, 0
      %p159 = por %p157, %p158
      %s161 = sadd.s32 %s160, 1
      %p164 = scmp.eq.s32.totalorder %s21, 1
      %p165 = scmp.ne.s32.totalorder %s160, %s162
      %p166 = scmp.eq.s32.totalorder %s21, 0
      %p167 = por %p165, %p166
      %p168 = scmp.ne.s32.totalorder %s160, %s162
      %p169 = scmp.eq.s32.totalorder %s26, 1
      %p170 = por %p168, %p169
      %p171 = scmp.ne.s32.totalorder %s162, %s163
      %p172 = scmp.eq.s32.totalorder %s26, 0
      %p173 = por %p171, %p172
      %p174 = scmp.ne.s32.totalorder %s162, %s163
      %p175 = scmp.eq.s32.totalorder %s27, 1
      %p176 = por %p174, %p175
      %p178 = scmp.ne.s32.totalorder %s163, %s177
      %p179 = scmp.eq.s32.totalorder %s27, 0
      %p180 = por %p178, %p179
      %s182 = sadd.s32 %s181, 1
      %p185 = scmp.eq.s32.totalorder %s21, 1
      %p186 = scmp.ne.s32.totalorder %s181, %s183
      %p187 = scmp.eq.s32.totalorder %s21, 0
      %p188 = por %p186, %p187
      %p189 = scmp.ne.s32.totalorder %s181, %s183
      %p190 = scmp.eq.s32.totalorder %s26, 1
      %p191 = por %p189, %p190
      %p192 = scmp.ne.s32.totalorder %s183, %s184
      %p193 = scmp.eq.s32.totalorder %s26, 0
      %p194 = por %p192, %p193
      %p195 = scmp.ne.s32.totalorder %s183, %s184
      %p196 = scmp.eq.s32.totalorder %s27, 1
      %p197 = por %p195, %p196
      %p199 = scmp.ne.s32.totalorder %s184, %s198
      %p200 = scmp.eq.s32.totalorder %s27, 0
      %p201 = por %p199, %p200
      %s203 = sadd.s32 %s202, 1
      %p206 = scmp.eq.s32.totalorder %s21, 1
      %p207 = scmp.ne.s32.totalorder %s202, %s204
      %p208 = scmp.eq.s32.totalorder %s21, 0
      %p209 = por %p207, %p208
      %p210 = scmp.ne.s32.totalorder %s202, %s204
      %p211 = scmp.eq.s32.totalorder %s26, 1
      %p212 = por %p210, %p211
      %p213 = scmp.ne.s32.totalorder %s204, %s205
      %p214 = scmp.eq.s32.totalorder %s26, 0
      %p215 = por %p213, %p214
      %p216 = scmp.ne.s32.totalorder %s204, %s205
      %p217 = scmp.eq.s32.totalorder %s27, 1
      %p218 = por %p216, %p217
      %p220 = scmp.ne.s32.totalorder %s205, %s219
      %p221 = scmp.eq.s32.totalorder %s27, 0
      %p222 = por %p220, %p221
      %s224 = sadd.s32 %s223, 1
      %p227 = scmp.eq.s32.totalorder %s21, 1
      %p228 = scmp.ne.s32.totalorder %s223, %s225
      %p229 = scmp.eq.s32.totalorder %s21, 0
      %p230 = por %p228, %p229
      %p231 = scmp.ne.s32.totalorder %s223, %s225
      %p232 = scmp.eq.s32.totalorder %s26, 1
      %p233 = por %p231, %p232
      %p234 = scmp.ne.s32.totalorder %s225, %s226
      %p235 = scmp.eq.s32.totalorder %s26, 0
      %p236 = por %p234, %p235
      %p237 = scmp.ne.s32.totalorder %s225, %s226
      %p238 = scmp.eq.s32.totalorder %s27, 1
      %p239 = por %p237, %p238
      %p241 = scmp.ne.s32.totalorder %s226, %s240
      %p242 = scmp.eq.s32.totalorder %s27, 0
      %p243 = por %p241, %p242
      %s244 = ssub.s32 %s21, %s28
      %p245 = scmp.eq.s32.totalorder %s244, 0
      %s247 = sadd.s32 %s246, 1
      %s248 = scalar_select %p245, %s246, %s247
      %p251 = pneg %p245
      %p252 = scmp.eq.s32.totalorder %s21, 1
      %p253 = por %p251, %p252
      %p254 = scmp.ne.s32.totalorder %s246, %s249
      %p255 = scmp.eq.s32.totalorder %s21, 0
      %p256 = por %p254, %p255
      %p257 = scmp.ne.s32.totalorder %s246, %s249
      %p258 = scmp.eq.s32.totalorder %s26, 1
      %p259 = por %p257, %p258
      %p260 = scmp.ne.s32.totalorder %s249, %s250
      %p261 = scmp.eq.s32.totalorder %s26, 0
      %p262 = por %p260, %p261
      %p263 = scmp.ne.s32.totalorder %s249, %s250
      %p264 = scmp.eq.s32.totalorder %s27, 1
      %p265 = por %p263, %p264
      %p267 = scmp.ne.s32.totalorder %s250, %s266
      %p268 = scmp.eq.s32.totalorder %s27, 0
      %p269 = por %p267, %p268
      %p270 = scmp.le.s32.totalorder 1, %s21
      %p271 = scmp.lt.s32.totalorder %s21, 3
      %p272 = pnand %p270, %p271
      %p273 = pneg %p272
      // Predicated region
      $region9: #{tpu_custom_call.1} parent=5 // pred_check
        _
      $region10: #{tpu_custom_call.1} parent=5 // pred_check_branch
        %275 = sbr.rel (%p272) target = $region12
      $region11: #{tpu_custom_call.1} parent=5 // pred_region
        %s276 = ssub.s32 %s21, 1
        // Predicated region
        $region13: #{tpu_custom_call.1} parent=11 // pred_check
          %p277 = pneg %p68
        $region14: #{tpu_custom_call.1} parent=11 // pred_check_branch
          %279 = sbr.rel (%p277) target = $region16
        $region15: #{tpu_custom_call.1} parent=11 // pred_region
          _
        $region16: #{tpu_custom_call.1} parent=11 // pred_fallthru
          _
        // Predicated region
        $region17: #{tpu_custom_call.1} parent=11 // pred_check
          %p280 = pneg %p89
        $region18: #{tpu_custom_call.1} parent=11 // pred_check_branch
          %282 = sbr.rel (%p280) target = $region20
        $region19: #{tpu_custom_call.1} parent=11 // pred_region
          _
        $region20: #{tpu_custom_call.1} parent=11 // pred_fallthru
          _
        // Predicated region
        $region21: #{tpu_custom_call.1} parent=11 // pred_check
          %p283 = pneg %p110
        $region22: #{tpu_custom_call.1} parent=11 // pred_check_branch
          %285 = sbr.rel (%p283) target = $region24
        $region23: #{tpu_custom_call.1} parent=11 // pred_region
          _
        $region24: #{tpu_custom_call.1} parent=11 // pred_fallthru
          _
        // Predicated region
        $region25: #{tpu_custom_call.1} parent=11 // pred_check
          %p286 = pneg %p131
        $region26: #{tpu_custom_call.1} parent=11 // pred_check_branch
          %288 = sbr.rel (%p286) target = $region28
        $region27: #{tpu_custom_call.1} parent=11 // pred_region
          _
        $region28: #{tpu_custom_call.1} parent=11 // pred_fallthru
          _
        // Predicated region
        $region29: #{tpu_custom_call.1} parent=11 // pred_check
          %p289 = pneg %p152
        $region30: #{tpu_custom_call.1} parent=11 // pred_check_branch
          %291 = sbr.rel (%p289) target = $region32
        $region31: #{tpu_custom_call.1} parent=11 // pred_region
          _
        $region32: #{tpu_custom_call.1} parent=11 // pred_fallthru
          _
        // Predicated region
        $region33: #{tpu_custom_call.1} parent=11 // pred_check
          %p292 = pneg %p173
        $region34: #{tpu_custom_call.1} parent=11 // pred_check_branch
          %294 = sbr.rel (%p292) target = $region36
        $region35: #{tpu_custom_call.1} parent=11 // pred_region
          _
        $region36: #{tpu_custom_call.1} parent=11 // pred_fallthru
          _
        // Predicated region
        $region37: #{tpu_custom_call.1} parent=11 // pred_check
          %p295 = pneg %p194
        $region38: #{tpu_custom_call.1} parent=11 // pred_check_branch
          %297 = sbr.rel (%p295) target = $region40
        $region39: #{tpu_custom_call.1} parent=11 // pred_region
          _
        $region40: #{tpu_custom_call.1} parent=11 // pred_fallthru
          _
        // Predicated region
        $region41: #{tpu_custom_call.1} parent=11 // pred_check
          %p298 = pneg %p215
        $region42: #{tpu_custom_call.1} parent=11 // pred_check_branch
          %300 = sbr.rel (%p298) target = $region44
        $region43: #{tpu_custom_call.1} parent=11 // pred_region
          _
        $region44: #{tpu_custom_call.1} parent=11 // pred_fallthru
          _
        // Predicated region
        $region45: #{tpu_custom_call.1} parent=11 // pred_check
          %p301 = pneg %p236
        $region46: #{tpu_custom_call.1} parent=11 // pred_check_branch
          %303 = sbr.rel (%p301) target = $region48
        $region47: #{tpu_custom_call.1} parent=11 // pred_region
          _
        $region48: #{tpu_custom_call.1} parent=11 // pred_fallthru
          _
      $region12: #{tpu_custom_call.1} parent=5 // pred_fallthru
        _
      %p304 = scmp.lt.s32.totalorder %s21, 2
      // Predicated region
      $region49: #{tpu_custom_call.1} parent=5 // pred_check
        %p305 = pneg %p304
      $region50: #{tpu_custom_call.1} parent=5 // pred_check_branch
        %307 = sbr.rel (%p305) target = $region52
      $region51: #{tpu_custom_call.1} parent=5 // pred_region
        // Predicated region
        $region53: #{tpu_custom_call.1} parent=51 // pred_check
          %p308 = pneg %p41
        $region54: #{tpu_custom_call.1} parent=51 // pred_check_branch
          %310 = sbr.rel (%p308) target = $region56
        $region55: #{tpu_custom_call.1} parent=51 // pred_region
          %p311 = scmp.lt.s32.totalorder %s21, 1
          %s312 = scalar_select %p311, %s21, 1
          %s313 = smul.addr %s312, 8
          %s314 = scalar_lea.vmem %s0, %s313
        $region56: #{tpu_custom_call.1} parent=51 // pred_fallthru
          _
      $region52: #{tpu_custom_call.1} parent=5 // pred_fallthru
        _
      %p315 = scmp.le.s32.totalorder 1, %s21
      %p316 = scmp.lt.s32.totalorder %s21, 3
      %p317 = pnand %p315, %p316
      %p318 = pneg %p317
      // Predicated region
      $region57: #{tpu_custom_call.1} parent=5 // pred_check
        _
      $region58: #{tpu_custom_call.1} parent=5 // pred_check_branch
        %320 = sbr.rel (%p317) target = $region60
      $region59: #{tpu_custom_call.1} parent=5 // pred_region
        %s321 = ssub.s32 %s21, 1
        %p322 = scmp.lt.s32.totalorder %s26, 1
        %s323 = scalar_select %p322, %s26, 1
        %s324 = smul.addr %s323, 8
        %s325 = scalar_lea.vmem %s0, %s324
        %p326 = pneg %p47
        %p327 = pneg %p44
        %p328 = pneg %p68
        %p329 = pneg %p65
        %p330 = pneg %p89
        %p331 = pneg %p86
        %p332 = pneg %p110
        %p333 = pneg %p107
        %p334 = pneg %p131
        %p335 = pneg %p128
        %p336 = pneg %p152
        %p337 = pneg %p149
        %p338 = pneg %p173
        %p339 = pneg %p170
        %p340 = pneg %p194
        %p341 = pneg %p191
        %p342 = pneg %p215
        %p343 = pneg %p212
        %p344 = pneg %p236
        %p345 = pneg %p233
        %p346 = pneg %p262
        %p347 = pneg %p259
        %s348 = sand.u32 %s249, 1
        %s349 = scalar_lea.sflag [#allocation4], %s348
        %s350 = sand.u32 %s249, 1
        %s351 = smul.addr %s350, 8
        %s352 = scalar_lea.vmem [#allocation3], %s351
        %p353 = scmp.lt.s32.totalorder %s26, 1
        %s354 = scalar_select %p353, %s26, 1
        %s355 = smul.addr %s354, 8
        %s356 = scalar_lea.vmem %s0, %s355
        %v357 = vld [vmem:[%s7] sm:$0xff]
        %v358 = vld [vmem:[%s356] sm:$0xff]
        %v359 = vld [vmem:[%s1] sm:$0xff]
        %v360 = vld [vmem:[%s1 + $0x8] sm:$0xff]
        %v361 = vld [vmem:[%s1 + $0x10] sm:$0xff]
        %v362 = vld [vmem:[%s1 + $0x18] sm:$0xff]
        %v364 = vlaneseq
        %v365 = vshrl.u32 %v364, 7
        %v366 = vsub.s32 0, %v365
        %v367 = vrot.slane %v358, %v366
        %v368 = vlaneseq
        %v369 = vshrl.u32 %v368, 7
        %v370 = vsub.s32 1, %v369
        %v371 = vrot.slane %v358, %v370
        %v372 = vlaneseq
        %v373 = vshrl.u32 %v372, 7
        %v374 = vsub.s32 2, %v373
        %v375 = vrot.slane %v358, %v374
        %v376 = vlaneseq
        %v377 = vshrl.u32 %v376, 7
        %v378 = vsub.s32 3, %v377
        %v379 = vrot.slane %v358, %v378
        %v380 = vlaneseq
        %v381 = vshrl.u32 %v380, 7
        %v382 = vsub.s32 4, %v381
        %v383 = vrot.slane %v358, %v382
        %v384 = vlaneseq
        %v385 = vshrl.u32 %v384, 7
        %v386 = vsub.s32 5, %v385
        %v387 = vrot.slane %v358, %v386
        %v388 = vlaneseq
        %v389 = vshrl.u32 %v388, 7
        %v390 = vsub.s32 6, %v389
        %v391 = vrot.slane %v358, %v390
        %v392 = vlaneseq
        %v393 = vshrl.u32 %v392, 7
        %v394 = vsub.s32 7, %v393
        %v395 = vrot.slane %v358, %v394
        %404 = vrot.lane.b32.xlu0 %v367, 4
        %v405 = vpop.permute.xlu0 %404
        %406 = vrot.lane.b32.xlu0 %v371, 4
        %v407 = vpop.permute.xlu0 %406
        %408 = vrot.lane.b32.xlu0 %v375, 4
        %v409 = vpop.permute.xlu0 %408
        %410 = vrot.lane.b32.xlu0 %v379, 4
        %v411 = vpop.permute.xlu0 %410
        %412 = vrot.lane.b32.xlu0 %v383, 4
        %v413 = vpop.permute.xlu0 %412
        %414 = vrot.lane.b32.xlu0 %v387, 4
        %v415 = vpop.permute.xlu0 %414
        %416 = vrot.lane.b32.xlu0 %v391, 4
        %v417 = vpop.permute.xlu0 %416
        %418 = vrot.lane.b32.xlu0 %v395, 4
        %v419 = vpop.permute.xlu0 %418
        %v420 = vlaneseq
        %v421 = vand.u32 %v420, 127
        %vm422 = vcmp.lt.s32.totalorder %v421, 4
        %v423 = vsel %vm422, %v417, %v419
        %v424 = vsel %vm422, %v415, %v417
        %v425 = vsel %vm422, %v413, %v415
        %v426 = vsel %vm422, %v411, %v413
        %v427 = vsel %vm422, %v409, %v411
        %v428 = vsel %vm422, %v407, %v409
        %v429 = vsel %vm422, %v405, %v407
        %v430 = vsel %vm422, %v419, %v405
        %431 = vrot.lane.b32.xlu0 %v367, 3
        %v432 = vpop.permute.xlu0 %431
        %433 = vrot.lane.b32.xlu0 %v371, 3
        %v434 = vpop.permute.xlu0 %433
        %435 = vrot.lane.b32.xlu0 %v375, 3
        %v436 = vpop.permute.xlu0 %435
        %437 = vrot.lane.b32.xlu0 %v379, 3
        %v438 = vpop.permute.xlu0 %437
        %439 = vrot.lane.b32.xlu0 %v383, 3
        %v440 = vpop.permute.xlu0 %439
        %441 = vrot.lane.b32.xlu0 %v387, 3
        %v442 = vpop.permute.xlu0 %441
        %443 = vrot.lane.b32.xlu0 %v391, 3
        %v444 = vpop.permute.xlu0 %443
        %445 = vrot.lane.b32.xlu0 %v395, 3
        %v446 = vpop.permute.xlu0 %445
        %vm447 = vcmp.lt.s32.totalorder %v421, 3
        %v448 = vsel %vm447, %v444, %v446
        %v449 = vsel %vm447, %v442, %v444
        %v450 = vsel %vm447, %v440, %v442
        %v451 = vsel %vm447, %v438, %v440
        %v452 = vsel %vm447, %v436, %v438
        %v453 = vsel %vm447, %v434, %v436
        %v454 = vsel %vm447, %v432, %v434
        %v455 = vsel %vm447, %v446, %v432
        %460 = vrot.lane.b32.xlu0 %v359, 127
        %v461 = vpop.permute.xlu0 %460
        %462 = vrot.lane.b32.xlu0 %v360, 127
        %v463 = vpop.permute.xlu0 %462
        %464 = vrot.lane.b32.xlu0 %v361, 127
        %v465 = vpop.permute.xlu0 %464
        %466 = vrot.lane.b32.xlu0 %v362, 127
        %v467 = vpop.permute.xlu0 %466
        %vm468 = vcmask 7168
        %v469 = vsel %vm468, %v461, 0
        %v471 = vsel %vm468, %v463, 0
        %v473 = vsel %vm468, %v465, 0
        %v475 = vsel %vm468, %v467, 0
        %vm477 = vcmask 1040384
        %v479 = vsel %vm477, %v455, 0
        %v482 = vsel %vm477, %v454, 0
        %v485 = vsel %vm477, %v453, 0
        %v488 = vsel %vm477, %v452, 0
        %v491 = vsel %vm477, %v451, 0
        %v494 = vsel %vm477, %v450, 0
        %v497 = vsel %vm477, %v449, 0
        %v500 = vsel %vm477, %v448, 0
        %502 = vmatprep.subr.mxu0 %v482
        %503 = vmatpush1.msra.mxu0 %v479
        %504 = vmatprep.subr.mxu0 0.0
        %505 = vmatpush1.msra.mxu0 0.0
        %506 = vmatprep.subr.mxu0 0.0
        %507 = vmatpush1.msra.mxu0 0.0
        %508 = vmatprep.subr.mxu0 0.0
        %509 = vmatpush1.msra.mxu0 0.0
        %510 = vmatprep.subr.mxu0 0.0
        %511 = vmatpush1.msra.mxu0 0.0
        %512 = vmatprep.subr.mxu0 0.0
        %513 = vmatpush1.msra.mxu0 0.0
        %514 = vmatprep.subr.mxu0 0.0
        %515 = vmatpush1.msra.mxu0 0.0
        %516 = vmatprep.subr.mxu0 0.0
        %517 = vmatpush1.msra.mxu0 0.0
        %518 = vmatprep.subr.mxu0 0.0
        %519 = vmatpush1.msra.mxu0 0.0
        %520 = vmatprep.subr.mxu0 0.0
        %521 = vmatpush1.msra.mxu0 0.0
        %522 = vmatprep.subr.mxu0 0.0
        %523 = vmatpush1.msra.mxu0 0.0
        %524 = vmatprep.subr.mxu0 0.0
        %525 = vmatpush1.msra.mxu0 0.0
        %526 = vmatprep.subr.mxu0 0.0
        %527 = vmatpush1.msra.mxu0 0.0
        %528 = vmatprep.subr.mxu0 0.0
        %529 = vmatpush1.msra.mxu0 0.0
        %530 = vmatprep.subr.mxu0 0.0
        %531 = vmatpush1.msra.mxu0 0.0
        %532 = vmatprep.subr.mxu0 0.0
        %533 = vmatpush1.msra.mxu0 0.0
        %534 = vmatprep.subr.mxu0 0.0
        %535 = vmatpush1.msra.mxu0 0.0
        %536 = vmatprep.subr.mxu0 0.0
        %537 = vmatpush1.msra.mxu0 0.0
        %538 = vmatprep.subr.mxu0 0.0
        %539 = vmatpush1.msra.mxu0 0.0
        %540 = vmatprep.subr.mxu0 0.0
        %541 = vmatpush1.msra.mxu0 0.0
        %542 = vmatprep.subr.mxu0 0.0
        %543 = vmatpush1.msra.mxu0 0.0
        %544 = vmatprep.subr.mxu0 0.0
        %545 = vmatpush1.msra.mxu0 0.0
        %546 = vmatprep.subr.mxu0 0.0
        %547 = vmatpush1.msra.mxu0 0.0
        %548 = vmatprep.subr.mxu0 0.0
        %549 = vmatpush1.msra.mxu0 0.0
        %550 = vmatprep.subr.mxu0 0.0
        %551 = vmatpush1.msra.mxu0 0.0
        %552 = vmatprep.subr.mxu0 0.0
        %553 = vmatpush1.msra.mxu0 0.0
        %554 = vmatprep.subr.mxu0 0.0
        %555 = vmatpush1.msra.mxu0 0.0
        %556 = vmatprep.subr.mxu0 0.0
        %557 = vmatpush1.msra.mxu0 0.0
        %558 = vmatprep.subr.mxu0 0.0
        %559 = vmatpush1.msra.mxu0 0.0
        %560 = vmatprep.subr.mxu0 0.0
        %561 = vmatpush1.msra.mxu0 0.0
        %562 = vmatprep.subr.mxu0 0.0
        %563 = vmatpush1.msra.mxu0 0.0
        %564 = vmatprep.subr.mxu0 0.0
        %565 = vmatpush1.msra.mxu0 0.0
        %566 = vmatprep.mubr.f32.mxu0 0.0
        %567 = vmatmul.mubr.f32.gmra.mrb[0].mxu0 %v469
        %v568 = vpop.f32.mrb[0].mxu0
        %v569 = vadd.f32 0.0, %v568
        %v570 = vpop.f32.mrb[0].mxu0
        %v571 = vadd.f32 0.0, %v570
        %572 = vmatprep.mubr.f32.mxu0 0.0
        %573 = vmatmul.mubr.f32.gmra.mrb[0].mxu0 %v471
        %v574 = vpop.f32.mrb[0].mxu0
        %v575 = vadd.f32 0.0, %v574
        %v576 = vpop.f32.mrb[0].mxu0
        %v577 = vadd.f32 0.0, %v576
        %578 = vmatprep.mubr.f32.mxu0 0.0
        %579 = vmatmul.mubr.f32.gmra.mrb[0].mxu0 %v473
        %v580 = vpop.f32.mrb[0].mxu0
        %v581 = vadd.f32 0.0, %v580
        %v582 = vpop.f32.mrb[0].mxu0
        %v583 = vadd.f32 0.0, %v582
        %584 = vmatprep.mubr.f32.mxu0 0.0
        %585 = vmatmul.mubr.f32.gmra.mrb[0].mxu0 %v475
        %v586 = vpop.f32.mrb[0].mxu0
        %v587 = vadd.f32 0.0, %v586
        %v588 = vpop.f32.mrb[0].mxu0
        %v589 = vadd.f32 0.0, %v588
        %590 = vdwg.mxu0
        %591 = vmatprep.subr.mxu0 %v488
        %592 = vmatpush1.msra.mxu0 %v485
        %593 = vmatprep.subr.mxu0 0.0
        %594 = vmatpush1.msra.mxu0 0.0
        %595 = vmatprep.subr.mxu0 0.0
        %596 = vmatpush1.msra.mxu0 0.0
        %597 = vmatprep.subr.mxu0 0.0
        %598 = vmatpush1.msra.mxu0 0.0
        %599 = vmatprep.subr.mxu0 0.0
        %600 = vmatpush1.msra.mxu0 0.0
        %601 = vmatprep.subr.mxu0 0.0
        %602 = vmatpush1.msra.mxu0 0.0
        %603 = vmatprep.subr.mxu0 0.0
        %604 = vmatpush1.msra.mxu0 0.0
        %605 = vmatprep.subr.mxu0 0.0
        %606 = vmatpush1.msra.mxu0 0.0
        %607 = vmatprep.subr.mxu0 0.0
        %608 = vmatpush1.msra.mxu0 0.0
        %609 = vmatprep.subr.mxu0 0.0
        %610 = vmatpush1.msra.mxu0 0.0
        %611 = vmatprep.subr.mxu0 0.0
        %612 = vmatpush1.msra.mxu0 0.0
        %613 = vmatprep.subr.mxu0 0.0
        %614 = vmatpush1.msra.mxu0 0.0
        %615 = vmatprep.subr.mxu0 0.0
        %616 = vmatpush1.msra.mxu0 0.0
        %617 = vmatprep.subr.mxu0 0.0
        %618 = vmatpush1.msra.mxu0 0.0
        %619 = vmatprep.subr.mxu0 0.0
        %620 = vmatpush1.msra.mxu0 0.0
        %621 = vmatprep.subr.mxu0 0.0
        %622 = vmatpush1.msra.mxu0 0.0
        %623 = vmatprep.subr.mxu0 0.0
        %624 = vmatpush1.msra.mxu0 0.0
        %625 = vmatprep.subr.mxu0 0.0
        %626 = vmatpush1.msra.mxu0 0.0
        %627 = vmatprep.subr.mxu0 0.0
        %628 = vmatpush1.msra.mxu0 0.0
        %629 = vmatprep.subr.mxu0 0.0
        %630 = vmatpush1.msra.mxu0 0.0
        %631 = vmatprep.subr.mxu0 0.0
        %632 = vmatpush1.msra.mxu0 0.0
        %633 = vmatprep.subr.mxu0 0.0
        %634 = vmatpush1.msra.mxu0 0.0
        %635 = vmatprep.subr.mxu0 0.0
        %636 = vmatpush1.msra.mxu0 0.0
        %637 = vmatprep.subr.mxu0 0.0
        %638 = vmatpush1.msra.mxu0 0.0
        %639 = vmatprep.subr.mxu0 0.0
        %640 = vmatpush1.msra.mxu0 0.0
        %641 = vmatprep.subr.mxu0 0.0
        %642 = vmatpush1.msra.mxu0 0.0
        %643 = vmatprep.subr.mxu0 0.0
        %644 = vmatpush1.msra.mxu0 0.0
        %645 = vmatprep.subr.mxu0 0.0
        %646 = vmatpush1.msra.mxu0 0.0
        %647 = vmatprep.subr.mxu0 0.0
        %648 = vmatpush1.msra.mxu0 0.0
        %649 = vmatprep.subr.mxu0 0.0
        %650 = vmatpush1.msra.mxu0 0.0
        %651 = vmatprep.subr.mxu0 0.0
        %652 = vmatpush1.msra.mxu0 0.0
        %653 = vmatprep.subr.mxu0 0.0
        %654 = vmatpush1.msra.mxu0 0.0
        %655 = vmatprep.mubr.f32.mxu0 0.0
        %656 = vmatmul.mubr.f32.gmra.mrb[0].mxu0 %v469
        %v657 = vpop.f32.mrb[0].mxu0
        %v658 = vadd.f32 0.0, %v657
        %v659 = vpop.f32.mrb[0].mxu0
        %v660 = vadd.f32 0.0, %v659
        %661 = vmatprep.mubr.f32.mxu0 0.0
        %662 = vmatmul.mubr.f32.gmra.mrb[0].mxu0 %v471
        %v663 = vpop.f32.mrb[0].mxu0
        %v664 = vadd.f32 0.0, %v663
        %v665 = vpop.f32.mrb[0].mxu0
        %v666 = vadd.f32 0.0, %v665
        %667 = vmatprep.mubr.f32.mxu0 0.0
        %668 = vmatmul.mubr.f32.gmra.mrb[0].mxu0 %v473
        %v669 = vpop.f32.mrb[0].mxu0
        %v670 = vadd.f32 0.0, %v669
        %v671 = vpop.f32.mrb[0].mxu0
        %v672 = vadd.f32 0.0, %v671
        %673 = vmatprep.mubr.f32.mxu0 0.0
        %674 = vmatmul.mubr.f32.gmra.mrb[0].mxu0 %v475
        %v675 = vpop.f32.mrb[0].mxu0
        %v676 = vadd.f32 0.0, %v675
        %v677 = vpop.f32.mrb[0].mxu0
        %v678 = vadd.f32 0.0, %v677
        %679 = vdwg.mxu0
        %680 = vmatprep.subr.mxu0 %v494
        %681 = vmatpush1.msra.mxu0 %v491
        %682 = vmatprep.subr.mxu0 0.0
        %683 = vmatpush1.msra.mxu0 0.0
        %684 = vmatprep.subr.mxu0 0.0
        %685 = vmatpush1.msra.mxu0 0.0
        %686 = vmatprep.subr.mxu0 0.0
        %687 = vmatpush1.msra.mxu0 0.0
        %688 = vmatprep.subr.mxu0 0.0
        %689 = vmatpush1.msra.mxu0 0.0
        %690 = vmatprep.subr.mxu0 0.0
        %691 = vmatpush1.msra.mxu0 0.0
        %692 = vmatprep.subr.mxu0 0.0
        %693 = vmatpush1.msra.mxu0 0.0
        %694 = vmatprep.subr.mxu0 0.0
        %695 = vmatpush1.msra.mxu0 0.0
        %696 = vmatprep.subr.mxu0 0.0
        %697 = vmatpush1.msra.mxu0 0.0
        %698 = vmatprep.subr.mxu0 0.0
        %699 = vmatpush1.msra.mxu0 0.0
        %700 = vmatprep.subr.mxu0 0.0
        %701 = vmatpush1.msra.mxu0 0.0
        %702 = vmatprep.subr.mxu0 0.0
        %703 = vmatpush1.msra.mxu0 0.0
        %704 = vmatprep.subr.mxu0 0.0
        %705 = vmatpush1.msra.mxu0 0.0
        %706 = vmatprep.subr.mxu0 0.0
        %707 = vmatpush1.msra.mxu0 0.0
        %708 = vmatprep.subr.mxu0 0.0
        %709 = vmatpush1.msra.mxu0 0.0
        %710 = vmatprep.subr.mxu0 0.0
        %711 = vmatpush1.msra.mxu0 0.0
        %712 = vmatprep.subr.mxu0 0.0
        %713 = vmatpush1.msra.mxu0 0.0
        %714 = vmatprep.subr.mxu0 0.0
        %715 = vmatpush1.msra.mxu0 0.0
        %716 = vmatprep.subr.mxu0 0.0
        %717 = vmatpush1.msra.mxu0 0.0
        %718 = vmatprep.subr.mxu0 0.0
        %719 = vmatpush1.msra.mxu0 0.0
        %720 = vmatprep.subr.mxu0 0.0
        %721 = vmatpush1.msra.mxu0 0.0
        %722 = vmatprep.subr.mxu0 0.0
        %723 = vmatpush1.msra.mxu0 0.0
        %724 = vmatprep.subr.mxu0 0.0
        %725 = vmatpush1.msra.mxu0 0.0
        %726 = vmatprep.subr.mxu0 0.0
        %727 = vmatpush1.msra.mxu0 0.0
        %728 = vmatprep.subr.mxu0 0.0
        %729 = vmatpush1.msra.mxu0 0.0
        %730 = vmatprep.subr.mxu0 0.0
        %731 = vmatpush1.msra.mxu0 0.0
        %732 = vmatprep.subr.mxu0 0.0
        %733 = vmatpush1.msra.mxu0 0.0
        %734 = vmatprep.subr.mxu0 0.0
        %735 = vmatpush1.msra.mxu0 0.0
        %736 = vmatprep.subr.mxu0 0.0
        %737 = vmatpush1.msra.mxu0 0.0
        %738 = vmatprep.subr.mxu0 0.0
        %739 = vmatpush1.msra.mxu0 0.0
        %740 = vmatprep.subr.mxu0 0.0
        %741 = vmatpush1.msra.mxu0 0.0
        %742 = vmatprep.subr.mxu0 0.0
        %743 = vmatpush1.msra.mxu0 0.0
        %744 = vmatprep.mubr.f32.mxu0 0.0
        %745 = vmatmul.mubr.f32.gmra.mrb[0].mxu0 %v469
        %v746 = vpop.f32.mrb[0].mxu0
        %v747 = vadd.f32 0.0, %v746
        %v748 = vpop.f32.mrb[0].mxu0
        %v749 = vadd.f32 0.0, %v748
        %750 = vmatprep.mubr.f32.mxu0 0.0
        %751 = vmatmul.mubr.f32.gmra.mrb[0].mxu0 %v471
        %v752 = vpop.f32.mrb[0].mxu0
        %v753 = vadd.f32 0.0, %v752
        %v754 = vpop.f32.mrb[0].mxu0
        %v755 = vadd.f32 0.0, %v754
        %756 = vmatprep.mubr.f32.mxu0 0.0
        %757 = vmatmul.mubr.f32.gmra.mrb[0].mxu0 %v473
        %v758 = vpop.f32.mrb[0].mxu0
        %v759 = vadd.f32 0.0, %v758
        %v760 = vpop.f32.mrb[0].mxu0
        %v761 = vadd.f32 0.0, %v760
        %762 = vmatprep.mubr.f32.mxu0 0.0
        %763 = vmatmul.mubr.f32.gmra.mrb[0].mxu0 %v475
        %v764 = vpop.f32.mrb[0].mxu0
        %v765 = vadd.f32 0.0, %v764
        %v766 = vpop.f32.mrb[0].mxu0
        %v767 = vadd.f32 0.0, %v766
        %768 = vdwg.mxu0
        %769 = vmatprep.subr.mxu0 %v500
        %770 = vmatpush1.msra.mxu0 %v497
        %771 = vmatprep.subr.mxu0 0.0
        %772 = vmatpush1.msra.mxu0 0.0
        %773 = vmatprep.subr.mxu0 0.0
        %774 = vmatpush1.msra.mxu0 0.0
        %775 = vmatprep.subr.mxu0 0.0
        %776 = vmatpush1.msra.mxu0 0.0
        %777 = vmatprep.subr.mxu0 0.0
        %778 = vmatpush1.msra.mxu0 0.0
        %779 = vmatprep.subr.mxu0 0.0
        %780 = vmatpush1.msra.mxu0 0.0
        %781 = vmatprep.subr.mxu0 0.0
        %782 = vmatpush1.msra.mxu0 0.0
        %783 = vmatprep.subr.mxu0 0.0
        %784 = vmatpush1.msra.mxu0 0.0
        %785 = vmatprep.subr.mxu0 0.0
        %786 = vmatpush1.msra.mxu0 0.0
        %787 = vmatprep.subr.mxu0 0.0
        %788 = vmatpush1.msra.mxu0 0.0
        %789 = vmatprep.subr.mxu0 0.0
        %790 = vmatpush1.msra.mxu0 0.0
        %791 = vmatprep.subr.mxu0 0.0
        %792 = vmatpush1.msra.mxu0 0.0
        %793 = vmatprep.subr.mxu0 0.0
        %794 = vmatpush1.msra.mxu0 0.0
        %795 = vmatprep.subr.mxu0 0.0
        %796 = vmatpush1.msra.mxu0 0.0
        %797 = vmatprep.subr.mxu0 0.0
        %798 = vmatpush1.msra.mxu0 0.0
        %799 = vmatprep.subr.mxu0 0.0
        %800 = vmatpush1.msra.mxu0 0.0
        %801 = vmatprep.subr.mxu0 0.0
        %802 = vmatpush1.msra.mxu0 0.0
        %803 = vmatprep.subr.mxu0 0.0
        %804 = vmatpush1.msra.mxu0 0.0
        %805 = vmatprep.subr.mxu0 0.0
        %806 = vmatpush1.msra.mxu0 0.0
        %807 = vmatprep.subr.mxu0 0.0
        %808 = vmatpush1.msra.mxu0 0.0
        %809 = vmatprep.subr.mxu0 0.0
        %810 = vmatpush1.msra.mxu0 0.0
        %811 = vmatprep.subr.mxu0 0.0
        %812 = vmatpush1.msra.mxu0 0.0
        %813 = vmatprep.subr.mxu0 0.0
        %814 = vmatpush1.msra.mxu0 0.0
        %815 = vmatprep.subr.mxu0 0.0
        %816 = vmatpush1.msra.mxu0 0.0
        %817 = vmatprep.subr.mxu0 0.0
        %818 = vmatpush1.msra.mxu0 0.0
        %819 = vmatprep.subr.mxu0 0.0
        %820 = vmatpush1.msra.mxu0 0.0
        %821 = vmatprep.subr.mxu0 0.0
        %822 = vmatpush1.msra.mxu0 0.0
        %823 = vmatprep.subr.mxu0 0.0
        %824 = vmatpush1.msra.mxu0 0.0
        %825 = vmatprep.subr.mxu0 0.0
        %826 = vmatpush1.msra.mxu0 0.0
        %827 = vmatprep.subr.mxu0 0.0
        %828 = vmatpush1.msra.mxu0 0.0
        %829 = vmatprep.subr.mxu0 0.0
        %830 = vmatpush1.msra.mxu0 0.0
        %831 = vmatprep.subr.mxu0 0.0
        %832 = vmatpush1.msra.mxu0 0.0
        %833 = vmatprep.mubr.f32.mxu0 0.0
        %834 = vmatmul.mubr.f32.gmra.mrb[0].mxu0 %v469
        %v835 = vpop.f32.mrb[0].mxu0
        %v836 = vadd.f32 0.0, %v835
        %v837 = vpop.f32.mrb[0].mxu0
        %v838 = vadd.f32 0.0, %v837
        %839 = vmatprep.mubr.f32.mxu0 0.0
        %840 = vmatmul.mubr.f32.gmra.mrb[0].mxu0 %v471
        %v841 = vpop.f32.mrb[0].mxu0
        %v842 = vadd.f32 0.0, %v841
        %v843 = vpop.f32.mrb[0].mxu0
        %v844 = vadd.f32 0.0, %v843
        %845 = vmatprep.mubr.f32.mxu0 0.0
        %846 = vmatmul.mubr.f32.gmra.mrb[0].mxu0 %v473
        %v847 = vpop.f32.mrb[0].mxu0
        %v848 = vadd.f32 0.0, %v847
        %v849 = vpop.f32.mrb[0].mxu0
        %v850 = vadd.f32 0.0, %v849
        %851 = vmatprep.mubr.f32.mxu0 0.0
        %852 = vmatmul.mubr.f32.gmra.mrb[0].mxu0 %v475
        %v853 = vpop.f32.mrb[0].mxu0
        %v854 = vadd.f32 0.0, %v853
        %v855 = vpop.f32.mrb[0].mxu0
        %v856 = vadd.f32 0.0, %v855
        %857 = vdwg.mxu0
        %v858 = vsel %vm468, %v359, 0
        %v860 = vsel %vm468, %v360, 0
        %v862 = vsel %vm468, %v361, 0
        %v864 = vsel %vm468, %v362, 0
        %v867 = vsel %vm477, %v430, 0
        %v870 = vsel %vm477, %v429, 0
        %v873 = vsel %vm477, %v428, 0
        %v876 = vsel %vm477, %v427, 0
        %v879 = vsel %vm477, %v426, 0
        %v882 = vsel %vm477, %v425, 0
        %v885 = vsel %vm477, %v424, 0
        %v888 = vsel %vm477, %v423, 0
        %890 = vmatprep.subr.mxu0 %v870
        %891 = vmatpush1.msra.mxu0 %v867
        %892 = vmatprep.subr.mxu0 0.0
        %893 = vmatpush1.msra.mxu0 0.0
        %894 = vmatprep.subr.mxu0 0.0
        %895 = vmatpush1.msra.mxu0 0.0
        %896 = vmatprep.subr.mxu0 0.0
        %897 = vmatpush1.msra.mxu0 0.0
        %898 = vmatprep.subr.mxu0 0.0
        %899 = vmatpush1.msra.mxu0 0.0
        %900 = vmatprep.subr.mxu0 0.0
        %901 = vmatpush1.msra.mxu0 0.0
        %902 = vmatprep.subr.mxu0 0.0
        %903 = vmatpush1.msra.mxu0 0.0
        %904 = vmatprep.subr.mxu0 0.0
        %905 = vmatpush1.msra.mxu0 0.0
        %906 = vmatprep.subr.mxu0 0.0
        %907 = vmatpush1.msra.mxu0 0.0
        %908 = vmatprep.subr.mxu0 0.0
        %909 = vmatpush1.msra.mxu0 0.0
        %910 = vmatprep.subr.mxu0 0.0
        %911 = vmatpush1.msra.mxu0 0.0
        %912 = vmatprep.subr.mxu0 0.0
        %913 = vmatpush1.msra.mxu0 0.0
        %914 = vmatprep.subr.mxu0 0.0
        %915 = vmatpush1.msra.mxu0 0.0
        %916 = vmatprep.subr.mxu0 0.0
        %917 = vmatpush1.msra.mxu0 0.0
        %918 = vmatprep.subr.mxu0 0.0
        %919 = vmatpush1.msra.mxu0 0.0
        %920 = vmatprep.subr.mxu0 0.0
        %921 = vmatpush1.msra.mxu0 0.0
        %922 = vmatprep.subr.mxu0 0.0
        %923 = vmatpush1.msra.mxu0 0.0
        %924 = vmatprep.subr.mxu0 0.0
        %925 = vmatpush1.msra.mxu0 0.0
        %926 = vmatprep.subr.mxu0 0.0
        %927 = vmatpush1.msra.mxu0 0.0
        %928 = vmatprep.subr.mxu0 0.0
        %929 = vmatpush1.msra.mxu0 0.0
        %930 = vmatprep.subr.mxu0 0.0
        %931 = vmatpush1.msra.mxu0 0.0
        %932 = vmatprep.subr.mxu0 0.0
        %933 = vmatpush1.msra.mxu0 0.0
        %934 = vmatprep.subr.mxu0 0.0
        %935 = vmatpush1.msra.mxu0 0.0
        %936 = vmatprep.subr.mxu0 0.0
        %937 = vmatpush1.msra.mxu0 0.0
        %938 = vmatprep.subr.mxu0 0.0
        %939 = vmatpush1.msra.mxu0 0.0
        %940 = vmatprep.subr.mxu0 0.0
        %941 = vmatpush1.msra.mxu0 0.0
        %942 = vmatprep.subr.mxu0 0.0
        %943 = vmatpush1.msra.mxu0 0.0
        %944 = vmatprep.subr.mxu0 0.0
        %945 = vmatpush1.msra.mxu0 0.0
        %946 = vmatprep.subr.mxu0 0.0
        %947 = vmatpush1.msra.mxu0 0.0
        %948 = vmatprep.subr.mxu0 0.0
        %949 = vmatpush1.msra.mxu0 0.0
        %950 = vmatprep.subr.mxu0 0.0
        %951 = vmatpush1.msra.mxu0 0.0
        %952 = vmatprep.subr.mxu0 0.0
        %953 = vmatpush1.msra.mxu0 0.0
        %954 = vmatprep.mubr.f32.mxu0 0.0
        %955 = vmatmul.mubr.f32.gmra.mrb[0].mxu0 %v858
        %v956 = vpop.f32.mrb[0].mxu0
        %v957 = vadd.f32 %v569, %v956
        %v958 = vpop.f32.mrb[0].mxu0
        %v959 = vadd.f32 %v571, %v958
        %960 = vmatprep.mubr.f32.mxu0 0.0
        %961 = vmatmul.mubr.f32.gmra.mrb[0].mxu0 %v860
        %v962 = vpop.f32.mrb[0].mxu0
        %v963 = vadd.f32 %v575, %v962
        %v964 = vpop.f32.mrb[0].mxu0
        %v965 = vadd.f32 %v577, %v964
        %966 = vmatprep.mubr.f32.mxu0 0.0
        %967 = vmatmul.mubr.f32.gmra.mrb[0].mxu0 %v862
        %v968 = vpop.f32.mrb[0].mxu0
        %v969 = vadd.f32 %v581, %v968
        %v970 = vpop.f32.mrb[0].mxu0
        %v971 = vadd.f32 %v583, %v970
        %972 = vmatprep.mubr.f32.mxu0 0.0
        %973 = vmatmul.mubr.f32.gmra.mrb[0].mxu0 %v864
        %v974 = vpop.f32.mrb[0].mxu0
        %v975 = vadd.f32 %v587, %v974
        %v976 = vpop.f32.mrb[0].mxu0
        %v977 = vadd.f32 %v589, %v976
        %978 = vdwg.mxu0
        %979 = vmatprep.subr.mxu0 %v876
        %980 = vmatpush1.msra.mxu0 %v873
        %981 = vmatprep.subr.mxu0 0.0
        %982 = vmatpush1.msra.mxu0 0.0
        %983 = vmatprep.subr.mxu0 0.0
        %984 = vmatpush1.msra.mxu0 0.0
        %985 = vmatprep.subr.mxu0 0.0
        %986 = vmatpush1.msra.mxu0 0.0
        %987 = vmatprep.subr.mxu0 0.0
        %988 = vmatpush1.msra.mxu0 0.0
        %989 = vmatprep.subr.mxu0 0.0
        %990 = vmatpush1.msra.mxu0 0.0
        %991 = vmatprep.subr.mxu0 0.0
        %992 = vmatpush1.msra.mxu0 0.0
        %993 = vmatprep.subr.mxu0 0.0
        %994 = vmatpush1.msra.mxu0 0.0
        %995 = vmatprep.subr.mxu0 0.0
        %996 = vmatpush1.msra.mxu0 0.0
        %997 = vmatprep.subr.mxu0 0.0
        %998 = vmatpush1.msra.mxu0 0.0
        %999 = vmatprep.subr.mxu0 0.0
        %1000 = vmatpush1.msra.mxu0 0.0
        %1001 = vmatprep.subr.mxu0 0.0
        %1002 = vmatpush1.msra.mxu0 0.0
        %1003 = vmatprep.subr.mxu0 0.0
        %1004 = vmatpush1.msra.mxu0 0.0
        %1005 = vmatprep.subr.mxu0 0.0
        %1006 = vmatpush1.msra.mxu0 0.0
        %1007 = vmatprep.subr.mxu0 0.0
        %1008 = vmatpush1.msra.mxu0 0.0
        %1009 = vmatprep.subr.mxu0 0.0
        %1010 = vmatpush1.msra.mxu0 0.0
        %1011 = vmatprep.subr.mxu0 0.0
        %1012 = vmatpush1.msra.mxu0 0.0
        %1013 = vmatprep.subr.mxu0 0.0
        %1014 = vmatpush1.msra.mxu0 0.0
        %1015 = vmatprep.subr.mxu0 0.0
        %1016 = vmatpush1.msra.mxu0 0.0
        %1017 = vmatprep.subr.mxu0 0.0
        %1018 = vmatpush1.msra.mxu0 0.0
        %1019 = vmatprep.subr.mxu0 0.0
        %1020 = vmatpush1.msra.mxu0 0.0
        %1021 = vmatprep.subr.mxu0 0.0
        %1022 = vmatpush1.msra.mxu0 0.0
        %1023 = vmatprep.subr.mxu0 0.0
        %1024 = vmatpush1.msra.mxu0 0.0
        %1025 = vmatprep.subr.mxu0 0.0
        %1026 = vmatpush1.msra.mxu0 0.0
        %1027 = vmatprep.subr.mxu0 0.0
        %1028 = vmatpush1.msra.mxu0 0.0
        %1029 = vmatprep.subr.mxu0 0.0
        %1030 = vmatpush1.msra.mxu0 0.0
        %1031 = vmatprep.subr.mxu0 0.0
        %1032 = vmatpush1.msra.mxu0 0.0
        %1033 = vmatprep.subr.mxu0 0.0
        %1034 = vmatpush1.msra.mxu0 0.0
        %1035 = vmatprep.subr.mxu0 0.0
        %1036 = vmatpush1.msra.mxu0 0.0
        %1037 = vmatprep.subr.mxu0 0.0
        %1038 = vmatpush1.msra.mxu0 0.0
        %1039 = vmatprep.subr.mxu0 0.0
        %1040 = vmatpush1.msra.mxu0 0.0
        %1041 = vmatprep.subr.mxu0 0.0
        %1042 = vmatpush1.msra.mxu0 0.0
        %1043 = vmatprep.mubr.f32.mxu0 0.0
        %1044 = vmatmul.mubr.f32.gmra.mrb[0].mxu0 %v858
        %v1045 = vpop.f32.mrb[0].mxu0
        %v1046 = vadd.f32 %v658, %v1045
        %v1047 = vpop.f32.mrb[0].mxu0
        %v1048 = vadd.f32 %v660, %v1047
        %1049 = vmatprep.mubr.f32.mxu0 0.0
        %1050 = vmatmul.mubr.f32.gmra.mrb[0].mxu0 %v860
        %v1051 = vpop.f32.mrb[0].mxu0
        %v1052 = vadd.f32 %v664, %v1051
        %v1053 = vpop.f32.mrb[0].mxu0
        %v1054 = vadd.f32 %v666, %v1053
        %1055 = vmatprep.mubr.f32.mxu0 0.0
        %1056 = vmatmul.mubr.f32.gmra.mrb[0].mxu0 %v862
        %v1057 = vpop.f32.mrb[0].mxu0
        %v1058 = vadd.f32 %v670, %v1057
        %v1059 = vpop.f32.mrb[0].mxu0
        %v1060 = vadd.f32 %v672, %v1059
        %1061 = vmatprep.mubr.f32.mxu0 0.0
        %1062 = vmatmul.mubr.f32.gmra.mrb[0].mxu0 %v864
        %v1063 = vpop.f32.mrb[0].mxu0
        %v1064 = vadd.f32 %v676, %v1063
        %v1065 = vpop.f32.mrb[0].mxu0
        %v1066 = vadd.f32 %v678, %v1065
        %1067 = vdwg.mxu0
        %1068 = vmatprep.subr.mxu0 %v882
        %1069 = vmatpush1.msra.mxu0 %v879
        %1070 = vmatprep.subr.mxu0 0.0
        %1071 = vmatpush1.msra.mxu0 0.0
        %1072 = vmatprep.subr.mxu0 0.0
        %1073 = vmatpush1.msra.mxu0 0.0
        %1074 = vmatprep.subr.mxu0 0.0
        %1075 = vmatpush1.msra.mxu0 0.0
        %1076 = vmatprep.subr.mxu0 0.0
        %1077 = vmatpush1.msra.mxu0 0.0
        %1078 = vmatprep.subr.mxu0 0.0
        %1079 = vmatpush1.msra.mxu0 0.0
        %1080 = vmatprep.subr.mxu0 0.0
        %1081 = vmatpush1.msra.mxu0 0.0
        %1082 = vmatprep.subr.mxu0 0.0
        %1083 = vmatpush1.msra.mxu0 0.0
        %1084 = vmatprep.subr.mxu0 0.0
        %1085 = vmatpush1.msra.mxu0 0.0
        %1086 = vmatprep.subr.mxu0 0.0
        %1087 = vmatpush1.msra.mxu0 0.0
        %1088 = vmatprep.subr.mxu0 0.0
        %1089 = vmatpush1.msra.mxu0 0.0
        %1090 = vmatprep.subr.mxu0 0.0
        %1091 = vmatpush1.msra.mxu0 0.0
        %1092 = vmatprep.subr.mxu0 0.0
        %1093 = vmatpush1.msra.mxu0 0.0
        %1094 = vmatprep.subr.mxu0 0.0
        %1095 = vmatpush1.msra.mxu0 0.0
        %1096 = vmatprep.subr.mxu0 0.0
        %1097 = vmatpush1.msra.mxu0 0.0
        %1098 = vmatprep.subr.mxu0 0.0
        %1099 = vmatpush1.msra.mxu0 0.0
        %1100 = vmatprep.subr.mxu0 0.0
        %1101 = vmatpush1.msra.mxu0 0.0
        %1102 = vmatprep.subr.mxu0 0.0
        %1103 = vmatpush1.msra.mxu0 0.0
        %1104 = vmatprep.subr.mxu0 0.0
        %1105 = vmatpush1.msra.mxu0 0.0
        %1106 = vmatprep.subr.mxu0 0.0
        %1107 = vmatpush1.msra.mxu0 0.0
        %1108 = vmatprep.subr.mxu0 0.0
        %1109 = vmatpush1.msra.mxu0 0.0
        %1110 = vmatprep.subr.mxu0 0.0
        %1111 = vmatpush1.msra.mxu0 0.0
        %1112 = vmatprep.subr.mxu0 0.0
        %1113 = vmatpush1.msra.mxu0 0.0
        %1114 = vmatprep.subr.mxu0 0.0
        %1115 = vmatpush1.msra.mxu0 0.0
        %1116 = vmatprep.subr.mxu0 0.0
        %1117 = vmatpush1.msra.mxu0 0.0
        %1118 = vmatprep.subr.mxu0 0.0
        %1119 = vmatpush1.msra.mxu0 0.0
        %1120 = vmatprep.subr.mxu0 0.0
        %1121 = vmatpush1.msra.mxu0 0.0
        %1122 = vmatprep.subr.mxu0 0.0
        %1123 = vmatpush1.msra.mxu0 0.0
        %1124 = vmatprep.subr.mxu0 0.0
        %1125 = vmatpush1.msra.mxu0 0.0
        %1126 = vmatprep.subr.mxu0 0.0
        %1127 = vmatpush1.msra.mxu0 0.0
        %1128 = vmatprep.subr.mxu0 0.0
        %1129 = vmatpush1.msra.mxu0 0.0
        %1130 = vmatprep.subr.mxu0 0.0
        %1131 = vmatpush1.msra.mxu0 0.0
        %1132 = vmatprep.mubr.f32.mxu0 0.0
        %1133 = vmatmul.mubr.f32.gmra.mrb[0].mxu0 %v858
        %v1134 = vpop.f32.mrb[0].mxu0
        %v1135 = vadd.f32 %v747, %v1134
        %v1136 = vpop.f32.mrb[0].mxu0
        %v1137 = vadd.f32 %v749, %v1136
        %1138 = vmatprep.mubr.f32.mxu0 0.0
        %1139 = vmatmul.mubr.f32.gmra.mrb[0].mxu0 %v860
        %v1140 = vpop.f32.mrb[0].mxu0
        %v1141 = vadd.f32 %v753, %v1140
        %v1142 = vpop.f32.mrb[0].mxu0
        %v1143 = vadd.f32 %v755, %v1142
        %1144 = vmatprep.mubr.f32.mxu0 0.0
        %1145 = vmatmul.mubr.f32.gmra.mrb[0].mxu0 %v862
        %v1146 = vpop.f32.mrb[0].mxu0
        %v1147 = vadd.f32 %v759, %v1146
        %v1148 = vpop.f32.mrb[0].mxu0
        %v1149 = vadd.f32 %v761, %v1148
        %1150 = vmatprep.mubr.f32.mxu0 0.0
        %1151 = vmatmul.mubr.f32.gmra.mrb[0].mxu0 %v864
        %v1152 = vpop.f32.mrb[0].mxu0
        %v1153 = vadd.f32 %v765, %v1152
        %v1154 = vpop.f32.mrb[0].mxu0
        %v1155 = vadd.f32 %v767, %v1154
        %1156 = vdwg.mxu0
        %1157 = vmatprep.subr.mxu0 %v888
        %1158 = vmatpush1.msra.mxu0 %v885
        %1159 = vmatprep.subr.mxu0 0.0
        %1160 = vmatpush1.msra.mxu0 0.0
        %1161 = vmatprep.subr.mxu0 0.0
        %1162 = vmatpush1.msra.mxu0 0.0
        %1163 = vmatprep.subr.mxu0 0.0
        %1164 = vmatpush1.msra.mxu0 0.0
        %1165 = vmatprep.subr.mxu0 0.0
        %1166 = vmatpush1.msra.mxu0 0.0
        %1167 = vmatprep.subr.mxu0 0.0
        %1168 = vmatpush1.msra.mxu0 0.0
        %1169 = vmatprep.subr.mxu0 0.0
        %1170 = vmatpush1.msra.mxu0 0.0
        %1171 = vmatprep.subr.mxu0 0.0
        %1172 = vmatpush1.msra.mxu0 0.0
        %1173 = vmatprep.subr.mxu0 0.0
        %1174 = vmatpush1.msra.mxu0 0.0
        %1175 = vmatprep.subr.mxu0 0.0
        %1176 = vmatpush1.msra.mxu0 0.0
        %1177 = vmatprep.subr.mxu0 0.0
        %1178 = vmatpush1.msra.mxu0 0.0
        %1179 = vmatprep.subr.mxu0 0.0
        %1180 = vmatpush1.msra.mxu0 0.0
        %1181 = vmatprep.subr.mxu0 0.0
        %1182 = vmatpush1.msra.mxu0 0.0
        %1183 = vmatprep.subr.mxu0 0.0
        %1184 = vmatpush1.msra.mxu0 0.0
        %1185 = vmatprep.subr.mxu0 0.0
        %1186 = vmatpush1.msra.mxu0 0.0
        %1187 = vmatprep.subr.mxu0 0.0
        %1188 = vmatpush1.msra.mxu0 0.0
        %1189 = vmatprep.subr.mxu0 0.0
        %1190 = vmatpush1.msra.mxu0 0.0
        %1191 = vmatprep.subr.mxu0 0.0
        %1192 = vmatpush1.msra.mxu0 0.0
        %1193 = vmatprep.subr.mxu0 0.0
        %1194 = vmatpush1.msra.mxu0 0.0
        %1195 = vmatprep.subr.mxu0 0.0
        %1196 = vmatpush1.msra.mxu0 0.0
        %1197 = vmatprep.subr.mxu0 0.0
        %1198 = vmatpush1.msra.mxu0 0.0
        %1199 = vmatprep.subr.mxu0 0.0
        %1200 = vmatpush1.msra.mxu0 0.0
        %1201 = vmatprep.subr.mxu0 0.0
        %1202 = vmatpush1.msra.mxu0 0.0
        %1203 = vmatprep.subr.mxu0 0.0
        %1204 = vmatpush1.msra.mxu0 0.0
        %1205 = vmatprep.subr.mxu0 0.0
        %1206 = vmatpush1.msra.mxu0 0.0
        %1207 = vmatprep.subr.mxu0 0.0
        %1208 = vmatpush1.msra.mxu0 0.0
        %1209 = vmatprep.subr.mxu0 0.0
        %1210 = vmatpush1.msra.mxu0 0.0
        %1211 = vmatprep.subr.mxu0 0.0
        %1212 = vmatpush1.msra.mxu0 0.0
        %1213 = vmatprep.subr.mxu0 0.0
        %1214 = vmatpush1.msra.mxu0 0.0
        %1215 = vmatprep.subr.mxu0 0.0
        %1216 = vmatpush1.msra.mxu0 0.0
        %1217 = vmatprep.subr.mxu0 0.0
        %1218 = vmatpush1.msra.mxu0 0.0
        %1219 = vmatprep.subr.mxu0 0.0
        %1220 = vmatpush1.msra.mxu0 0.0
        %1221 = vmatprep.mubr.f32.mxu0 0.0
        %1222 = vmatmul.mubr.f32.gmra.mrb[0].mxu0 %v858
        %v1223 = vpop.f32.mrb[0].mxu0
        %v1224 = vadd.f32 %v836, %v1223
        %v1225 = vpop.f32.mrb[0].mxu0
        %v1226 = vadd.f32 %v838, %v1225
        %1227 = vmatprep.mubr.f32.mxu0 0.0
        %1228 = vmatmul.mubr.f32.gmra.mrb[0].mxu0 %v860
        %v1229 = vpop.f32.mrb[0].mxu0
        %v1230 = vadd.f32 %v842, %v1229
        %v1231 = vpop.f32.mrb[0].mxu0
        %v1232 = vadd.f32 %v844, %v1231
        %1233 = vmatprep.mubr.f32.mxu0 0.0
        %1234 = vmatmul.mubr.f32.gmra.mrb[0].mxu0 %v862
        %v1235 = vpop.f32.mrb[0].mxu0
        %v1236 = vadd.f32 %v848, %v1235
        %v1237 = vpop.f32.mrb[0].mxu0
        %v1238 = vadd.f32 %v850, %v1237
        %1239 = vmatprep.mubr.f32.mxu0 0.0
        %1240 = vmatmul.mubr.f32.gmra.mrb[0].mxu0 %v864
        %v1241 = vpop.f32.mrb[0].mxu0
        %v1242 = vadd.f32 %v854, %v1241
        %v1243 = vpop.f32.mrb[0].mxu0
        %v1244 = vadd.f32 %v856, %v1243
        %1245 = vdwg.mxu0
        %1246 = vrot.lane.b32.xlu0 %v367, 2
        %v1247 = vpop.permute.xlu0 %1246
        %1248 = vrot.lane.b32.xlu0 %v371, 2
        %v1249 = vpop.permute.xlu0 %1248
        %1250 = vrot.lane.b32.xlu0 %v375, 2
        %v1251 = vpop.permute.xlu0 %1250
        %1252 = vrot.lane.b32.xlu0 %v379, 2
        %v1253 = vpop.permute.xlu0 %1252
        %1254 = vrot.lane.b32.xlu0 %v383, 2
        %v1255 = vpop.permute.xlu0 %1254
        %1256 = vrot.lane.b32.xlu0 %v387, 2
        %v1257 = vpop.permute.xlu0 %1256
        %1258 = vrot.lane.b32.xlu0 %v391, 2
        %v1259 = vpop.permute.xlu0 %1258
        %1260 = vrot.lane.b32.xlu0 %v395, 2
        %v1261 = vpop.permute.xlu0 %1260
        %vm1262 = vcmp.lt.s32.totalorder %v421, 2
        %v1263 = vsel %vm1262, %v1259, %v1261
        %v1264 = vsel %vm1262, %v1257, %v1259
        %v1265 = vsel %vm1262, %v1255, %v1257
        %v1266 = vsel %vm1262, %v1253, %v1255
        %v1267 = vsel %vm1262, %v1251, %v1253
        %v1268 = vsel %vm1262, %v1249, %v1251
        %v1269 = vsel %vm1262, %v1247, %v1249
        %v1270 = vsel %vm1262, %v1261, %v1247
        %1271 = vrot.lane.b32.xlu0 %v359, 126
        %v1272 = vpop.permute.xlu0 %1271
        %1273 = vrot.lane.b32.xlu0 %v360, 126
        %v1274 = vpop.permute.xlu0 %1273
        %1275 = vrot.lane.b32.xlu0 %v361, 126
        %v1276 = vpop.permute.xlu0 %1275
        %1277 = vrot.lane.b32.xlu0 %v362, 126
        %v1278 = vpop.permute.xlu0 %1277
        %v1279 = vsel %vm468, %v1272, 0
        %v1281 = vsel %vm468, %v1274, 0
        %v1283 = vsel %vm468, %v1276, 0
        %v1285 = vsel %vm468, %v1278, 0
        %v1288 = vsel %vm477, %v1270, 0
        %v1291 = vsel %vm477, %v1269, 0
        %v1294 = vsel %vm477, %v1268, 0
        %v1297 = vsel %vm477, %v1267, 0
        %v1300 = vsel %vm477, %v1266, 0
        %v1303 = vsel %vm477, %v1265, 0
        %v1306 = vsel %vm477, %v1264, 0
        %v1309 = vsel %vm477, %v1263, 0
        %1311 = vmatprep.subr.mxu0 %v1291
        %1312 = vmatpush1.msra.mxu0 %v1288
        %1313 = vmatprep.subr.mxu0 0.0
        %1314 = vmatpush1.msra.mxu0 0.0
        %1315 = vmatprep.subr.mxu0 0.0
        %1316 = vmatpush1.msra.mxu0 0.0
        %1317 = vmatprep.subr.mxu0 0.0
        %1318 = vmatpush1.msra.mxu0 0.0
        %1319 = vmatprep.subr.mxu0 0.0
        %1320 = vmatpush1.msra.mxu0 0.0
        %1321 = vmatprep.subr.mxu0 0.0
        %1322 = vmatpush1.msra.mxu0 0.0
        %1323 = vmatprep.subr.mxu0 0.0
        %1324 = vmatpush1.msra.mxu0 0.0
        %1325 = vmatprep.subr.mxu0 0.0
        %1326 = vmatpush1.msra.mxu0 0.0
        %1327 = vmatprep.subr.mxu0 0.0
        %1328 = vmatpush1.msra.mxu0 0.0
        %1329 = vmatprep.subr.mxu0 0.0
        %1330 = vmatpush1.msra.mxu0 0.0
        %1331 = vmatprep.subr.mxu0 0.0
        %1332 = vmatpush1.msra.mxu0 0.0
        %1333 = vmatprep.subr.mxu0 0.0
        %1334 = vmatpush1.msra.mxu0 0.0
        %1335 = vmatprep.subr.mxu0 0.0
        %1336 = vmatpush1.msra.mxu0 0.0
        %1337 = vmatprep.subr.mxu0 0.0
        %1338 = vmatpush1.msra.mxu0 0.0
        %1339 = vmatprep.subr.mxu0 0.0
        %1340 = vmatpush1.msra.mxu0 0.0
        %1341 = vmatprep.subr.mxu0 0.0
        %1342 = vmatpush1.msra.mxu0 0.0
        %1343 = vmatprep.subr.mxu0 0.0
        %1344 = vmatpush1.msra.mxu0 0.0
        %1345 = vmatprep.subr.mxu0 0.0
        %1346 = vmatpush1.msra.mxu0 0.0
        %1347 = vmatprep.subr.mxu0 0.0
        %1348 = vmatpush1.msra.mxu0 0.0
        %1349 = vmatprep.subr.mxu0 0.0
        %1350 = vmatpush1.msra.mxu0 0.0
        %1351 = vmatprep.subr.mxu0 0.0
        %1352 = vmatpush1.msra.mxu0 0.0
        %1353 = vmatprep.subr.mxu0 0.0
        %1354 = vmatpush1.msra.mxu0 0.0
        %1355 = vmatprep.subr.mxu0 0.0
        %1356 = vmatpush1.msra.mxu0 0.0
        %1357 = vmatprep.subr.mxu0 0.0
        %1358 = vmatpush1.msra.mxu0 0.0
        %1359 = vmatprep.subr.mxu0 0.0
        %1360 = vmatpush1.msra.mxu0 0.0
        %1361 = vmatprep.subr.mxu0 0.0
        %1362 = vmatpush1.msra.mxu0 0.0
        %1363 = vmatprep.subr.mxu0 0.0
        %1364 = vmatpush1.msra.mxu0 0.0
        %1365 = vmatprep.subr.mxu0 0.0
        %1366 = vmatpush1.msra.mxu0 0.0
        %1367 = vmatprep.subr.mxu0 0.0
        %1368 = vmatpush1.msra.mxu0 0.0
        %1369 = vmatprep.subr.mxu0 0.0
        %1370 = vmatpush1.msra.mxu0 0.0
        %1371 = vmatprep.subr.mxu0 0.0
        %1372 = vmatpush1.msra.mxu0 0.0
        %1373 = vmatprep.subr.mxu0 0.0
        %1374 = vmatpush1.msra.mxu0 0.0
        %1375 = vmatprep.mubr.f32.mxu0 0.0
        %1376 = vmatmul.mubr.f32.gmra.mrb[0].mxu0 %v1279
        %v1377 = vpop.f32.mrb[0].mxu0
        %v1378 = vadd.f32 0.0, %v1377
        %v1379 = vpop.f32.mrb[0].mxu0
        %v1380 = vadd.f32 0.0, %v1379
        %1381 = vmatprep.mubr.f32.mxu0 0.0
        %1382 = vmatmul.mubr.f32.gmra.mrb[0].mxu0 %v1281
        %v1383 = vpop.f32.mrb[0].mxu0
        %v1384 = vadd.f32 0.0, %v1383
        %v1385 = vpop.f32.mrb[0].mxu0
        %v1386 = vadd.f32 0.0, %v1385
        %1387 = vmatprep.mubr.f32.mxu0 0.0
        %1388 = vmatmul.mubr.f32.gmra.mrb[0].mxu0 %v1283
        %v1389 = vpop.f32.mrb[0].mxu0
        %v1390 = vadd.f32 0.0, %v1389
        %v1391 = vpop.f32.mrb[0].mxu0
        %v1392 = vadd.f32 0.0, %v1391
        %1393 = vmatprep.mubr.f32.mxu0 0.0
        %1394 = vmatmul.mubr.f32.gmra.mrb[0].mxu0 %v1285
        %v1395 = vpop.f32.mrb[0].mxu0
        %v1396 = vadd.f32 0.0, %v1395
        %v1397 = vpop.f32.mrb[0].mxu0
        %v1398 = vadd.f32 0.0, %v1397
        %1399 = vdwg.mxu0
        %1400 = vmatprep.subr.mxu0 %v1297
        %1401 = vmatpush1.msra.mxu0 %v1294
        %1402 = vmatprep.subr.mxu0 0.0
        %1403 = vmatpush1.msra.mxu0 0.0
        %1404 = vmatprep.subr.mxu0 0.0
        %1405 = vmatpush1.msra.mxu0 0.0
        %1406 = vmatprep.subr.mxu0 0.0
        %1407 = vmatpush1.msra.mxu0 0.0
        %1408 = vmatprep.subr.mxu0 0.0
        %1409 = vmatpush1.msra.mxu0 0.0
        %1410 = vmatprep.subr.mxu0 0.0
        %1411 = vmatpush1.msra.mxu0 0.0
        %1412 = vmatprep.subr.mxu0 0.0
        %1413 = vmatpush1.msra.mxu0 0.0
        %1414 = vmatprep.subr.mxu0 0.0
        %1415 = vmatpush1.msra.mxu0 0.0
        %1416 = vmatprep.subr.mxu0 0.0
        %1417 = vmatpush1.msra.mxu0 0.0
        %1418 = vmatprep.subr.mxu0 0.0
        %1419 = vmatpush1.msra.mxu0 0.0
        %1420 = vmatprep.subr.mxu0 0.0
        %1421 = vmatpush1.msra.mxu0 0.0
        %1422 = vmatprep.subr.mxu0 0.0
        %1423 = vmatpush1.msra.mxu0 0.0
        %1424 = vmatprep.subr.mxu0 0.0
        %1425 = vmatpush1.msra.mxu0 0.0
        %1426 = vmatprep.subr.mxu0 0.0
        %1427 = vmatpush1.msra.mxu0 0.0
        %1428 = vmatprep.subr.mxu0 0.0
        %1429 = vmatpush1.msra.mxu0 0.0
        %1430 = vmatprep.subr.mxu0 0.0
        %1431 = vmatpush1.msra.mxu0 0.0
        %1432 = vmatprep.subr.mxu0 0.0
        %1433 = vmatpush1.msra.mxu0 0.0
        %1434 = vmatprep.subr.mxu0 0.0
        %1435 = vmatpush1.msra.mxu0 0.0
        %1436 = vmatprep.subr.mxu0 0.0
        %1437 = vmatpush1.msra.mxu0 0.0
        %1438 = vmatprep.subr.mxu0 0.0
        %1439 = vmatpush1.msra.mxu0 0.0
        %1440 = vmatprep.subr.mxu0 0.0
        %1441 = vmatpush1.msra.mxu0 0.0
        %1442 = vmatprep.subr.mxu0 0.0
        %1443 = vmatpush1.msra.mxu0 0.0
        %1444 = vmatprep.subr.mxu0 0.0
        %1445 = vmatpush1.msra.mxu0 0.0
        %1446 = vmatprep.subr.mxu0 0.0
        %1447 = vmatpush1.msra.mxu0 0.0
        %1448 = vmatprep.subr.mxu0 0.0
        %1449 = vmatpush1.msra.mxu0 0.0
        %1450 = vmatprep.subr.mxu0 0.0
        %1451 = vmatpush1.msra.mxu0 0.0
        %1452 = vmatprep.subr.mxu0 0.0
        %1453 = vmatpush1.msra.mxu0 0.0
        %1454 = vmatprep.subr.mxu0 0.0
        %1455 = vmatpush1.msra.mxu0 0.0
        %1456 = vmatprep.subr.mxu0 0.0
        %1457 = vmatpush1.msra.mxu0 0.0
        %1458 = vmatprep.subr.mxu0 0.0
        %1459 = vmatpush1.msra.mxu0 0.0
        %1460 = vmatprep.subr.mxu0 0.0
        %1461 = vmatpush1.msra.mxu0 0.0
        %1462 = vmatprep.subr.mxu0 0.0
        %1463 = vmatpush1.msra.mxu0 0.0
        %1464 = vmatprep.mubr.f32.mxu0 0.0
        %1465 = vmatmul.mubr.f32.gmra.mrb[0].mxu0 %v1279
        %v1466 = vpop.f32.mrb[0].mxu0
        %v1467 = vadd.f32 0.0, %v1466
        %v1468 = vpop.f32.mrb[0].mxu0
        %v1469 = vadd.f32 0.0, %v1468
        %1470 = vmatprep.mubr.f32.mxu0 0.0
        %1471 = vmatmul.mubr.f32.gmra.mrb[0].mxu0 %v1281
        %v1472 = vpop.f32.mrb[0].mxu0
        %v1473 = vadd.f32 0.0, %v1472
        %v1474 = vpop.f32.mrb[0].mxu0
        %v1475 = vadd.f32 0.0, %v1474
        %1476 = vmatprep.mubr.f32.mxu0 0.0
        %1477 = vmatmul.mubr.f32.gmra.mrb[0].mxu0 %v1283
        %v1478 = vpop.f32.mrb[0].mxu0
        %v1479 = vadd.f32 0.0, %v1478
        %v1480 = vpop.f32.mrb[0].mxu0
        %v1481 = vadd.f32 0.0, %v1480
        %1482 = vmatprep.mubr.f32.mxu0 0.0
        %1483 = vmatmul.mubr.f32.gmra.mrb[0].mxu0 %v1285
        %v1484 = vpop.f32.mrb[0].mxu0
        %v1485 = vadd.f32 0.0, %v1484
        %v1486 = vpop.f32.mrb[0].mxu0
        %v1487 = vadd.f32 0.0, %v1486
        %1488 = vdwg.mxu0
        %1489 = vmatprep.subr.mxu0 %v1303
        %1490 = vmatpush1.msra.mxu0 %v1300
        %1491 = vmatprep.subr.mxu0 0.0
        %1492 = vmatpush1.msra.mxu0 0.0
        %1493 = vmatprep.subr.mxu0 0.0
        %1494 = vmatpush1.msra.mxu0 0.0
        %1495 = vmatprep.subr.mxu0 0.0
        %1496 = vmatpush1.msra.mxu0 0.0
        %1497 = vmatprep.subr.mxu0 0.0
        %1498 = vmatpush1.msra.mxu0 0.0
        %1499 = vmatprep.subr.mxu0 0.0
        %1500 = vmatpush1.msra.mxu0 0.0
        %1501 = vmatprep.subr.mxu0 0.0
        %1502 = vmatpush1.msra.mxu0 0.0
        %1503 = vmatprep.subr.mxu0 0.0
        %1504 = vmatpush1.msra.mxu0 0.0
        %1505 = vmatprep.subr.mxu0 0.0
        %1506 = vmatpush1.msra.mxu0 0.0
        %1507 = vmatprep.subr.mxu0 0.0
        %1508 = vmatpush1.msra.mxu0 0.0
        %1509 = vmatprep.subr.mxu0 0.0
        %1510 = vmatpush1.msra.mxu0 0.0
        %1511 = vmatprep.subr.mxu0 0.0
        %1512 = vmatpush1.msra.mxu0 0.0
        %1513 = vmatprep.subr.mxu0 0.0
        %1514 = vmatpush1.msra.mxu0 0.0
        %1515 = vmatprep.subr.mxu0 0.0
        %1516 = vmatpush1.msra.mxu0 0.0
        %1517 = vmatprep.subr.mxu0 0.0
        %1518 = vmatpush1.msra.mxu0 0.0
        %1519 = vmatprep.subr.mxu0 0.0
        %1520 = vmatpush1.msra.mxu0 0.0
        %1521 = vmatprep.subr.mxu0 0.0
        %1522 = vmatpush1.msra.mxu0 0.0
        %1523 = vmatprep.subr.mxu0 0.0
        %1524 = vmatpush1.msra.mxu0 0.0
        %1525 = vmatprep.subr.mxu0 0.0
        %1526 = vmatpush1.msra.mxu0 0.0
        %1527 = vmatprep.subr.mxu0 0.0
        %1528 = vmatpush1.msra.mxu0 0.0
        %1529 = vmatprep.subr.mxu0 0.0
        %1530 = vmatpush1.msra.mxu0 0.0
        %1531 = vmatprep.subr.mxu0 0.0
        %1532 = vmatpush1.msra.mxu0 0.0
        %1533 = vmatprep.subr.mxu0 0.0
        %1534 = vmatpush1.msra.mxu0 0.0
        %1535 = vmatprep.subr.mxu0 0.0
        %1536 = vmatpush1.msra.mxu0 0.0
        %1537 = vmatprep.subr.mxu0 0.0
        %1538 = vmatpush1.msra.mxu0 0.0
        %1539 = vmatprep.subr.mxu0 0.0
        %1540 = vmatpush1.msra.mxu0 0.0
        %1541 = vmatprep.subr.mxu0 0.0
        %1542 = vmatpush1.msra.mxu0 0.0
        %1543 = vmatprep.subr.mxu0 0.0
        %1544 = vmatpush1.msra.mxu0 0.0
        %1545 = vmatprep.subr.mxu0 0.0
        %1546 = vmatpush1.msra.mxu0 0.0
        %1547 = vmatprep.subr.mxu0 0.0
        %1548 = vmatpush1.msra.mxu0 0.0
        %1549 = vmatprep.subr.mxu0 0.0
        %1550 = vmatpush1.msra.mxu0 0.0
        %1551 = vmatprep.subr.mxu0 0.0
        %1552 = vmatpush1.msra.mxu0 0.0
        %1553 = vmatprep.mubr.f32.mxu0 0.0
        %1554 = vmatmul.mubr.f32.gmra.mrb[0].mxu0 %v1279
        %v1555 = vpop.f32.mrb[0].mxu0
        %v1556 = vadd.f32 0.0, %v1555
        %v1557 = vpop.f32.mrb[0].mxu0
        %v1558 = vadd.f32 0.0, %v1557
        %1559 = vmatprep.mubr.f32.mxu0 0.0
        %1560 = vmatmul.mubr.f32.gmra.mrb[0].mxu0 %v1281
        %v1561 = vpop.f32.mrb[0].mxu0
        %v1562 = vadd.f32 0.0, %v1561
        %v1563 = vpop.f32.mrb[0].mxu0
        %v1564 = vadd.f32 0.0, %v1563
        %1565 = vmatprep.mubr.f32.mxu0 0.0
        %1566 = vmatmul.mubr.f32.gmra.mrb[0].mxu0 %v1283
        %v1567 = vpop.f32.mrb[0].mxu0
        %v1568 = vadd.f32 0.0, %v1567
        %v1569 = vpop.f32.mrb[0].mxu0
        %v1570 = vadd.f32 0.0, %v1569
        %1571 = vmatprep.mubr.f32.mxu0 0.0
        %1572 = vmatmul.mubr.f32.gmra.mrb[0].mxu0 %v1285
        %v1573 = vpop.f32.mrb[0].mxu0
        %v1574 = vadd.f32 0.0, %v1573
        %v1575 = vpop.f32.mrb[0].mxu0
        %v1576 = vadd.f32 0.0, %v1575
        %1577 = vdwg.mxu0
        %1578 = vmatprep.subr.mxu0 %v1309
        %1579 = vmatpush1.msra.mxu0 %v1306
        %1580 = vmatprep.subr.mxu0 0.0
        %1581 = vmatpush1.msra.mxu0 0.0
        %1582 = vmatprep.subr.mxu0 0.0
        %1583 = vmatpush1.msra.mxu0 0.0
        %1584 = vmatprep.subr.mxu0 0.0
        %1585 = vmatpush1.msra.mxu0 0.0
        %1586 = vmatprep.subr.mxu0 0.0
        %1587 = vmatpush1.msra.mxu0 0.0
        %1588 = vmatprep.subr.mxu0 0.0
        %1589 = vmatpush1.msra.mxu0 0.0
        %1590 = vmatprep.subr.mxu0 0.0
        %1591 = vmatpush1.msra.mxu0 0.0
        %1592 = vmatprep.subr.mxu0 0.0
        %1593 = vmatpush1.msra.mxu0 0.0
        %1594 = vmatprep.subr.mxu0 0.0
        %1595 = vmatpush1.msra.mxu0 0.0
        %1596 = vmatprep.subr.mxu0 0.0
        %1597 = vmatpush1.msra.mxu0 0.0
        %1598 = vmatprep.subr.mxu0 0.0
        %1599 = vmatpush1.msra.mxu0 0.0
        %1600 = vmatprep.subr.mxu0 0.0
        %1601 = vmatpush1.msra.mxu0 0.0
        %1602 = vmatprep.subr.mxu0 0.0
        %1603 = vmatpush1.msra.mxu0 0.0
        %1604 = vmatprep.subr.mxu0 0.0
        %1605 = vmatpush1.msra.mxu0 0.0
        %1606 = vmatprep.subr.mxu0 0.0
        %1607 = vmatpush1.msra.mxu0 0.0
        %1608 = vmatprep.subr.mxu0 0.0
        %1609 = vmatpush1.msra.mxu0 0.0
        %1610 = vmatprep.subr.mxu0 0.0
        %1611 = vmatpush1.msra.mxu0 0.0
        %1612 = vmatprep.subr.mxu0 0.0
        %1613 = vmatpush1.msra.mxu0 0.0
        %1614 = vmatprep.subr.mxu0 0.0
        %1615 = vmatpush1.msra.mxu0 0.0
        %1616 = vmatprep.subr.mxu0 0.0
        %1617 = vmatpush1.msra.mxu0 0.0
        %1618 = vmatprep.subr.mxu0 0.0
        %1619 = vmatpush1.msra.mxu0 0.0
        %1620 = vmatprep.subr.mxu0 0.0
        %1621 = vmatpush1.msra.mxu0 0.0
        %1622 = vmatprep.subr.mxu0 0.0
        %1623 = vmatpush1.msra.mxu0 0.0
        %1624 = vmatprep.subr.mxu0 0.0
        %1625 = vmatpush1.msra.mxu0 0.0
        %1626 = vmatprep.subr.mxu0 0.0
        %1627 = vmatpush1.msra.mxu0 0.0
        %1628 = vmatprep.subr.mxu0 0.0
        %1629 = vmatpush1.msra.mxu0 0.0
        %1630 = vmatprep.subr.mxu0 0.0
        %1631 = vmatpush1.msra.mxu0 0.0
        %1632 = vmatprep.subr.mxu0 0.0
        %1633 = vmatpush1.msra.mxu0 0.0
        %1634 = vmatprep.subr.mxu0 0.0
        %1635 = vmatpush1.msra.mxu0 0.0
        %1636 = vmatprep.subr.mxu0 0.0
        %1637 = vmatpush1.msra.mxu0 0.0
        %1638 = vmatprep.subr.mxu0 0.0
        %1639 = vmatpush1.msra.mxu0 0.0
        %1640 = vmatprep.subr.mxu0 0.0
        %1641 = vmatpush1.msra.mxu0 0.0
        %1642 = vmatprep.mubr.f32.mxu0 0.0
        %1643 = vmatmul.mubr.f32.gmra.mrb[0].mxu0 %v1279
        %v1644 = vpop.f32.mrb[0].mxu0
        %v1645 = vadd.f32 0.0, %v1644
        %v1646 = vpop.f32.mrb[0].mxu0
        %v1647 = vadd.f32 0.0, %v1646
        %1648 = vmatprep.mubr.f32.mxu0 0.0
        %1649 = vmatmul.mubr.f32.gmra.mrb[0].mxu0 %v1281
        %v1650 = vpop.f32.mrb[0].mxu0
        %v1651 = vadd.f32 0.0, %v1650
        %v1652 = vpop.f32.mrb[0].mxu0
        %v1653 = vadd.f32 0.0, %v1652
        %1654 = vmatprep.mubr.f32.mxu0 0.0
        %1655 = vmatmul.mubr.f32.gmra.mrb[0].mxu0 %v1283
        %v1656 = vpop.f32.mrb[0].mxu0
        %v1657 = vadd.f32 0.0, %v1656
        %v1658 = vpop.f32.mrb[0].mxu0
        %v1659 = vadd.f32 0.0, %v1658
        %1660 = vmatprep.mubr.f32.mxu0 0.0
        %1661 = vmatmul.mubr.f32.gmra.mrb[0].mxu0 %v1285
        %v1662 = vpop.f32.mrb[0].mxu0
        %v1663 = vadd.f32 0.0, %v1662
        %v1664 = vpop.f32.mrb[0].mxu0
        %v1665 = vadd.f32 0.0, %v1664
        %1666 = vdwg.mxu0
        %v1667 = vadd.f32 %v957, %v1378
        %v1668 = vadd.f32 %v959, %v1380
        %v1669 = vadd.f32 %v1046, %v1467
        %v1670 = vadd.f32 %v1048, %v1469
        %v1671 = vadd.f32 %v1135, %v1556
        %v1672 = vadd.f32 %v1137, %v1558
        %v1673 = vadd.f32 %v1224, %v1645
        %v1674 = vadd.f32 %v1226, %v1647
        %v1675 = vadd.f32 %v963, %v1384
        %v1676 = vadd.f32 %v965, %v1386
        %v1677 = vadd.f32 %v1052, %v1473
        %v1678 = vadd.f32 %v1054, %v1475
        %v1679 = vadd.f32 %v1141, %v1562
        %v1680 = vadd.f32 %v1143, %v1564
        %v1681 = vadd.f32 %v1230, %v1651
        %v1682 = vadd.f32 %v1232, %v1653
        %v1683 = vadd.f32 %v969, %v1390
        %v1684 = vadd.f32 %v971, %v1392
        %v1685 = vadd.f32 %v1058, %v1479
        %v1686 = vadd.f32 %v1060, %v1481
        %v1687 = vadd.f32 %v1147, %v1568
        %v1688 = vadd.f32 %v1149, %v1570
        %v1689 = vadd.f32 %v1236, %v1657
        %v1690 = vadd.f32 %v1238, %v1659
        %v1691 = vadd.f32 %v975, %v1396
        %v1692 = vadd.f32 %v977, %v1398
        %v1693 = vadd.f32 %v1064, %v1485
        %v1694 = vadd.f32 %v1066, %v1487
        %v1695 = vadd.f32 %v1153, %v1574
        %v1696 = vadd.f32 %v1155, %v1576
        %v1697 = vadd.f32 %v1242, %v1663
        %v1698 = vadd.f32 %v1244, %v1665
        %1699 = vrot.lane.b32.xlu0 %v367, 1
        %v1700 = vpop.permute.xlu0 %1699
        %1701 = vrot.lane.b32.xlu0 %v371, 1
        %v1702 = vpop.permute.xlu0 %1701
        %1703 = vrot.lane.b32.xlu0 %v375, 1
        %v1704 = vpop.permute.xlu0 %1703
        %1705 = vrot.lane.b32.xlu0 %v379, 1
        %v1706 = vpop.permute.xlu0 %1705
        %1707 = vrot.lane.b32.xlu0 %v383, 1
        %v1708 = vpop.permute.xlu0 %1707
        %1709 = vrot.lane.b32.xlu0 %v387, 1
        %v1710 = vpop.permute.xlu0 %1709
        %1711 = vrot.lane.b32.xlu0 %v391, 1
        %v1712 = vpop.permute.xlu0 %1711
        %1713 = vrot.lane.b32.xlu0 %v395, 1
        %v1714 = vpop.permute.xlu0 %1713
        %vm1715 = vcmp.lt.s32.totalorder %v421, 1
        %v1716 = vsel %vm1715, %v1712, %v1714
        %v1717 = vsel %vm1715, %v1710, %v1712
        %v1718 = vsel %vm1715, %v1708, %v1710
        %v1719 = vsel %vm1715, %v1706, %v1708
        %v1720 = vsel %vm1715, %v1704, %v1706
        %v1721 = vsel %vm1715, %v1702, %v1704
        %v1722 = vsel %vm1715, %v1700, %v1702
        %v1723 = vsel %vm1715, %v1714, %v1700
        %1724 = vrot.lane.b32.xlu0 %v359, 125
        %v1725 = vpop.permute.xlu0 %1724
        %1726 = vrot.lane.b32.xlu0 %v360, 125
        %v1727 = vpop.permute.xlu0 %1726
        %1728 = vrot.lane.b32.xlu0 %v361, 125
        %v1729 = vpop.permute.xlu0 %1728
        %1730 = vrot.lane.b32.xlu0 %v362, 125
        %v1731 = vpop.permute.xlu0 %1730
        %v1732 = vsel %vm468, %v1725, 0
        %v1734 = vsel %vm468, %v1727, 0
        %v1736 = vsel %vm468, %v1729, 0
        %v1738 = vsel %vm468, %v1731, 0
        %v1741 = vsel %vm477, %v1723, 0
        %v1744 = vsel %vm477, %v1722, 0
        %v1747 = vsel %vm477, %v1721, 0
        %v1750 = vsel %vm477, %v1720, 0
        %v1753 = vsel %vm477, %v1719, 0
        %v1756 = vsel %vm477, %v1718, 0
        %v1759 = vsel %vm477, %v1717, 0
        %v1762 = vsel %vm477, %v1716, 0
        %1764 = vmatprep.subr.mxu0 %v1744
        %1765 = vmatpush1.msra.mxu0 %v1741
        %1766 = vmatprep.subr.mxu0 0.0
        %1767 = vmatpush1.msra.mxu0 0.0
        %1768 = vmatprep.subr.mxu0 0.0
        %1769 = vmatpush1.msra.mxu0 0.0
        %1770 = vmatprep.subr.mxu0 0.0
        %1771 = vmatpush1.msra.mxu0 0.0
        %1772 = vmatprep.subr.mxu0 0.0
        %1773 = vmatpush1.msra.mxu0 0.0
        %1774 = vmatprep.subr.mxu0 0.0
        %1775 = vmatpush1.msra.mxu0 0.0
        %1776 = vmatprep.subr.mxu0 0.0
        %1777 = vmatpush1.msra.mxu0 0.0
        %1778 = vmatprep.subr.mxu0 0.0
        %1779 = vmatpush1.msra.mxu0 0.0
        %1780 = vmatprep.subr.mxu0 0.0
        %1781 = vmatpush1.msra.mxu0 0.0
        %1782 = vmatprep.subr.mxu0 0.0
        %1783 = vmatpush1.msra.mxu0 0.0
        %1784 = vmatprep.subr.mxu0 0.0
        %1785 = vmatpush1.msra.mxu0 0.0
        %1786 = vmatprep.subr.mxu0 0.0
        %1787 = vmatpush1.msra.mxu0 0.0
        %1788 = vmatprep.subr.mxu0 0.0
        %1789 = vmatpush1.msra.mxu0 0.0
        %1790 = vmatprep.subr.mxu0 0.0
        %1791 = vmatpush1.msra.mxu0 0.0
        %1792 = vmatprep.subr.mxu0 0.0
        %1793 = vmatpush1.msra.mxu0 0.0
        %1794 = vmatprep.subr.mxu0 0.0
        %1795 = vmatpush1.msra.mxu0 0.0
        %1796 = vmatprep.subr.mxu0 0.0
        %1797 = vmatpush1.msra.mxu0 0.0
        %1798 = vmatprep.subr.mxu0 0.0
        %1799 = vmatpush1.msra.mxu0 0.0
        %1800 = vmatprep.subr.mxu0 0.0
        %1801 = vmatpush1.msra.mxu0 0.0
        %1802 = vmatprep.subr.mxu0 0.0
        %1803 = vmatpush1.msra.mxu0 0.0
        %1804 = vmatprep.subr.mxu0 0.0
        %1805 = vmatpush1.msra.mxu0 0.0
        %1806 = vmatprep.subr.mxu0 0.0
        %1807 = vmatpush1.msra.mxu0 0.0
        %1808 = vmatprep.subr.mxu0 0.0
        %1809 = vmatpush1.msra.mxu0 0.0
        %1810 = vmatprep.subr.mxu0 0.0
        %1811 = vmatpush1.msra.mxu0 0.0
        %1812 = vmatprep.subr.mxu0 0.0
        %1813 = vmatpush1.msra.mxu0 0.0
        %1814 = vmatprep.subr.mxu0 0.0
        %1815 = vmatpush1.msra.mxu0 0.0
        %1816 = vmatprep.subr.mxu0 0.0
        %1817 = vmatpush1.msra.mxu0 0.0
        %1818 = vmatprep.subr.mxu0 0.0
        %1819 = vmatpush1.msra.mxu0 0.0
        %1820 = vmatprep.subr.mxu0 0.0
        %1821 = vmatpush1.msra.mxu0 0.0
        %1822 = vmatprep.subr.mxu0 0.0
        %1823 = vmatpush1.msra.mxu0 0.0
        %1824 = vmatprep.subr.mxu0 0.0
        %1825 = vmatpush1.msra.mxu0 0.0
        %1826 = vmatprep.subr.mxu0 0.0
        %1827 = vmatpush1.msra.mxu0 0.0
        %1828 = vmatprep.mubr.f32.mxu0 0.0
        %1829 = vmatmul.mubr.f32.gmra.mrb[0].mxu0 %v1732
        %v1830 = vpop.f32.mrb[0].mxu0
        %v1831 = vadd.f32 0.0, %v1830
        %v1832 = vpop.f32.mrb[0].mxu0
        %v1833 = vadd.f32 0.0, %v1832
        %1834 = vmatprep.mubr.f32.mxu0 0.0
        %1835 = vmatmul.mubr.f32.gmra.mrb[0].mxu0 %v1734
        %v1836 = vpop.f32.mrb[0].mxu0
        %v1837 = vadd.f32 0.0, %v1836
        %v1838 = vpop.f32.mrb[0].mxu0
        %v1839 = vadd.f32 0.0, %v1838
        %1840 = vmatprep.mubr.f32.mxu0 0.0
        %1841 = vmatmul.mubr.f32.gmra.mrb[0].mxu0 %v1736
        %v1842 = vpop.f32.mrb[0].mxu0
        %v1843 = vadd.f32 0.0, %v1842
        %v1844 = vpop.f32.mrb[0].mxu0
        %v1845 = vadd.f32 0.0, %v1844
        %1846 = vmatprep.mubr.f32.mxu0 0.0
        %1847 = vmatmul.mubr.f32.gmra.mrb[0].mxu0 %v1738
        %v1848 = vpop.f32.mrb[0].mxu0
        %v1849 = vadd.f32 0.0, %v1848
        %v1850 = vpop.f32.mrb[0].mxu0
        %v1851 = vadd.f32 0.0, %v1850
        %1852 = vdwg.mxu0
        %1853 = vmatprep.subr.mxu0 %v1750
        %1854 = vmatpush1.msra.mxu0 %v1747
        %1855 = vmatprep.subr.mxu0 0.0
        %1856 = vmatpush1.msra.mxu0 0.0
        %1857 = vmatprep.subr.mxu0 0.0
        %1858 = vmatpush1.msra.mxu0 0.0
        %1859 = vmatprep.subr.mxu0 0.0
        %1860 = vmatpush1.msra.mxu0 0.0
        %1861 = vmatprep.subr.mxu0 0.0
        %1862 = vmatpush1.msra.mxu0 0.0
        %1863 = vmatprep.subr.mxu0 0.0
        %1864 = vmatpush1.msra.mxu0 0.0
        %1865 = vmatprep.subr.mxu0 0.0
        %1866 = vmatpush1.msra.mxu0 0.0
        %1867 = vmatprep.subr.mxu0 0.0
        %1868 = vmatpush1.msra.mxu0 0.0
        %1869 = vmatprep.subr.mxu0 0.0
        %1870 = vmatpush1.msra.mxu0 0.0
        %1871 = vmatprep.subr.mxu0 0.0
        %1872 = vmatpush1.msra.mxu0 0.0
        %1873 = vmatprep.subr.mxu0 0.0
        %1874 = vmatpush1.msra.mxu0 0.0
        %1875 = vmatprep.subr.mxu0 0.0
        %1876 = vmatpush1.msra.mxu0 0.0
        %1877 = vmatprep.subr.mxu0 0.0
        %1878 = vmatpush1.msra.mxu0 0.0
        %1879 = vmatprep.subr.mxu0 0.0
        %1880 = vmatpush1.msra.mxu0 0.0
        %1881 = vmatprep.subr.mxu0 0.0
        %1882 = vmatpush1.msra.mxu0 0.0
        %1883 = vmatprep.subr.mxu0 0.0
        %1884 = vmatpush1.msra.mxu0 0.0
        %1885 = vmatprep.subr.mxu0 0.0
        %1886 = vmatpush1.msra.mxu0 0.0
        %1887 = vmatprep.subr.mxu0 0.0
        %1888 = vmatpush1.msra.mxu0 0.0
        %1889 = vmatprep.subr.mxu0 0.0
        %1890 = vmatpush1.msra.mxu0 0.0
        %1891 = vmatprep.subr.mxu0 0.0
        %1892 = vmatpush1.msra.mxu0 0.0
        %1893 = vmatprep.subr.mxu0 0.0
        %1894 = vmatpush1.msra.mxu0 0.0
        %1895 = vmatprep.subr.mxu0 0.0
        %1896 = vmatpush1.msra.mxu0 0.0
        %1897 = vmatprep.subr.mxu0 0.0
        %1898 = vmatpush1.msra.mxu0 0.0
        %1899 = vmatprep.subr.mxu0 0.0
        %1900 = vmatpush1.msra.mxu0 0.0
        %1901 = vmatprep.subr.mxu0 0.0
        %1902 = vmatpush1.msra.mxu0 0.0
        %1903 = vmatprep.subr.mxu0 0.0
        %1904 = vmatpush1.msra.mxu0 0.0
        %1905 = vmatprep.subr.mxu0 0.0
        %1906 = vmatpush1.msra.mxu0 0.0
        %1907 = vmatprep.subr.mxu0 0.0
        %1908 = vmatpush1.msra.mxu0 0.0
        %1909 = vmatprep.subr.mxu0 0.0
        %1910 = vmatpush1.msra.mxu0 0.0
        %1911 = vmatprep.subr.mxu0 0.0
        %1912 = vmatpush1.msra.mxu0 0.0
        %1913 = vmatprep.subr.mxu0 0.0
        %1914 = vmatpush1.msra.mxu0 0.0
        %1915 = vmatprep.subr.mxu0 0.0
        %1916 = vmatpush1.msra.mxu0 0.0
        %1917 = vmatprep.mubr.f32.mxu0 0.0
        %1918 = vmatmul.mubr.f32.gmra.mrb[0].mxu0 %v1732
        %v1919 = vpop.f32.mrb[0].mxu0
        %v1920 = vadd.f32 0.0, %v1919
        %v1921 = vpop.f32.mrb[0].mxu0
        %v1922 = vadd.f32 0.0, %v1921
        %1923 = vmatprep.mubr.f32.mxu0 0.0
        %1924 = vmatmul.mubr.f32.gmra.mrb[0].mxu0 %v1734
        %v1925 = vpop.f32.mrb[0].mxu0
        %v1926 = vadd.f32 0.0, %v1925
        %v1927 = vpop.f32.mrb[0].mxu0
        %v1928 = vadd.f32 0.0, %v1927
        %1929 = vmatprep.mubr.f32.mxu0 0.0
        %1930 = vmatmul.mubr.f32.gmra.mrb[0].mxu0 %v1736
        %v1931 = vpop.f32.mrb[0].mxu0
        %v1932 = vadd.f32 0.0, %v1931
        %v1933 = vpop.f32.mrb[0].mxu0
        %v1934 = vadd.f32 0.0, %v1933
        %1935 = vmatprep.mubr.f32.mxu0 0.0
        %1936 = vmatmul.mubr.f32.gmra.mrb[0].mxu0 %v1738
        %v1937 = vpop.f32.mrb[0].mxu0
        %v1938 = vadd.f32 0.0, %v1937
        %v1939 = vpop.f32.mrb[0].mxu0
        %v1940 = vadd.f32 0.0, %v1939
        %1941 = vdwg.mxu0
        %1942 = vmatprep.subr.mxu0 %v1756
        %1943 = vmatpush1.msra.mxu0 %v1753
        %1944 = vmatprep.subr.mxu0 0.0
        %1945 = vmatpush1.msra.mxu0 0.0
        %1946 = vmatprep.subr.mxu0 0.0
        %1947 = vmatpush1.msra.mxu0 0.0
        %1948 = vmatprep.subr.mxu0 0.0
        %1949 = vmatpush1.msra.mxu0 0.0
        %1950 = vmatprep.subr.mxu0 0.0
        %1951 = vmatpush1.msra.mxu0 0.0
        %1952 = vmatprep.subr.mxu0 0.0
        %1953 = vmatpush1.msra.mxu0 0.0
        %1954 = vmatprep.subr.mxu0 0.0
        %1955 = vmatpush1.msra.mxu0 0.0
        %1956 = vmatprep.subr.mxu0 0.0
        %1957 = vmatpush1.msra.mxu0 0.0
        %1958 = vmatprep.subr.mxu0 0.0
        %1959 = vmatpush1.msra.mxu0 0.0
        %1960 = vmatprep.subr.mxu0 0.0
        %1961 = vmatpush1.msra.mxu0 0.0
        %1962 = vmatprep.subr.mxu0 0.0
        %1963 = vmatpush1.msra.mxu0 0.0
        %1964 = vmatprep.subr.mxu0 0.0
        %1965 = vmatpush1.msra.mxu0 0.0
        %1966 = vmatprep.subr.mxu0 0.0
        %1967 = vmatpush1.msra.mxu0 0.0
        %1968 = vmatprep.subr.mxu0 0.0
        %1969 = vmatpush1.msra.mxu0 0.0
        %1970 = vmatprep.subr.mxu0 0.0
        %1971 = vmatpush1.msra.mxu0 0.0
        %1972 = vmatprep.subr.mxu0 0.0
        %1973 = vmatpush1.msra.mxu0 0.0
        %1974 = vmatprep.subr.mxu0 0.0
        %1975 = vmatpush1.msra.mxu0 0.0
        %1976 = vmatprep.subr.mxu0 0.0
        %1977 = vmatpush1.msra.mxu0 0.0
        %1978 = vmatprep.subr.mxu0 0.0
        %1979 = vmatpush1.msra.mxu0 0.0
        %1980 = vmatprep.subr.mxu0 0.0
        %1981 = vmatpush1.msra.mxu0 0.0
        %1982 = vmatprep.subr.mxu0 0.0
        %1983 = vmatpush1.msra.mxu0 0.0
        %1984 = vmatprep.subr.mxu0 0.0
        %1985 = vmatpush1.msra.mxu0 0.0
        %1986 = vmatprep.subr.mxu0 0.0
        %1987 = vmatpush1.msra.mxu0 0.0
        %1988 = vmatprep.subr.mxu0 0.0
        %1989 = vmatpush1.msra.mxu0 0.0
        %1990 = vmatprep.subr.mxu0 0.0
        %1991 = vmatpush1.msra.mxu0 0.0
        %1992 = vmatprep.subr.mxu0 0.0
        %1993 = vmatpush1.msra.mxu0 0.0
        %1994 = vmatprep.subr.mxu0 0.0
        %1995 = vmatpush1.msra.mxu0 0.0
        %1996 = vmatprep.subr.mxu0 0.0
        %1997 = vmatpush1.msra.mxu0 0.0
        %1998 = vmatprep.subr.mxu0 0.0
        %1999 = vmatpush1.msra.mxu0 0.0
        %2000 = vmatprep.subr.mxu0 0.0
        %2001 = vmatpush1.msra.mxu0 0.0
        %2002 = vmatprep.subr.mxu0 0.0
        %2003 = vmatpush1.msra.mxu0 0.0
        %2004 = vmatprep.subr.mxu0 0.0
        %2005 = vmatpush1.msra.mxu0 0.0
        %2006 = vmatprep.mubr.f32.mxu0 0.0
        %2007 = vmatmul.mubr.f32.gmra.mrb[0].mxu0 %v1732
        %v2008 = vpop.f32.mrb[0].mxu0
        %v2009 = vadd.f32 0.0, %v2008
        %v2010 = vpop.f32.mrb[0].mxu0
        %v2011 = vadd.f32 0.0, %v2010
        %2012 = vmatprep.mubr.f32.mxu0 0.0
        %2013 = vmatmul.mubr.f32.gmra.mrb[0].mxu0 %v1734
        %v2014 = vpop.f32.mrb[0].mxu0
        %v2015 = vadd.f32 0.0, %v2014
        %v2016 = vpop.f32.mrb[0].mxu0
        %v2017 = vadd.f32 0.0, %v2016
        %2018 = vmatprep.mubr.f32.mxu0 0.0
        %2019 = vmatmul.mubr.f32.gmra.mrb[0].mxu0 %v1736
        %v2020 = vpop.f32.mrb[0].mxu0
        %v2021 = vadd.f32 0.0, %v2020
        %v2022 = vpop.f32.mrb[0].mxu0
        %v2023 = vadd.f32 0.0, %v2022
        %2024 = vmatprep.mubr.f32.mxu0 0.0
        %2025 = vmatmul.mubr.f32.gmra.mrb[0].mxu0 %v1738
        %v2026 = vpop.f32.mrb[0].mxu0
        %v2027 = vadd.f32 0.0, %v2026
        %v2028 = vpop.f32.mrb[0].mxu0
        %v2029 = vadd.f32 0.0, %v2028
        %2030 = vdwg.mxu0
        %2031 = vmatprep.subr.mxu0 %v1762
        %2032 = vmatpush1.msra.mxu0 %v1759
        %2033 = vmatprep.subr.mxu0 0.0
        %2034 = vmatpush1.msra.mxu0 0.0
        %2035 = vmatprep.subr.mxu0 0.0
        %2036 = vmatpush1.msra.mxu0 0.0
        %2037 = vmatprep.subr.mxu0 0.0
        %2038 = vmatpush1.msra.mxu0 0.0
        %2039 = vmatprep.subr.mxu0 0.0
        %2040 = vmatpush1.msra.mxu0 0.0
        %2041 = vmatprep.subr.mxu0 0.0
        %2042 = vmatpush1.msra.mxu0 0.0
        %2043 = vmatprep.subr.mxu0 0.0
        %2044 = vmatpush1.msra.mxu0 0.0
        %2045 = vmatprep.subr.mxu0 0.0
        %2046 = vmatpush1.msra.mxu0 0.0
        %2047 = vmatprep.subr.mxu0 0.0
        %2048 = vmatpush1.msra.mxu0 0.0
        %2049 = vmatprep.subr.mxu0 0.0
        %2050 = vmatpush1.msra.mxu0 0.0
        %2051 = vmatprep.subr.mxu0 0.0
        %2052 = vmatpush1.msra.mxu0 0.0
        %2053 = vmatprep.subr.mxu0 0.0
        %2054 = vmatpush1.msra.mxu0 0.0
        %2055 = vmatprep.subr.mxu0 0.0
        %2056 = vmatpush1.msra.mxu0 0.0
        %2057 = vmatprep.subr.mxu0 0.0
        %2058 = vmatpush1.msra.mxu0 0.0
        %2059 = vmatprep.subr.mxu0 0.0
        %2060 = vmatpush1.msra.mxu0 0.0
        %2061 = vmatprep.subr.mxu0 0.0
        %2062 = vmatpush1.msra.mxu0 0.0
        %2063 = vmatprep.subr.mxu0 0.0
        %2064 = vmatpush1.msra.mxu0 0.0
        %2065 = vmatprep.subr.mxu0 0.0
        %2066 = vmatpush1.msra.mxu0 0.0
        %2067 = vmatprep.subr.mxu0 0.0
        %2068 = vmatpush1.msra.mxu0 0.0
        %2069 = vmatprep.subr.mxu0 0.0
        %2070 = vmatpush1.msra.mxu0 0.0
        %2071 = vmatprep.subr.mxu0 0.0
        %2072 = vmatpush1.msra.mxu0 0.0
        %2073 = vmatprep.subr.mxu0 0.0
        %2074 = vmatpush1.msra.mxu0 0.0
        %2075 = vmatprep.subr.mxu0 0.0
        %2076 = vmatpush1.msra.mxu0 0.0
        %2077 = vmatprep.subr.mxu0 0.0
        %2078 = vmatpush1.msra.mxu0 0.0
        %2079 = vmatprep.subr.mxu0 0.0
        %2080 = vmatpush1.msra.mxu0 0.0
        %2081 = vmatprep.subr.mxu0 0.0
        %2082 = vmatpush1.msra.mxu0 0.0
        %2083 = vmatprep.subr.mxu0 0.0
        %2084 = vmatpush1.msra.mxu0 0.0
        %2085 = vmatprep.subr.mxu0 0.0
        %2086 = vmatpush1.msra.mxu0 0.0
        %2087 = vmatprep.subr.mxu0 0.0
        %2088 = vmatpush1.msra.mxu0 0.0
        %2089 = vmatprep.subr.mxu0 0.0
        %2090 = vmatpush1.msra.mxu0 0.0
        %2091 = vmatprep.subr.mxu0 0.0
        %2092 = vmatpush1.msra.mxu0 0.0
        %2093 = vmatprep.subr.mxu0 0.0
        %2094 = vmatpush1.msra.mxu0 0.0
        %2095 = vmatprep.mubr.f32.mxu0 0.0
        %2096 = vmatmul.mubr.f32.gmra.mrb[0].mxu0 %v1732
        %v2097 = vpop.f32.mrb[0].mxu0
        %v2098 = vadd.f32 0.0, %v2097
        %v2099 = vpop.f32.mrb[0].mxu0
        %v2100 = vadd.f32 0.0, %v2099
        %2101 = vmatprep.mubr.f32.mxu0 0.0
        %2102 = vmatmul.mubr.f32.gmra.mrb[0].mxu0 %v1734
        %v2103 = vpop.f32.mrb[0].mxu0
        %v2104 = vadd.f32 0.0, %v2103
        %v2105 = vpop.f32.mrb[0].mxu0
        %v2106 = vadd.f32 0.0, %v2105
        %2107 = vmatprep.mubr.f32.mxu0 0.0
        %2108 = vmatmul.mubr.f32.gmra.mrb[0].mxu0 %v1736
        %v2109 = vpop.f32.mrb[0].mxu0
        %v2110 = vadd.f32 0.0, %v2109
        %v2111 = vpop.f32.mrb[0].mxu0
        %v2112 = vadd.f32 0.0, %v2111
        %2113 = vmatprep.mubr.f32.mxu0 0.0
        %2114 = vmatmul.mubr.f32.gmra.mrb[0].mxu0 %v1738
        %v2115 = vpop.f32.mrb[0].mxu0
        %v2116 = vadd.f32 0.0, %v2115
        %v2117 = vpop.f32.mrb[0].mxu0
        %v2118 = vadd.f32 0.0, %v2117
        %2119 = vdwg.mxu0
        %v2120 = vadd.f32 %v1667, %v1831
        %v2121 = vadd.f32 %v1668, %v1833
        %v2122 = vadd.f32 %v1669, %v1920
        %v2123 = vadd.f32 %v1670, %v1922
        %v2124 = vadd.f32 %v1671, %v2009
        %v2125 = vadd.f32 %v1672, %v2011
        %v2126 = vadd.f32 %v1673, %v2098
        %v2127 = vadd.f32 %v1674, %v2100
        %v2128 = vadd.f32 %v1675, %v1837
        %v2129 = vadd.f32 %v1676, %v1839
        %v2130 = vadd.f32 %v1677, %v1926
        %v2131 = vadd.f32 %v1678, %v1928
        %v2132 = vadd.f32 %v1679, %v2015
        %v2133 = vadd.f32 %v1680, %v2017
        %v2134 = vadd.f32 %v1681, %v2104
        %v2135 = vadd.f32 %v1682, %v2106
        %v2136 = vadd.f32 %v1683, %v1843
        %v2137 = vadd.f32 %v1684, %v1845
        %v2138 = vadd.f32 %v1685, %v1932
        %v2139 = vadd.f32 %v1686, %v1934
        %v2140 = vadd.f32 %v1687, %v2021
        %v2141 = vadd.f32 %v1688, %v2023
        %v2142 = vadd.f32 %v1689, %v2110
        %v2143 = vadd.f32 %v1690, %v2112
        %v2144 = vadd.f32 %v1691, %v1849
        %v2145 = vadd.f32 %v1692, %v1851
        %v2146 = vadd.f32 %v1693, %v1938
        %v2147 = vadd.f32 %v1694, %v1940
        %v2148 = vadd.f32 %v1695, %v2027
        %v2149 = vadd.f32 %v1696, %v2029
        %v2150 = vadd.f32 %v1697, %v2116
        %v2151 = vadd.f32 %v1698, %v2118
        %2152 = vrot.lane.b32.xlu0 %v359, 124
        %v2153 = vpop.permute.xlu0 %2152
        %2154 = vrot.lane.b32.xlu0 %v360, 124
        %v2155 = vpop.permute.xlu0 %2154
        %2156 = vrot.lane.b32.xlu0 %v361, 124
        %v2157 = vpop.permute.xlu0 %2156
        %2158 = vrot.lane.b32.xlu0 %v362, 124
        %v2159 = vpop.permute.xlu0 %2158
        %v2160 = vsel %vm468, %v2153, 0
        %v2162 = vsel %vm468, %v2155, 0
        %v2164 = vsel %vm468, %v2157, 0
        %v2166 = vsel %vm468, %v2159, 0
        %v2168 = vsel %vm477, %v367, 0
        %v2170 = vsel %vm477, %v371, 0
        %v2172 = vsel %vm477, %v375, 0
        %v2174 = vsel %vm477, %v379, 0
        %v2176 = vsel %vm477, %v383, 0
        %v2178 = vsel %vm477, %v387, 0
        %v2180 = vsel %vm477, %v391, 0
        %v2182 = vsel %vm477, %v395, 0
        %2184 = vmatprep.subr.mxu0 %v2170
        %2185 = vmatpush1.msra.mxu0 %v2168
        %2186 = vmatprep.subr.mxu0 0.0
        %2187 = vmatpush1.msra.mxu0 0.0
        %2188 = vmatprep.subr.mxu0 0.0
        %2189 = vmatpush1.msra.mxu0 0.0
        %2190 = vmatprep.subr.mxu0 0.0
        %2191 = vmatpush1.msra.mxu0 0.0
        %2192 = vmatprep.subr.mxu0 0.0
        %2193 = vmatpush1.msra.mxu0 0.0
        %2194 = vmatprep.subr.mxu0 0.0
        %2195 = vmatpush1.msra.mxu0 0.0
        %2196 = vmatprep.subr.mxu0 0.0
        %2197 = vmatpush1.msra.mxu0 0.0
        %2198 = vmatprep.subr.mxu0 0.0
        %2199 = vmatpush1.msra.mxu0 0.0
        %2200 = vmatprep.subr.mxu0 0.0
        %2201 = vmatpush1.msra.mxu0 0.0
        %2202 = vmatprep.subr.mxu0 0.0
        %2203 = vmatpush1.msra.mxu0 0.0
        %2204 = vmatprep.subr.mxu0 0.0
        %2205 = vmatpush1.msra.mxu0 0.0
        %2206 = vmatprep.subr.mxu0 0.0
        %2207 = vmatpush1.msra.mxu0 0.0
        %2208 = vmatprep.subr.mxu0 0.0
        %2209 = vmatpush1.msra.mxu0 0.0
        %2210 = vmatprep.subr.mxu0 0.0
        %2211 = vmatpush1.msra.mxu0 0.0
        %2212 = vmatprep.subr.mxu0 0.0
        %2213 = vmatpush1.msra.mxu0 0.0
        %2214 = vmatprep.subr.mxu0 0.0
        %2215 = vmatpush1.msra.mxu0 0.0
        %2216 = vmatprep.subr.mxu0 0.0
        %2217 = vmatpush1.msra.mxu0 0.0
        %2218 = vmatprep.subr.mxu0 0.0
        %2219 = vmatpush1.msra.mxu0 0.0
        %2220 = vmatprep.subr.mxu0 0.0
        %2221 = vmatpush1.msra.mxu0 0.0
        %2222 = vmatprep.subr.mxu0 0.0
        %2223 = vmatpush1.msra.mxu0 0.0
        %2224 = vmatprep.subr.mxu0 0.0
        %2225 = vmatpush1.msra.mxu0 0.0
        %2226 = vmatprep.subr.mxu0 0.0
        %2227 = vmatpush1.msra.mxu0 0.0
        %2228 = vmatprep.subr.mxu0 0.0
        %2229 = vmatpush1.msra.mxu0 0.0
        %2230 = vmatprep.subr.mxu0 0.0
        %2231 = vmatpush1.msra.mxu0 0.0
        %2232 = vmatprep.subr.mxu0 0.0
        %2233 = vmatpush1.msra.mxu0 0.0
        %2234 = vmatprep.subr.mxu0 0.0
        %2235 = vmatpush1.msra.mxu0 0.0
        %2236 = vmatprep.subr.mxu0 0.0
        %2237 = vmatpush1.msra.mxu0 0.0
        %2238 = vmatprep.subr.mxu0 0.0
        %2239 = vmatpush1.msra.mxu0 0.0
        %2240 = vmatprep.subr.mxu0 0.0
        %2241 = vmatpush1.msra.mxu0 0.0
        %2242 = vmatprep.subr.mxu0 0.0
        %2243 = vmatpush1.msra.mxu0 0.0
        %2244 = vmatprep.subr.mxu0 0.0
        %2245 = vmatpush1.msra.mxu0 0.0
        %2246 = vmatprep.subr.mxu0 0.0
        %2247 = vmatpush1.msra.mxu0 0.0
        %2248 = vmatprep.mubr.f32.mxu0 0.0
        %2249 = vmatmul.mubr.f32.gmra.mrb[0].mxu0 %v2160
        %v2250 = vpop.f32.mrb[0].mxu0
        %v2251 = vadd.f32 0.0, %v2250
        %v2252 = vpop.f32.mrb[0].mxu0
        %v2253 = vadd.f32 0.0, %v2252
        %2254 = vmatprep.mubr.f32.mxu0 0.0
        %2255 = vmatmul.mubr.f32.gmra.mrb[0].mxu0 %v2162
        %v2256 = vpop.f32.mrb[0].mxu0
        %v2257 = vadd.f32 0.0, %v2256
        %v2258 = vpop.f32.mrb[0].mxu0
        %v2259 = vadd.f32 0.0, %v2258
        %2260 = vmatprep.mubr.f32.mxu0 0.0
        %2261 = vmatmul.mubr.f32.gmra.mrb[0].mxu0 %v2164
        %v2262 = vpop.f32.mrb[0].mxu0
        %v2263 = vadd.f32 0.0, %v2262
        %v2264 = vpop.f32.mrb[0].mxu0
        %v2265 = vadd.f32 0.0, %v2264
        %2266 = vmatprep.mubr.f32.mxu0 0.0
        %2267 = vmatmul.mubr.f32.gmra.mrb[0].mxu0 %v2166
        %v2268 = vpop.f32.mrb[0].mxu0
        %v2269 = vadd.f32 0.0, %v2268
        %v2270 = vpop.f32.mrb[0].mxu0
        %v2271 = vadd.f32 0.0, %v2270
        %2272 = vdwg.mxu0
        %2273 = vmatprep.subr.mxu0 %v2174
        %2274 = vmatpush1.msra.mxu0 %v2172
        %2275 = vmatprep.subr.mxu0 0.0
        %2276 = vmatpush1.msra.mxu0 0.0
        %2277 = vmatprep.subr.mxu0 0.0
        %2278 = vmatpush1.msra.mxu0 0.0
        %2279 = vmatprep.subr.mxu0 0.0
        %2280 = vmatpush1.msra.mxu0 0.0
        %2281 = vmatprep.subr.mxu0 0.0
        %2282 = vmatpush1.msra.mxu0 0.0
        %2283 = vmatprep.subr.mxu0 0.0
        %2284 = vmatpush1.msra.mxu0 0.0
        %2285 = vmatprep.subr.mxu0 0.0
        %2286 = vmatpush1.msra.mxu0 0.0
        %2287 = vmatprep.subr.mxu0 0.0
        %2288 = vmatpush1.msra.mxu0 0.0
        %2289 = vmatprep.subr.mxu0 0.0
        %2290 = vmatpush1.msra.mxu0 0.0
        %2291 = vmatprep.subr.mxu0 0.0
        %2292 = vmatpush1.msra.mxu0 0.0
        %2293 = vmatprep.subr.mxu0 0.0
        %2294 = vmatpush1.msra.mxu0 0.0
        %2295 = vmatprep.subr.mxu0 0.0
        %2296 = vmatpush1.msra.mxu0 0.0
        %2297 = vmatprep.subr.mxu0 0.0
        %2298 = vmatpush1.msra.mxu0 0.0
        %2299 = vmatprep.subr.mxu0 0.0
        %2300 = vmatpush1.msra.mxu0 0.0
        %2301 = vmatprep.subr.mxu0 0.0
        %2302 = vmatpush1.msra.mxu0 0.0
        %2303 = vmatprep.subr.mxu0 0.0
        %2304 = vmatpush1.msra.mxu0 0.0
        %2305 = vmatprep.subr.mxu0 0.0
        %2306 = vmatpush1.msra.mxu0 0.0
        %2307 = vmatprep.subr.mxu0 0.0
        %2308 = vmatpush1.msra.mxu0 0.0
        %2309 = vmatprep.subr.mxu0 0.0
        %2310 = vmatpush1.msra.mxu0 0.0
        %2311 = vmatprep.subr.mxu0 0.0
        %2312 = vmatpush1.msra.mxu0 0.0
        %2313 = vmatprep.subr.mxu0 0.0
        %2314 = vmatpush1.msra.mxu0 0.0
        %2315 = vmatprep.subr.mxu0 0.0
        %2316 = vmatpush1.msra.mxu0 0.0
        %2317 = vmatprep.subr.mxu0 0.0
        %2318 = vmatpush1.msra.mxu0 0.0
        %2319 = vmatprep.subr.mxu0 0.0
        %2320 = vmatpush1.msra.mxu0 0.0
        %2321 = vmatprep.subr.mxu0 0.0
        %2322 = vmatpush1.msra.mxu0 0.0
        %2323 = vmatprep.subr.mxu0 0.0
        %2324 = vmatpush1.msra.mxu0 0.0
        %2325 = vmatprep.subr.mxu0 0.0
        %2326 = vmatpush1.msra.mxu0 0.0
        %2327 = vmatprep.subr.mxu0 0.0
        %2328 = vmatpush1.msra.mxu0 0.0
        %2329 = vmatprep.subr.mxu0 0.0
        %2330 = vmatpush1.msra.mxu0 0.0
        %2331 = vmatprep.subr.mxu0 0.0
        %2332 = vmatpush1.msra.mxu0 0.0
        %2333 = vmatprep.subr.mxu0 0.0
        %2334 = vmatpush1.msra.mxu0 0.0
        %2335 = vmatprep.subr.mxu0 0.0
        %2336 = vmatpush1.msra.mxu0 0.0
        %2337 = vmatprep.mubr.f32.mxu0 0.0
        %2338 = vmatmul.mubr.f32.gmra.mrb[0].mxu0 %v2160
        %v2339 = vpop.f32.mrb[0].mxu0
        %v2340 = vadd.f32 0.0, %v2339
        %v2341 = vpop.f32.mrb[0].mxu0
        %v2342 = vadd.f32 0.0, %v2341
        %2343 = vmatprep.mubr.f32.mxu0 0.0
        %2344 = vmatmul.mubr.f32.gmra.mrb[0].mxu0 %v2162
        %v2345 = vpop.f32.mrb[0].mxu0
        %v2346 = vadd.f32 0.0, %v2345
        %v2347 = vpop.f32.mrb[0].mxu0
        %v2348 = vadd.f32 0.0, %v2347
        %2349 = vmatprep.mubr.f32.mxu0 0.0
        %2350 = vmatmul.mubr.f32.gmra.mrb[0].mxu0 %v2164
        %v2351 = vpop.f32.mrb[0].mxu0
        %v2352 = vadd.f32 0.0, %v2351
        %v2353 = vpop.f32.mrb[0].mxu0
        %v2354 = vadd.f32 0.0, %v2353
        %2355 = vmatprep.mubr.f32.mxu0 0.0
        %2356 = vmatmul.mubr.f32.gmra.mrb[0].mxu0 %v2166
        %v2357 = vpop.f32.mrb[0].mxu0
        %v2358 = vadd.f32 0.0, %v2357
        %v2359 = vpop.f32.mrb[0].mxu0
        %v2360 = vadd.f32 0.0, %v2359
        %2361 = vdwg.mxu0
        %2362 = vmatprep.subr.mxu0 %v2178
        %2363 = vmatpush1.msra.mxu0 %v2176
        %2364 = vmatprep.subr.mxu0 0.0
        %2365 = vmatpush1.msra.mxu0 0.0
        %2366 = vmatprep.subr.mxu0 0.0
        %2367 = vmatpush1.msra.mxu0 0.0
        %2368 = vmatprep.subr.mxu0 0.0
        %2369 = vmatpush1.msra.mxu0 0.0
        %2370 = vmatprep.subr.mxu0 0.0
        %2371 = vmatpush1.msra.mxu0 0.0
        %2372 = vmatprep.subr.mxu0 0.0
        %2373 = vmatpush1.msra.mxu0 0.0
        %2374 = vmatprep.subr.mxu0 0.0
        %2375 = vmatpush1.msra.mxu0 0.0
        %2376 = vmatprep.subr.mxu0 0.0
        %2377 = vmatpush1.msra.mxu0 0.0
        %2378 = vmatprep.subr.mxu0 0.0
        %2379 = vmatpush1.msra.mxu0 0.0
        %2380 = vmatprep.subr.mxu0 0.0
        %2381 = vmatpush1.msra.mxu0 0.0
        %2382 = vmatprep.subr.mxu0 0.0
        %2383 = vmatpush1.msra.mxu0 0.0
        %2384 = vmatprep.subr.mxu0 0.0
        %2385 = vmatpush1.msra.mxu0 0.0
        %2386 = vmatprep.subr.mxu0 0.0
        %2387 = vmatpush1.msra.mxu0 0.0
        %2388 = vmatprep.subr.mxu0 0.0
        %2389 = vmatpush1.msra.mxu0 0.0
        %2390 = vmatprep.subr.mxu0 0.0
        %2391 = vmatpush1.msra.mxu0 0.0
        %2392 = vmatprep.subr.mxu0 0.0
        %2393 = vmatpush1.msra.mxu0 0.0
        %2394 = vmatprep.subr.mxu0 0.0
        %2395 = vmatpush1.msra.mxu0 0.0
        %2396 = vmatprep.subr.mxu0 0.0
        %2397 = vmatpush1.msra.mxu0 0.0
        %2398 = vmatprep.subr.mxu0 0.0
        %2399 = vmatpush1.msra.mxu0 0.0
        %2400 = vmatprep.subr.mxu0 0.0
        %2401 = vmatpush1.msra.mxu0 0.0
        %2402 = vmatprep.subr.mxu0 0.0
        %2403 = vmatpush1.msra.mxu0 0.0
        %2404 = vmatprep.subr.mxu0 0.0
        %2405 = vmatpush1.msra.mxu0 0.0
        %2406 = vmatprep.subr.mxu0 0.0
        %2407 = vmatpush1.msra.mxu0 0.0
        %2408 = vmatprep.subr.mxu0 0.0
        %2409 = vmatpush1.msra.mxu0 0.0
        %2410 = vmatprep.subr.mxu0 0.0
        %2411 = vmatpush1.msra.mxu0 0.0
        %2412 = vmatprep.subr.mxu0 0.0
        %2413 = vmatpush1.msra.mxu0 0.0
        %2414 = vmatprep.subr.mxu0 0.0
        %2415 = vmatpush1.msra.mxu0 0.0
        %2416 = vmatprep.subr.mxu0 0.0
        %2417 = vmatpush1.msra.mxu0 0.0
        %2418 = vmatprep.subr.mxu0 0.0
        %2419 = vmatpush1.msra.mxu0 0.0
        %2420 = vmatprep.subr.mxu0 0.0
        %2421 = vmatpush1.msra.mxu0 0.0
        %2422 = vmatprep.subr.mxu0 0.0
        %2423 = vmatpush1.msra.mxu0 0.0
        %2424 = vmatprep.subr.mxu0 0.0
        %2425 = vmatpush1.msra.mxu0 0.0
        %2426 = vmatprep.mubr.f32.mxu0 0.0
        %2427 = vmatmul.mubr.f32.gmra.mrb[0].mxu0 %v2160
        %v2428 = vpop.f32.mrb[0].mxu0
        %v2429 = vadd.f32 0.0, %v2428
        %v2430 = vpop.f32.mrb[0].mxu0
        %v2431 = vadd.f32 0.0, %v2430
        %2432 = vmatprep.mubr.f32.mxu0 0.0
        %2433 = vmatmul.mubr.f32.gmra.mrb[0].mxu0 %v2162
        %v2434 = vpop.f32.mrb[0].mxu0
        %v2435 = vadd.f32 0.0, %v2434
        %v2436 = vpop.f32.mrb[0].mxu0
        %v2437 = vadd.f32 0.0, %v2436
        %2438 = vmatprep.mubr.f32.mxu0 0.0
        %2439 = vmatmul.mubr.f32.gmra.mrb[0].mxu0 %v2164
        %v2440 = vpop.f32.mrb[0].mxu0
        %v2441 = vadd.f32 0.0, %v2440
        %v2442 = vpop.f32.mrb[0].mxu0
        %v2443 = vadd.f32 0.0, %v2442
        %2444 = vmatprep.mubr.f32.mxu0 0.0
        %2445 = vmatmul.mubr.f32.gmra.mrb[0].mxu0 %v2166
        %v2446 = vpop.f32.mrb[0].mxu0
        %v2447 = vadd.f32 0.0, %v2446
        %v2448 = vpop.f32.mrb[0].mxu0
        %v2449 = vadd.f32 0.0, %v2448
        %2450 = vdwg.mxu0
        %2451 = vmatprep.subr.mxu0 %v2182
        %2452 = vmatpush1.msra.mxu0 %v2180
        %2453 = vmatprep.subr.mxu0 0.0
        %2454 = vmatpush1.msra.mxu0 0.0
        %2455 = vmatprep.subr.mxu0 0.0
        %2456 = vmatpush1.msra.mxu0 0.0
        %2457 = vmatprep.subr.mxu0 0.0
        %2458 = vmatpush1.msra.mxu0 0.0
        %2459 = vmatprep.subr.mxu0 0.0
        %2460 = vmatpush1.msra.mxu0 0.0
        %2461 = vmatprep.subr.mxu0 0.0
        %2462 = vmatpush1.msra.mxu0 0.0
        %2463 = vmatprep.subr.mxu0 0.0
        %2464 = vmatpush1.msra.mxu0 0.0
        %2465 = vmatprep.subr.mxu0 0.0
        %2466 = vmatpush1.msra.mxu0 0.0
        %2467 = vmatprep.subr.mxu0 0.0
        %2468 = vmatpush1.msra.mxu0 0.0
        %2469 = vmatprep.subr.mxu0 0.0
        %2470 = vmatpush1.msra.mxu0 0.0
        %2471 = vmatprep.subr.mxu0 0.0
        %2472 = vmatpush1.msra.mxu0 0.0
        %2473 = vmatprep.subr.mxu0 0.0
        %2474 = vmatpush1.msra.mxu0 0.0
        %2475 = vmatprep.subr.mxu0 0.0
        %2476 = vmatpush1.msra.mxu0 0.0
        %2477 = vmatprep.subr.mxu0 0.0
        %2478 = vmatpush1.msra.mxu0 0.0
        %2479 = vmatprep.subr.mxu0 0.0
        %2480 = vmatpush1.msra.mxu0 0.0
        %2481 = vmatprep.subr.mxu0 0.0
        %2482 = vmatpush1.msra.mxu0 0.0
        %2483 = vmatprep.subr.mxu0 0.0
        %2484 = vmatpush1.msra.mxu0 0.0
        %2485 = vmatprep.subr.mxu0 0.0
        %2486 = vmatpush1.msra.mxu0 0.0
        %2487 = vmatprep.subr.mxu0 0.0
        %2488 = vmatpush1.msra.mxu0 0.0
        %2489 = vmatprep.subr.mxu0 0.0
        %2490 = vmatpush1.msra.mxu0 0.0
        %2491 = vmatprep.subr.mxu0 0.0
        %2492 = vmatpush1.msra.mxu0 0.0
        %2493 = vmatprep.subr.mxu0 0.0
        %2494 = vmatpush1.msra.mxu0 0.0
        %2495 = vmatprep.subr.mxu0 0.0
        %2496 = vmatpush1.msra.mxu0 0.0
        %2497 = vmatprep.subr.mxu0 0.0
        %2498 = vmatpush1.msra.mxu0 0.0
        %2499 = vmatprep.subr.mxu0 0.0
        %2500 = vmatpush1.msra.mxu0 0.0
        %2501 = vmatprep.subr.mxu0 0.0
        %2502 = vmatpush1.msra.mxu0 0.0
        %2503 = vmatprep.subr.mxu0 0.0
        %2504 = vmatpush1.msra.mxu0 0.0
        %2505 = vmatprep.subr.mxu0 0.0
        %2506 = vmatpush1.msra.mxu0 0.0
        %2507 = vmatprep.subr.mxu0 0.0
        %2508 = vmatpush1.msra.mxu0 0.0
        %2509 = vmatprep.subr.mxu0 0.0
        %2510 = vmatpush1.msra.mxu0 0.0
        %2511 = vmatprep.subr.mxu0 0.0
        %2512 = vmatpush1.msra.mxu0 0.0
        %2513 = vmatprep.subr.mxu0 0.0
        %2514 = vmatpush1.msra.mxu0 0.0
        %2515 = vmatprep.mubr.f32.mxu0 0.0
        %2516 = vmatmul.mubr.f32.gmra.mrb[0].mxu0 %v2160
        %v2517 = vpop.f32.mrb[0].mxu0
        %v2518 = vadd.f32 0.0, %v2517
        %v2519 = vpop.f32.mrb[0].mxu0
        %v2520 = vadd.f32 0.0, %v2519
        %2521 = vmatprep.mubr.f32.mxu0 0.0
        %2522 = vmatmul.mubr.f32.gmra.mrb[0].mxu0 %v2162
        %v2523 = vpop.f32.mrb[0].mxu0
        %v2524 = vadd.f32 0.0, %v2523
        %v2525 = vpop.f32.mrb[0].mxu0
        %v2526 = vadd.f32 0.0, %v2525
        %2527 = vmatprep.mubr.f32.mxu0 0.0
        %2528 = vmatmul.mubr.f32.gmra.mrb[0].mxu0 %v2164
        %v2529 = vpop.f32.mrb[0].mxu0
        %v2530 = vadd.f32 0.0, %v2529
        %v2531 = vpop.f32.mrb[0].mxu0
        %v2532 = vadd.f32 0.0, %v2531
        %2533 = vmatprep.mubr.f32.mxu0 0.0
        %2534 = vmatmul.mubr.f32.gmra.mrb[0].mxu0 %v2166
        %v2535 = vpop.f32.mrb[0].mxu0
        %v2536 = vadd.f32 0.0, %v2535
        %v2537 = vpop.f32.mrb[0].mxu0
        %v2538 = vadd.f32 0.0, %v2537
        %2539 = vdwg.mxu0
        %v2540 = vadd.f32 %v2120, %v2251
        %v2541 = vadd.f32 %v2121, %v2253
        %v2542 = vadd.f32 %v2122, %v2340
        %v2543 = vadd.f32 %v2123, %v2342
        %v2544 = vadd.f32 %v2124, %v2429
        %v2545 = vadd.f32 %v2125, %v2431
        %v2546 = vadd.f32 %v2126, %v2518
        %v2547 = vadd.f32 %v2127, %v2520
        %v2548 = vadd.f32 %v2128, %v2257
        %v2549 = vadd.f32 %v2129, %v2259
        %v2550 = vadd.f32 %v2130, %v2346
        %v2551 = vadd.f32 %v2131, %v2348
        %v2552 = vadd.f32 %v2132, %v2435
        %v2553 = vadd.f32 %v2133, %v2437
        %v2554 = vadd.f32 %v2134, %v2524
        %v2555 = vadd.f32 %v2135, %v2526
        %v2556 = vadd.f32 %v2136, %v2263
        %v2557 = vadd.f32 %v2137, %v2265
        %v2558 = vadd.f32 %v2138, %v2352
        %v2559 = vadd.f32 %v2139, %v2354
        %v2560 = vadd.f32 %v2140, %v2441
        %v2561 = vadd.f32 %v2141, %v2443
        %v2562 = vadd.f32 %v2142, %v2530
        %v2563 = vadd.f32 %v2143, %v2532
        %v2564 = vadd.f32 %v2144, %v2269
        %v2565 = vadd.f32 %v2145, %v2271
        %v2566 = vadd.f32 %v2146, %v2358
        %v2567 = vadd.f32 %v2147, %v2360
        %v2568 = vadd.f32 %v2148, %v2447
        %v2569 = vadd.f32 %v2149, %v2449
        %v2570 = vadd.f32 %v2150, %v2536
        %v2571 = vadd.f32 %v2151, %v2538
        %2572 = vrot.lane.b32.xlu0 %v367, 127
        %v2573 = vpop.permute.xlu0 %2572
        %2574 = vrot.lane.b32.xlu0 %v371, 127
        %v2575 = vpop.permute.xlu0 %2574
        %2576 = vrot.lane.b32.xlu0 %v375, 127
        %v2577 = vpop.permute.xlu0 %2576
        %2578 = vrot.lane.b32.xlu0 %v379, 127
        %v2579 = vpop.permute.xlu0 %2578
        %2580 = vrot.lane.b32.xlu0 %v383, 127
        %v2581 = vpop.permute.xlu0 %2580
        %2582 = vrot.lane.b32.xlu0 %v387, 127
        %v2583 = vpop.permute.xlu0 %2582
        %2584 = vrot.lane.b32.xlu0 %v391, 127
        %v2585 = vpop.permute.xlu0 %2584
        %2586 = vrot.lane.b32.xlu0 %v395, 127
        %v2587 = vpop.permute.xlu0 %2586
        %vm2588 = vcmp.lt.s32.totalorder %v421, 127
        %v2589 = vsel %vm2588, %v2585, %v2587
        %v2590 = vsel %vm2588, %v2583, %v2585
        %v2591 = vsel %vm2588, %v2581, %v2583
        %v2592 = vsel %vm2588, %v2579, %v2581
        %v2593 = vsel %vm2588, %v2577, %v2579
        %v2594 = vsel %vm2588, %v2575, %v2577
        %v2595 = vsel %vm2588, %v2573, %v2575
        %v2596 = vsel %vm2588, %v2587, %v2573
        %2597 = vrot.lane.b32.xlu0 %v359, 123
        %v2598 = vpop.permute.xlu0 %2597
        %2599 = vrot.lane.b32.xlu0 %v360, 123
        %v2600 = vpop.permute.xlu0 %2599
        %2601 = vrot.lane.b32.xlu0 %v361, 123
        %v2602 = vpop.permute.xlu0 %2601
        %2603 = vrot.lane.b32.xlu0 %v362, 123
        %v2604 = vpop.permute.xlu0 %2603
        %v2605 = vsel %vm468, %v2598, 0
        %v2607 = vsel %vm468, %v2600, 0
        %v2609 = vsel %vm468, %v2602, 0
        %v2611 = vsel %vm468, %v2604, 0
        %v2614 = vsel %vm477, %v2595, 0
        %v2617 = vsel %vm477, %v2594, 0
        %v2620 = vsel %vm477, %v2593, 0
        %v2623 = vsel %vm477, %v2592, 0
        %v2626 = vsel %vm477, %v2591, 0
        %v2629 = vsel %vm477, %v2590, 0
        %v2632 = vsel %vm477, %v2589, 0
        %v2635 = vsel %vm477, %v2596, 0
        %2637 = vmatprep.subr.mxu0 %v2617
        %2638 = vmatpush1.msra.mxu0 %v2614
        %2639 = vmatprep.subr.mxu0 0.0
        %2640 = vmatpush1.msra.mxu0 0.0
        %2641 = vmatprep.subr.mxu0 0.0
        %2642 = vmatpush1.msra.mxu0 0.0
        %2643 = vmatprep.subr.mxu0 0.0
        %2644 = vmatpush1.msra.mxu0 0.0
        %2645 = vmatprep.subr.mxu0 0.0
        %2646 = vmatpush1.msra.mxu0 0.0
        %2647 = vmatprep.subr.mxu0 0.0
        %2648 = vmatpush1.msra.mxu0 0.0
        %2649 = vmatprep.subr.mxu0 0.0
        %2650 = vmatpush1.msra.mxu0 0.0
        %2651 = vmatprep.subr.mxu0 0.0
        %2652 = vmatpush1.msra.mxu0 0.0
        %2653 = vmatprep.subr.mxu0 0.0
        %2654 = vmatpush1.msra.mxu0 0.0
        %2655 = vmatprep.subr.mxu0 0.0
        %2656 = vmatpush1.msra.mxu0 0.0
        %2657 = vmatprep.subr.mxu0 0.0
        %2658 = vmatpush1.msra.mxu0 0.0
        %2659 = vmatprep.subr.mxu0 0.0
        %2660 = vmatpush1.msra.mxu0 0.0
        %2661 = vmatprep.subr.mxu0 0.0
        %2662 = vmatpush1.msra.mxu0 0.0
        %2663 = vmatprep.subr.mxu0 0.0
        %2664 = vmatpush1.msra.mxu0 0.0
        %2665 = vmatprep.subr.mxu0 0.0
        %2666 = vmatpush1.msra.mxu0 0.0
        %2667 = vmatprep.subr.mxu0 0.0
        %2668 = vmatpush1.msra.mxu0 0.0
        %2669 = vmatprep.subr.mxu0 0.0
        %2670 = vmatpush1.msra.mxu0 0.0
        %2671 = vmatprep.subr.mxu0 0.0
        %2672 = vmatpush1.msra.mxu0 0.0
        %2673 = vmatprep.subr.mxu0 0.0
        %2674 = vmatpush1.msra.mxu0 0.0
        %2675 = vmatprep.subr.mxu0 0.0
        %2676 = vmatpush1.msra.mxu0 0.0
        %2677 = vmatprep.subr.mxu0 0.0
        %2678 = vmatpush1.msra.mxu0 0.0
        %2679 = vmatprep.subr.mxu0 0.0
        %2680 = vmatpush1.msra.mxu0 0.0
        %2681 = vmatprep.subr.mxu0 0.0
        %2682 = vmatpush1.msra.mxu0 0.0
        %2683 = vmatprep.subr.mxu0 0.0
        %2684 = vmatpush1.msra.mxu0 0.0
        %2685 = vmatprep.subr.mxu0 0.0
        %2686 = vmatpush1.msra.mxu0 0.0
        %2687 = vmatprep.subr.mxu0 0.0
        %2688 = vmatpush1.msra.mxu0 0.0
        %2689 = vmatprep.subr.mxu0 0.0
        %2690 = vmatpush1.msra.mxu0 0.0
        %2691 = vmatprep.subr.mxu0 0.0
        %2692 = vmatpush1.msra.mxu0 0.0
        %2693 = vmatprep.subr.mxu0 0.0
        %2694 = vmatpush1.msra.mxu0 0.0
        %2695 = vmatprep.subr.mxu0 0.0
        %2696 = vmatpush1.msra.mxu0 0.0
        %2697 = vmatprep.subr.mxu0 0.0
        %2698 = vmatpush1.msra.mxu0 0.0
        %2699 = vmatprep.subr.mxu0 0.0
        %2700 = vmatpush1.msra.mxu0 0.0
        %2701 = vmatprep.mubr.f32.mxu0 0.0
        %2702 = vmatmul.mubr.f32.gmra.mrb[0].mxu0 %v2605
        %v2703 = vpop.f32.mrb[0].mxu0
        %v2704 = vadd.f32 0.0, %v2703
        %v2705 = vpop.f32.mrb[0].mxu0
        %v2706 = vadd.f32 0.0, %v2705
        %2707 = vmatprep.mubr.f32.mxu0 0.0
        %2708 = vmatmul.mubr.f32.gmra.mrb[0].mxu0 %v2607
        %v2709 = vpop.f32.mrb[0].mxu0
        %v2710 = vadd.f32 0.0, %v2709
        %v2711 = vpop.f32.mrb[0].mxu0
        %v2712 = vadd.f32 0.0, %v2711
        %2713 = vmatprep.mubr.f32.mxu0 0.0
        %2714 = vmatmul.mubr.f32.gmra.mrb[0].mxu0 %v2609
        %v2715 = vpop.f32.mrb[0].mxu0
        %v2716 = vadd.f32 0.0, %v2715
        %v2717 = vpop.f32.mrb[0].mxu0
        %v2718 = vadd.f32 0.0, %v2717
        %2719 = vmatprep.mubr.f32.mxu0 0.0
        %2720 = vmatmul.mubr.f32.gmra.mrb[0].mxu0 %v2611
        %v2721 = vpop.f32.mrb[0].mxu0
        %v2722 = vadd.f32 0.0, %v2721
        %v2723 = vpop.f32.mrb[0].mxu0
        %v2724 = vadd.f32 0.0, %v2723
        %2725 = vdwg.mxu0
        %2726 = vmatprep.subr.mxu0 %v2623
        %2727 = vmatpush1.msra.mxu0 %v2620
        %2728 = vmatprep.subr.mxu0 0.0
        %2729 = vmatpush1.msra.mxu0 0.0
        %2730 = vmatprep.subr.mxu0 0.0
        %2731 = vmatpush1.msra.mxu0 0.0
        %2732 = vmatprep.subr.mxu0 0.0
        %2733 = vmatpush1.msra.mxu0 0.0
        %2734 = vmatprep.subr.mxu0 0.0
        %2735 = vmatpush1.msra.mxu0 0.0
        %2736 = vmatprep.subr.mxu0 0.0
        %2737 = vmatpush1.msra.mxu0 0.0
        %2738 = vmatprep.subr.mxu0 0.0
        %2739 = vmatpush1.msra.mxu0 0.0
        %2740 = vmatprep.subr.mxu0 0.0
        %2741 = vmatpush1.msra.mxu0 0.0
        %2742 = vmatprep.subr.mxu0 0.0
        %2743 = vmatpush1.msra.mxu0 0.0
        %2744 = vmatprep.subr.mxu0 0.0
        %2745 = vmatpush1.msra.mxu0 0.0
        %2746 = vmatprep.subr.mxu0 0.0
        %2747 = vmatpush1.msra.mxu0 0.0
        %2748 = vmatprep.subr.mxu0 0.0
        %2749 = vmatpush1.msra.mxu0 0.0
        %2750 = vmatprep.subr.mxu0 0.0
        %2751 = vmatpush1.msra.mxu0 0.0
        %2752 = vmatprep.subr.mxu0 0.0
        %2753 = vmatpush1.msra.mxu0 0.0
        %2754 = vmatprep.subr.mxu0 0.0
        %2755 = vmatpush1.msra.mxu0 0.0
        %2756 = vmatprep.subr.mxu0 0.0
        %2757 = vmatpush1.msra.mxu0 0.0
        %2758 = vmatprep.subr.mxu0 0.0
        %2759 = vmatpush1.msra.mxu0 0.0
        %2760 = vmatprep.subr.mxu0 0.0
        %2761 = vmatpush1.msra.mxu0 0.0
        %2762 = vmatprep.subr.mxu0 0.0
        %2763 = vmatpush1.msra.mxu0 0.0
        %2764 = vmatprep.subr.mxu0 0.0
        %2765 = vmatpush1.msra.mxu0 0.0
        %2766 = vmatprep.subr.mxu0 0.0
        %2767 = vmatpush1.msra.mxu0 0.0
        %2768 = vmatprep.subr.mxu0 0.0
        %2769 = vmatpush1.msra.mxu0 0.0
        %2770 = vmatprep.subr.mxu0 0.0
        %2771 = vmatpush1.msra.mxu0 0.0
        %2772 = vmatprep.subr.mxu0 0.0
        %2773 = vmatpush1.msra.mxu0 0.0
        %2774 = vmatprep.subr.mxu0 0.0
        %2775 = vmatpush1.msra.mxu0 0.0
        %2776 = vmatprep.subr.mxu0 0.0
        %2777 = vmatpush1.msra.mxu0 0.0
        %2778 = vmatprep.subr.mxu0 0.0
        %2779 = vmatpush1.msra.mxu0 0.0
        %2780 = vmatprep.subr.mxu0 0.0
        %2781 = vmatpush1.msra.mxu0 0.0
        %2782 = vmatprep.subr.mxu0 0.0
        %2783 = vmatpush1.msra.mxu0 0.0
        %2784 = vmatprep.subr.mxu0 0.0
        %2785 = vmatpush1.msra.mxu0 0.0
        %2786 = vmatprep.subr.mxu0 0.0
        %2787 = vmatpush1.msra.mxu0 0.0
        %2788 = vmatprep.subr.mxu0 0.0
        %2789 = vmatpush1.msra.mxu0 0.0
        %2790 = vmatprep.mubr.f32.mxu0 0.0
        %2791 = vmatmul.mubr.f32.gmra.mrb[0].mxu0 %v2605
        %v2792 = vpop.f32.mrb[0].mxu0
        %v2793 = vadd.f32 0.0, %v2792
        %v2794 = vpop.f32.mrb[0].mxu0
        %v2795 = vadd.f32 0.0, %v2794
        %2796 = vmatprep.mubr.f32.mxu0 0.0
        %2797 = vmatmul.mubr.f32.gmra.mrb[0].mxu0 %v2607
        %v2798 = vpop.f32.mrb[0].mxu0
        %v2799 = vadd.f32 0.0, %v2798
        %v2800 = vpop.f32.mrb[0].mxu0
        %v2801 = vadd.f32 0.0, %v2800
        %2802 = vmatprep.mubr.f32.mxu0 0.0
        %2803 = vmatmul.mubr.f32.gmra.mrb[0].mxu0 %v2609
        %v2804 = vpop.f32.mrb[0].mxu0
        %v2805 = vadd.f32 0.0, %v2804
        %v2806 = vpop.f32.mrb[0].mxu0
        %v2807 = vadd.f32 0.0, %v2806
        %2808 = vmatprep.mubr.f32.mxu0 0.0
        %2809 = vmatmul.mubr.f32.gmra.mrb[0].mxu0 %v2611
        %v2810 = vpop.f32.mrb[0].mxu0
        %v2811 = vadd.f32 0.0, %v2810
        %v2812 = vpop.f32.mrb[0].mxu0
        %v2813 = vadd.f32 0.0, %v2812
        %2814 = vdwg.mxu0
        %2815 = vmatprep.subr.mxu0 %v2629
        %2816 = vmatpush1.msra.mxu0 %v2626
        %2817 = vmatprep.subr.mxu0 0.0
        %2818 = vmatpush1.msra.mxu0 0.0
        %2819 = vmatprep.subr.mxu0 0.0
        %2820 = vmatpush1.msra.mxu0 0.0
        %2821 = vmatprep.subr.mxu0 0.0
        %2822 = vmatpush1.msra.mxu0 0.0
        %2823 = vmatprep.subr.mxu0 0.0
        %2824 = vmatpush1.msra.mxu0 0.0
        %2825 = vmatprep.subr.mxu0 0.0
        %2826 = vmatpush1.msra.mxu0 0.0
        %2827 = vmatprep.subr.mxu0 0.0
        %2828 = vmatpush1.msra.mxu0 0.0
        %2829 = vmatprep.subr.mxu0 0.0
        %2830 = vmatpush1.msra.mxu0 0.0
        %2831 = vmatprep.subr.mxu0 0.0
        %2832 = vmatpush1.msra.mxu0 0.0
        %2833 = vmatprep.subr.mxu0 0.0
        %2834 = vmatpush1.msra.mxu0 0.0
        %2835 = vmatprep.subr.mxu0 0.0
        %2836 = vmatpush1.msra.mxu0 0.0
        %2837 = vmatprep.subr.mxu0 0.0
        %2838 = vmatpush1.msra.mxu0 0.0
        %2839 = vmatprep.subr.mxu0 0.0
        %2840 = vmatpush1.msra.mxu0 0.0
        %2841 = vmatprep.subr.mxu0 0.0
        %2842 = vmatpush1.msra.mxu0 0.0
        %2843 = vmatprep.subr.mxu0 0.0
        %2844 = vmatpush1.msra.mxu0 0.0
        %2845 = vmatprep.subr.mxu0 0.0
        %2846 = vmatpush1.msra.mxu0 0.0
        %2847 = vmatprep.subr.mxu0 0.0
        %2848 = vmatpush1.msra.mxu0 0.0
        %2849 = vmatprep.subr.mxu0 0.0
        %2850 = vmatpush1.msra.mxu0 0.0
        %2851 = vmatprep.subr.mxu0 0.0
        %2852 = vmatpush1.msra.mxu0 0.0
        %2853 = vmatprep.subr.mxu0 0.0
        %2854 = vmatpush1.msra.mxu0 0.0
        %2855 = vmatprep.subr.mxu0 0.0
        %2856 = vmatpush1.msra.mxu0 0.0
        %2857 = vmatprep.subr.mxu0 0.0
        %2858 = vmatpush1.msra.mxu0 0.0
        %2859 = vmatprep.subr.mxu0 0.0
        %2860 = vmatpush1.msra.mxu0 0.0
        %2861 = vmatprep.subr.mxu0 0.0
        %2862 = vmatpush1.msra.mxu0 0.0
        %2863 = vmatprep.subr.mxu0 0.0
        %2864 = vmatpush1.msra.mxu0 0.0
        %2865 = vmatprep.subr.mxu0 0.0
        %2866 = vmatpush1.msra.mxu0 0.0
        %2867 = vmatprep.subr.mxu0 0.0
        %2868 = vmatpush1.msra.mxu0 0.0
        %2869 = vmatprep.subr.mxu0 0.0
        %2870 = vmatpush1.msra.mxu0 0.0
        %2871 = vmatprep.subr.mxu0 0.0
        %2872 = vmatpush1.msra.mxu0 0.0
        %2873 = vmatprep.subr.mxu0 0.0
        %2874 = vmatpush1.msra.mxu0 0.0
        %2875 = vmatprep.subr.mxu0 0.0
        %2876 = vmatpush1.msra.mxu0 0.0
        %2877 = vmatprep.subr.mxu0 0.0
        %2878 = vmatpush1.msra.mxu0 0.0
        %2879 = vmatprep.mubr.f32.mxu0 0.0
        %2880 = vmatmul.mubr.f32.gmra.mrb[0].mxu0 %v2605
        %v2881 = vpop.f32.mrb[0].mxu0
        %v2882 = vadd.f32 0.0, %v2881
        %v2883 = vpop.f32.mrb[0].mxu0
        %v2884 = vadd.f32 0.0, %v2883
        %2885 = vmatprep.mubr.f32.mxu0 0.0
        %2886 = vmatmul.mubr.f32.gmra.mrb[0].mxu0 %v2607
        %v2887 = vpop.f32.mrb[0].mxu0
        %v2888 = vadd.f32 0.0, %v2887
        %v2889 = vpop.f32.mrb[0].mxu0
        %v2890 = vadd.f32 0.0, %v2889
        %2891 = vmatprep.mubr.f32.mxu0 0.0
        %2892 = vmatmul.mubr.f32.gmra.mrb[0].mxu0 %v2609
        %v2893 = vpop.f32.mrb[0].mxu0
        %v2894 = vadd.f32 0.0, %v2893
        %v2895 = vpop.f32.mrb[0].mxu0
        %v2896 = vadd.f32 0.0, %v2895
        %2897 = vmatprep.mubr.f32.mxu0 0.0
        %2898 = vmatmul.mubr.f32.gmra.mrb[0].mxu0 %v2611
        %v2899 = vpop.f32.mrb[0].mxu0
        %v2900 = vadd.f32 0.0, %v2899
        %v2901 = vpop.f32.mrb[0].mxu0
        %v2902 = vadd.f32 0.0, %v2901
        %2903 = vdwg.mxu0
        %2904 = vmatprep.subr.mxu0 %v2635
        %2905 = vmatpush1.msra.mxu0 %v2632
        %2906 = vmatprep.subr.mxu0 0.0
        %2907 = vmatpush1.msra.mxu0 0.0
        %2908 = vmatprep.subr.mxu0 0.0
        %2909 = vmatpush1.msra.mxu0 0.0
        %2910 = vmatprep.subr.mxu0 0.0
        %2911 = vmatpush1.msra.mxu0 0.0
        %2912 = vmatprep.subr.mxu0 0.0
        %2913 = vmatpush1.msra.mxu0 0.0
        %2914 = vmatprep.subr.mxu0 0.0
        %2915 = vmatpush1.msra.mxu0 0.0
        %2916 = vmatprep.subr.mxu0 0.0
        %2917 = vmatpush1.msra.mxu0 0.0
        %2918 = vmatprep.subr.mxu0 0.0
        %2919 = vmatpush1.msra.mxu0 0.0
        %2920 = vmatprep.subr.mxu0 0.0
        %2921 = vmatpush1.msra.mxu0 0.0
        %2922 = vmatprep.subr.mxu0 0.0
        %2923 = vmatpush1.msra.mxu0 0.0
        %2924 = vmatprep.subr.mxu0 0.0
        %2925 = vmatpush1.msra.mxu0 0.0
        %2926 = vmatprep.subr.mxu0 0.0
        %2927 = vmatpush1.msra.mxu0 0.0
        %2928 = vmatprep.subr.mxu0 0.0
        %2929 = vmatpush1.msra.mxu0 0.0
        %2930 = vmatprep.subr.mxu0 0.0
        %2931 = vmatpush1.msra.mxu0 0.0
        %2932 = vmatprep.subr.mxu0 0.0
        %2933 = vmatpush1.msra.mxu0 0.0
        %2934 = vmatprep.subr.mxu0 0.0
        %2935 = vmatpush1.msra.mxu0 0.0
        %2936 = vmatprep.subr.mxu0 0.0
        %2937 = vmatpush1.msra.mxu0 0.0
        %2938 = vmatprep.subr.mxu0 0.0
        %2939 = vmatpush1.msra.mxu0 0.0
        %2940 = vmatprep.subr.mxu0 0.0
        %2941 = vmatpush1.msra.mxu0 0.0
        %2942 = vmatprep.subr.mxu0 0.0
        %2943 = vmatpush1.msra.mxu0 0.0
        %2944 = vmatprep.subr.mxu0 0.0
        %2945 = vmatpush1.msra.mxu0 0.0
        %2946 = vmatprep.subr.mxu0 0.0
        %2947 = vmatpush1.msra.mxu0 0.0
        %2948 = vmatprep.subr.mxu0 0.0
        %2949 = vmatpush1.msra.mxu0 0.0
        %2950 = vmatprep.subr.mxu0 0.0
        %2951 = vmatpush1.msra.mxu0 0.0
        %2952 = vmatprep.subr.mxu0 0.0
        %2953 = vmatpush1.msra.mxu0 0.0
        %2954 = vmatprep.subr.mxu0 0.0
        %2955 = vmatpush1.msra.mxu0 0.0
        %2956 = vmatprep.subr.mxu0 0.0
        %2957 = vmatpush1.msra.mxu0 0.0
        %2958 = vmatprep.subr.mxu0 0.0
        %2959 = vmatpush1.msra.mxu0 0.0
        %2960 = vmatprep.subr.mxu0 0.0
        %2961 = vmatpush1.msra.mxu0 0.0
        %2962 = vmatprep.subr.mxu0 0.0
        %2963 = vmatpush1.msra.mxu0 0.0
        %2964 = vmatprep.subr.mxu0 0.0
        %2965 = vmatpush1.msra.mxu0 0.0
        %2966 = vmatprep.subr.mxu0 0.0
        %2967 = vmatpush1.msra.mxu0 0.0
        %2968 = vmatprep.mubr.f32.mxu0 0.0
        %2969 = vmatmul.mubr.f32.gmra.mrb[0].mxu0 %v2605
        %v2970 = vpop.f32.mrb[0].mxu0
        %v2971 = vadd.f32 0.0, %v2970
        %v2972 = vpop.f32.mrb[0].mxu0
        %v2973 = vadd.f32 0.0, %v2972
        %2974 = vmatprep.mubr.f32.mxu0 0.0
        %2975 = vmatmul.mubr.f32.gmra.mrb[0].mxu0 %v2607
        %v2976 = vpop.f32.mrb[0].mxu0
        %v2977 = vadd.f32 0.0, %v2976
        %v2978 = vpop.f32.mrb[0].mxu0
        %v2979 = vadd.f32 0.0, %v2978
        %2980 = vmatprep.mubr.f32.mxu0 0.0
        %2981 = vmatmul.mubr.f32.gmra.mrb[0].mxu0 %v2609
        %v2982 = vpop.f32.mrb[0].mxu0
        %v2983 = vadd.f32 0.0, %v2982
        %v2984 = vpop.f32.mrb[0].mxu0
        %v2985 = vadd.f32 0.0, %v2984
        %2986 = vmatprep.mubr.f32.mxu0 0.0
        %2987 = vmatmul.mubr.f32.gmra.mrb[0].mxu0 %v2611
        %v2988 = vpop.f32.mrb[0].mxu0
        %v2989 = vadd.f32 0.0, %v2988
        %v2990 = vpop.f32.mrb[0].mxu0
        %v2991 = vadd.f32 0.0, %v2990
        %2992 = vdwg.mxu0
        %v2993 = vadd.f32 %v2540, %v2704
        %v2994 = vadd.f32 %v2541, %v2706
        %v2995 = vadd.f32 %v2542, %v2793
        %v2996 = vadd.f32 %v2543, %v2795
        %v2997 = vadd.f32 %v2544, %v2882
        %v2998 = vadd.f32 %v2545, %v2884
        %v2999 = vadd.f32 %v2546, %v2971
        %v3000 = vadd.f32 %v2547, %v2973
        %v3001 = vadd.f32 %v2548, %v2710
        %v3002 = vadd.f32 %v2549, %v2712
        %v3003 = vadd.f32 %v2550, %v2799
        %v3004 = vadd.f32 %v2551, %v2801
        %v3005 = vadd.f32 %v2552, %v2888
        %v3006 = vadd.f32 %v2553, %v2890
        %v3007 = vadd.f32 %v2554, %v2977
        %v3008 = vadd.f32 %v2555, %v2979
        %v3009 = vadd.f32 %v2556, %v2716
        %v3010 = vadd.f32 %v2557, %v2718
        %v3011 = vadd.f32 %v2558, %v2805
        %v3012 = vadd.f32 %v2559, %v2807
        %v3013 = vadd.f32 %v2560, %v2894
        %v3014 = vadd.f32 %v2561, %v2896
        %v3015 = vadd.f32 %v2562, %v2983
        %v3016 = vadd.f32 %v2563, %v2985
        %v3017 = vadd.f32 %v2564, %v2722
        %v3018 = vadd.f32 %v2565, %v2724
        %v3019 = vadd.f32 %v2566, %v2811
        %v3020 = vadd.f32 %v2567, %v2813
        %v3021 = vadd.f32 %v2568, %v2900
        %v3022 = vadd.f32 %v2569, %v2902
        %v3023 = vadd.f32 %v2570, %v2989
        %v3024 = vadd.f32 %v2571, %v2991
        %3025 = vrot.lane.b32.xlu0 %v367, 126
        %v3026 = vpop.permute.xlu0 %3025
        %3027 = vrot.lane.b32.xlu0 %v371, 126
        %v3028 = vpop.permute.xlu0 %3027
        %3029 = vrot.lane.b32.xlu0 %v375, 126
        %v3030 = vpop.permute.xlu0 %3029
        %3031 = vrot.lane.b32.xlu0 %v379, 126
        %v3032 = vpop.permute.xlu0 %3031
        %3033 = vrot.lane.b32.xlu0 %v383, 126
        %v3034 = vpop.permute.xlu0 %3033
        %3035 = vrot.lane.b32.xlu0 %v387, 126
        %v3036 = vpop.permute.xlu0 %3035
        %3037 = vrot.lane.b32.xlu0 %v391, 126
        %v3038 = vpop.permute.xlu0 %3037
        %3039 = vrot.lane.b32.xlu0 %v395, 126
        %v3040 = vpop.permute.xlu0 %3039
        %vm3041 = vcmp.lt.s32.totalorder %v421, 126
        %v3042 = vsel %vm3041, %v3038, %v3040
        %v3043 = vsel %vm3041, %v3036, %v3038
        %v3044 = vsel %vm3041, %v3034, %v3036
        %v3045 = vsel %vm3041, %v3032, %v3034
        %v3046 = vsel %vm3041, %v3030, %v3032
        %v3047 = vsel %vm3041, %v3028, %v3030
        %v3048 = vsel %vm3041, %v3026, %v3028
        %v3049 = vsel %vm3041, %v3040, %v3026
        %3050 = vrot.lane.b32.xlu0 %v359, 122
        %v3051 = vpop.permute.xlu0 %3050
        %3052 = vrot.lane.b32.xlu0 %v360, 122
        %v3053 = vpop.permute.xlu0 %3052
        %3054 = vrot.lane.b32.xlu0 %v361, 122
        %v3055 = vpop.permute.xlu0 %3054
        %3056 = vrot.lane.b32.xlu0 %v362, 122
        %v3057 = vpop.permute.xlu0 %3056
        %v3058 = vsel %vm468, %v3051, 0
        %v3060 = vsel %vm468, %v3053, 0
        %v3062 = vsel %vm468, %v3055, 0
        %v3064 = vsel %vm468, %v3057, 0
        %v3067 = vsel %vm477, %v3048, 0
        %v3070 = vsel %vm477, %v3047, 0
        %v3073 = vsel %vm477, %v3046, 0
        %v3076 = vsel %vm477, %v3045, 0
        %v3079 = vsel %vm477, %v3044, 0
        %v3082 = vsel %vm477, %v3043, 0
        %v3085 = vsel %vm477, %v3042, 0
        %v3088 = vsel %vm477, %v3049, 0
        %3090 = vmatprep.subr.mxu0 %v3070
        %3091 = vmatpush1.msra.mxu0 %v3067
        %3092 = vmatprep.subr.mxu0 0.0
        %3093 = vmatpush1.msra.mxu0 0.0
        %3094 = vmatprep.subr.mxu0 0.0
        %3095 = vmatpush1.msra.mxu0 0.0
        %3096 = vmatprep.subr.mxu0 0.0
        %3097 = vmatpush1.msra.mxu0 0.0
        %3098 = vmatprep.subr.mxu0 0.0
        %3099 = vmatpush1.msra.mxu0 0.0
        %3100 = vmatprep.subr.mxu0 0.0
        %3101 = vmatpush1.msra.mxu0 0.0
        %3102 = vmatprep.subr.mxu0 0.0
        %3103 = vmatpush1.msra.mxu0 0.0
        %3104 = vmatprep.subr.mxu0 0.0
        %3105 = vmatpush1.msra.mxu0 0.0
        %3106 = vmatprep.subr.mxu0 0.0
        %3107 = vmatpush1.msra.mxu0 0.0
        %3108 = vmatprep.subr.mxu0 0.0
        %3109 = vmatpush1.msra.mxu0 0.0
        %3110 = vmatprep.subr.mxu0 0.0
        %3111 = vmatpush1.msra.mxu0 0.0
        %3112 = vmatprep.subr.mxu0 0.0
        %3113 = vmatpush1.msra.mxu0 0.0
        %3114 = vmatprep.subr.mxu0 0.0
        %3115 = vmatpush1.msra.mxu0 0.0
        %3116 = vmatprep.subr.mxu0 0.0
        %3117 = vmatpush1.msra.mxu0 0.0
        %3118 = vmatprep.subr.mxu0 0.0
        %3119 = vmatpush1.msra.mxu0 0.0
        %3120 = vmatprep.subr.mxu0 0.0
        %3121 = vmatpush1.msra.mxu0 0.0
        %3122 = vmatprep.subr.mxu0 0.0
        %3123 = vmatpush1.msra.mxu0 0.0
        %3124 = vmatprep.subr.mxu0 0.0
        %3125 = vmatpush1.msra.mxu0 0.0
        %3126 = vmatprep.subr.mxu0 0.0
        %3127 = vmatpush1.msra.mxu0 0.0
        %3128 = vmatprep.subr.mxu0 0.0
        %3129 = vmatpush1.msra.mxu0 0.0
        %3130 = vmatprep.subr.mxu0 0.0
        %3131 = vmatpush1.msra.mxu0 0.0
        %3132 = vmatprep.subr.mxu0 0.0
        %3133 = vmatpush1.msra.mxu0 0.0
        %3134 = vmatprep.subr.mxu0 0.0
        %3135 = vmatpush1.msra.mxu0 0.0
        %3136 = vmatprep.subr.mxu0 0.0
        %3137 = vmatpush1.msra.mxu0 0.0
        %3138 = vmatprep.subr.mxu0 0.0
        %3139 = vmatpush1.msra.mxu0 0.0
        %3140 = vmatprep.subr.mxu0 0.0
        %3141 = vmatpush1.msra.mxu0 0.0
        %3142 = vmatprep.subr.mxu0 0.0
        %3143 = vmatpush1.msra.mxu0 0.0
        %3144 = vmatprep.subr.mxu0 0.0
        %3145 = vmatpush1.msra.mxu0 0.0
        %3146 = vmatprep.subr.mxu0 0.0
        %3147 = vmatpush1.msra.mxu0 0.0
        %3148 = vmatprep.subr.mxu0 0.0
        %3149 = vmatpush1.msra.mxu0 0.0
        %3150 = vmatprep.subr.mxu0 0.0
        %3151 = vmatpush1.msra.mxu0 0.0
        %3152 = vmatprep.subr.mxu0 0.0
        %3153 = vmatpush1.msra.mxu0 0.0
        %3154 = vmatprep.mubr.f32.mxu0 0.0
        %3155 = vmatmul.mubr.f32.gmra.mrb[0].mxu0 %v3058
        %v3156 = vpop.f32.mrb[0].mxu0
        %v3157 = vadd.f32 0.0, %v3156
        %v3158 = vpop.f32.mrb[0].mxu0
        %v3159 = vadd.f32 0.0, %v3158
        %3160 = vmatprep.mubr.f32.mxu0 0.0
        %3161 = vmatmul.mubr.f32.gmra.mrb[0].mxu0 %v3060
        %v3162 = vpop.f32.mrb[0].mxu0
        %v3163 = vadd.f32 0.0, %v3162
        %v3164 = vpop.f32.mrb[0].mxu0
        %v3165 = vadd.f32 0.0, %v3164
        %3166 = vmatprep.mubr.f32.mxu0 0.0
        %3167 = vmatmul.mubr.f32.gmra.mrb[0].mxu0 %v3062
        %v3168 = vpop.f32.mrb[0].mxu0
        %v3169 = vadd.f32 0.0, %v3168
        %v3170 = vpop.f32.mrb[0].mxu0
        %v3171 = vadd.f32 0.0, %v3170
        %3172 = vmatprep.mubr.f32.mxu0 0.0
        %3173 = vmatmul.mubr.f32.gmra.mrb[0].mxu0 %v3064
        %v3174 = vpop.f32.mrb[0].mxu0
        %v3175 = vadd.f32 0.0, %v3174
        %v3176 = vpop.f32.mrb[0].mxu0
        %v3177 = vadd.f32 0.0, %v3176
        %3178 = vdwg.mxu0
        %3179 = vmatprep.subr.mxu0 %v3076
        %3180 = vmatpush1.msra.mxu0 %v3073
        %3181 = vmatprep.subr.mxu0 0.0
        %3182 = vmatpush1.msra.mxu0 0.0
        %3183 = vmatprep.subr.mxu0 0.0
        %3184 = vmatpush1.msra.mxu0 0.0
        %3185 = vmatprep.subr.mxu0 0.0
        %3186 = vmatpush1.msra.mxu0 0.0
        %3187 = vmatprep.subr.mxu0 0.0
        %3188 = vmatpush1.msra.mxu0 0.0
        %3189 = vmatprep.subr.mxu0 0.0
        %3190 = vmatpush1.msra.mxu0 0.0
        %3191 = vmatprep.subr.mxu0 0.0
        %3192 = vmatpush1.msra.mxu0 0.0
        %3193 = vmatprep.subr.mxu0 0.0
        %3194 = vmatpush1.msra.mxu0 0.0
        %3195 = vmatprep.subr.mxu0 0.0
        %3196 = vmatpush1.msra.mxu0 0.0
        %3197 = vmatprep.subr.mxu0 0.0
        %3198 = vmatpush1.msra.mxu0 0.0
        %3199 = vmatprep.subr.mxu0 0.0
        %3200 = vmatpush1.msra.mxu0 0.0
        %3201 = vmatprep.subr.mxu0 0.0
        %3202 = vmatpush1.msra.mxu0 0.0
        %3203 = vmatprep.subr.mxu0 0.0
        %3204 = vmatpush1.msra.mxu0 0.0
        %3205 = vmatprep.subr.mxu0 0.0
        %3206 = vmatpush1.msra.mxu0 0.0
        %3207 = vmatprep.subr.mxu0 0.0
        %3208 = vmatpush1.msra.mxu0 0.0
        %3209 = vmatprep.subr.mxu0 0.0
        %3210 = vmatpush1.msra.mxu0 0.0
        %3211 = vmatprep.subr.mxu0 0.0
        %3212 = vmatpush1.msra.mxu0 0.0
        %3213 = vmatprep.subr.mxu0 0.0
        %3214 = vmatpush1.msra.mxu0 0.0
        %3215 = vmatprep.subr.mxu0 0.0
        %3216 = vmatpush1.msra.mxu0 0.0
        %3217 = vmatprep.subr.mxu0 0.0
        %3218 = vmatpush1.msra.mxu0 0.0
        %3219 = vmatprep.subr.mxu0 0.0
        %3220 = vmatpush1.msra.mxu0 0.0
        %3221 = vmatprep.subr.mxu0 0.0
        %3222 = vmatpush1.msra.mxu0 0.0
        %3223 = vmatprep.subr.mxu0 0.0
        %3224 = vmatpush1.msra.mxu0 0.0
        %3225 = vmatprep.subr.mxu0 0.0
        %3226 = vmatpush1.msra.mxu0 0.0
        %3227 = vmatprep.subr.mxu0 0.0
        %3228 = vmatpush1.msra.mxu0 0.0
        %3229 = vmatprep.subr.mxu0 0.0
        %3230 = vmatpush1.msra.mxu0 0.0
        %3231 = vmatprep.subr.mxu0 0.0
        %3232 = vmatpush1.msra.mxu0 0.0
        %3233 = vmatprep.subr.mxu0 0.0
        %3234 = vmatpush1.msra.mxu0 0.0
        %3235 = vmatprep.subr.mxu0 0.0
        %3236 = vmatpush1.msra.mxu0 0.0
        %3237 = vmatprep.subr.mxu0 0.0
        %3238 = vmatpush1.msra.mxu0 0.0
        %3239 = vmatprep.subr.mxu0 0.0
        %3240 = vmatpush1.msra.mxu0 0.0
        %3241 = vmatprep.subr.mxu0 0.0
        %3242 = vmatpush1.msra.mxu0 0.0
        %3243 = vmatprep.mubr.f32.mxu0 0.0
        %3244 = vmatmul.mubr.f32.gmra.mrb[0].mxu0 %v3058
        %v3245 = vpop.f32.mrb[0].mxu0
        %v3246 = vadd.f32 0.0, %v3245
        %v3247 = vpop.f32.mrb[0].mxu0
        %v3248 = vadd.f32 0.0, %v3247
        %3249 = vmatprep.mubr.f32.mxu0 0.0
        %3250 = vmatmul.mubr.f32.gmra.mrb[0].mxu0 %v3060
        %v3251 = vpop.f32.mrb[0].mxu0
        %v3252 = vadd.f32 0.0, %v3251
        %v3253 = vpop.f32.mrb[0].mxu0
        %v3254 = vadd.f32 0.0, %v3253
        %3255 = vmatprep.mubr.f32.mxu0 0.0
        %3256 = vmatmul.mubr.f32.gmra.mrb[0].mxu0 %v3062
        %v3257 = vpop.f32.mrb[0].mxu0
        %v3258 = vadd.f32 0.0, %v3257
        %v3259 = vpop.f32.mrb[0].mxu0
        %v3260 = vadd.f32 0.0, %v3259
        %3261 = vmatprep.mubr.f32.mxu0 0.0
        %3262 = vmatmul.mubr.f32.gmra.mrb[0].mxu0 %v3064
        %v3263 = vpop.f32.mrb[0].mxu0
        %v3264 = vadd.f32 0.0, %v3263
        %v3265 = vpop.f32.mrb[0].mxu0
        %v3266 = vadd.f32 0.0, %v3265
        %3267 = vdwg.mxu0
        %3268 = vmatprep.subr.mxu0 %v3082
        %3269 = vmatpush1.msra.mxu0 %v3079
        %3270 = vmatprep.subr.mxu0 0.0
        %3271 = vmatpush1.msra.mxu0 0.0
        %3272 = vmatprep.subr.mxu0 0.0
        %3273 = vmatpush1.msra.mxu0 0.0
        %3274 = vmatprep.subr.mxu0 0.0
        %3275 = vmatpush1.msra.mxu0 0.0
        %3276 = vmatprep.subr.mxu0 0.0
        %3277 = vmatpush1.msra.mxu0 0.0
        %3278 = vmatprep.subr.mxu0 0.0
        %3279 = vmatpush1.msra.mxu0 0.0
        %3280 = vmatprep.subr.mxu0 0.0
        %3281 = vmatpush1.msra.mxu0 0.0
        %3282 = vmatprep.subr.mxu0 0.0
        %3283 = vmatpush1.msra.mxu0 0.0
        %3284 = vmatprep.subr.mxu0 0.0
        %3285 = vmatpush1.msra.mxu0 0.0
        %3286 = vmatprep.subr.mxu0 0.0
        %3287 = vmatpush1.msra.mxu0 0.0
        %3288 = vmatprep.subr.mxu0 0.0
        %3289 = vmatpush1.msra.mxu0 0.0
        %3290 = vmatprep.subr.mxu0 0.0
        %3291 = vmatpush1.msra.mxu0 0.0
        %3292 = vmatprep.subr.mxu0 0.0
        %3293 = vmatpush1.msra.mxu0 0.0
        %3294 = vmatprep.subr.mxu0 0.0
        %3295 = vmatpush1.msra.mxu0 0.0
        %3296 = vmatprep.subr.mxu0 0.0
        %3297 = vmatpush1.msra.mxu0 0.0
        %3298 = vmatprep.subr.mxu0 0.0
        %3299 = vmatpush1.msra.mxu0 0.0
        %3300 = vmatprep.subr.mxu0 0.0
        %3301 = vmatpush1.msra.mxu0 0.0
        %3302 = vmatprep.subr.mxu0 0.0
        %3303 = vmatpush1.msra.mxu0 0.0
        %3304 = vmatprep.subr.mxu0 0.0
        %3305 = vmatpush1.msra.mxu0 0.0
        %3306 = vmatprep.subr.mxu0 0.0
        %3307 = vmatpush1.msra.mxu0 0.0
        %3308 = vmatprep.subr.mxu0 0.0
        %3309 = vmatpush1.msra.mxu0 0.0
        %3310 = vmatprep.subr.mxu0 0.0
        %3311 = vmatpush1.msra.mxu0 0.0
        %3312 = vmatprep.subr.mxu0 0.0
        %3313 = vmatpush1.msra.mxu0 0.0
        %3314 = vmatprep.subr.mxu0 0.0
        %3315 = vmatpush1.msra.mxu0 0.0
        %3316 = vmatprep.subr.mxu0 0.0
        %3317 = vmatpush1.msra.mxu0 0.0
        %3318 = vmatprep.subr.mxu0 0.0
        %3319 = vmatpush1.msra.mxu0 0.0
        %3320 = vmatprep.subr.mxu0 0.0
        %3321 = vmatpush1.msra.mxu0 0.0
        %3322 = vmatprep.subr.mxu0 0.0
        %3323 = vmatpush1.msra.mxu0 0.0
        %3324 = vmatprep.subr.mxu0 0.0
        %3325 = vmatpush1.msra.mxu0 0.0
        %3326 = vmatprep.subr.mxu0 0.0
        %3327 = vmatpush1.msra.mxu0 0.0
        %3328 = vmatprep.subr.mxu0 0.0
        %3329 = vmatpush1.msra.mxu0 0.0
        %3330 = vmatprep.subr.mxu0 0.0
        %3331 = vmatpush1.msra.mxu0 0.0
        %3332 = vmatprep.mubr.f32.mxu0 0.0
        %3333 = vmatmul.mubr.f32.gmra.mrb[0].mxu0 %v3058
        %v3334 = vpop.f32.mrb[0].mxu0
        %v3335 = vadd.f32 0.0, %v3334
        %v3336 = vpop.f32.mrb[0].mxu0
        %v3337 = vadd.f32 0.0, %v3336
        %3338 = vmatprep.mubr.f32.mxu0 0.0
        %3339 = vmatmul.mubr.f32.gmra.mrb[0].mxu0 %v3060
        %v3340 = vpop.f32.mrb[0].mxu0
        %v3341 = vadd.f32 0.0, %v3340
        %v3342 = vpop.f32.mrb[0].mxu0
        %v3343 = vadd.f32 0.0, %v3342
        %3344 = vmatprep.mubr.f32.mxu0 0.0
        %3345 = vmatmul.mubr.f32.gmra.mrb[0].mxu0 %v3062
        %v3346 = vpop.f32.mrb[0].mxu0
        %v3347 = vadd.f32 0.0, %v3346
        %v3348 = vpop.f32.mrb[0].mxu0
        %v3349 = vadd.f32 0.0, %v3348
        %3350 = vmatprep.mubr.f32.mxu0 0.0
        %3351 = vmatmul.mubr.f32.gmra.mrb[0].mxu0 %v3064
        %v3352 = vpop.f32.mrb[0].mxu0
        %v3353 = vadd.f32 0.0, %v3352
        %v3354 = vpop.f32.mrb[0].mxu0
        %v3355 = vadd.f32 0.0, %v3354
        %3356 = vdwg.mxu0
        %3357 = vmatprep.subr.mxu0 %v3088
        %3358 = vmatpush1.msra.mxu0 %v3085
        %3359 = vmatprep.subr.mxu0 0.0
        %3360 = vmatpush1.msra.mxu0 0.0
        %3361 = vmatprep.subr.mxu0 0.0
        %3362 = vmatpush1.msra.mxu0 0.0
        %3363 = vmatprep.subr.mxu0 0.0
        %3364 = vmatpush1.msra.mxu0 0.0
        %3365 = vmatprep.subr.mxu0 0.0
        %3366 = vmatpush1.msra.mxu0 0.0
        %3367 = vmatprep.subr.mxu0 0.0
        %3368 = vmatpush1.msra.mxu0 0.0
        %3369 = vmatprep.subr.mxu0 0.0
        %3370 = vmatpush1.msra.mxu0 0.0
        %3371 = vmatprep.subr.mxu0 0.0
        %3372 = vmatpush1.msra.mxu0 0.0
        %3373 = vmatprep.subr.mxu0 0.0
        %3374 = vmatpush1.msra.mxu0 0.0
        %3375 = vmatprep.subr.mxu0 0.0
        %3376 = vmatpush1.msra.mxu0 0.0
        %3377 = vmatprep.subr.mxu0 0.0
        %3378 = vmatpush1.msra.mxu0 0.0
        %3379 = vmatprep.subr.mxu0 0.0
        %3380 = vmatpush1.msra.mxu0 0.0
        %3381 = vmatprep.subr.mxu0 0.0
        %3382 = vmatpush1.msra.mxu0 0.0
        %3383 = vmatprep.subr.mxu0 0.0
        %3384 = vmatpush1.msra.mxu0 0.0
        %3385 = vmatprep.subr.mxu0 0.0
        %3386 = vmatpush1.msra.mxu0 0.0
        %3387 = vmatprep.subr.mxu0 0.0
        %3388 = vmatpush1.msra.mxu0 0.0
        %3389 = vmatprep.subr.mxu0 0.0
        %3390 = vmatpush1.msra.mxu0 0.0
        %3391 = vmatprep.subr.mxu0 0.0
        %3392 = vmatpush1.msra.mxu0 0.0
        %3393 = vmatprep.subr.mxu0 0.0
        %3394 = vmatpush1.msra.mxu0 0.0
        %3395 = vmatprep.subr.mxu0 0.0
        %3396 = vmatpush1.msra.mxu0 0.0
        %3397 = vmatprep.subr.mxu0 0.0
        %3398 = vmatpush1.msra.mxu0 0.0
        %3399 = vmatprep.subr.mxu0 0.0
        %3400 = vmatpush1.msra.mxu0 0.0
        %3401 = vmatprep.subr.mxu0 0.0
        %3402 = vmatpush1.msra.mxu0 0.0
        %3403 = vmatprep.subr.mxu0 0.0
        %3404 = vmatpush1.msra.mxu0 0.0
        %3405 = vmatprep.subr.mxu0 0.0
        %3406 = vmatpush1.msra.mxu0 0.0
        %3407 = vmatprep.subr.mxu0 0.0
        %3408 = vmatpush1.msra.mxu0 0.0
        %3409 = vmatprep.subr.mxu0 0.0
        %3410 = vmatpush1.msra.mxu0 0.0
        %3411 = vmatprep.subr.mxu0 0.0
        %3412 = vmatpush1.msra.mxu0 0.0
        %3413 = vmatprep.subr.mxu0 0.0
        %3414 = vmatpush1.msra.mxu0 0.0
        %3415 = vmatprep.subr.mxu0 0.0
        %3416 = vmatpush1.msra.mxu0 0.0
        %3417 = vmatprep.subr.mxu0 0.0
        %3418 = vmatpush1.msra.mxu0 0.0
        %3419 = vmatprep.subr.mxu0 0.0
        %3420 = vmatpush1.msra.mxu0 0.0
        %3421 = vmatprep.mubr.f32.mxu0 0.0
        %3422 = vmatmul.mubr.f32.gmra.mrb[0].mxu0 %v3058
        %v3423 = vpop.f32.mrb[0].mxu0
        %v3424 = vadd.f32 0.0, %v3423
        %v3425 = vpop.f32.mrb[0].mxu0
        %v3426 = vadd.f32 0.0, %v3425
        %3427 = vmatprep.mubr.f32.mxu0 0.0
        %3428 = vmatmul.mubr.f32.gmra.mrb[0].mxu0 %v3060
        %v3429 = vpop.f32.mrb[0].mxu0
        %v3430 = vadd.f32 0.0, %v3429
        %v3431 = vpop.f32.mrb[0].mxu0
        %v3432 = vadd.f32 0.0, %v3431
        %3433 = vmatprep.mubr.f32.mxu0 0.0
        %3434 = vmatmul.mubr.f32.gmra.mrb[0].mxu0 %v3062
        %v3435 = vpop.f32.mrb[0].mxu0
        %v3436 = vadd.f32 0.0, %v3435
        %v3437 = vpop.f32.mrb[0].mxu0
        %v3438 = vadd.f32 0.0, %v3437
        %3439 = vmatprep.mubr.f32.mxu0 0.0
        %3440 = vmatmul.mubr.f32.gmra.mrb[0].mxu0 %v3064
        %v3441 = vpop.f32.mrb[0].mxu0
        %v3442 = vadd.f32 0.0, %v3441
        %v3443 = vpop.f32.mrb[0].mxu0
        %v3444 = vadd.f32 0.0, %v3443
        %3445 = vdwg.mxu0
        %v3446 = vadd.f32 %v2993, %v3157
        %v3447 = vadd.f32 %v2994, %v3159
        %v3448 = vadd.f32 %v2995, %v3246
        %v3449 = vadd.f32 %v2996, %v3248
        %v3450 = vadd.f32 %v2997, %v3335
        %v3451 = vadd.f32 %v2998, %v3337
        %v3452 = vadd.f32 %v2999, %v3424
        %v3453 = vadd.f32 %v3000, %v3426
        %v3454 = vadd.f32 %v3001, %v3163
        %v3455 = vadd.f32 %v3002, %v3165
        %v3456 = vadd.f32 %v3003, %v3252
        %v3457 = vadd.f32 %v3004, %v3254
        %v3458 = vadd.f32 %v3005, %v3341
        %v3459 = vadd.f32 %v3006, %v3343
        %v3460 = vadd.f32 %v3007, %v3430
        %v3461 = vadd.f32 %v3008, %v3432
        %v3462 = vadd.f32 %v3009, %v3169
        %v3463 = vadd.f32 %v3010, %v3171
        %v3464 = vadd.f32 %v3011, %v3258
        %v3465 = vadd.f32 %v3012, %v3260
        %v3466 = vadd.f32 %v3013, %v3347
        %v3467 = vadd.f32 %v3014, %v3349
        %v3468 = vadd.f32 %v3015, %v3436
        %v3469 = vadd.f32 %v3016, %v3438
        %v3470 = vadd.f32 %v3017, %v3175
        %v3471 = vadd.f32 %v3018, %v3177
        %v3472 = vadd.f32 %v3019, %v3264
        %v3473 = vadd.f32 %v3020, %v3266
        %v3474 = vadd.f32 %v3021, %v3353
        %v3475 = vadd.f32 %v3022, %v3355
        %v3476 = vadd.f32 %v3023, %v3442
        %v3477 = vadd.f32 %v3024, %v3444
        %3478 = vrot.lane.b32.xlu0 %v367, 125
        %v3479 = vpop.permute.xlu0 %3478
        %3480 = vrot.lane.b32.xlu0 %v371, 125
        %v3481 = vpop.permute.xlu0 %3480
        %3482 = vrot.lane.b32.xlu0 %v375, 125
        %v3483 = vpop.permute.xlu0 %3482
        %3484 = vrot.lane.b32.xlu0 %v379, 125
        %v3485 = vpop.permute.xlu0 %3484
        %3486 = vrot.lane.b32.xlu0 %v383, 125
        %v3487 = vpop.permute.xlu0 %3486
        %3488 = vrot.lane.b32.xlu0 %v387, 125
        %v3489 = vpop.permute.xlu0 %3488
        %3490 = vrot.lane.b32.xlu0 %v391, 125
        %v3491 = vpop.permute.xlu0 %3490
        %3492 = vrot.lane.b32.xlu0 %v395, 125
        %v3493 = vpop.permute.xlu0 %3492
        %vm3494 = vcmp.lt.s32.totalorder %v421, 125
        %v3495 = vsel %vm3494, %v3491, %v3493
        %v3496 = vsel %vm3494, %v3489, %v3491
        %v3497 = vsel %vm3494, %v3487, %v3489
        %v3498 = vsel %vm3494, %v3485, %v3487
        %v3499 = vsel %vm3494, %v3483, %v3485
        %v3500 = vsel %vm3494, %v3481, %v3483
        %v3501 = vsel %vm3494, %v3479, %v3481
        %v3502 = vsel %vm3494, %v3493, %v3479
        %3503 = vrot.lane.b32.xlu0 %v359, 121
        %v3504 = vpop.permute.xlu0 %3503
        %3505 = vrot.lane.b32.xlu0 %v360, 121
        %v3506 = vpop.permute.xlu0 %3505
        %3507 = vrot.lane.b32.xlu0 %v361, 121
        %v3508 = vpop.permute.xlu0 %3507
        %3509 = vrot.lane.b32.xlu0 %v362, 121
        %v3510 = vpop.permute.xlu0 %3509
        %v3511 = vsel %vm468, %v3504, 0
        %v3513 = vsel %vm468, %v3506, 0
        %v3515 = vsel %vm468, %v3508, 0
        %v3517 = vsel %vm468, %v3510, 0
        %v3520 = vsel %vm477, %v3501, 0
        %v3523 = vsel %vm477, %v3500, 0
        %v3526 = vsel %vm477, %v3499, 0
        %v3529 = vsel %vm477, %v3498, 0
        %v3532 = vsel %vm477, %v3497, 0
        %v3535 = vsel %vm477, %v3496, 0
        %v3538 = vsel %vm477, %v3495, 0
        %v3541 = vsel %vm477, %v3502, 0
        %3543 = vmatprep.subr.mxu0 %v3523
        %3544 = vmatpush1.msra.mxu0 %v3520
        %3545 = vmatprep.subr.mxu0 0.0
        %3546 = vmatpush1.msra.mxu0 0.0
        %3547 = vmatprep.subr.mxu0 0.0
        %3548 = vmatpush1.msra.mxu0 0.0
        %3549 = vmatprep.subr.mxu0 0.0
        %3550 = vmatpush1.msra.mxu0 0.0
        %3551 = vmatprep.subr.mxu0 0.0
        %3552 = vmatpush1.msra.mxu0 0.0
        %3553 = vmatprep.subr.mxu0 0.0
        %3554 = vmatpush1.msra.mxu0 0.0
        %3555 = vmatprep.subr.mxu0 0.0
        %3556 = vmatpush1.msra.mxu0 0.0
        %3557 = vmatprep.subr.mxu0 0.0
        %3558 = vmatpush1.msra.mxu0 0.0
        %3559 = vmatprep.subr.mxu0 0.0
        %3560 = vmatpush1.msra.mxu0 0.0
        %3561 = vmatprep.subr.mxu0 0.0
        %3562 = vmatpush1.msra.mxu0 0.0
        %3563 = vmatprep.subr.mxu0 0.0
        %3564 = vmatpush1.msra.mxu0 0.0
        %3565 = vmatprep.subr.mxu0 0.0
        %3566 = vmatpush1.msra.mxu0 0.0
        %3567 = vmatprep.subr.mxu0 0.0
        %3568 = vmatpush1.msra.mxu0 0.0
        %3569 = vmatprep.subr.mxu0 0.0
        %3570 = vmatpush1.msra.mxu0 0.0
        %3571 = vmatprep.subr.mxu0 0.0
        %3572 = vmatpush1.msra.mxu0 0.0
        %3573 = vmatprep.subr.mxu0 0.0
        %3574 = vmatpush1.msra.mxu0 0.0
        %3575 = vmatprep.subr.mxu0 0.0
        %3576 = vmatpush1.msra.mxu0 0.0
        %3577 = vmatprep.subr.mxu0 0.0
        %3578 = vmatpush1.msra.mxu0 0.0
        %3579 = vmatprep.subr.mxu0 0.0
        %3580 = vmatpush1.msra.mxu0 0.0
        %3581 = vmatprep.subr.mxu0 0.0
        %3582 = vmatpush1.msra.mxu0 0.0
        %3583 = vmatprep.subr.mxu0 0.0
        %3584 = vmatpush1.msra.mxu0 0.0
        %3585 = vmatprep.subr.mxu0 0.0
        %3586 = vmatpush1.msra.mxu0 0.0
        %3587 = vmatprep.subr.mxu0 0.0
        %3588 = vmatpush1.msra.mxu0 0.0
        %3589 = vmatprep.subr.mxu0 0.0
        %3590 = vmatpush1.msra.mxu0 0.0
        %3591 = vmatprep.subr.mxu0 0.0
        %3592 = vmatpush1.msra.mxu0 0.0
        %3593 = vmatprep.subr.mxu0 0.0
        %3594 = vmatpush1.msra.mxu0 0.0
        %3595 = vmatprep.subr.mxu0 0.0
        %3596 = vmatpush1.msra.mxu0 0.0
        %3597 = vmatprep.subr.mxu0 0.0
        %3598 = vmatpush1.msra.mxu0 0.0
        %3599 = vmatprep.subr.mxu0 0.0
        %3600 = vmatpush1.msra.mxu0 0.0
        %3601 = vmatprep.subr.mxu0 0.0
        %3602 = vmatpush1.msra.mxu0 0.0
        %3603 = vmatprep.subr.mxu0 0.0
        %3604 = vmatpush1.msra.mxu0 0.0
        %3605 = vmatprep.subr.mxu0 0.0
        %3606 = vmatpush1.msra.mxu0 0.0
        %3607 = vmatprep.mubr.f32.mxu0 0.0
        %3608 = vmatmul.mubr.f32.gmra.mrb[0].mxu0 %v3511
        %v3609 = vpop.f32.mrb[0].mxu0
        %v3610 = vadd.f32 0.0, %v3609
        %v3611 = vpop.f32.mrb[0].mxu0
        %v3612 = vadd.f32 0.0, %v3611
        %3613 = vmatprep.mubr.f32.mxu0 0.0
        %3614 = vmatmul.mubr.f32.gmra.mrb[0].mxu0 %v3513
        %v3615 = vpop.f32.mrb[0].mxu0
        %v3616 = vadd.f32 0.0, %v3615
        %v3617 = vpop.f32.mrb[0].mxu0
        %v3618 = vadd.f32 0.0, %v3617
        %3619 = vmatprep.mubr.f32.mxu0 0.0
        %3620 = vmatmul.mubr.f32.gmra.mrb[0].mxu0 %v3515
        %v3621 = vpop.f32.mrb[0].mxu0
        %v3622 = vadd.f32 0.0, %v3621
        %v3623 = vpop.f32.mrb[0].mxu0
        %v3624 = vadd.f32 0.0, %v3623
        %3625 = vmatprep.mubr.f32.mxu0 0.0
        %3626 = vmatmul.mubr.f32.gmra.mrb[0].mxu0 %v3517
        %v3627 = vpop.f32.mrb[0].mxu0
        %v3628 = vadd.f32 0.0, %v3627
        %v3629 = vpop.f32.mrb[0].mxu0
        %v3630 = vadd.f32 0.0, %v3629
        %3631 = vdwg.mxu0
        %3632 = vmatprep.subr.mxu0 %v3529
        %3633 = vmatpush1.msra.mxu0 %v3526
        %3634 = vmatprep.subr.mxu0 0.0
        %3635 = vmatpush1.msra.mxu0 0.0
        %3636 = vmatprep.subr.mxu0 0.0
        %3637 = vmatpush1.msra.mxu0 0.0
        %3638 = vmatprep.subr.mxu0 0.0
        %3639 = vmatpush1.msra.mxu0 0.0
        %3640 = vmatprep.subr.mxu0 0.0
        %3641 = vmatpush1.msra.mxu0 0.0
        %3642 = vmatprep.subr.mxu0 0.0
        %3643 = vmatpush1.msra.mxu0 0.0
        %3644 = vmatprep.subr.mxu0 0.0
        %3645 = vmatpush1.msra.mxu0 0.0
        %3646 = vmatprep.subr.mxu0 0.0
        %3647 = vmatpush1.msra.mxu0 0.0
        %3648 = vmatprep.subr.mxu0 0.0
        %3649 = vmatpush1.msra.mxu0 0.0
        %3650 = vmatprep.subr.mxu0 0.0
        %3651 = vmatpush1.msra.mxu0 0.0
        %3652 = vmatprep.subr.mxu0 0.0
        %3653 = vmatpush1.msra.mxu0 0.0
        %3654 = vmatprep.subr.mxu0 0.0
        %3655 = vmatpush1.msra.mxu0 0.0
        %3656 = vmatprep.subr.mxu0 0.0
        %3657 = vmatpush1.msra.mxu0 0.0
        %3658 = vmatprep.subr.mxu0 0.0
        %3659 = vmatpush1.msra.mxu0 0.0
        %3660 = vmatprep.subr.mxu0 0.0
        %3661 = vmatpush1.msra.mxu0 0.0
        %3662 = vmatprep.subr.mxu0 0.0
        %3663 = vmatpush1.msra.mxu0 0.0
        %3664 = vmatprep.subr.mxu0 0.0
        %3665 = vmatpush1.msra.mxu0 0.0
        %3666 = vmatprep.subr.mxu0 0.0
        %3667 = vmatpush1.msra.mxu0 0.0
        %3668 = vmatprep.subr.mxu0 0.0
        %3669 = vmatpush1.msra.mxu0 0.0
        %3670 = vmatprep.subr.mxu0 0.0
        %3671 = vmatpush1.msra.mxu0 0.0
        %3672 = vmatprep.subr.mxu0 0.0
        %3673 = vmatpush1.msra.mxu0 0.0
        %3674 = vmatprep.subr.mxu0 0.0
        %3675 = vmatpush1.msra.mxu0 0.0
        %3676 = vmatprep.subr.mxu0 0.0
        %3677 = vmatpush1.msra.mxu0 0.0
        %3678 = vmatprep.subr.mxu0 0.0
        %3679 = vmatpush1.msra.mxu0 0.0
        %3680 = vmatprep.subr.mxu0 0.0
        %3681 = vmatpush1.msra.mxu0 0.0
        %3682 = vmatprep.subr.mxu0 0.0
        %3683 = vmatpush1.msra.mxu0 0.0
        %3684 = vmatprep.subr.mxu0 0.0
        %3685 = vmatpush1.msra.mxu0 0.0
        %3686 = vmatprep.subr.mxu0 0.0
        %3687 = vmatpush1.msra.mxu0 0.0
        %3688 = vmatprep.subr.mxu0 0.0
        %3689 = vmatpush1.msra.mxu0 0.0
        %3690 = vmatprep.subr.mxu0 0.0
        %3691 = vmatpush1.msra.mxu0 0.0
        %3692 = vmatprep.subr.mxu0 0.0
        %3693 = vmatpush1.msra.mxu0 0.0
        %3694 = vmatprep.subr.mxu0 0.0
        %3695 = vmatpush1.msra.mxu0 0.0
        %3696 = vmatprep.mubr.f32.mxu0 0.0
        %3697 = vmatmul.mubr.f32.gmra.mrb[0].mxu0 %v3511
        %v3698 = vpop.f32.mrb[0].mxu0
        %v3699 = vadd.f32 0.0, %v3698
        %v3700 = vpop.f32.mrb[0].mxu0
        %v3701 = vadd.f32 0.0, %v3700
        %3702 = vmatprep.mubr.f32.mxu0 0.0
        %3703 = vmatmul.mubr.f32.gmra.mrb[0].mxu0 %v3513
        %v3704 = vpop.f32.mrb[0].mxu0
        %v3705 = vadd.f32 0.0, %v3704
        %v3706 = vpop.f32.mrb[0].mxu0
        %v3707 = vadd.f32 0.0, %v3706
        %3708 = vmatprep.mubr.f32.mxu0 0.0
        %3709 = vmatmul.mubr.f32.gmra.mrb[0].mxu0 %v3515
        %v3710 = vpop.f32.mrb[0].mxu0
        %v3711 = vadd.f32 0.0, %v3710
        %v3712 = vpop.f32.mrb[0].mxu0
        %v3713 = vadd.f32 0.0, %v3712
        %3714 = vmatprep.mubr.f32.mxu0 0.0
        %3715 = vmatmul.mubr.f32.gmra.mrb[0].mxu0 %v3517
        %v3716 = vpop.f32.mrb[0].mxu0
        %v3717 = vadd.f32 0.0, %v3716
        %v3718 = vpop.f32.mrb[0].mxu0
        %v3719 = vadd.f32 0.0, %v3718
        %3720 = vdwg.mxu0
        %3721 = vmatprep.subr.mxu0 %v3535
        %3722 = vmatpush1.msra.mxu0 %v3532
        %3723 = vmatprep.subr.mxu0 0.0
        %3724 = vmatpush1.msra.mxu0 0.0
        %3725 = vmatprep.subr.mxu0 0.0
        %3726 = vmatpush1.msra.mxu0 0.0
        %3727 = vmatprep.subr.mxu0 0.0
        %3728 = vmatpush1.msra.mxu0 0.0
        %3729 = vmatprep.subr.mxu0 0.0
        %3730 = vmatpush1.msra.mxu0 0.0
        %3731 = vmatprep.subr.mxu0 0.0
        %3732 = vmatpush1.msra.mxu0 0.0
        %3733 = vmatprep.subr.mxu0 0.0
        %3734 = vmatpush1.msra.mxu0 0.0
        %3735 = vmatprep.subr.mxu0 0.0
        %3736 = vmatpush1.msra.mxu0 0.0
        %3737 = vmatprep.subr.mxu0 0.0
        %3738 = vmatpush1.msra.mxu0 0.0
        %3739 = vmatprep.subr.mxu0 0.0
        %3740 = vmatpush1.msra.mxu0 0.0
        %3741 = vmatprep.subr.mxu0 0.0
        %3742 = vmatpush1.msra.mxu0 0.0
        %3743 = vmatprep.subr.mxu0 0.0
        %3744 = vmatpush1.msra.mxu0 0.0
        %3745 = vmatprep.subr.mxu0 0.0
        %3746 = vmatpush1.msra.mxu0 0.0
        %3747 = vmatprep.subr.mxu0 0.0
        %3748 = vmatpush1.msra.mxu0 0.0
        %3749 = vmatprep.subr.mxu0 0.0
        %3750 = vmatpush1.msra.mxu0 0.0
        %3751 = vmatprep.subr.mxu0 0.0
        %3752 = vmatpush1.msra.mxu0 0.0
        %3753 = vmatprep.subr.mxu0 0.0
        %3754 = vmatpush1.msra.mxu0 0.0
        %3755 = vmatprep.subr.mxu0 0.0
        %3756 = vmatpush1.msra.mxu0 0.0
        %3757 = vmatprep.subr.mxu0 0.0
        %3758 = vmatpush1.msra.mxu0 0.0
        %3759 = vmatprep.subr.mxu0 0.0
        %3760 = vmatpush1.msra.mxu0 0.0
        %3761 = vmatprep.subr.mxu0 0.0
        %3762 = vmatpush1.msra.mxu0 0.0
        %3763 = vmatprep.subr.mxu0 0.0
        %3764 = vmatpush1.msra.mxu0 0.0
        %3765 = vmatprep.subr.mxu0 0.0
        %3766 = vmatpush1.msra.mxu0 0.0
        %3767 = vmatprep.subr.mxu0 0.0
        %3768 = vmatpush1.msra.mxu0 0.0
        %3769 = vmatprep.subr.mxu0 0.0
        %3770 = vmatpush1.msra.mxu0 0.0
        %3771 = vmatprep.subr.mxu0 0.0
        %3772 = vmatpush1.msra.mxu0 0.0
        %3773 = vmatprep.subr.mxu0 0.0
        %3774 = vmatpush1.msra.mxu0 0.0
        %3775 = vmatprep.subr.mxu0 0.0
        %3776 = vmatpush1.msra.mxu0 0.0
        %3777 = vmatprep.subr.mxu0 0.0
        %3778 = vmatpush1.msra.mxu0 0.0
        %3779 = vmatprep.subr.mxu0 0.0
        %3780 = vmatpush1.msra.mxu0 0.0
        %3781 = vmatprep.subr.mxu0 0.0
        %3782 = vmatpush1.msra.mxu0 0.0
        %3783 = vmatprep.subr.mxu0 0.0
        %3784 = vmatpush1.msra.mxu0 0.0
        %3785 = vmatprep.mubr.f32.mxu0 0.0
        %3786 = vmatmul.mubr.f32.gmra.mrb[0].mxu0 %v3511
        %v3787 = vpop.f32.mrb[0].mxu0
        %v3788 = vadd.f32 0.0, %v3787
        %v3789 = vpop.f32.mrb[0].mxu0
        %v3790 = vadd.f32 0.0, %v3789
        %3791 = vmatprep.mubr.f32.mxu0 0.0
        %3792 = vmatmul.mubr.f32.gmra.mrb[0].mxu0 %v3513
        %v3793 = vpop.f32.mrb[0].mxu0
        %v3794 = vadd.f32 0.0, %v3793
        %v3795 = vpop.f32.mrb[0].mxu0
        %v3796 = vadd.f32 0.0, %v3795
        %3797 = vmatprep.mubr.f32.mxu0 0.0
        %3798 = vmatmul.mubr.f32.gmra.mrb[0].mxu0 %v3515
        %v3799 = vpop.f32.mrb[0].mxu0
        %v3800 = vadd.f32 0.0, %v3799
        %v3801 = vpop.f32.mrb[0].mxu0
        %v3802 = vadd.f32 0.0, %v3801
        %3803 = vmatprep.mubr.f32.mxu0 0.0
        %3804 = vmatmul.mubr.f32.gmra.mrb[0].mxu0 %v3517
        %v3805 = vpop.f32.mrb[0].mxu0
        %v3806 = vadd.f32 0.0, %v3805
        %v3807 = vpop.f32.mrb[0].mxu0
        %v3808 = vadd.f32 0.0, %v3807
        %3809 = vdwg.mxu0
        %3810 = vmatprep.subr.mxu0 %v3541
        %3811 = vmatpush1.msra.mxu0 %v3538
        %3812 = vmatprep.subr.mxu0 0.0
        %3813 = vmatpush1.msra.mxu0 0.0
        %3814 = vmatprep.subr.mxu0 0.0
        %3815 = vmatpush1.msra.mxu0 0.0
        %3816 = vmatprep.subr.mxu0 0.0
        %3817 = vmatpush1.msra.mxu0 0.0
        %3818 = vmatprep.subr.mxu0 0.0
        %3819 = vmatpush1.msra.mxu0 0.0
        %3820 = vmatprep.subr.mxu0 0.0
        %3821 = vmatpush1.msra.mxu0 0.0
        %3822 = vmatprep.subr.mxu0 0.0
        %3823 = vmatpush1.msra.mxu0 0.0
        %3824 = vmatprep.subr.mxu0 0.0
        %3825 = vmatpush1.msra.mxu0 0.0
        %3826 = vmatprep.subr.mxu0 0.0
        %3827 = vmatpush1.msra.mxu0 0.0
        %3828 = vmatprep.subr.mxu0 0.0
        %3829 = vmatpush1.msra.mxu0 0.0
        %3830 = vmatprep.subr.mxu0 0.0
        %3831 = vmatpush1.msra.mxu0 0.0
        %3832 = vmatprep.subr.mxu0 0.0
        %3833 = vmatpush1.msra.mxu0 0.0
        %3834 = vmatprep.subr.mxu0 0.0
        %3835 = vmatpush1.msra.mxu0 0.0
        %3836 = vmatprep.subr.mxu0 0.0
        %3837 = vmatpush1.msra.mxu0 0.0
        %3838 = vmatprep.subr.mxu0 0.0
        %3839 = vmatpush1.msra.mxu0 0.0
        %3840 = vmatprep.subr.mxu0 0.0
        %3841 = vmatpush1.msra.mxu0 0.0
        %3842 = vmatprep.subr.mxu0 0.0
        %3843 = vmatpush1.msra.mxu0 0.0
        %3844 = vmatprep.subr.mxu0 0.0
        %3845 = vmatpush1.msra.mxu0 0.0
        %3846 = vmatprep.subr.mxu0 0.0
        %3847 = vmatpush1.msra.mxu0 0.0
        %3848 = vmatprep.subr.mxu0 0.0
        %3849 = vmatpush1.msra.mxu0 0.0
        %3850 = vmatprep.subr.mxu0 0.0
        %3851 = vmatpush1.msra.mxu0 0.0
        %3852 = vmatprep.subr.mxu0 0.0
        %3853 = vmatpush1.msra.mxu0 0.0
        %3854 = vmatprep.subr.mxu0 0.0
        %3855 = vmatpush1.msra.mxu0 0.0
        %3856 = vmatprep.subr.mxu0 0.0
        %3857 = vmatpush1.msra.mxu0 0.0
        %3858 = vmatprep.subr.mxu0 0.0
        %3859 = vmatpush1.msra.mxu0 0.0
        %3860 = vmatprep.subr.mxu0 0.0
        %3861 = vmatpush1.msra.mxu0 0.0
        %3862 = vmatprep.subr.mxu0 0.0
        %3863 = vmatpush1.msra.mxu0 0.0
        %3864 = vmatprep.subr.mxu0 0.0
        %3865 = vmatpush1.msra.mxu0 0.0
        %3866 = vmatprep.subr.mxu0 0.0
        %3867 = vmatpush1.msra.mxu0 0.0
        %3868 = vmatprep.subr.mxu0 0.0
        %3869 = vmatpush1.msra.mxu0 0.0
        %3870 = vmatprep.subr.mxu0 0.0
        %3871 = vmatpush1.msra.mxu0 0.0
        %3872 = vmatprep.subr.mxu0 0.0
        %3873 = vmatpush1.msra.mxu0 0.0
        %3874 = vmatprep.mubr.f32.mxu0 0.0
        %3875 = vmatmul.mubr.f32.gmra.mrb[0].mxu0 %v3511
        %v3876 = vpop.f32.mrb[0].mxu0
        %v3877 = vadd.f32 0.0, %v3876
        %v3878 = vpop.f32.mrb[0].mxu0
        %v3879 = vadd.f32 0.0, %v3878
        %3880 = vmatprep.mubr.f32.mxu0 0.0
        %3881 = vmatmul.mubr.f32.gmra.mrb[0].mxu0 %v3513
        %v3882 = vpop.f32.mrb[0].mxu0
        %v3883 = vadd.f32 0.0, %v3882
        %v3884 = vpop.f32.mrb[0].mxu0
        %v3885 = vadd.f32 0.0, %v3884
        %3886 = vmatprep.mubr.f32.mxu0 0.0
        %3887 = vmatmul.mubr.f32.gmra.mrb[0].mxu0 %v3515
        %v3888 = vpop.f32.mrb[0].mxu0
        %v3889 = vadd.f32 0.0, %v3888
        %v3890 = vpop.f32.mrb[0].mxu0
        %v3891 = vadd.f32 0.0, %v3890
        %3892 = vmatprep.mubr.f32.mxu0 0.0
        %3893 = vmatmul.mubr.f32.gmra.mrb[0].mxu0 %v3517
        %v3894 = vpop.f32.mrb[0].mxu0
        %v3895 = vadd.f32 0.0, %v3894
        %v3896 = vpop.f32.mrb[0].mxu0
        %v3897 = vadd.f32 0.0, %v3896
        %3898 = vdwg.mxu0
        %v3899 = vadd.f32 %v3446, %v3610
        %v3900 = vadd.f32 %v3447, %v3612
        %v3901 = vadd.f32 %v3448, %v3699
        %v3902 = vadd.f32 %v3449, %v3701
        %v3903 = vadd.f32 %v3450, %v3788
        %v3904 = vadd.f32 %v3451, %v3790
        %v3905 = vadd.f32 %v3452, %v3877
        %v3906 = vadd.f32 %v3453, %v3879
        %v3907 = vadd.f32 %v3454, %v3616
        %v3908 = vadd.f32 %v3455, %v3618
        %v3909 = vadd.f32 %v3456, %v3705
        %v3910 = vadd.f32 %v3457, %v3707
        %v3911 = vadd.f32 %v3458, %v3794
        %v3912 = vadd.f32 %v3459, %v3796
        %v3913 = vadd.f32 %v3460, %v3883
        %v3914 = vadd.f32 %v3461, %v3885
        %v3915 = vadd.f32 %v3462, %v3622
        %v3916 = vadd.f32 %v3463, %v3624
        %v3917 = vadd.f32 %v3464, %v3711
        %v3918 = vadd.f32 %v3465, %v3713
        %v3919 = vadd.f32 %v3466, %v3800
        %v3920 = vadd.f32 %v3467, %v3802
        %v3921 = vadd.f32 %v3468, %v3889
        %v3922 = vadd.f32 %v3469, %v3891
        %v3923 = vadd.f32 %v3470, %v3628
        %v3924 = vadd.f32 %v3471, %v3630
        %v3925 = vadd.f32 %v3472, %v3717
        %v3926 = vadd.f32 %v3473, %v3719
        %v3927 = vadd.f32 %v3474, %v3806
        %v3928 = vadd.f32 %v3475, %v3808
        %v3929 = vadd.f32 %v3476, %v3895
        %v3930 = vadd.f32 %v3477, %v3897
        %3931 = vrot.lane.b32.xlu0 %v367, 124
        %v3932 = vpop.permute.xlu0 %3931
        %3933 = vrot.lane.b32.xlu0 %v371, 124
        %v3934 = vpop.permute.xlu0 %3933
        %3935 = vrot.lane.b32.xlu0 %v375, 124
        %v3936 = vpop.permute.xlu0 %3935
        %3937 = vrot.lane.b32.xlu0 %v379, 124
        %v3938 = vpop.permute.xlu0 %3937
        %3939 = vrot.lane.b32.xlu0 %v383, 124
        %v3940 = vpop.permute.xlu0 %3939
        %3941 = vrot.lane.b32.xlu0 %v387, 124
        %v3942 = vpop.permute.xlu0 %3941
        %3943 = vrot.lane.b32.xlu0 %v391, 124
        %v3944 = vpop.permute.xlu0 %3943
        %3945 = vrot.lane.b32.xlu0 %v395, 124
        %v3946 = vpop.permute.xlu0 %3945
        %vm3947 = vcmp.lt.s32.totalorder %v421, 124
        %v3948 = vsel %vm3947, %v3944, %v3946
        %v3949 = vsel %vm3947, %v3942, %v3944
        %v3950 = vsel %vm3947, %v3940, %v3942
        %v3951 = vsel %vm3947, %v3938, %v3940
        %v3952 = vsel %vm3947, %v3936, %v3938
        %v3953 = vsel %vm3947, %v3934, %v3936
        %v3954 = vsel %vm3947, %v3932, %v3934
        %v3955 = vsel %vm3947, %v3946, %v3932
        %3956 = vrot.lane.b32.xlu0 %v359, 120
        %v3957 = vpop.permute.xlu0 %3956
        %3958 = vrot.lane.b32.xlu0 %v360, 120
        %v3959 = vpop.permute.xlu0 %3958
        %3960 = vrot.lane.b32.xlu0 %v361, 120
        %v3961 = vpop.permute.xlu0 %3960
        %3962 = vrot.lane.b32.xlu0 %v362, 120
        %v3963 = vpop.permute.xlu0 %3962
        %v3964 = vsel %vm468, %v3957, 0
        %v3966 = vsel %vm468, %v3959, 0
        %v3968 = vsel %vm468, %v3961, 0
        %v3970 = vsel %vm468, %v3963, 0
        %v3973 = vsel %vm477, %v3954, 0
        %v3976 = vsel %vm477, %v3953, 0
        %v3979 = vsel %vm477, %v3952, 0
        %v3982 = vsel %vm477, %v3951, 0
        %v3985 = vsel %vm477, %v3950, 0
        %v3988 = vsel %vm477, %v3949, 0
        %v3991 = vsel %vm477, %v3948, 0
        %v3994 = vsel %vm477, %v3955, 0
        %3996 = vmatprep.subr.mxu0 %v3976
        %3997 = vmatpush1.msra.mxu0 %v3973
        %3998 = vmatprep.subr.mxu0 0.0
        %3999 = vmatpush1.msra.mxu0 0.0
        %4000 = vmatprep.subr.mxu0 0.0
        %4001 = vmatpush1.msra.mxu0 0.0
        %4002 = vmatprep.subr.mxu0 0.0
        %4003 = vmatpush1.msra.mxu0 0.0
        %4004 = vmatprep.subr.mxu0 0.0
        %4005 = vmatpush1.msra.mxu0 0.0
        %4006 = vmatprep.subr.mxu0 0.0
        %4007 = vmatpush1.msra.mxu0 0.0
        %4008 = vmatprep.subr.mxu0 0.0
        %4009 = vmatpush1.msra.mxu0 0.0
        %4010 = vmatprep.subr.mxu0 0.0
        %4011 = vmatpush1.msra.mxu0 0.0
        %4012 = vmatprep.subr.mxu0 0.0
        %4013 = vmatpush1.msra.mxu0 0.0
        %4014 = vmatprep.subr.mxu0 0.0
        %4015 = vmatpush1.msra.mxu0 0.0
        %4016 = vmatprep.subr.mxu0 0.0
        %4017 = vmatpush1.msra.mxu0 0.0
        %4018 = vmatprep.subr.mxu0 0.0
        %4019 = vmatpush1.msra.mxu0 0.0
        %4020 = vmatprep.subr.mxu0 0.0
        %4021 = vmatpush1.msra.mxu0 0.0
        %4022 = vmatprep.subr.mxu0 0.0
        %4023 = vmatpush1.msra.mxu0 0.0
        %4024 = vmatprep.subr.mxu0 0.0
        %4025 = vmatpush1.msra.mxu0 0.0
        %4026 = vmatprep.subr.mxu0 0.0
        %4027 = vmatpush1.msra.mxu0 0.0
        %4028 = vmatprep.subr.mxu0 0.0
        %4029 = vmatpush1.msra.mxu0 0.0
        %4030 = vmatprep.subr.mxu0 0.0
        %4031 = vmatpush1.msra.mxu0 0.0
        %4032 = vmatprep.subr.mxu0 0.0
        %4033 = vmatpush1.msra.mxu0 0.0
        %4034 = vmatprep.subr.mxu0 0.0
        %4035 = vmatpush1.msra.mxu0 0.0
        %4036 = vmatprep.subr.mxu0 0.0
        %4037 = vmatpush1.msra.mxu0 0.0
        %4038 = vmatprep.subr.mxu0 0.0
        %4039 = vmatpush1.msra.mxu0 0.0
        %4040 = vmatprep.subr.mxu0 0.0
        %4041 = vmatpush1.msra.mxu0 0.0
        %4042 = vmatprep.subr.mxu0 0.0
        %4043 = vmatpush1.msra.mxu0 0.0
        %4044 = vmatprep.subr.mxu0 0.0
        %4045 = vmatpush1.msra.mxu0 0.0
        %4046 = vmatprep.subr.mxu0 0.0
        %4047 = vmatpush1.msra.mxu0 0.0
        %4048 = vmatprep.subr.mxu0 0.0
        %4049 = vmatpush1.msra.mxu0 0.0
        %4050 = vmatprep.subr.mxu0 0.0
        %4051 = vmatpush1.msra.mxu0 0.0
        %4052 = vmatprep.subr.mxu0 0.0
        %4053 = vmatpush1.msra.mxu0 0.0
        %4054 = vmatprep.subr.mxu0 0.0
        %4055 = vmatpush1.msra.mxu0 0.0
        %4056 = vmatprep.subr.mxu0 0.0
        %4057 = vmatpush1.msra.mxu0 0.0
        %4058 = vmatprep.subr.mxu0 0.0
        %4059 = vmatpush1.msra.mxu0 0.0
        %4060 = vmatprep.mubr.f32.mxu0 0.0
        %4061 = vmatmul.mubr.f32.gmra.mrb[0].mxu0 %v3964
        %v4062 = vpop.f32.mrb[0].mxu0
        %v4063 = vadd.f32 0.0, %v4062
        %v4064 = vpop.f32.mrb[0].mxu0
        %v4065 = vadd.f32 0.0, %v4064
        %4066 = vmatprep.mubr.f32.mxu0 0.0
        %4067 = vmatmul.mubr.f32.gmra.mrb[0].mxu0 %v3966
        %v4068 = vpop.f32.mrb[0].mxu0
        %v4069 = vadd.f32 0.0, %v4068
        %v4070 = vpop.f32.mrb[0].mxu0
        %v4071 = vadd.f32 0.0, %v4070
        %4072 = vmatprep.mubr.f32.mxu0 0.0
        %4073 = vmatmul.mubr.f32.gmra.mrb[0].mxu0 %v3968
        %v4074 = vpop.f32.mrb[0].mxu0
        %v4075 = vadd.f32 0.0, %v4074
        %v4076 = vpop.f32.mrb[0].mxu0
        %v4077 = vadd.f32 0.0, %v4076
        %4078 = vmatprep.mubr.f32.mxu0 0.0
        %4079 = vmatmul.mubr.f32.gmra.mrb[0].mxu0 %v3970
        %v4080 = vpop.f32.mrb[0].mxu0
        %v4081 = vadd.f32 0.0, %v4080
        %v4082 = vpop.f32.mrb[0].mxu0
        %v4083 = vadd.f32 0.0, %v4082
        %4084 = vdwg.mxu0
        %4085 = vmatprep.subr.mxu0 %v3982
        %4086 = vmatpush1.msra.mxu0 %v3979
        %4087 = vmatprep.subr.mxu0 0.0
        %4088 = vmatpush1.msra.mxu0 0.0
        %4089 = vmatprep.subr.mxu0 0.0
        %4090 = vmatpush1.msra.mxu0 0.0
        %4091 = vmatprep.subr.mxu0 0.0
        %4092 = vmatpush1.msra.mxu0 0.0
        %4093 = vmatprep.subr.mxu0 0.0
        %4094 = vmatpush1.msra.mxu0 0.0
        %4095 = vmatprep.subr.mxu0 0.0
        %4096 = vmatpush1.msra.mxu0 0.0
        %4097 = vmatprep.subr.mxu0 0.0
        %4098 = vmatpush1.msra.mxu0 0.0
        %4099 = vmatprep.subr.mxu0 0.0
        %4100 = vmatpush1.msra.mxu0 0.0
        %4101 = vmatprep.subr.mxu0 0.0
        %4102 = vmatpush1.msra.mxu0 0.0
        %4103 = vmatprep.subr.mxu0 0.0
        %4104 = vmatpush1.msra.mxu0 0.0
        %4105 = vmatprep.subr.mxu0 0.0
        %4106 = vmatpush1.msra.mxu0 0.0
        %4107 = vmatprep.subr.mxu0 0.0
        %4108 = vmatpush1.msra.mxu0 0.0
        %4109 = vmatprep.subr.mxu0 0.0
        %4110 = vmatpush1.msra.mxu0 0.0
        %4111 = vmatprep.subr.mxu0 0.0
        %4112 = vmatpush1.msra.mxu0 0.0
        %4113 = vmatprep.subr.mxu0 0.0
        %4114 = vmatpush1.msra.mxu0 0.0
        %4115 = vmatprep.subr.mxu0 0.0
        %4116 = vmatpush1.msra.mxu0 0.0
        %4117 = vmatprep.subr.mxu0 0.0
        %4118 = vmatpush1.msra.mxu0 0.0
        %4119 = vmatprep.subr.mxu0 0.0
        %4120 = vmatpush1.msra.mxu0 0.0
        %4121 = vmatprep.subr.mxu0 0.0
        %4122 = vmatpush1.msra.mxu0 0.0
        %4123 = vmatprep.subr.mxu0 0.0
        %4124 = vmatpush1.msra.mxu0 0.0
        %4125 = vmatprep.subr.mxu0 0.0
        %4126 = vmatpush1.msra.mxu0 0.0
        %4127 = vmatprep.subr.mxu0 0.0
        %4128 = vmatpush1.msra.mxu0 0.0
        %4129 = vmatprep.subr.mxu0 0.0
        %4130 = vmatpush1.msra.mxu0 0.0
        %4131 = vmatprep.subr.mxu0 0.0
        %4132 = vmatpush1.msra.mxu0 0.0
        %4133 = vmatprep.subr.mxu0 0.0
        %4134 = vmatpush1.msra.mxu0 0.0
        %4135 = vmatprep.subr.mxu0 0.0
        %4136 = vmatpush1.msra.mxu0 0.0
        %4137 = vmatprep.subr.mxu0 0.0
        %4138 = vmatpush1.msra.mxu0 0.0
        %4139 = vmatprep.subr.mxu0 0.0
        %4140 = vmatpush1.msra.mxu0 0.0
        %4141 = vmatprep.subr.mxu0 0.0
        %4142 = vmatpush1.msra.mxu0 0.0
        %4143 = vmatprep.subr.mxu0 0.0
        %4144 = vmatpush1.msra.mxu0 0.0
        %4145 = vmatprep.subr.mxu0 0.0
        %4146 = vmatpush1.msra.mxu0 0.0
        %4147 = vmatprep.subr.mxu0 0.0
        %4148 = vmatpush1.msra.mxu0 0.0
        %4149 = vmatprep.mubr.f32.mxu0 0.0
        %4150 = vmatmul.mubr.f32.gmra.mrb[0].mxu0 %v3964
        %v4151 = vpop.f32.mrb[0].mxu0
        %v4152 = vadd.f32 0.0, %v4151
        %v4153 = vpop.f32.mrb[0].mxu0
        %v4154 = vadd.f32 0.0, %v4153
        %4155 = vmatprep.mubr.f32.mxu0 0.0
        %4156 = vmatmul.mubr.f32.gmra.mrb[0].mxu0 %v3966
        %v4157 = vpop.f32.mrb[0].mxu0
        %v4158 = vadd.f32 0.0, %v4157
        %v4159 = vpop.f32.mrb[0].mxu0
        %v4160 = vadd.f32 0.0, %v4159
        %4161 = vmatprep.mubr.f32.mxu0 0.0
        %4162 = vmatmul.mubr.f32.gmra.mrb[0].mxu0 %v3968
        %v4163 = vpop.f32.mrb[0].mxu0
        %v4164 = vadd.f32 0.0, %v4163
        %v4165 = vpop.f32.mrb[0].mxu0
        %v4166 = vadd.f32 0.0, %v4165
        %4167 = vmatprep.mubr.f32.mxu0 0.0
        %4168 = vmatmul.mubr.f32.gmra.mrb[0].mxu0 %v3970
        %v4169 = vpop.f32.mrb[0].mxu0
        %v4170 = vadd.f32 0.0, %v4169
        %v4171 = vpop.f32.mrb[0].mxu0
        %v4172 = vadd.f32 0.0, %v4171
        %4173 = vdwg.mxu0
        %4174 = vmatprep.subr.mxu0 %v3988
        %4175 = vmatpush1.msra.mxu0 %v3985
        %4176 = vmatprep.subr.mxu0 0.0
        %4177 = vmatpush1.msra.mxu0 0.0
        %4178 = vmatprep.subr.mxu0 0.0
        %4179 = vmatpush1.msra.mxu0 0.0
        %4180 = vmatprep.subr.mxu0 0.0
        %4181 = vmatpush1.msra.mxu0 0.0
        %4182 = vmatprep.subr.mxu0 0.0
        %4183 = vmatpush1.msra.mxu0 0.0
        %4184 = vmatprep.subr.mxu0 0.0
        %4185 = vmatpush1.msra.mxu0 0.0
        %4186 = vmatprep.subr.mxu0 0.0
        %4187 = vmatpush1.msra.mxu0 0.0
        %4188 = vmatprep.subr.mxu0 0.0
        %4189 = vmatpush1.msra.mxu0 0.0
        %4190 = vmatprep.subr.mxu0 0.0
        %4191 = vmatpush1.msra.mxu0 0.0
        %4192 = vmatprep.subr.mxu0 0.0
        %4193 = vmatpush1.msra.mxu0 0.0
        %4194 = vmatprep.subr.mxu0 0.0
        %4195 = vmatpush1.msra.mxu0 0.0
        %4196 = vmatprep.subr.mxu0 0.0
        %4197 = vmatpush1.msra.mxu0 0.0
        %4198 = vmatprep.subr.mxu0 0.0
        %4199 = vmatpush1.msra.mxu0 0.0
        %4200 = vmatprep.subr.mxu0 0.0
        %4201 = vmatpush1.msra.mxu0 0.0
        %4202 = vmatprep.subr.mxu0 0.0
        %4203 = vmatpush1.msra.mxu0 0.0
        %4204 = vmatprep.subr.mxu0 0.0
        %4205 = vmatpush1.msra.mxu0 0.0
        %4206 = vmatprep.subr.mxu0 0.0
        %4207 = vmatpush1.msra.mxu0 0.0
        %4208 = vmatprep.subr.mxu0 0.0
        %4209 = vmatpush1.msra.mxu0 0.0
        %4210 = vmatprep.subr.mxu0 0.0
        %4211 = vmatpush1.msra.mxu0 0.0
        %4212 = vmatprep.subr.mxu0 0.0
        %4213 = vmatpush1.msra.mxu0 0.0
        %4214 = vmatprep.subr.mxu0 0.0
        %4215 = vmatpush1.msra.mxu0 0.0
        %4216 = vmatprep.subr.mxu0 0.0
        %4217 = vmatpush1.msra.mxu0 0.0
        %4218 = vmatprep.subr.mxu0 0.0
        %4219 = vmatpush1.msra.mxu0 0.0
        %4220 = vmatprep.subr.mxu0 0.0
        %4221 = vmatpush1.msra.mxu0 0.0
        %4222 = vmatprep.subr.mxu0 0.0
        %4223 = vmatpush1.msra.mxu0 0.0
        %4224 = vmatprep.subr.mxu0 0.0
        %4225 = vmatpush1.msra.mxu0 0.0
        %4226 = vmatprep.subr.mxu0 0.0
        %4227 = vmatpush1.msra.mxu0 0.0
        %4228 = vmatprep.subr.mxu0 0.0
        %4229 = vmatpush1.msra.mxu0 0.0
        %4230 = vmatprep.subr.mxu0 0.0
        %4231 = vmatpush1.msra.mxu0 0.0
        %4232 = vmatprep.subr.mxu0 0.0
        %4233 = vmatpush1.msra.mxu0 0.0
        %4234 = vmatprep.subr.mxu0 0.0
        %4235 = vmatpush1.msra.mxu0 0.0
        %4236 = vmatprep.subr.mxu0 0.0
        %4237 = vmatpush1.msra.mxu0 0.0
        %4238 = vmatprep.mubr.f32.mxu0 0.0
        %4239 = vmatmul.mubr.f32.gmra.mrb[0].mxu0 %v3964
        %v4240 = vpop.f32.mrb[0].mxu0
        %v4241 = vadd.f32 0.0, %v4240
        %v4242 = vpop.f32.mrb[0].mxu0
        %v4243 = vadd.f32 0.0, %v4242
        %4244 = vmatprep.mubr.f32.mxu0 0.0
        %4245 = vmatmul.mubr.f32.gmra.mrb[0].mxu0 %v3966
        %v4246 = vpop.f32.mrb[0].mxu0
        %v4247 = vadd.f32 0.0, %v4246
        %v4248 = vpop.f32.mrb[0].mxu0
        %v4249 = vadd.f32 0.0, %v4248
        %4250 = vmatprep.mubr.f32.mxu0 0.0
        %4251 = vmatmul.mubr.f32.gmra.mrb[0].mxu0 %v3968
        %v4252 = vpop.f32.mrb[0].mxu0
        %v4253 = vadd.f32 0.0, %v4252
        %v4254 = vpop.f32.mrb[0].mxu0
        %v4255 = vadd.f32 0.0, %v4254
        %4256 = vmatprep.mubr.f32.mxu0 0.0
        %4257 = vmatmul.mubr.f32.gmra.mrb[0].mxu0 %v3970
        %v4258 = vpop.f32.mrb[0].mxu0
        %v4259 = vadd.f32 0.0, %v4258
        %v4260 = vpop.f32.mrb[0].mxu0
        %v4261 = vadd.f32 0.0, %v4260
        %4262 = vdwg.mxu0
        %4263 = vmatprep.subr.mxu0 %v3994
        %4264 = vmatpush1.msra.mxu0 %v3991
        %4265 = vmatprep.subr.mxu0 0.0
        %4266 = vmatpush1.msra.mxu0 0.0
        %4267 = vmatprep.subr.mxu0 0.0
        %4268 = vmatpush1.msra.mxu0 0.0
        %4269 = vmatprep.subr.mxu0 0.0
        %4270 = vmatpush1.msra.mxu0 0.0
        %4271 = vmatprep.subr.mxu0 0.0
        %4272 = vmatpush1.msra.mxu0 0.0
        %4273 = vmatprep.subr.mxu0 0.0
        %4274 = vmatpush1.msra.mxu0 0.0
        %4275 = vmatprep.subr.mxu0 0.0
        %4276 = vmatpush1.msra.mxu0 0.0
        %4277 = vmatprep.subr.mxu0 0.0
        %4278 = vmatpush1.msra.mxu0 0.0
        %4279 = vmatprep.subr.mxu0 0.0
        %4280 = vmatpush1.msra.mxu0 0.0
        %4281 = vmatprep.subr.mxu0 0.0
        %4282 = vmatpush1.msra.mxu0 0.0
        %4283 = vmatprep.subr.mxu0 0.0
        %4284 = vmatpush1.msra.mxu0 0.0
        %4285 = vmatprep.subr.mxu0 0.0
        %4286 = vmatpush1.msra.mxu0 0.0
        %4287 = vmatprep.subr.mxu0 0.0
        %4288 = vmatpush1.msra.mxu0 0.0
        %4289 = vmatprep.subr.mxu0 0.0
        %4290 = vmatpush1.msra.mxu0 0.0
        %4291 = vmatprep.subr.mxu0 0.0
        %4292 = vmatpush1.msra.mxu0 0.0
        %4293 = vmatprep.subr.mxu0 0.0
        %4294 = vmatpush1.msra.mxu0 0.0
        %4295 = vmatprep.subr.mxu0 0.0
        %4296 = vmatpush1.msra.mxu0 0.0
        %4297 = vmatprep.subr.mxu0 0.0
        %4298 = vmatpush1.msra.mxu0 0.0
        %4299 = vmatprep.subr.mxu0 0.0
        %4300 = vmatpush1.msra.mxu0 0.0
        %4301 = vmatprep.subr.mxu0 0.0
        %4302 = vmatpush1.msra.mxu0 0.0
        %4303 = vmatprep.subr.mxu0 0.0
        %4304 = vmatpush1.msra.mxu0 0.0
        %4305 = vmatprep.subr.mxu0 0.0
        %4306 = vmatpush1.msra.mxu0 0.0
        %4307 = vmatprep.subr.mxu0 0.0
        %4308 = vmatpush1.msra.mxu0 0.0
        %4309 = vmatprep.subr.mxu0 0.0
        %4310 = vmatpush1.msra.mxu0 0.0
        %4311 = vmatprep.subr.mxu0 0.0
        %4312 = vmatpush1.msra.mxu0 0.0
        %4313 = vmatprep.subr.mxu0 0.0
        %4314 = vmatpush1.msra.mxu0 0.0
        %4315 = vmatprep.subr.mxu0 0.0
        %4316 = vmatpush1.msra.mxu0 0.0
        %4317 = vmatprep.subr.mxu0 0.0
        %4318 = vmatpush1.msra.mxu0 0.0
        %4319 = vmatprep.subr.mxu0 0.0
        %4320 = vmatpush1.msra.mxu0 0.0
        %4321 = vmatprep.subr.mxu0 0.0
        %4322 = vmatpush1.msra.mxu0 0.0
        %4323 = vmatprep.subr.mxu0 0.0
        %4324 = vmatpush1.msra.mxu0 0.0
        %4325 = vmatprep.subr.mxu0 0.0
        %4326 = vmatpush1.msra.mxu0 0.0
        %4327 = vmatprep.mubr.f32.mxu0 0.0
        %4328 = vmatmul.mubr.f32.gmra.mrb[0].mxu0 %v3964
        %v4329 = vpop.f32.mrb[0].mxu0
        %v4330 = vadd.f32 0.0, %v4329
        %v4331 = vpop.f32.mrb[0].mxu0
        %v4332 = vadd.f32 0.0, %v4331
        %4333 = vmatprep.mubr.f32.mxu0 0.0
        %4334 = vmatmul.mubr.f32.gmra.mrb[0].mxu0 %v3966
        %v4335 = vpop.f32.mrb[0].mxu0
        %v4336 = vadd.f32 0.0, %v4335
        %v4337 = vpop.f32.mrb[0].mxu0
        %v4338 = vadd.f32 0.0, %v4337
        %4339 = vmatprep.mubr.f32.mxu0 0.0
        %4340 = vmatmul.mubr.f32.gmra.mrb[0].mxu0 %v3968
        %v4341 = vpop.f32.mrb[0].mxu0
        %v4342 = vadd.f32 0.0, %v4341
        %v4343 = vpop.f32.mrb[0].mxu0
        %v4344 = vadd.f32 0.0, %v4343
        %4345 = vmatprep.mubr.f32.mxu0 0.0
        %4346 = vmatmul.mubr.f32.gmra.mrb[0].mxu0 %v3970
        %v4347 = vpop.f32.mrb[0].mxu0
        %v4348 = vadd.f32 0.0, %v4347
        %v4349 = vpop.f32.mrb[0].mxu0
        %v4350 = vadd.f32 0.0, %v4349
        %4351 = vdwg.mxu0
        %v4352 = vadd.f32 %v3899, %v4063
        %v4353 = vadd.f32 %v3900, %v4065
        %v4354 = vadd.f32 %v3901, %v4152
        %v4355 = vadd.f32 %v3902, %v4154
        %v4356 = vadd.f32 %v3903, %v4241
        %v4357 = vadd.f32 %v3904, %v4243
        %v4358 = vadd.f32 %v3905, %v4330
        %v4359 = vadd.f32 %v3906, %v4332
        %v4360 = vadd.f32 %v3907, %v4069
        %v4361 = vadd.f32 %v3908, %v4071
        %v4362 = vadd.f32 %v3909, %v4158
        %v4363 = vadd.f32 %v3910, %v4160
        %v4364 = vadd.f32 %v3911, %v4247
        %v4365 = vadd.f32 %v3912, %v4249
        %v4366 = vadd.f32 %v3913, %v4336
        %v4367 = vadd.f32 %v3914, %v4338
        %v4368 = vadd.f32 %v3915, %v4075
        %v4369 = vadd.f32 %v3916, %v4077
        %v4370 = vadd.f32 %v3917, %v4164
        %v4371 = vadd.f32 %v3918, %v4166
        %v4372 = vadd.f32 %v3919, %v4253
        %v4373 = vadd.f32 %v3920, %v4255
        %v4374 = vadd.f32 %v3921, %v4342
        %v4375 = vadd.f32 %v3922, %v4344
        %v4376 = vadd.f32 %v3923, %v4081
        %v4377 = vadd.f32 %v3924, %v4083
        %v4378 = vadd.f32 %v3925, %v4170
        %v4379 = vadd.f32 %v3926, %v4172
        %v4380 = vadd.f32 %v3927, %v4259
        %v4381 = vadd.f32 %v3928, %v4261
        %v4382 = vadd.f32 %v3929, %v4348
        %v4383 = vadd.f32 %v3930, %v4350
        %v4384 = vld [vmem:[%s2] sm:$0xff]
        %v4385 = vld [vmem:[%s2 + $0x8] sm:$0xff]
        %v4386 = vld [vmem:[%s2 + $0x10] sm:$0xff]
        %v4387 = vld [vmem:[%s2 + $0x18] sm:$0xff]
        %4389 = vset.pattern.permute.xlu0 0
        %4390 = vperm.xlu0 %4389, %v4384
        %v4391 = vpop.permute.xlu0 %4390
        %4394 = vset.pattern.permute.xlu0 0
        %4395 = vperm.xlu0 %4394, %v4385
        %v4396 = vpop.permute.xlu0 %4395
        %4399 = vset.pattern.permute.xlu0 0
        %4400 = vperm.xlu0 %4399, %v4386
        %v4401 = vpop.permute.xlu0 %4400
        %4404 = vset.pattern.permute.xlu0 0
        %4405 = vperm.xlu0 %4404, %v4387
        %v4406 = vpop.permute.xlu0 %4405
        %v4408 = vadd.f32 %v4352, %v4391
        %v4409 = vadd.f32 %v4353, %v4391
        %v4410 = vadd.f32 %v4354, %v4391
        %v4411 = vadd.f32 %v4355, %v4391
        %v4412 = vadd.f32 %v4356, %v4391
        %v4413 = vadd.f32 %v4357, %v4391
        %v4414 = vadd.f32 %v4358, %v4391
        %v4415 = vadd.f32 %v4359, %v4391
        %v4416 = vadd.f32 %v4360, %v4396
        %v4417 = vadd.f32 %v4361, %v4396
        %v4418 = vadd.f32 %v4362, %v4396
        %v4419 = vadd.f32 %v4363, %v4396
        %v4420 = vadd.f32 %v4364, %v4396
        %v4421 = vadd.f32 %v4365, %v4396
        %v4422 = vadd.f32 %v4366, %v4396
        %v4423 = vadd.f32 %v4367, %v4396
        %v4424 = vadd.f32 %v4368, %v4401
        %v4425 = vadd.f32 %v4369, %v4401
        %v4426 = vadd.f32 %v4370, %v4401
        %v4427 = vadd.f32 %v4371, %v4401
        %v4428 = vadd.f32 %v4372, %v4401
        %v4429 = vadd.f32 %v4373, %v4401
        %v4430 = vadd.f32 %v4374, %v4401
        %v4431 = vadd.f32 %v4375, %v4401
        %v4432 = vadd.f32 %v4376, %v4406
        %v4433 = vadd.f32 %v4377, %v4406
        %v4434 = vadd.f32 %v4378, %v4406
        %v4435 = vadd.f32 %v4379, %v4406
        %v4436 = vadd.f32 %v4380, %v4406
        %v4437 = vadd.f32 %v4381, %v4406
        %v4438 = vadd.f32 %v4382, %v4406
        %v4439 = vadd.f32 %v4383, %v4406
        %v4440 = vmax.f32 %v4408, 0.0
        %v4441 = vmax.f32 %v4409, 0.0
        %v4442 = vmax.f32 %v4410, 0.0
        %v4443 = vmax.f32 %v4411, 0.0
        %v4444 = vmax.f32 %v4412, 0.0
        %v4445 = vmax.f32 %v4413, 0.0
        %v4446 = vmax.f32 %v4414, 0.0
        %v4447 = vmax.f32 %v4415, 0.0
        %v4448 = vmax.f32 %v4416, 0.0
        %v4449 = vmax.f32 %v4417, 0.0
        %v4450 = vmax.f32 %v4418, 0.0
        %v4451 = vmax.f32 %v4419, 0.0
        %v4452 = vmax.f32 %v4420, 0.0
        %v4453 = vmax.f32 %v4421, 0.0
        %v4454 = vmax.f32 %v4422, 0.0
        %v4455 = vmax.f32 %v4423, 0.0
        %v4456 = vmax.f32 %v4424, 0.0
        %v4457 = vmax.f32 %v4425, 0.0
        %v4458 = vmax.f32 %v4426, 0.0
        %v4459 = vmax.f32 %v4427, 0.0
        %v4460 = vmax.f32 %v4428, 0.0
        %v4461 = vmax.f32 %v4429, 0.0
        %v4462 = vmax.f32 %v4430, 0.0
        %v4463 = vmax.f32 %v4431, 0.0
        %v4464 = vmax.f32 %v4432, 0.0
        %v4465 = vmax.f32 %v4433, 0.0
        %v4466 = vmax.f32 %v4434, 0.0
        %v4467 = vmax.f32 %v4435, 0.0
        %v4468 = vmax.f32 %v4436, 0.0
        %v4469 = vmax.f32 %v4437, 0.0
        %v4470 = vmax.f32 %v4438, 0.0
        %v4471 = vmax.f32 %v4439, 0.0
        %4472 = vrot.lane.b32.xlu0 %v4440, 127
        %v4473 = vpop.permute.xlu0 %4472
        %4474 = vrot.lane.b32.xlu0 %v4448, 127
        %v4475 = vpop.permute.xlu0 %4474
        %4476 = vrot.lane.b32.xlu0 %v4456, 127
        %v4477 = vpop.permute.xlu0 %4476
        %4478 = vrot.lane.b32.xlu0 %v4464, 127
        %v4479 = vpop.permute.xlu0 %4478
        %4480 = vrot.lane.b32.xlu0 %v4441, 127
        %v4481 = vpop.permute.xlu0 %4480
        %4482 = vrot.lane.b32.xlu0 %v4449, 127
        %v4483 = vpop.permute.xlu0 %4482
        %4484 = vrot.lane.b32.xlu0 %v4457, 127
        %v4485 = vpop.permute.xlu0 %4484
        %4486 = vrot.lane.b32.xlu0 %v4465, 127
        %v4487 = vpop.permute.xlu0 %4486
        %4488 = vrot.lane.b32.xlu0 %v4442, 127
        %v4489 = vpop.permute.xlu0 %4488
        %4490 = vrot.lane.b32.xlu0 %v4450, 127
        %v4491 = vpop.permute.xlu0 %4490
        %4492 = vrot.lane.b32.xlu0 %v4458, 127
        %v4493 = vpop.permute.xlu0 %4492
        %4494 = vrot.lane.b32.xlu0 %v4466, 127
        %v4495 = vpop.permute.xlu0 %4494
        %4496 = vrot.lane.b32.xlu0 %v4443, 127
        %v4497 = vpop.permute.xlu0 %4496
        %4498 = vrot.lane.b32.xlu0 %v4451, 127
        %v4499 = vpop.permute.xlu0 %4498
        %4500 = vrot.lane.b32.xlu0 %v4459, 127
        %v4501 = vpop.permute.xlu0 %4500
        %4502 = vrot.lane.b32.xlu0 %v4467, 127
        %v4503 = vpop.permute.xlu0 %4502
        %4504 = vrot.lane.b32.xlu0 %v4444, 127
        %v4505 = vpop.permute.xlu0 %4504
        %4506 = vrot.lane.b32.xlu0 %v4452, 127
        %v4507 = vpop.permute.xlu0 %4506
        %4508 = vrot.lane.b32.xlu0 %v4460, 127
        %v4509 = vpop.permute.xlu0 %4508
        %4510 = vrot.lane.b32.xlu0 %v4468, 127
        %v4511 = vpop.permute.xlu0 %4510
        %4512 = vrot.lane.b32.xlu0 %v4445, 127
        %v4513 = vpop.permute.xlu0 %4512
        %4514 = vrot.lane.b32.xlu0 %v4453, 127
        %v4515 = vpop.permute.xlu0 %4514
        %4516 = vrot.lane.b32.xlu0 %v4461, 127
        %v4517 = vpop.permute.xlu0 %4516
        %4518 = vrot.lane.b32.xlu0 %v4469, 127
        %v4519 = vpop.permute.xlu0 %4518
        %4520 = vrot.lane.b32.xlu0 %v4446, 127
        %v4521 = vpop.permute.xlu0 %4520
        %4522 = vrot.lane.b32.xlu0 %v4454, 127
        %v4523 = vpop.permute.xlu0 %4522
        %4524 = vrot.lane.b32.xlu0 %v4462, 127
        %v4525 = vpop.permute.xlu0 %4524
        %4526 = vrot.lane.b32.xlu0 %v4470, 127
        %v4527 = vpop.permute.xlu0 %4526
        %4528 = vrot.lane.b32.xlu0 %v4447, 127
        %v4529 = vpop.permute.xlu0 %4528
        %4530 = vrot.lane.b32.xlu0 %v4455, 127
        %v4531 = vpop.permute.xlu0 %4530
        %4532 = vrot.lane.b32.xlu0 %v4463, 127
        %v4533 = vpop.permute.xlu0 %4532
        %4534 = vrot.lane.b32.xlu0 %v4471, 127
        %v4535 = vpop.permute.xlu0 %4534
        %v4536 = vsel %vm2588, %v4521, %v4529
        %v4537 = vsel %vm2588, %v4523, %v4531
        %v4538 = vsel %vm2588, %v4525, %v4533
        %v4539 = vsel %vm2588, %v4527, %v4535
        %v4540 = vsel %vm2588, %v4513, %v4521
        %v4541 = vsel %vm2588, %v4515, %v4523
        %v4542 = vsel %vm2588, %v4517, %v4525
        %v4543 = vsel %vm2588, %v4519, %v4527
        %v4544 = vsel %vm2588, %v4505, %v4513
        %v4545 = vsel %vm2588, %v4507, %v4515
        %v4546 = vsel %vm2588, %v4509, %v4517
        %v4547 = vsel %vm2588, %v4511, %v4519
        %v4548 = vsel %vm2588, %v4497, %v4505
        %v4549 = vsel %vm2588, %v4499, %v4507
        %v4550 = vsel %vm2588, %v4501, %v4509
        %v4551 = vsel %vm2588, %v4503, %v4511
        %v4552 = vsel %vm2588, %v4489, %v4497
        %v4553 = vsel %vm2588, %v4491, %v4499
        %v4554 = vsel %vm2588, %v4493, %v4501
        %v4555 = vsel %vm2588, %v4495, %v4503
        %v4556 = vsel %vm2588, %v4481, %v4489
        %v4557 = vsel %vm2588, %v4483, %v4491
        %v4558 = vsel %vm2588, %v4485, %v4493
        %v4559 = vsel %vm2588, %v4487, %v4495
        %v4560 = vsel %vm2588, %v4473, %v4481
        %v4561 = vsel %vm2588, %v4475, %v4483
        %v4562 = vsel %vm2588, %v4477, %v4485
        %v4563 = vsel %vm2588, %v4479, %v4487
        %v4564 = vsel %vm2588, %v4529, %v4473
        %v4565 = vsel %vm2588, %v4531, %v4475
        %v4566 = vsel %vm2588, %v4533, %v4477
        %v4567 = vsel %vm2588, %v4535, %v4479
        %v4568 = vmax.f32 %v4440, %v4560
        %v4569 = vmax.f32 %v4441, %v4556
        %v4570 = vmax.f32 %v4442, %v4552
        %v4571 = vmax.f32 %v4443, %v4548
        %v4572 = vmax.f32 %v4444, %v4544
        %v4573 = vmax.f32 %v4445, %v4540
        %v4574 = vmax.f32 %v4446, %v4536
        %v4575 = vmax.f32 %v4447, %v4564
        %v4576 = vmax.f32 %v4448, %v4561
        %v4577 = vmax.f32 %v4449, %v4557
        %v4578 = vmax.f32 %v4450, %v4553
        %v4579 = vmax.f32 %v4451, %v4549
        %v4580 = vmax.f32 %v4452, %v4545
        %v4581 = vmax.f32 %v4453, %v4541
        %v4582 = vmax.f32 %v4454, %v4537
        %v4583 = vmax.f32 %v4455, %v4565
        %v4584 = vmax.f32 %v4456, %v4562
        %v4585 = vmax.f32 %v4457, %v4558
        %v4586 = vmax.f32 %v4458, %v4554
        %v4587 = vmax.f32 %v4459, %v4550
        %v4588 = vmax.f32 %v4460, %v4546
        %v4589 = vmax.f32 %v4461, %v4542
        %v4590 = vmax.f32 %v4462, %v4538
        %v4591 = vmax.f32 %v4463, %v4566
        %v4592 = vmax.f32 %v4464, %v4563
        %v4593 = vmax.f32 %v4465, %v4559
        %v4594 = vmax.f32 %v4466, %v4555
        %v4595 = vmax.f32 %v4467, %v4551
        %v4596 = vmax.f32 %v4468, %v4547
        %v4597 = vmax.f32 %v4469, %v4543
        %v4598 = vmax.f32 %v4470, %v4539
        %v4599 = vmax.f32 %v4471, %v4567
        %v4601 = vlaneseq
        %v4602 = vshrl.u32 %v4601, 7
        %v4603 = vsub.s32 0, %v4602
        %v4604 = vrot.slane %v357, %v4603
        %v4605 = vlaneseq
        %v4606 = vshrl.u32 %v4605, 7
        %v4607 = vsub.s32 1, %v4606
        %v4608 = vrot.slane %v357, %v4607
        %v4609 = vlaneseq
        %v4610 = vshrl.u32 %v4609, 7
        %v4611 = vsub.s32 2, %v4610
        %v4612 = vrot.slane %v357, %v4611
        %v4613 = vlaneseq
        %v4614 = vshrl.u32 %v4613, 7
        %v4615 = vsub.s32 3, %v4614
        %v4616 = vrot.slane %v357, %v4615
        %v4617 = vlaneseq
        %v4618 = vshrl.u32 %v4617, 7
        %v4619 = vsub.s32 4, %v4618
        %v4620 = vrot.slane %v357, %v4619
        %v4621 = vlaneseq
        %v4622 = vshrl.u32 %v4621, 7
        %v4623 = vsub.s32 5, %v4622
        %v4624 = vrot.slane %v357, %v4623
        %v4625 = vlaneseq
        %v4626 = vshrl.u32 %v4625, 7
        %v4627 = vsub.s32 6, %v4626
        %v4628 = vrot.slane %v357, %v4627
        %v4629 = vlaneseq
        %v4630 = vshrl.u32 %v4629, 7
        %v4631 = vsub.s32 7, %v4630
        %v4632 = vrot.slane %v357, %v4631
        %v4641 = vmul.f32 %v4568, %v4604
        %v4642 = vmul.f32 %v4569, %v4608
        %v4643 = vmul.f32 %v4570, %v4612
        %v4644 = vmul.f32 %v4571, %v4616
        %v4645 = vmul.f32 %v4572, %v4620
        %v4646 = vmul.f32 %v4573, %v4624
        %v4647 = vmul.f32 %v4574, %v4628
        %v4648 = vmul.f32 %v4575, %v4632
        %v4649 = vmul.f32 %v4576, %v4604
        %v4650 = vmul.f32 %v4577, %v4608
        %v4651 = vmul.f32 %v4578, %v4612
        %v4652 = vmul.f32 %v4579, %v4616
        %v4653 = vmul.f32 %v4580, %v4620
        %v4654 = vmul.f32 %v4581, %v4624
        %v4655 = vmul.f32 %v4582, %v4628
        %v4656 = vmul.f32 %v4583, %v4632
        %v4657 = vmul.f32 %v4584, %v4604
        %v4658 = vmul.f32 %v4585, %v4608
        %v4659 = vmul.f32 %v4586, %v4612
        %v4660 = vmul.f32 %v4587, %v4616
        %v4661 = vmul.f32 %v4588, %v4620
        %v4662 = vmul.f32 %v4589, %v4624
        %v4663 = vmul.f32 %v4590, %v4628
        %v4664 = vmul.f32 %v4591, %v4632
        %v4665 = vmul.f32 %v4592, %v4604
        %v4666 = vmul.f32 %v4593, %v4608
        %v4667 = vmul.f32 %v4594, %v4612
        %v4668 = vmul.f32 %v4595, %v4616
        %v4669 = vmul.f32 %v4596, %v4620
        %v4670 = vmul.f32 %v4597, %v4624
        %v4671 = vmul.f32 %v4598, %v4628
        %v4672 = vmul.f32 %v4599, %v4632
        %v4673 = vld [vmem:[%s3] sm:$0xff]
        %v4674 = vld [vmem:[%s3 + $0x8] sm:$0xff]
        %v4675 = vld [vmem:[%s3 + $0x10] sm:$0xff]
        %v4676 = vld [vmem:[%s3 + $0x18] sm:$0xff]
        %4677 = vrot.lane.b32.xlu0 %v4641, 4
        %v4678 = vpop.permute.xlu0 %4677
        %4679 = vrot.lane.b32.xlu0 %v4649, 4
        %v4680 = vpop.permute.xlu0 %4679
        %4681 = vrot.lane.b32.xlu0 %v4657, 4
        %v4682 = vpop.permute.xlu0 %4681
        %4683 = vrot.lane.b32.xlu0 %v4665, 4
        %v4684 = vpop.permute.xlu0 %4683
        %4685 = vrot.lane.b32.xlu0 %v4642, 4
        %v4686 = vpop.permute.xlu0 %4685
        %4687 = vrot.lane.b32.xlu0 %v4650, 4
        %v4688 = vpop.permute.xlu0 %4687
        %4689 = vrot.lane.b32.xlu0 %v4658, 4
        %v4690 = vpop.permute.xlu0 %4689
        %4691 = vrot.lane.b32.xlu0 %v4666, 4
        %v4692 = vpop.permute.xlu0 %4691
        %4693 = vrot.lane.b32.xlu0 %v4643, 4
        %v4694 = vpop.permute.xlu0 %4693
        %4695 = vrot.lane.b32.xlu0 %v4651, 4
        %v4696 = vpop.permute.xlu0 %4695
        %4697 = vrot.lane.b32.xlu0 %v4659, 4
        %v4698 = vpop.permute.xlu0 %4697
        %4699 = vrot.lane.b32.xlu0 %v4667, 4
        %v4700 = vpop.permute.xlu0 %4699
        %4701 = vrot.lane.b32.xlu0 %v4644, 4
        %v4702 = vpop.permute.xlu0 %4701
        %4703 = vrot.lane.b32.xlu0 %v4652, 4
        %v4704 = vpop.permute.xlu0 %4703
        %4705 = vrot.lane.b32.xlu0 %v4660, 4
        %v4706 = vpop.permute.xlu0 %4705
        %4707 = vrot.lane.b32.xlu0 %v4668, 4
        %v4708 = vpop.permute.xlu0 %4707
        %4709 = vrot.lane.b32.xlu0 %v4645, 4
        %v4710 = vpop.permute.xlu0 %4709
        %4711 = vrot.lane.b32.xlu0 %v4653, 4
        %v4712 = vpop.permute.xlu0 %4711
        %4713 = vrot.lane.b32.xlu0 %v4661, 4
        %v4714 = vpop.permute.xlu0 %4713
        %4715 = vrot.lane.b32.xlu0 %v4669, 4
        %v4716 = vpop.permute.xlu0 %4715
        %4717 = vrot.lane.b32.xlu0 %v4646, 4
        %v4718 = vpop.permute.xlu0 %4717
        %4719 = vrot.lane.b32.xlu0 %v4654, 4
        %v4720 = vpop.permute.xlu0 %4719
        %4721 = vrot.lane.b32.xlu0 %v4662, 4
        %v4722 = vpop.permute.xlu0 %4721
        %4723 = vrot.lane.b32.xlu0 %v4670, 4
        %v4724 = vpop.permute.xlu0 %4723
        %4725 = vrot.lane.b32.xlu0 %v4647, 4
        %v4726 = vpop.permute.xlu0 %4725
        %4727 = vrot.lane.b32.xlu0 %v4655, 4
        %v4728 = vpop.permute.xlu0 %4727
        %4729 = vrot.lane.b32.xlu0 %v4663, 4
        %v4730 = vpop.permute.xlu0 %4729
        %4731 = vrot.lane.b32.xlu0 %v4671, 4
        %v4732 = vpop.permute.xlu0 %4731
        %4733 = vrot.lane.b32.xlu0 %v4648, 4
        %v4734 = vpop.permute.xlu0 %4733
        %4735 = vrot.lane.b32.xlu0 %v4656, 4
        %v4736 = vpop.permute.xlu0 %4735
        %4737 = vrot.lane.b32.xlu0 %v4664, 4
        %v4738 = vpop.permute.xlu0 %4737
        %4739 = vrot.lane.b32.xlu0 %v4672, 4
        %v4740 = vpop.permute.xlu0 %4739
        %v4741 = vsel %vm422, %v4726, %v4734
        %v4742 = vsel %vm422, %v4728, %v4736
        %v4743 = vsel %vm422, %v4730, %v4738
        %v4744 = vsel %vm422, %v4732, %v4740
        %v4745 = vsel %vm422, %v4718, %v4726
        %v4746 = vsel %vm422, %v4720, %v4728
        %v4747 = vsel %vm422, %v4722, %v4730
        %v4748 = vsel %vm422, %v4724, %v4732
        %v4749 = vsel %vm422, %v4710, %v4718
        %v4750 = vsel %vm422, %v4712, %v4720
        %v4751 = vsel %vm422, %v4714, %v4722
        %v4752 = vsel %vm422, %v4716, %v4724
        %v4753 = vsel %vm422, %v4702, %v4710
        %v4754 = vsel %vm422, %v4704, %v4712
        %v4755 = vsel %vm422, %v4706, %v4714
        %v4756 = vsel %vm422, %v4708, %v4716
        %v4757 = vsel %vm422, %v4694, %v4702
        %v4758 = vsel %vm422, %v4696, %v4704
        %v4759 = vsel %vm422, %v4698, %v4706
        %v4760 = vsel %vm422, %v4700, %v4708
        %v4761 = vsel %vm422, %v4686, %v4694
        %v4762 = vsel %vm422, %v4688, %v4696
        %v4763 = vsel %vm422, %v4690, %v4698
        %v4764 = vsel %vm422, %v4692, %v4700
        %v4765 = vsel %vm422, %v4678, %v4686
        %v4766 = vsel %vm422, %v4680, %v4688
        %v4767 = vsel %vm422, %v4682, %v4690
        %v4768 = vsel %vm422, %v4684, %v4692
        %v4769 = vsel %vm422, %v4734, %v4678
        %v4770 = vsel %vm422, %v4736, %v4680
        %v4771 = vsel %vm422, %v4738, %v4682
        %v4772 = vsel %vm422, %v4740, %v4684
        %4773 = vrot.lane.b32.xlu0 %v4641, 2
        %v4774 = vpop.permute.xlu0 %4773
        %4775 = vrot.lane.b32.xlu0 %v4649, 2
        %v4776 = vpop.permute.xlu0 %4775
        %4777 = vrot.lane.b32.xlu0 %v4657, 2
        %v4778 = vpop.permute.xlu0 %4777
        %4779 = vrot.lane.b32.xlu0 %v4665, 2
        %v4780 = vpop.permute.xlu0 %4779
        %4781 = vrot.lane.b32.xlu0 %v4642, 2
        %v4782 = vpop.permute.xlu0 %4781
        %4783 = vrot.lane.b32.xlu0 %v4650, 2
        %v4784 = vpop.permute.xlu0 %4783
        %4785 = vrot.lane.b32.xlu0 %v4658, 2
        %v4786 = vpop.permute.xlu0 %4785
        %4787 = vrot.lane.b32.xlu0 %v4666, 2
        %v4788 = vpop.permute.xlu0 %4787
        %4789 = vrot.lane.b32.xlu0 %v4643, 2
        %v4790 = vpop.permute.xlu0 %4789
        %4791 = vrot.lane.b32.xlu0 %v4651, 2
        %v4792 = vpop.permute.xlu0 %4791
        %4793 = vrot.lane.b32.xlu0 %v4659, 2
        %v4794 = vpop.permute.xlu0 %4793
        %4795 = vrot.lane.b32.xlu0 %v4667, 2
        %v4796 = vpop.permute.xlu0 %4795
        %4797 = vrot.lane.b32.xlu0 %v4644, 2
        %v4798 = vpop.permute.xlu0 %4797
        %4799 = vrot.lane.b32.xlu0 %v4652, 2
        %v4800 = vpop.permute.xlu0 %4799
        %4801 = vrot.lane.b32.xlu0 %v4660, 2
        %v4802 = vpop.permute.xlu0 %4801
        %4803 = vrot.lane.b32.xlu0 %v4668, 2
        %v4804 = vpop.permute.xlu0 %4803
        %4805 = vrot.lane.b32.xlu0 %v4645, 2
        %v4806 = vpop.permute.xlu0 %4805
        %4807 = vrot.lane.b32.xlu0 %v4653, 2
        %v4808 = vpop.permute.xlu0 %4807
        %4809 = vrot.lane.b32.xlu0 %v4661, 2
        %v4810 = vpop.permute.xlu0 %4809
        %4811 = vrot.lane.b32.xlu0 %v4669, 2
        %v4812 = vpop.permute.xlu0 %4811
        %4813 = vrot.lane.b32.xlu0 %v4646, 2
        %v4814 = vpop.permute.xlu0 %4813
        %4815 = vrot.lane.b32.xlu0 %v4654, 2
        %v4816 = vpop.permute.xlu0 %4815
        %4817 = vrot.lane.b32.xlu0 %v4662, 2
        %v4818 = vpop.permute.xlu0 %4817
        %4819 = vrot.lane.b32.xlu0 %v4670, 2
        %v4820 = vpop.permute.xlu0 %4819
        %4821 = vrot.lane.b32.xlu0 %v4647, 2
        %v4822 = vpop.permute.xlu0 %4821
        %4823 = vrot.lane.b32.xlu0 %v4655, 2
        %v4824 = vpop.permute.xlu0 %4823
        %4825 = vrot.lane.b32.xlu0 %v4663, 2
        %v4826 = vpop.permute.xlu0 %4825
        %4827 = vrot.lane.b32.xlu0 %v4671, 2
        %v4828 = vpop.permute.xlu0 %4827
        %4829 = vrot.lane.b32.xlu0 %v4648, 2
        %v4830 = vpop.permute.xlu0 %4829
        %4831 = vrot.lane.b32.xlu0 %v4656, 2
        %v4832 = vpop.permute.xlu0 %4831
        %4833 = vrot.lane.b32.xlu0 %v4664, 2
        %v4834 = vpop.permute.xlu0 %4833
        %4835 = vrot.lane.b32.xlu0 %v4672, 2
        %v4836 = vpop.permute.xlu0 %4835
        %v4837 = vsel %vm1262, %v4822, %v4830
        %v4838 = vsel %vm1262, %v4824, %v4832
        %v4839 = vsel %vm1262, %v4826, %v4834
        %v4840 = vsel %vm1262, %v4828, %v4836
        %v4841 = vsel %vm1262, %v4814, %v4822
        %v4842 = vsel %vm1262, %v4816, %v4824
        %v4843 = vsel %vm1262, %v4818, %v4826
        %v4844 = vsel %vm1262, %v4820, %v4828
        %v4845 = vsel %vm1262, %v4806, %v4814
        %v4846 = vsel %vm1262, %v4808, %v4816
        %v4847 = vsel %vm1262, %v4810, %v4818
        %v4848 = vsel %vm1262, %v4812, %v4820
        %v4849 = vsel %vm1262, %v4798, %v4806
        %v4850 = vsel %vm1262, %v4800, %v4808
        %v4851 = vsel %vm1262, %v4802, %v4810
        %v4852 = vsel %vm1262, %v4804, %v4812
        %v4853 = vsel %vm1262, %v4790, %v4798
        %v4854 = vsel %vm1262, %v4792, %v4800
        %v4855 = vsel %vm1262, %v4794, %v4802
        %v4856 = vsel %vm1262, %v4796, %v4804
        %v4857 = vsel %vm1262, %v4782, %v4790
        %v4858 = vsel %vm1262, %v4784, %v4792
        %v4859 = vsel %vm1262, %v4786, %v4794
        %v4860 = vsel %vm1262, %v4788, %v4796
        %v4861 = vsel %vm1262, %v4774, %v4782
        %v4862 = vsel %vm1262, %v4776, %v4784
        %v4863 = vsel %vm1262, %v4778, %v4786
        %v4864 = vsel %vm1262, %v4780, %v4788
        %v4865 = vsel %vm1262, %v4830, %v4774
        %v4866 = vsel %vm1262, %v4832, %v4776
        %v4867 = vsel %vm1262, %v4834, %v4778
        %v4868 = vsel %vm1262, %v4836, %v4780
        %4869 = vrot.lane.b32.xlu0 %v4641, 126
        %v4870 = vpop.permute.xlu0 %4869
        %4871 = vrot.lane.b32.xlu0 %v4649, 126
        %v4872 = vpop.permute.xlu0 %4871
        %4873 = vrot.lane.b32.xlu0 %v4657, 126
        %v4874 = vpop.permute.xlu0 %4873
        %4875 = vrot.lane.b32.xlu0 %v4665, 126
        %v4876 = vpop.permute.xlu0 %4875
        %4877 = vrot.lane.b32.xlu0 %v4642, 126
        %v4878 = vpop.permute.xlu0 %4877
        %4879 = vrot.lane.b32.xlu0 %v4650, 126
        %v4880 = vpop.permute.xlu0 %4879
        %4881 = vrot.lane.b32.xlu0 %v4658, 126
        %v4882 = vpop.permute.xlu0 %4881
        %4883 = vrot.lane.b32.xlu0 %v4666, 126
        %v4884 = vpop.permute.xlu0 %4883
        %4885 = vrot.lane.b32.xlu0 %v4643, 126
        %v4886 = vpop.permute.xlu0 %4885
        %4887 = vrot.lane.b32.xlu0 %v4651, 126
        %v4888 = vpop.permute.xlu0 %4887
        %4889 = vrot.lane.b32.xlu0 %v4659, 126
        %v4890 = vpop.permute.xlu0 %4889
        %4891 = vrot.lane.b32.xlu0 %v4667, 126
        %v4892 = vpop.permute.xlu0 %4891
        %4893 = vrot.lane.b32.xlu0 %v4644, 126
        %v4894 = vpop.permute.xlu0 %4893
        %4895 = vrot.lane.b32.xlu0 %v4652, 126
        %v4896 = vpop.permute.xlu0 %4895
        %4897 = vrot.lane.b32.xlu0 %v4660, 126
        %v4898 = vpop.permute.xlu0 %4897
        %4899 = vrot.lane.b32.xlu0 %v4668, 126
        %v4900 = vpop.permute.xlu0 %4899
        %4901 = vrot.lane.b32.xlu0 %v4645, 126
        %v4902 = vpop.permute.xlu0 %4901
        %4903 = vrot.lane.b32.xlu0 %v4653, 126
        %v4904 = vpop.permute.xlu0 %4903
        %4905 = vrot.lane.b32.xlu0 %v4661, 126
        %v4906 = vpop.permute.xlu0 %4905
        %4907 = vrot.lane.b32.xlu0 %v4669, 126
        %v4908 = vpop.permute.xlu0 %4907
        %4909 = vrot.lane.b32.xlu0 %v4646, 126
        %v4910 = vpop.permute.xlu0 %4909
        %4911 = vrot.lane.b32.xlu0 %v4654, 126
        %v4912 = vpop.permute.xlu0 %4911
        %4913 = vrot.lane.b32.xlu0 %v4662, 126
        %v4914 = vpop.permute.xlu0 %4913
        %4915 = vrot.lane.b32.xlu0 %v4670, 126
        %v4916 = vpop.permute.xlu0 %4915
        %4917 = vrot.lane.b32.xlu0 %v4647, 126
        %v4918 = vpop.permute.xlu0 %4917
        %4919 = vrot.lane.b32.xlu0 %v4655, 126
        %v4920 = vpop.permute.xlu0 %4919
        %4921 = vrot.lane.b32.xlu0 %v4663, 126
        %v4922 = vpop.permute.xlu0 %4921
        %4923 = vrot.lane.b32.xlu0 %v4671, 126
        %v4924 = vpop.permute.xlu0 %4923
        %4925 = vrot.lane.b32.xlu0 %v4648, 126
        %v4926 = vpop.permute.xlu0 %4925
        %4927 = vrot.lane.b32.xlu0 %v4656, 126
        %v4928 = vpop.permute.xlu0 %4927
        %4929 = vrot.lane.b32.xlu0 %v4664, 126
        %v4930 = vpop.permute.xlu0 %4929
        %4931 = vrot.lane.b32.xlu0 %v4672, 126
        %v4932 = vpop.permute.xlu0 %4931
        %v4933 = vsel %vm3041, %v4918, %v4926
        %v4934 = vsel %vm3041, %v4920, %v4928
        %v4935 = vsel %vm3041, %v4922, %v4930
        %v4936 = vsel %vm3041, %v4924, %v4932
        %v4937 = vsel %vm3041, %v4910, %v4918
        %v4938 = vsel %vm3041, %v4912, %v4920
        %v4939 = vsel %vm3041, %v4914, %v4922
        %v4940 = vsel %vm3041, %v4916, %v4924
        %v4941 = vsel %vm3041, %v4902, %v4910
        %v4942 = vsel %vm3041, %v4904, %v4912
        %v4943 = vsel %vm3041, %v4906, %v4914
        %v4944 = vsel %vm3041, %v4908, %v4916
        %v4945 = vsel %vm3041, %v4894, %v4902
        %v4946 = vsel %vm3041, %v4896, %v4904
        %v4947 = vsel %vm3041, %v4898, %v4906
        %v4948 = vsel %vm3041, %v4900, %v4908
        %v4949 = vsel %vm3041, %v4886, %v4894
        %v4950 = vsel %vm3041, %v4888, %v4896
        %v4951 = vsel %vm3041, %v4890, %v4898
        %v4952 = vsel %vm3041, %v4892, %v4900
        %v4953 = vsel %vm3041, %v4878, %v4886
        %v4954 = vsel %vm3041, %v4880, %v4888
        %v4955 = vsel %vm3041, %v4882, %v4890
        %v4956 = vsel %vm3041, %v4884, %v4892
        %v4957 = vsel %vm3041, %v4870, %v4878
        %v4958 = vsel %vm3041, %v4872, %v4880
        %v4959 = vsel %vm3041, %v4874, %v4882
        %v4960 = vsel %vm3041, %v4876, %v4884
        %v4961 = vsel %vm3041, %v4926, %v4870
        %v4962 = vsel %vm3041, %v4928, %v4872
        %v4963 = vsel %vm3041, %v4930, %v4874
        %v4964 = vsel %vm3041, %v4932, %v4876
        %4965 = vrot.lane.b32.xlu0 %v4641, 124
        %v4966 = vpop.permute.xlu0 %4965
        %4967 = vrot.lane.b32.xlu0 %v4649, 124
        %v4968 = vpop.permute.xlu0 %4967
        %4969 = vrot.lane.b32.xlu0 %v4657, 124
        %v4970 = vpop.permute.xlu0 %4969
        %4971 = vrot.lane.b32.xlu0 %v4665, 124
        %v4972 = vpop.permute.xlu0 %4971
        %4973 = vrot.lane.b32.xlu0 %v4642, 124
        %v4974 = vpop.permute.xlu0 %4973
        %4975 = vrot.lane.b32.xlu0 %v4650, 124
        %v4976 = vpop.permute.xlu0 %4975
        %4977 = vrot.lane.b32.xlu0 %v4658, 124
        %v4978 = vpop.permute.xlu0 %4977
        %4979 = vrot.lane.b32.xlu0 %v4666, 124
        %v4980 = vpop.permute.xlu0 %4979
        %4981 = vrot.lane.b32.xlu0 %v4643, 124
        %v4982 = vpop.permute.xlu0 %4981
        %4983 = vrot.lane.b32.xlu0 %v4651, 124
        %v4984 = vpop.permute.xlu0 %4983
        %4985 = vrot.lane.b32.xlu0 %v4659, 124
        %v4986 = vpop.permute.xlu0 %4985
        %4987 = vrot.lane.b32.xlu0 %v4667, 124
        %v4988 = vpop.permute.xlu0 %4987
        %4989 = vrot.lane.b32.xlu0 %v4644, 124
        %v4990 = vpop.permute.xlu0 %4989
        %4991 = vrot.lane.b32.xlu0 %v4652, 124
        %v4992 = vpop.permute.xlu0 %4991
        %4993 = vrot.lane.b32.xlu0 %v4660, 124
        %v4994 = vpop.permute.xlu0 %4993
        %4995 = vrot.lane.b32.xlu0 %v4668, 124
        %v4996 = vpop.permute.xlu0 %4995
        %4997 = vrot.lane.b32.xlu0 %v4645, 124
        %v4998 = vpop.permute.xlu0 %4997
        %4999 = vrot.lane.b32.xlu0 %v4653, 124
        %v5000 = vpop.permute.xlu0 %4999
        %5001 = vrot.lane.b32.xlu0 %v4661, 124
        %v5002 = vpop.permute.xlu0 %5001
        %5003 = vrot.lane.b32.xlu0 %v4669, 124
        %v5004 = vpop.permute.xlu0 %5003
        %5005 = vrot.lane.b32.xlu0 %v4646, 124
        %v5006 = vpop.permute.xlu0 %5005
        %5007 = vrot.lane.b32.xlu0 %v4654, 124
        %v5008 = vpop.permute.xlu0 %5007
        %5009 = vrot.lane.b32.xlu0 %v4662, 124
        %v5010 = vpop.permute.xlu0 %5009
        %5011 = vrot.lane.b32.xlu0 %v4670, 124
        %v5012 = vpop.permute.xlu0 %5011
        %5013 = vrot.lane.b32.xlu0 %v4647, 124
        %v5014 = vpop.permute.xlu0 %5013
        %5015 = vrot.lane.b32.xlu0 %v4655, 124
        %v5016 = vpop.permute.xlu0 %5015
        %5017 = vrot.lane.b32.xlu0 %v4663, 124
        %v5018 = vpop.permute.xlu0 %5017
        %5019 = vrot.lane.b32.xlu0 %v4671, 124
        %v5020 = vpop.permute.xlu0 %5019
        %5021 = vrot.lane.b32.xlu0 %v4648, 124
        %v5022 = vpop.permute.xlu0 %5021
        %5023 = vrot.lane.b32.xlu0 %v4656, 124
        %v5024 = vpop.permute.xlu0 %5023
        %5025 = vrot.lane.b32.xlu0 %v4664, 124
        %v5026 = vpop.permute.xlu0 %5025
        %5027 = vrot.lane.b32.xlu0 %v4672, 124
        %v5028 = vpop.permute.xlu0 %5027
        %v5029 = vsel %vm3947, %v5014, %v5022
        %v5030 = vsel %vm3947, %v5016, %v5024
        %v5031 = vsel %vm3947, %v5018, %v5026
        %v5032 = vsel %vm3947, %v5020, %v5028
        %v5033 = vsel %vm3947, %v5006, %v5014
        %v5034 = vsel %vm3947, %v5008, %v5016
        %v5035 = vsel %vm3947, %v5010, %v5018
        %v5036 = vsel %vm3947, %v5012, %v5020
        %v5037 = vsel %vm3947, %v4998, %v5006
        %v5038 = vsel %vm3947, %v5000, %v5008
        %v5039 = vsel %vm3947, %v5002, %v5010
        %v5040 = vsel %vm3947, %v5004, %v5012
        %v5041 = vsel %vm3947, %v4990, %v4998
        %v5042 = vsel %vm3947, %v4992, %v5000
        %v5043 = vsel %vm3947, %v4994, %v5002
        %v5044 = vsel %vm3947, %v4996, %v5004
        %v5045 = vsel %vm3947, %v4982, %v4990
        %v5046 = vsel %vm3947, %v4984, %v4992
        %v5047 = vsel %vm3947, %v4986, %v4994
        %v5048 = vsel %vm3947, %v4988, %v4996
        %v5049 = vsel %vm3947, %v4974, %v4982
        %v5050 = vsel %vm3947, %v4976, %v4984
        %v5051 = vsel %vm3947, %v4978, %v4986
        %v5052 = vsel %vm3947, %v4980, %v4988
        %v5053 = vsel %vm3947, %v4966, %v4974
        %v5054 = vsel %vm3947, %v4968, %v4976
        %v5055 = vsel %vm3947, %v4970, %v4978
        %v5056 = vsel %vm3947, %v4972, %v4980
        %v5057 = vsel %vm3947, %v5022, %v4966
        %v5058 = vsel %vm3947, %v5024, %v4968
        %v5059 = vsel %vm3947, %v5026, %v4970
        %v5060 = vsel %vm3947, %v5028, %v4972
        %v5061 = vld [vmem:[%s4] sm:$0xff]
        %v5062 = vld [vmem:[%s4 + $0x8] sm:$0xff]
        %5064 = vset.pattern.permute.xlu0 0
        %5065 = vperm.xlu0 %5064, %v5061
        %v5066 = vpop.permute.xlu0 %5065
        %5069 = vset.pattern.permute.xlu0 0
        %5070 = vperm.xlu0 %5069, %v5062
        %v5071 = vpop.permute.xlu0 %5070
        %vm5073 = vcmask 261120
        %v5075 = vsel %vm5073, %v4674, 0
        %v5078 = vsel %vm5073, %v4676, 0
        %5080 = vmatprep.subr.mxu0 %v4765
        %5081 = vmatpush1.msra.mxu0 %v4769
        %5082 = vmatprep.subr.mxu0 %v4766
        %5083 = vmatpush1.msra.mxu0 %v4770
        %5084 = vmatprep.subr.mxu0 %v4767
        %5085 = vmatpush1.msra.mxu0 %v4771
        %5086 = vmatprep.subr.mxu0 %v4768
        %5087 = vmatpush1.msra.mxu0 %v4772
        %5088 = vmatprep.subr.mxu0 %v4861
        %5089 = vmatpush1.msra.mxu0 %v4865
        %5090 = vmatprep.subr.mxu0 %v4862
        %5091 = vmatpush1.msra.mxu0 %v4866
        %5092 = vmatprep.subr.mxu0 %v4863
        %5093 = vmatpush1.msra.mxu0 %v4867
        %5094 = vmatprep.subr.mxu0 %v4864
        %5095 = vmatpush1.msra.mxu0 %v4868
        %5096 = vmatprep.subr.mxu0 %v4642
        %5097 = vmatpush1.msra.mxu0 %v4641
        %5098 = vmatprep.subr.mxu0 %v4650
        %5099 = vmatpush1.msra.mxu0 %v4649
        %5100 = vmatprep.subr.mxu0 %v4658
        %5101 = vmatpush1.msra.mxu0 %v4657
        %5102 = vmatprep.subr.mxu0 %v4666
        %5103 = vmatpush1.msra.mxu0 %v4665
        %5104 = vmatprep.subr.mxu0 %v4953
        %5105 = vmatpush1.msra.mxu0 %v4957
        %5106 = vmatprep.subr.mxu0 %v4954
        %5107 = vmatpush1.msra.mxu0 %v4958
        %5108 = vmatprep.subr.mxu0 %v4955
        %5109 = vmatpush1.msra.mxu0 %v4959
        %5110 = vmatprep.subr.mxu0 %v4956
        %5111 = vmatpush1.msra.mxu0 %v4960
        %5112 = vmatprep.subr.mxu0 %v5049
        %5113 = vmatpush1.msra.mxu0 %v5053
        %5114 = vmatprep.subr.mxu0 %v5050
        %5115 = vmatpush1.msra.mxu0 %v5054
        %5116 = vmatprep.subr.mxu0 %v5051
        %5117 = vmatpush1.msra.mxu0 %v5055
        %5118 = vmatprep.subr.mxu0 %v5052
        %5119 = vmatpush1.msra.mxu0 %v5056
        %5120 = vmatprep.subr.mxu0 0.0
        %5121 = vmatpush1.msra.mxu0 0.0
        %5122 = vmatprep.subr.mxu0 0.0
        %5123 = vmatpush1.msra.mxu0 0.0
        %5124 = vmatprep.subr.mxu0 0.0
        %5125 = vmatpush1.msra.mxu0 0.0
        %5126 = vmatprep.subr.mxu0 0.0
        %5127 = vmatpush1.msra.mxu0 0.0
        %5128 = vmatprep.subr.mxu0 0.0
        %5129 = vmatpush1.msra.mxu0 0.0
        %5130 = vmatprep.subr.mxu0 0.0
        %5131 = vmatpush1.msra.mxu0 0.0
        %5132 = vmatprep.subr.mxu0 0.0
        %5133 = vmatpush1.msra.mxu0 0.0
        %5134 = vmatprep.subr.mxu0 0.0
        %5135 = vmatpush1.msra.mxu0 0.0
        %5136 = vmatprep.subr.mxu0 0.0
        %5137 = vmatpush1.msra.mxu0 0.0
        %5138 = vmatprep.subr.mxu0 0.0
        %5139 = vmatpush1.msra.mxu0 0.0
        %5140 = vmatprep.subr.mxu0 0.0
        %5141 = vmatpush1.msra.mxu0 0.0
        %5142 = vmatprep.subr.mxu0 0.0
        %5143 = vmatpush1.msra.mxu0 0.0
        %5144 = vmatprep.mubr.f32.mxu0 %v5075
        %5145 = vmatmul.mubr.f32.gmra.mrb[0].mxu0 %v4673
        %v5146 = vpop.f32.mrb[0].mxu0
        %v5147 = vadd.f32 %v5066, %v5146
        %v5148 = vpop.f32.mrb[0].mxu0
        %v5149 = vadd.f32 %v5066, %v5148
        %5150 = vmatprep.mubr.f32.mxu0 %v5078
        %5151 = vmatmul.mubr.f32.gmra.mrb[0].mxu0 %v4675
        %v5152 = vpop.f32.mrb[0].mxu0
        %v5153 = vadd.f32 %v5071, %v5152
        %v5154 = vpop.f32.mrb[0].mxu0
        %v5155 = vadd.f32 %v5071, %v5154
        %5156 = vdwg.mxu0
        %5157 = vmatprep.subr.mxu0 %v4757
        %5158 = vmatpush1.msra.mxu0 %v4761
        %5159 = vmatprep.subr.mxu0 %v4758
        %5160 = vmatpush1.msra.mxu0 %v4762
        %5161 = vmatprep.subr.mxu0 %v4759
        %5162 = vmatpush1.msra.mxu0 %v4763
        %5163 = vmatprep.subr.mxu0 %v4760
        %5164 = vmatpush1.msra.mxu0 %v4764
        %5165 = vmatprep.subr.mxu0 %v4853
        %5166 = vmatpush1.msra.mxu0 %v4857
        %5167 = vmatprep.subr.mxu0 %v4854
        %5168 = vmatpush1.msra.mxu0 %v4858
        %5169 = vmatprep.subr.mxu0 %v4855
        %5170 = vmatpush1.msra.mxu0 %v4859
        %5171 = vmatprep.subr.mxu0 %v4856
        %5172 = vmatpush1.msra.mxu0 %v4860
        %5173 = vmatprep.subr.mxu0 %v4644
        %5174 = vmatpush1.msra.mxu0 %v4643
        %5175 = vmatprep.subr.mxu0 %v4652
        %5176 = vmatpush1.msra.mxu0 %v4651
        %5177 = vmatprep.subr.mxu0 %v4660
        %5178 = vmatpush1.msra.mxu0 %v4659
        %5179 = vmatprep.subr.mxu0 %v4668
        %5180 = vmatpush1.msra.mxu0 %v4667
        %5181 = vmatprep.subr.mxu0 %v4945
        %5182 = vmatpush1.msra.mxu0 %v4949
        %5183 = vmatprep.subr.mxu0 %v4946
        %5184 = vmatpush1.msra.mxu0 %v4950
        %5185 = vmatprep.subr.mxu0 %v4947
        %5186 = vmatpush1.msra.mxu0 %v4951
        %5187 = vmatprep.subr.mxu0 %v4948
        %5188 = vmatpush1.msra.mxu0 %v4952
        %5189 = vmatprep.subr.mxu0 %v5041
        %5190 = vmatpush1.msra.mxu0 %v5045
        %5191 = vmatprep.subr.mxu0 %v5042
        %5192 = vmatpush1.msra.mxu0 %v5046
        %5193 = vmatprep.subr.mxu0 %v5043
        %5194 = vmatpush1.msra.mxu0 %v5047
        %5195 = vmatprep.subr.mxu0 %v5044
        %5196 = vmatpush1.msra.mxu0 %v5048
        %5197 = vmatprep.subr.mxu0 0.0
        %5198 = vmatpush1.msra.mxu0 0.0
        %5199 = vmatprep.subr.mxu0 0.0
        %5200 = vmatpush1.msra.mxu0 0.0
        %5201 = vmatprep.subr.mxu0 0.0
        %5202 = vmatpush1.msra.mxu0 0.0
        %5203 = vmatprep.subr.mxu0 0.0
        %5204 = vmatpush1.msra.mxu0 0.0
        %5205 = vmatprep.subr.mxu0 0.0
        %5206 = vmatpush1.msra.mxu0 0.0
        %5207 = vmatprep.subr.mxu0 0.0
        %5208 = vmatpush1.msra.mxu0 0.0
        %5209 = vmatprep.subr.mxu0 0.0
        %5210 = vmatpush1.msra.mxu0 0.0
        %5211 = vmatprep.subr.mxu0 0.0
        %5212 = vmatpush1.msra.mxu0 0.0
        %5213 = vmatprep.subr.mxu0 0.0
        %5214 = vmatpush1.msra.mxu0 0.0
        %5215 = vmatprep.subr.mxu0 0.0
        %5216 = vmatpush1.msra.mxu0 0.0
        %5217 = vmatprep.subr.mxu0 0.0
        %5218 = vmatpush1.msra.mxu0 0.0
        %5219 = vmatprep.subr.mxu0 0.0
        %5220 = vmatpush1.msra.mxu0 0.0
        %5221 = vmatprep.mubr.f32.mxu0 %v5075
        %5222 = vmatmul.mubr.f32.gmra.mrb[0].mxu0 %v4673
        %v5223 = vpop.f32.mrb[0].mxu0
        %v5224 = vadd.f32 %v5066, %v5223
        %v5225 = vpop.f32.mrb[0].mxu0
        %v5226 = vadd.f32 %v5066, %v5225
        %5227 = vmatprep.mubr.f32.mxu0 %v5078
        %5228 = vmatmul.mubr.f32.gmra.mrb[0].mxu0 %v4675
        %v5229 = vpop.f32.mrb[0].mxu0
        %v5230 = vadd.f32 %v5071, %v5229
        %v5231 = vpop.f32.mrb[0].mxu0
        %v5232 = vadd.f32 %v5071, %v5231
        %5233 = vdwg.mxu0
        %5234 = vmatprep.subr.mxu0 %v4749
        %5235 = vmatpush1.msra.mxu0 %v4753
        %5236 = vmatprep.subr.mxu0 %v4750
        %5237 = vmatpush1.msra.mxu0 %v4754
        %5238 = vmatprep.subr.mxu0 %v4751
        %5239 = vmatpush1.msra.mxu0 %v4755
        %5240 = vmatprep.subr.mxu0 %v4752
        %5241 = vmatpush1.msra.mxu0 %v4756
        %5242 = vmatprep.subr.mxu0 %v4845
        %5243 = vmatpush1.msra.mxu0 %v4849
        %5244 = vmatprep.subr.mxu0 %v4846
        %5245 = vmatpush1.msra.mxu0 %v4850
        %5246 = vmatprep.subr.mxu0 %v4847
        %5247 = vmatpush1.msra.mxu0 %v4851
        %5248 = vmatprep.subr.mxu0 %v4848
        %5249 = vmatpush1.msra.mxu0 %v4852
        %5250 = vmatprep.subr.mxu0 %v4646
        %5251 = vmatpush1.msra.mxu0 %v4645
        %5252 = vmatprep.subr.mxu0 %v4654
        %5253 = vmatpush1.msra.mxu0 %v4653
        %5254 = vmatprep.subr.mxu0 %v4662
        %5255 = vmatpush1.msra.mxu0 %v4661
        %5256 = vmatprep.subr.mxu0 %v4670
        %5257 = vmatpush1.msra.mxu0 %v4669
        %5258 = vmatprep.subr.mxu0 %v4937
        %5259 = vmatpush1.msra.mxu0 %v4941
        %5260 = vmatprep.subr.mxu0 %v4938
        %5261 = vmatpush1.msra.mxu0 %v4942
        %5262 = vmatprep.subr.mxu0 %v4939
        %5263 = vmatpush1.msra.mxu0 %v4943
        %5264 = vmatprep.subr.mxu0 %v4940
        %5265 = vmatpush1.msra.mxu0 %v4944
        %5266 = vmatprep.subr.mxu0 %v5033
        %5267 = vmatpush1.msra.mxu0 %v5037
        %5268 = vmatprep.subr.mxu0 %v5034
        %5269 = vmatpush1.msra.mxu0 %v5038
        %5270 = vmatprep.subr.mxu0 %v5035
        %5271 = vmatpush1.msra.mxu0 %v5039
        %5272 = vmatprep.subr.mxu0 %v5036
        %5273 = vmatpush1.msra.mxu0 %v5040
        %5274 = vmatprep.subr.mxu0 0.0
        %5275 = vmatpush1.msra.mxu0 0.0
        %5276 = vmatprep.subr.mxu0 0.0
        %5277 = vmatpush1.msra.mxu0 0.0
        %5278 = vmatprep.subr.mxu0 0.0
        %5279 = vmatpush1.msra.mxu0 0.0
        %5280 = vmatprep.subr.mxu0 0.0
        %5281 = vmatpush1.msra.mxu0 0.0
        %5282 = vmatprep.subr.mxu0 0.0
        %5283 = vmatpush1.msra.mxu0 0.0
        %5284 = vmatprep.subr.mxu0 0.0
        %5285 = vmatpush1.msra.mxu0 0.0
        %5286 = vmatprep.subr.mxu0 0.0
        %5287 = vmatpush1.msra.mxu0 0.0
        %5288 = vmatprep.subr.mxu0 0.0
        %5289 = vmatpush1.msra.mxu0 0.0
        %5290 = vmatprep.subr.mxu0 0.0
        %5291 = vmatpush1.msra.mxu0 0.0
        %5292 = vmatprep.subr.mxu0 0.0
        %5293 = vmatpush1.msra.mxu0 0.0
        %5294 = vmatprep.subr.mxu0 0.0
        %5295 = vmatpush1.msra.mxu0 0.0
        %5296 = vmatprep.subr.mxu0 0.0
        %5297 = vmatpush1.msra.mxu0 0.0
        %5298 = vmatprep.mubr.f32.mxu0 %v5075
        %5299 = vmatmul.mubr.f32.gmra.mrb[0].mxu0 %v4673
        %v5300 = vpop.f32.mrb[0].mxu0
        %v5301 = vadd.f32 %v5066, %v5300
        %v5302 = vpop.f32.mrb[0].mxu0
        %v5303 = vadd.f32 %v5066, %v5302
        %5304 = vmatprep.mubr.f32.mxu0 %v5078
        %5305 = vmatmul.mubr.f32.gmra.mrb[0].mxu0 %v4675
        %v5306 = vpop.f32.mrb[0].mxu0
        %v5307 = vadd.f32 %v5071, %v5306
        %v5308 = vpop.f32.mrb[0].mxu0
        %v5309 = vadd.f32 %v5071, %v5308
        %5310 = vdwg.mxu0
        %5311 = vmatprep.subr.mxu0 %v4741
        %5312 = vmatpush1.msra.mxu0 %v4745
        %5313 = vmatprep.subr.mxu0 %v4742
        %5314 = vmatpush1.msra.mxu0 %v4746
        %5315 = vmatprep.subr.mxu0 %v4743
        %5316 = vmatpush1.msra.mxu0 %v4747
        %5317 = vmatprep.subr.mxu0 %v4744
        %5318 = vmatpush1.msra.mxu0 %v4748
        %5319 = vmatprep.subr.mxu0 %v4837
        %5320 = vmatpush1.msra.mxu0 %v4841
        %5321 = vmatprep.subr.mxu0 %v4838
        %5322 = vmatpush1.msra.mxu0 %v4842
        %5323 = vmatprep.subr.mxu0 %v4839
        %5324 = vmatpush1.msra.mxu0 %v4843
        %5325 = vmatprep.subr.mxu0 %v4840
        %5326 = vmatpush1.msra.mxu0 %v4844
        %5327 = vmatprep.subr.mxu0 %v4648
        %5328 = vmatpush1.msra.mxu0 %v4647
        %5329 = vmatprep.subr.mxu0 %v4656
        %5330 = vmatpush1.msra.mxu0 %v4655
        %5331 = vmatprep.subr.mxu0 %v4664
        %5332 = vmatpush1.msra.mxu0 %v4663
        %5333 = vmatprep.subr.mxu0 %v4672
        %5334 = vmatpush1.msra.mxu0 %v4671
        %5335 = vmatprep.subr.mxu0 %v4961
        %5336 = vmatpush1.msra.mxu0 %v4933
        %5337 = vmatprep.subr.mxu0 %v4962
        %5338 = vmatpush1.msra.mxu0 %v4934
        %5339 = vmatprep.subr.mxu0 %v4963
        %5340 = vmatpush1.msra.mxu0 %v4935
        %5341 = vmatprep.subr.mxu0 %v4964
        %5342 = vmatpush1.msra.mxu0 %v4936
        %5343 = vmatprep.subr.mxu0 %v5057
        %5344 = vmatpush1.msra.mxu0 %v5029
        %5345 = vmatprep.subr.mxu0 %v5058
        %5346 = vmatpush1.msra.mxu0 %v5030
        %5347 = vmatprep.subr.mxu0 %v5059
        %5348 = vmatpush1.msra.mxu0 %v5031
        %5349 = vmatprep.subr.mxu0 %v5060
        %5350 = vmatpush1.msra.mxu0 %v5032
        %5351 = vmatprep.subr.mxu0 0.0
        %5352 = vmatpush1.msra.mxu0 0.0
        %5353 = vmatprep.subr.mxu0 0.0
        %5354 = vmatpush1.msra.mxu0 0.0
        %5355 = vmatprep.subr.mxu0 0.0
        %5356 = vmatpush1.msra.mxu0 0.0
        %5357 = vmatprep.subr.mxu0 0.0
        %5358 = vmatpush1.msra.mxu0 0.0
        %5359 = vmatprep.subr.mxu0 0.0
        %5360 = vmatpush1.msra.mxu0 0.0
        %5361 = vmatprep.subr.mxu0 0.0
        %5362 = vmatpush1.msra.mxu0 0.0
        %5363 = vmatprep.subr.mxu0 0.0
        %5364 = vmatpush1.msra.mxu0 0.0
        %5365 = vmatprep.subr.mxu0 0.0
        %5366 = vmatpush1.msra.mxu0 0.0
        %5367 = vmatprep.subr.mxu0 0.0
        %5368 = vmatpush1.msra.mxu0 0.0
        %5369 = vmatprep.subr.mxu0 0.0
        %5370 = vmatpush1.msra.mxu0 0.0
        %5371 = vmatprep.subr.mxu0 0.0
        %5372 = vmatpush1.msra.mxu0 0.0
        %5373 = vmatprep.subr.mxu0 0.0
        %5374 = vmatpush1.msra.mxu0 0.0
        %5375 = vmatprep.mubr.f32.mxu0 %v5075
        %5376 = vmatmul.mubr.f32.gmra.mrb[0].mxu0 %v4673
        %v5377 = vpop.f32.mrb[0].mxu0
        %v5378 = vadd.f32 %v5066, %v5377
        %v5379 = vpop.f32.mrb[0].mxu0
        %v5380 = vadd.f32 %v5066, %v5379
        %5381 = vmatprep.mubr.f32.mxu0 %v5078
        %5382 = vmatmul.mubr.f32.gmra.mrb[0].mxu0 %v4675
        %v5383 = vpop.f32.mrb[0].mxu0
        %v5384 = vadd.f32 %v5071, %v5383
        %v5385 = vpop.f32.mrb[0].mxu0
        %v5386 = vadd.f32 %v5071, %v5385
        %5387 = vdwg.mxu0
        %v5388 = vmax.f32 %v5147, 0.0
        %v5389 = vmax.f32 %v5149, 0.0
        %v5390 = vmax.f32 %v5224, 0.0
        %v5391 = vmax.f32 %v5226, 0.0
        %v5392 = vmax.f32 %v5301, 0.0
        %v5393 = vmax.f32 %v5303, 0.0
        %v5394 = vmax.f32 %v5378, 0.0
        %v5395 = vmax.f32 %v5380, 0.0
        %v5396 = vmax.f32 %v5153, 0.0
        %v5397 = vmax.f32 %v5155, 0.0
        %v5398 = vmax.f32 %v5230, 0.0
        %v5399 = vmax.f32 %v5232, 0.0
        %v5400 = vmax.f32 %v5307, 0.0
        %v5401 = vmax.f32 %v5309, 0.0
        %v5402 = vmax.f32 %v5384, 0.0
        %v5403 = vmax.f32 %v5386, 0.0
        %5404 = vrot.lane.b32.xlu0 %v5388, 126
        %v5405 = vpop.permute.xlu0 %5404
        %5406 = vrot.lane.b32.xlu0 %v5396, 126
        %v5407 = vpop.permute.xlu0 %5406
        %5408 = vrot.lane.b32.xlu0 %v5389, 126
        %v5409 = vpop.permute.xlu0 %5408
        %5410 = vrot.lane.b32.xlu0 %v5397, 126
        %v5411 = vpop.permute.xlu0 %5410
        %5412 = vrot.lane.b32.xlu0 %v5390, 126
        %v5413 = vpop.permute.xlu0 %5412
        %5414 = vrot.lane.b32.xlu0 %v5398, 126
        %v5415 = vpop.permute.xlu0 %5414
        %5416 = vrot.lane.b32.xlu0 %v5391, 126
        %v5417 = vpop.permute.xlu0 %5416
        %5418 = vrot.lane.b32.xlu0 %v5399, 126
        %v5419 = vpop.permute.xlu0 %5418
        %5420 = vrot.lane.b32.xlu0 %v5392, 126
        %v5421 = vpop.permute.xlu0 %5420
        %5422 = vrot.lane.b32.xlu0 %v5400, 126
        %v5423 = vpop.permute.xlu0 %5422
        %5424 = vrot.lane.b32.xlu0 %v5393, 126
        %v5425 = vpop.permute.xlu0 %5424
        %5426 = vrot.lane.b32.xlu0 %v5401, 126
        %v5427 = vpop.permute.xlu0 %5426
        %5428 = vrot.lane.b32.xlu0 %v5394, 126
        %v5429 = vpop.permute.xlu0 %5428
        %5430 = vrot.lane.b32.xlu0 %v5402, 126
        %v5431 = vpop.permute.xlu0 %5430
        %5432 = vrot.lane.b32.xlu0 %v5395, 126
        %v5433 = vpop.permute.xlu0 %5432
        %5434 = vrot.lane.b32.xlu0 %v5403, 126
        %v5435 = vpop.permute.xlu0 %5434
        %v5436 = vsel %vm3041, %v5429, %v5433
        %v5437 = vsel %vm3041, %v5431, %v5435
        %v5438 = vsel %vm3041, %v5425, %v5429
        %v5439 = vsel %vm3041, %v5427, %v5431
        %v5440 = vsel %vm3041, %v5421, %v5425
        %v5441 = vsel %vm3041, %v5423, %v5427
        %v5442 = vsel %vm3041, %v5417, %v5421
        %v5443 = vsel %vm3041, %v5419, %v5423
        %v5444 = vsel %vm3041, %v5413, %v5417
        %v5445 = vsel %vm3041, %v5415, %v5419
        %v5446 = vsel %vm3041, %v5409, %v5413
        %v5447 = vsel %vm3041, %v5411, %v5415
        %v5448 = vsel %vm3041, %v5405, %v5409
        %v5449 = vsel %vm3041, %v5407, %v5411
        %v5450 = vsel %vm3041, %v5433, %v5405
        %v5451 = vsel %vm3041, %v5435, %v5407
        %v5452 = vmax.f32 %v5388, %v5448
        %v5453 = vmax.f32 %v5389, %v5446
        %v5454 = vmax.f32 %v5390, %v5444
        %v5455 = vmax.f32 %v5391, %v5442
        %v5456 = vmax.f32 %v5392, %v5440
        %v5457 = vmax.f32 %v5393, %v5438
        %v5458 = vmax.f32 %v5394, %v5436
        %v5459 = vmax.f32 %v5395, %v5450
        %v5460 = vmax.f32 %v5396, %v5449
        %v5461 = vmax.f32 %v5397, %v5447
        %v5462 = vmax.f32 %v5398, %v5445
        %v5463 = vmax.f32 %v5399, %v5443
        %v5464 = vmax.f32 %v5400, %v5441
        %v5465 = vmax.f32 %v5401, %v5439
        %v5466 = vmax.f32 %v5402, %v5437
        %v5467 = vmax.f32 %v5403, %v5451
        %v5468 = vmul.f32 %v5452, %v4604
        %v5469 = vmul.f32 %v5453, %v4608
        %v5470 = vmul.f32 %v5454, %v4612
        %v5471 = vmul.f32 %v5455, %v4616
        %v5472 = vmul.f32 %v5456, %v4620
        %v5473 = vmul.f32 %v5457, %v4624
        %v5474 = vmul.f32 %v5458, %v4628
        %v5475 = vmul.f32 %v5459, %v4632
        %v5476 = vmul.f32 %v5460, %v4604
        %v5477 = vmul.f32 %v5461, %v4608
        %v5478 = vmul.f32 %v5462, %v4612
        %v5479 = vmul.f32 %v5463, %v4616
        %v5480 = vmul.f32 %v5464, %v4620
        %v5481 = vmul.f32 %v5465, %v4624
        %v5482 = vmul.f32 %v5466, %v4628
        %v5483 = vmul.f32 %v5467, %v4632
        %v5484 = vld [vmem:[%s5] sm:$0x1]
        %5485 = vrot.lane.b32.xlu0 %v5468, 8
        %v5486 = vpop.permute.xlu0 %5485
        %5487 = vrot.lane.b32.xlu0 %v5476, 8
        %v5488 = vpop.permute.xlu0 %5487
        %5489 = vrot.lane.b32.xlu0 %v5469, 8
        %v5490 = vpop.permute.xlu0 %5489
        %5491 = vrot.lane.b32.xlu0 %v5477, 8
        %v5492 = vpop.permute.xlu0 %5491
        %5493 = vrot.lane.b32.xlu0 %v5470, 8
        %v5494 = vpop.permute.xlu0 %5493
        %5495 = vrot.lane.b32.xlu0 %v5478, 8
        %v5496 = vpop.permute.xlu0 %5495
        %5497 = vrot.lane.b32.xlu0 %v5471, 8
        %v5498 = vpop.permute.xlu0 %5497
        %5499 = vrot.lane.b32.xlu0 %v5479, 8
        %v5500 = vpop.permute.xlu0 %5499
        %5501 = vrot.lane.b32.xlu0 %v5472, 8
        %v5502 = vpop.permute.xlu0 %5501
        %5503 = vrot.lane.b32.xlu0 %v5480, 8
        %v5504 = vpop.permute.xlu0 %5503
        %5505 = vrot.lane.b32.xlu0 %v5473, 8
        %v5506 = vpop.permute.xlu0 %5505
        %5507 = vrot.lane.b32.xlu0 %v5481, 8
        %v5508 = vpop.permute.xlu0 %5507
        %5509 = vrot.lane.b32.xlu0 %v5474, 8
        %v5510 = vpop.permute.xlu0 %5509
        %5511 = vrot.lane.b32.xlu0 %v5482, 8
        %v5512 = vpop.permute.xlu0 %5511
        %5513 = vrot.lane.b32.xlu0 %v5475, 8
        %v5514 = vpop.permute.xlu0 %5513
        %5515 = vrot.lane.b32.xlu0 %v5483, 8
        %v5516 = vpop.permute.xlu0 %5515
        %vm5517 = vcmp.lt.s32.totalorder %v421, 8
        %v5518 = vsel %vm5517, %v5510, %v5514
        %v5519 = vsel %vm5517, %v5512, %v5516
        %v5520 = vsel %vm5517, %v5506, %v5510
        %v5521 = vsel %vm5517, %v5508, %v5512
        %v5522 = vsel %vm5517, %v5502, %v5506
        %v5523 = vsel %vm5517, %v5504, %v5508
        %v5524 = vsel %vm5517, %v5498, %v5502
        %v5525 = vsel %vm5517, %v5500, %v5504
        %v5526 = vsel %vm5517, %v5494, %v5498
        %v5527 = vsel %vm5517, %v5496, %v5500
        %v5528 = vsel %vm5517, %v5490, %v5494
        %v5529 = vsel %vm5517, %v5492, %v5496
        %v5530 = vsel %vm5517, %v5486, %v5490
        %v5531 = vsel %vm5517, %v5488, %v5492
        %v5532 = vsel %vm5517, %v5514, %v5486
        %v5533 = vsel %vm5517, %v5516, %v5488
        %5534 = vrot.lane.b32.xlu0 %v5468, 4
        %v5535 = vpop.permute.xlu0 %5534
        %5536 = vrot.lane.b32.xlu0 %v5476, 4
        %v5537 = vpop.permute.xlu0 %5536
        %5538 = vrot.lane.b32.xlu0 %v5469, 4
        %v5539 = vpop.permute.xlu0 %5538
        %5540 = vrot.lane.b32.xlu0 %v5477, 4
        %v5541 = vpop.permute.xlu0 %5540
        %5542 = vrot.lane.b32.xlu0 %v5470, 4
        %v5543 = vpop.permute.xlu0 %5542
        %5544 = vrot.lane.b32.xlu0 %v5478, 4
        %v5545 = vpop.permute.xlu0 %5544
        %5546 = vrot.lane.b32.xlu0 %v5471, 4
        %v5547 = vpop.permute.xlu0 %5546
        %5548 = vrot.lane.b32.xlu0 %v5479, 4
        %v5549 = vpop.permute.xlu0 %5548
        %5550 = vrot.lane.b32.xlu0 %v5472, 4
        %v5551 = vpop.permute.xlu0 %5550
        %5552 = vrot.lane.b32.xlu0 %v5480, 4
        %v5553 = vpop.permute.xlu0 %5552
        %5554 = vrot.lane.b32.xlu0 %v5473, 4
        %v5555 = vpop.permute.xlu0 %5554
        %5556 = vrot.lane.b32.xlu0 %v5481, 4
        %v5557 = vpop.permute.xlu0 %5556
        %5558 = vrot.lane.b32.xlu0 %v5474, 4
        %v5559 = vpop.permute.xlu0 %5558
        %5560 = vrot.lane.b32.xlu0 %v5482, 4
        %v5561 = vpop.permute.xlu0 %5560
        %5562 = vrot.lane.b32.xlu0 %v5475, 4
        %v5563 = vpop.permute.xlu0 %5562
        %5564 = vrot.lane.b32.xlu0 %v5483, 4
        %v5565 = vpop.permute.xlu0 %5564
        %v5566 = vsel %vm422, %v5559, %v5563
        %v5567 = vsel %vm422, %v5561, %v5565
        %v5568 = vsel %vm422, %v5555, %v5559
        %v5569 = vsel %vm422, %v5557, %v5561
        %v5570 = vsel %vm422, %v5551, %v5555
        %v5571 = vsel %vm422, %v5553, %v5557
        %v5572 = vsel %vm422, %v5547, %v5551
        %v5573 = vsel %vm422, %v5549, %v5553
        %v5574 = vsel %vm422, %v5543, %v5547
        %v5575 = vsel %vm422, %v5545, %v5549
        %v5576 = vsel %vm422, %v5539, %v5543
        %v5577 = vsel %vm422, %v5541, %v5545
        %v5578 = vsel %vm422, %v5535, %v5539
        %v5579 = vsel %vm422, %v5537, %v5541
        %v5580 = vsel %vm422, %v5563, %v5535
        %v5581 = vsel %vm422, %v5565, %v5537
        %5582 = vrot.lane.b32.xlu0 %v5468, 124
        %v5583 = vpop.permute.xlu0 %5582
        %5584 = vrot.lane.b32.xlu0 %v5476, 124
        %v5585 = vpop.permute.xlu0 %5584
        %5586 = vrot.lane.b32.xlu0 %v5469, 124
        %v5587 = vpop.permute.xlu0 %5586
        %5588 = vrot.lane.b32.xlu0 %v5477, 124
        %v5589 = vpop.permute.xlu0 %5588
        %5590 = vrot.lane.b32.xlu0 %v5470, 124
        %v5591 = vpop.permute.xlu0 %5590
        %5592 = vrot.lane.b32.xlu0 %v5478, 124
        %v5593 = vpop.permute.xlu0 %5592
        %5594 = vrot.lane.b32.xlu0 %v5471, 124
        %v5595 = vpop.permute.xlu0 %5594
        %5596 = vrot.lane.b32.xlu0 %v5479, 124
        %v5597 = vpop.permute.xlu0 %5596
        %5598 = vrot.lane.b32.xlu0 %v5472, 124
        %v5599 = vpop.permute.xlu0 %5598
        %5600 = vrot.lane.b32.xlu0 %v5480, 124
        %v5601 = vpop.permute.xlu0 %5600
        %5602 = vrot.lane.b32.xlu0 %v5473, 124
        %v5603 = vpop.permute.xlu0 %5602
        %5604 = vrot.lane.b32.xlu0 %v5481, 124
        %v5605 = vpop.permute.xlu0 %5604
        %5606 = vrot.lane.b32.xlu0 %v5474, 124
        %v5607 = vpop.permute.xlu0 %5606
        %5608 = vrot.lane.b32.xlu0 %v5482, 124
        %v5609 = vpop.permute.xlu0 %5608
        %5610 = vrot.lane.b32.xlu0 %v5475, 124
        %v5611 = vpop.permute.xlu0 %5610
        %5612 = vrot.lane.b32.xlu0 %v5483, 124
        %v5613 = vpop.permute.xlu0 %5612
        %v5614 = vsel %vm3947, %v5607, %v5611
        %v5615 = vsel %vm3947, %v5609, %v5613
        %v5616 = vsel %vm3947, %v5603, %v5607
        %v5617 = vsel %vm3947, %v5605, %v5609
        %v5618 = vsel %vm3947, %v5599, %v5603
        %v5619 = vsel %vm3947, %v5601, %v5605
        %v5620 = vsel %vm3947, %v5595, %v5599
        %v5621 = vsel %vm3947, %v5597, %v5601
        %v5622 = vsel %vm3947, %v5591, %v5595
        %v5623 = vsel %vm3947, %v5593, %v5597
        %v5624 = vsel %vm3947, %v5587, %v5591
        %v5625 = vsel %vm3947, %v5589, %v5593
        %v5626 = vsel %vm3947, %v5583, %v5587
        %v5627 = vsel %vm3947, %v5585, %v5589
        %v5628 = vsel %vm3947, %v5611, %v5583
        %v5629 = vsel %vm3947, %v5613, %v5585
        %5630 = vrot.lane.b32.xlu0 %v5468, 120
        %v5631 = vpop.permute.xlu0 %5630
        %5632 = vrot.lane.b32.xlu0 %v5476, 120
        %v5633 = vpop.permute.xlu0 %5632
        %5634 = vrot.lane.b32.xlu0 %v5469, 120
        %v5635 = vpop.permute.xlu0 %5634
        %5636 = vrot.lane.b32.xlu0 %v5477, 120
        %v5637 = vpop.permute.xlu0 %5636
        %5638 = vrot.lane.b32.xlu0 %v5470, 120
        %v5639 = vpop.permute.xlu0 %5638
        %5640 = vrot.lane.b32.xlu0 %v5478, 120
        %v5641 = vpop.permute.xlu0 %5640
        %5642 = vrot.lane.b32.xlu0 %v5471, 120
        %v5643 = vpop.permute.xlu0 %5642
        %5644 = vrot.lane.b32.xlu0 %v5479, 120
        %v5645 = vpop.permute.xlu0 %5644
        %5646 = vrot.lane.b32.xlu0 %v5472, 120
        %v5647 = vpop.permute.xlu0 %5646
        %5648 = vrot.lane.b32.xlu0 %v5480, 120
        %v5649 = vpop.permute.xlu0 %5648
        %5650 = vrot.lane.b32.xlu0 %v5473, 120
        %v5651 = vpop.permute.xlu0 %5650
        %5652 = vrot.lane.b32.xlu0 %v5481, 120
        %v5653 = vpop.permute.xlu0 %5652
        %5654 = vrot.lane.b32.xlu0 %v5474, 120
        %v5655 = vpop.permute.xlu0 %5654
        %5656 = vrot.lane.b32.xlu0 %v5482, 120
        %v5657 = vpop.permute.xlu0 %5656
        %5658 = vrot.lane.b32.xlu0 %v5475, 120
        %v5659 = vpop.permute.xlu0 %5658
        %5660 = vrot.lane.b32.xlu0 %v5483, 120
        %v5661 = vpop.permute.xlu0 %5660
        %vm5662 = vcmp.lt.s32.totalorder %v421, 120
        %v5663 = vsel %vm5662, %v5655, %v5659
        %v5664 = vsel %vm5662, %v5657, %v5661
        %v5665 = vsel %vm5662, %v5651, %v5655
        %v5666 = vsel %vm5662, %v5653, %v5657
        %v5667 = vsel %vm5662, %v5647, %v5651
        %v5668 = vsel %vm5662, %v5649, %v5653
        %v5669 = vsel %vm5662, %v5643, %v5647
        %v5670 = vsel %vm5662, %v5645, %v5649
        %v5671 = vsel %vm5662, %v5639, %v5643
        %v5672 = vsel %vm5662, %v5641, %v5645
        %v5673 = vsel %vm5662, %v5635, %v5639
        %v5674 = vsel %vm5662, %v5637, %v5641
        %v5675 = vsel %vm5662, %v5631, %v5635
        %v5676 = vsel %vm5662, %v5633, %v5637
        %v5677 = vsel %vm5662, %v5659, %v5631
        %v5678 = vsel %vm5662, %v5661, %v5633
        %v5679 = vld [vmem:[#allocation2] sm:$0x1]
        %5681 = vset.pattern.permute.xlu0 0
        %5682 = vperm.xlu0 %5681, %v5679
        %v5683 = vpop.permute.xlu0 %5682
        %v5685 = vlaneseq
        %v5686 = vshrl.u32 %v5685, 7
        %v5687 = vsub.s32 0, %v5686
        %v5688 = vrot.slane %v5683, %v5687
        %vm5689 = vcmask 654336
        %v5691 = vsel %vm5689, %v5484, 0
        %5693 = vmatprep.subr.mxu0 %v5530
        %5694 = vmatpush1.msra.mxu0 %v5532
        %5695 = vmatprep.subr.mxu0 %v5531
        %5696 = vmatpush1.msra.mxu0 %v5533
        %5697 = vmatprep.subr.mxu0 %v5578
        %5698 = vmatpush1.msra.mxu0 %v5580
        %5699 = vmatprep.subr.mxu0 %v5579
        %5700 = vmatpush1.msra.mxu0 %v5581
        %5701 = vmatprep.subr.mxu0 %v5469
        %5702 = vmatpush1.msra.mxu0 %v5468
        %5703 = vmatprep.subr.mxu0 %v5477
        %5704 = vmatpush1.msra.mxu0 %v5476
        %5705 = vmatprep.subr.mxu0 %v5624
        %5706 = vmatpush1.msra.mxu0 %v5626
        %5707 = vmatprep.subr.mxu0 %v5625
        %5708 = vmatpush1.msra.mxu0 %v5627
        %5709 = vmatprep.subr.mxu0 %v5673
        %5710 = vmatpush1.msra.mxu0 %v5675
        %5711 = vmatprep.subr.mxu0 %v5674
        %5712 = vmatpush1.msra.mxu0 %v5676
        %5713 = vmatprep.subr.mxu0 0.0
        %5714 = vmatpush1.msra.mxu0 0.0
        %5715 = vmatprep.subr.mxu0 0.0
        %5716 = vmatpush1.msra.mxu0 0.0
        %5717 = vmatprep.subr.mxu0 0.0
        %5718 = vmatpush1.msra.mxu0 0.0
        %5719 = vmatprep.subr.mxu0 0.0
        %5720 = vmatpush1.msra.mxu0 0.0
        %5721 = vmatprep.subr.mxu0 0.0
        %5722 = vmatpush1.msra.mxu0 0.0
        %5723 = vmatprep.subr.mxu0 0.0
        %5724 = vmatpush1.msra.mxu0 0.0
        %5725 = vmatprep.subr.mxu0 0.0
        %5726 = vmatpush1.msra.mxu0 0.0
        %5727 = vmatprep.subr.mxu0 0.0
        %5728 = vmatpush1.msra.mxu0 0.0
        %5729 = vmatprep.subr.mxu0 0.0
        %5730 = vmatpush1.msra.mxu0 0.0
        %5731 = vmatprep.subr.mxu0 0.0
        %5732 = vmatpush1.msra.mxu0 0.0
        %5733 = vmatprep.subr.mxu0 0.0
        %5734 = vmatpush1.msra.mxu0 0.0
        %5735 = vmatprep.subr.mxu0 0.0
        %5736 = vmatpush1.msra.mxu0 0.0
        %5737 = vmatprep.subr.mxu0 0.0
        %5738 = vmatpush1.msra.mxu0 0.0
        %5739 = vmatprep.subr.mxu0 0.0
        %5740 = vmatpush1.msra.mxu0 0.0
        %5741 = vmatprep.subr.mxu0 0.0
        %5742 = vmatpush1.msra.mxu0 0.0
        %5743 = vmatprep.subr.mxu0 0.0
        %5744 = vmatpush1.msra.mxu0 0.0
        %5745 = vmatprep.subr.mxu0 0.0
        %5746 = vmatpush1.msra.mxu0 0.0
        %5747 = vmatprep.subr.mxu0 0.0
        %5748 = vmatpush1.msra.mxu0 0.0
        %5749 = vmatprep.subr.mxu0 0.0
        %5750 = vmatpush1.msra.mxu0 0.0
        %5751 = vmatprep.subr.mxu0 0.0
        %5752 = vmatpush1.msra.mxu0 0.0
        %5753 = vmatprep.subr.mxu0 0.0
        %5754 = vmatpush1.msra.mxu0 0.0
        %5755 = vmatprep.subr.mxu0 0.0
        %5756 = vmatpush1.msra.mxu0 0.0
        %5757 = vmatprep.mubr.f32.mxu0 0.0
        %5758 = vmatmul.mubr.f32.gmra.mrb[0].mxu0 %v5691
        %v5759 = vpop.f32.mrb[0].mxu0
        %v5760 = vadd.f32 %v5688, %v5759
        %v5761 = vpop.f32.mrb[0].mxu0
        %v5762 = vadd.f32 %v5688, %v5761
        %5763 = vdwg.mxu0
        %5764 = vmatprep.subr.mxu0 %v5526
        %5765 = vmatpush1.msra.mxu0 %v5528
        %5766 = vmatprep.subr.mxu0 %v5527
        %5767 = vmatpush1.msra.mxu0 %v5529
        %5768 = vmatprep.subr.mxu0 %v5574
        %5769 = vmatpush1.msra.mxu0 %v5576
        %5770 = vmatprep.subr.mxu0 %v5575
        %5771 = vmatpush1.msra.mxu0 %v5577
        %5772 = vmatprep.subr.mxu0 %v5471
        %5773 = vmatpush1.msra.mxu0 %v5470
        %5774 = vmatprep.subr.mxu0 %v5479
        %5775 = vmatpush1.msra.mxu0 %v5478
        %5776 = vmatprep.subr.mxu0 %v5620
        %5777 = vmatpush1.msra.mxu0 %v5622
        %5778 = vmatprep.subr.mxu0 %v5621
        %5779 = vmatpush1.msra.mxu0 %v5623
        %5780 = vmatprep.subr.mxu0 %v5669
        %5781 = vmatpush1.msra.mxu0 %v5671
        %5782 = vmatprep.subr.mxu0 %v5670
        %5783 = vmatpush1.msra.mxu0 %v5672
        %5784 = vmatprep.subr.mxu0 0.0
        %5785 = vmatpush1.msra.mxu0 0.0
        %5786 = vmatprep.subr.mxu0 0.0
        %5787 = vmatpush1.msra.mxu0 0.0
        %5788 = vmatprep.subr.mxu0 0.0
        %5789 = vmatpush1.msra.mxu0 0.0
        %5790 = vmatprep.subr.mxu0 0.0
        %5791 = vmatpush1.msra.mxu0 0.0
        %5792 = vmatprep.subr.mxu0 0.0
        %5793 = vmatpush1.msra.mxu0 0.0
        %5794 = vmatprep.subr.mxu0 0.0
        %5795 = vmatpush1.msra.mxu0 0.0
        %5796 = vmatprep.subr.mxu0 0.0
        %5797 = vmatpush1.msra.mxu0 0.0
        %5798 = vmatprep.subr.mxu0 0.0
        %5799 = vmatpush1.msra.mxu0 0.0
        %5800 = vmatprep.subr.mxu0 0.0
        %5801 = vmatpush1.msra.mxu0 0.0
        %5802 = vmatprep.subr.mxu0 0.0
        %5803 = vmatpush1.msra.mxu0 0.0
        %5804 = vmatprep.subr.mxu0 0.0
        %5805 = vmatpush1.msra.mxu0 0.0
        %5806 = vmatprep.subr.mxu0 0.0
        %5807 = vmatpush1.msra.mxu0 0.0
        %5808 = vmatprep.subr.mxu0 0.0
        %5809 = vmatpush1.msra.mxu0 0.0
        %5810 = vmatprep.subr.mxu0 0.0
        %5811 = vmatpush1.msra.mxu0 0.0
        %5812 = vmatprep.subr.mxu0 0.0
        %5813 = vmatpush1.msra.mxu0 0.0
        %5814 = vmatprep.subr.mxu0 0.0
        %5815 = vmatpush1.msra.mxu0 0.0
        %5816 = vmatprep.subr.mxu0 0.0
        %5817 = vmatpush1.msra.mxu0 0.0
        %5818 = vmatprep.subr.mxu0 0.0
        %5819 = vmatpush1.msra.mxu0 0.0
        %5820 = vmatprep.subr.mxu0 0.0
        %5821 = vmatpush1.msra.mxu0 0.0
        %5822 = vmatprep.subr.mxu0 0.0
        %5823 = vmatpush1.msra.mxu0 0.0
        %5824 = vmatprep.subr.mxu0 0.0
        %5825 = vmatpush1.msra.mxu0 0.0
        %5826 = vmatprep.subr.mxu0 0.0
        %5827 = vmatpush1.msra.mxu0 0.0
        %5828 = vmatprep.mubr.f32.mxu0 0.0
        %5829 = vmatmul.mubr.f32.gmra.mrb[0].mxu0 %v5691
        %v5830 = vpop.f32.mrb[0].mxu0
        %v5831 = vadd.f32 %v5688, %v5830
        %v5832 = vpop.f32.mrb[0].mxu0
        %v5833 = vadd.f32 %v5688, %v5832
        %5834 = vdwg.mxu0
        %5835 = vmatprep.subr.mxu0 %v5522
        %5836 = vmatpush1.msra.mxu0 %v5524
        %5837 = vmatprep.subr.mxu0 %v5523
        %5838 = vmatpush1.msra.mxu0 %v5525
        %5839 = vmatprep.subr.mxu0 %v5570
        %5840 = vmatpush1.msra.mxu0 %v5572
        %5841 = vmatprep.subr.mxu0 %v5571
        %5842 = vmatpush1.msra.mxu0 %v5573
        %5843 = vmatprep.subr.mxu0 %v5473
        %5844 = vmatpush1.msra.mxu0 %v5472
        %5845 = vmatprep.subr.mxu0 %v5481
        %5846 = vmatpush1.msra.mxu0 %v5480
        %5847 = vmatprep.subr.mxu0 %v5616
        %5848 = vmatpush1.msra.mxu0 %v5618
        %5849 = vmatprep.subr.mxu0 %v5617
        %5850 = vmatpush1.msra.mxu0 %v5619
        %5851 = vmatprep.subr.mxu0 %v5665
        %5852 = vmatpush1.msra.mxu0 %v5667
        %5853 = vmatprep.subr.mxu0 %v5666
        %5854 = vmatpush1.msra.mxu0 %v5668
        %5855 = vmatprep.subr.mxu0 0.0
        %5856 = vmatpush1.msra.mxu0 0.0
        %5857 = vmatprep.subr.mxu0 0.0
        %5858 = vmatpush1.msra.mxu0 0.0
        %5859 = vmatprep.subr.mxu0 0.0
        %5860 = vmatpush1.msra.mxu0 0.0
        %5861 = vmatprep.subr.mxu0 0.0
        %5862 = vmatpush1.msra.mxu0 0.0
        %5863 = vmatprep.subr.mxu0 0.0
        %5864 = vmatpush1.msra.mxu0 0.0
        %5865 = vmatprep.subr.mxu0 0.0
        %5866 = vmatpush1.msra.mxu0 0.0
        %5867 = vmatprep.subr.mxu0 0.0
        %5868 = vmatpush1.msra.mxu0 0.0
        %5869 = vmatprep.subr.mxu0 0.0
        %5870 = vmatpush1.msra.mxu0 0.0
        %5871 = vmatprep.subr.mxu0 0.0
        %5872 = vmatpush1.msra.mxu0 0.0
        %5873 = vmatprep.subr.mxu0 0.0
        %5874 = vmatpush1.msra.mxu0 0.0
        %5875 = vmatprep.subr.mxu0 0.0
        %5876 = vmatpush1.msra.mxu0 0.0
        %5877 = vmatprep.subr.mxu0 0.0
        %5878 = vmatpush1.msra.mxu0 0.0
        %5879 = vmatprep.subr.mxu0 0.0
        %5880 = vmatpush1.msra.mxu0 0.0
        %5881 = vmatprep.subr.mxu0 0.0
        %5882 = vmatpush1.msra.mxu0 0.0
        %5883 = vmatprep.subr.mxu0 0.0
        %5884 = vmatpush1.msra.mxu0 0.0
        %5885 = vmatprep.subr.mxu0 0.0
        %5886 = vmatpush1.msra.mxu0 0.0
        %5887 = vmatprep.subr.mxu0 0.0
        %5888 = vmatpush1.msra.mxu0 0.0
        %5889 = vmatprep.subr.mxu0 0.0
        %5890 = vmatpush1.msra.mxu0 0.0
        %5891 = vmatprep.subr.mxu0 0.0
        %5892 = vmatpush1.msra.mxu0 0.0
        %5893 = vmatprep.subr.mxu0 0.0
        %5894 = vmatpush1.msra.mxu0 0.0
        %5895 = vmatprep.subr.mxu0 0.0
        %5896 = vmatpush1.msra.mxu0 0.0
        %5897 = vmatprep.subr.mxu0 0.0
        %5898 = vmatpush1.msra.mxu0 0.0
        %5899 = vmatprep.mubr.f32.mxu0 0.0
        %5900 = vmatmul.mubr.f32.gmra.mrb[0].mxu0 %v5691
        %v5901 = vpop.f32.mrb[0].mxu0
        %v5902 = vadd.f32 %v5688, %v5901
        %v5903 = vpop.f32.mrb[0].mxu0
        %v5904 = vadd.f32 %v5688, %v5903
        %5905 = vdwg.mxu0
        %5906 = vmatprep.subr.mxu0 %v5518
        %5907 = vmatpush1.msra.mxu0 %v5520
        %5908 = vmatprep.subr.mxu0 %v5519
        %5909 = vmatpush1.msra.mxu0 %v5521
        %5910 = vmatprep.subr.mxu0 %v5566
        %5911 = vmatpush1.msra.mxu0 %v5568
        %5912 = vmatprep.subr.mxu0 %v5567
        %5913 = vmatpush1.msra.mxu0 %v5569
        %5914 = vmatprep.subr.mxu0 %v5475
        %5915 = vmatpush1.msra.mxu0 %v5474
        %5916 = vmatprep.subr.mxu0 %v5483
        %5917 = vmatpush1.msra.mxu0 %v5482
        %5918 = vmatprep.subr.mxu0 %v5628
        %5919 = vmatpush1.msra.mxu0 %v5614
        %5920 = vmatprep.subr.mxu0 %v5629
        %5921 = vmatpush1.msra.mxu0 %v5615
        %5922 = vmatprep.subr.mxu0 %v5677
        %5923 = vmatpush1.msra.mxu0 %v5663
        %5924 = vmatprep.subr.mxu0 %v5678
        %5925 = vmatpush1.msra.mxu0 %v5664
        %5926 = vmatprep.subr.mxu0 0.0
        %5927 = vmatpush1.msra.mxu0 0.0
        %5928 = vmatprep.subr.mxu0 0.0
        %5929 = vmatpush1.msra.mxu0 0.0
        %5930 = vmatprep.subr.mxu0 0.0
        %5931 = vmatpush1.msra.mxu0 0.0
        %5932 = vmatprep.subr.mxu0 0.0
        %5933 = vmatpush1.msra.mxu0 0.0
        %5934 = vmatprep.subr.mxu0 0.0
        %5935 = vmatpush1.msra.mxu0 0.0
        %5936 = vmatprep.subr.mxu0 0.0
        %5937 = vmatpush1.msra.mxu0 0.0
        %5938 = vmatprep.subr.mxu0 0.0
        %5939 = vmatpush1.msra.mxu0 0.0
        %5940 = vmatprep.subr.mxu0 0.0
        %5941 = vmatpush1.msra.mxu0 0.0
        %5942 = vmatprep.subr.mxu0 0.0
        %5943 = vmatpush1.msra.mxu0 0.0
        %5944 = vmatprep.subr.mxu0 0.0
        %5945 = vmatpush1.msra.mxu0 0.0
        %5946 = vmatprep.subr.mxu0 0.0
        %5947 = vmatpush1.msra.mxu0 0.0
        %5948 = vmatprep.subr.mxu0 0.0
        %5949 = vmatpush1.msra.mxu0 0.0
        %5950 = vmatprep.subr.mxu0 0.0
        %5951 = vmatpush1.msra.mxu0 0.0
        %5952 = vmatprep.subr.mxu0 0.0
        %5953 = vmatpush1.msra.mxu0 0.0
        %5954 = vmatprep.subr.mxu0 0.0
        %5955 = vmatpush1.msra.mxu0 0.0
        %5956 = vmatprep.subr.mxu0 0.0
        %5957 = vmatpush1.msra.mxu0 0.0
        %5958 = vmatprep.subr.mxu0 0.0
        %5959 = vmatpush1.msra.mxu0 0.0
        %5960 = vmatprep.subr.mxu0 0.0
        %5961 = vmatpush1.msra.mxu0 0.0
        %5962 = vmatprep.subr.mxu0 0.0
        %5963 = vmatpush1.msra.mxu0 0.0
        %5964 = vmatprep.subr.mxu0 0.0
        %5965 = vmatpush1.msra.mxu0 0.0
        %5966 = vmatprep.subr.mxu0 0.0
        %5967 = vmatpush1.msra.mxu0 0.0
        %5968 = vmatprep.subr.mxu0 0.0
        %5969 = vmatpush1.msra.mxu0 0.0
        %5970 = vmatprep.mubr.f32.mxu0 0.0
        %5971 = vmatmul.mubr.f32.gmra.mrb[0].mxu0 %v5691
        %v5972 = vpop.f32.mrb[0].mxu0
        %v5973 = vadd.f32 %v5688, %v5972
        %v5974 = vpop.f32.mrb[0].mxu0
        %v5975 = vadd.f32 %v5688, %v5974
        %5976 = vdwg.mxu0
        %v5977 = vmax.f32 %v5760, 0.0
        %v5978 = vmax.f32 %v5762, 0.0
        %v5979 = vmax.f32 %v5831, 0.0
        %v5980 = vmax.f32 %v5833, 0.0
        %v5981 = vmax.f32 %v5902, 0.0
        %v5982 = vmax.f32 %v5904, 0.0
        %v5983 = vmax.f32 %v5973, 0.0
        %v5984 = vmax.f32 %v5975, 0.0
        %5985 = vrot.lane.b32.xlu0 %v5977, 124
        %v5986 = vpop.permute.xlu0 %5985
        %5987 = vrot.lane.b32.xlu0 %v5978, 124
        %v5988 = vpop.permute.xlu0 %5987
        %5989 = vrot.lane.b32.xlu0 %v5979, 124
        %v5990 = vpop.permute.xlu0 %5989
        %5991 = vrot.lane.b32.xlu0 %v5980, 124
        %v5992 = vpop.permute.xlu0 %5991
        %5993 = vrot.lane.b32.xlu0 %v5981, 124
        %v5994 = vpop.permute.xlu0 %5993
        %5995 = vrot.lane.b32.xlu0 %v5982, 124
        %v5996 = vpop.permute.xlu0 %5995
        %5997 = vrot.lane.b32.xlu0 %v5983, 124
        %v5998 = vpop.permute.xlu0 %5997
        %5999 = vrot.lane.b32.xlu0 %v5984, 124
        %v6000 = vpop.permute.xlu0 %5999
        %v6001 = vsel %vm3947, %v5998, %v6000
        %v6002 = vsel %vm3947, %v5996, %v5998
        %v6003 = vsel %vm3947, %v5994, %v5996
        %v6004 = vsel %vm3947, %v5992, %v5994
        %v6005 = vsel %vm3947, %v5990, %v5992
        %v6006 = vsel %vm3947, %v5988, %v5990
        %v6007 = vsel %vm3947, %v5986, %v5988
        %v6008 = vsel %vm3947, %v6000, %v5986
        %v6009 = vmax.f32 %v5977, %v6007
        %v6010 = vmax.f32 %v5978, %v6006
        %v6011 = vmax.f32 %v5979, %v6005
        %v6012 = vmax.f32 %v5980, %v6004
        %v6013 = vmax.f32 %v5981, %v6003
        %v6014 = vmax.f32 %v5982, %v6002
        %v6015 = vmax.f32 %v5983, %v6001
        %v6016 = vmax.f32 %v5984, %v6008
        %v6017 = vld [vmem:[%s8] sm:$0xff]
        %v6018 = vld [vmem:[%s8 + $0x8] sm:$0xff]
        %v6019 = vld [vmem:[%s8 + $0x10] sm:$0xff]
        %v6020 = vld [vmem:[%s8 + $0x18] sm:$0xff]
        %v6021 = vld [vmem:[%s8 + $0x20] sm:$0xff]
        %v6022 = vld [vmem:[%s8 + $0x28] sm:$0xff]
        %v6023 = vld [vmem:[%s8 + $0x30] sm:$0xff]
        %v6024 = vld [vmem:[%s8 + $0x38] sm:$0xff]
        %v6025 = vld [vmem:[%s8 + $0x40] sm:$0xff]
        %v6026 = vld [vmem:[%s8 + $0x48] sm:$0xff]
        %v6027 = vld [vmem:[%s8 + $0x50] sm:$0xff]
        %v6028 = vld [vmem:[%s8 + $0x58] sm:$0xff]
        %v6029 = vld [vmem:[%s8 + $0x60] sm:$0xff]
        %v6030 = vld [vmem:[%s8 + $0x68] sm:$0xff]
        %v6031 = vld [vmem:[%s8 + $0x70] sm:$0xff]
        %v6032 = vld [vmem:[%s8 + $0x78] sm:$0xff]
        %v6033 = vld [vmem:[%s9] sm:$0x1]
        %6034 = vmatprep.subr.mxu0 0.0
        %6035 = vmatpush1.msra.mxu0 %v6017
        %6036 = vmatprep.subr.mxu0 0.0
        %6037 = vmatpush1.msra.mxu0 %v6018
        %6038 = vmatprep.subr.mxu0 0.0
        %6039 = vmatpush1.msra.mxu0 %v6019
        %6040 = vmatprep.subr.mxu0 0.0
        %6041 = vmatpush1.msra.mxu0 %v6020
        %6042 = vmatprep.subr.mxu0 0.0
        %6043 = vmatpush1.msra.mxu0 %v6021
        %6044 = vmatprep.subr.mxu0 0.0
        %6045 = vmatpush1.msra.mxu0 %v6022
        %6046 = vmatprep.subr.mxu0 0.0
        %6047 = vmatpush1.msra.mxu0 %v6023
        %6048 = vmatprep.subr.mxu0 0.0
        %6049 = vmatpush1.msra.mxu0 %v6024
        %6050 = vmatprep.subr.mxu0 0.0
        %6051 = vmatpush1.msra.mxu0 %v6025
        %6052 = vmatprep.subr.mxu0 0.0
        %6053 = vmatpush1.msra.mxu0 %v6026
        %6054 = vmatprep.subr.mxu0 0.0
        %6055 = vmatpush1.msra.mxu0 %v6027
        %6056 = vmatprep.subr.mxu0 0.0
        %6057 = vmatpush1.msra.mxu0 %v6028
        %6058 = vmatprep.subr.mxu0 0.0
        %6059 = vmatpush1.msra.mxu0 %v6029
        %6060 = vmatprep.subr.mxu0 0.0
        %6061 = vmatpush1.msra.mxu0 %v6030
        %6062 = vmatprep.subr.mxu0 0.0
        %6063 = vmatpush1.msra.mxu0 %v6031
        %6064 = vmatprep.subr.mxu0 0.0
        %6065 = vmatpush1.msra.mxu0 %v6032
        %6066 = vmatprep.subr.mxu0 0.0
        %6067 = vmatpush1.msra.mxu0 0.0
        %6068 = vmatprep.subr.mxu0 0.0
        %6069 = vmatpush1.msra.mxu0 0.0
        %6070 = vmatprep.subr.mxu0 0.0
        %6071 = vmatpush1.msra.mxu0 0.0
        %6072 = vmatprep.subr.mxu0 0.0
        %6073 = vmatpush1.msra.mxu0 0.0
        %6074 = vmatprep.subr.mxu0 0.0
        %6075 = vmatpush1.msra.mxu0 0.0
        %6076 = vmatprep.subr.mxu0 0.0
        %6077 = vmatpush1.msra.mxu0 0.0
        %6078 = vmatprep.subr.mxu0 0.0
        %6079 = vmatpush1.msra.mxu0 0.0
        %6080 = vmatprep.subr.mxu0 0.0
        %6081 = vmatpush1.msra.mxu0 0.0
        %6082 = vmatprep.subr.mxu0 0.0
        %6083 = vmatpush1.msra.mxu0 0.0
        %6084 = vmatprep.subr.mxu0 0.0
        %6085 = vmatpush1.msra.mxu0 0.0
        %6086 = vmatprep.subr.mxu0 0.0
        %6087 = vmatpush1.msra.mxu0 0.0
        %6088 = vmatprep.subr.mxu0 0.0
        %6089 = vmatpush1.msra.mxu0 0.0
        %6090 = vmatprep.subr.mxu0 0.0
        %6091 = vmatpush1.msra.mxu0 0.0
        %6092 = vmatprep.subr.mxu0 0.0
        %6093 = vmatpush1.msra.mxu0 0.0
        %6094 = vmatprep.subr.mxu0 0.0
        %6095 = vmatpush1.msra.mxu0 0.0
        %6096 = vmatprep.subr.mxu0 0.0
        %6097 = vmatpush1.msra.mxu0 0.0
        %6098 = vmatprep.mubr.f32.mxu0 0.0
        %6099 = vmatmul.mubr.f32.gmra.mrb[0].mxu0 %v6009
        %v6100 = vpop.f32.mrb[0].mxu0
        %v6101 = vadd.f32 %v6033, %v6100
        %v6102 = vpop.f32.mrb[0].mxu0
        %6103 = vdwg.mxu0
        %vm6104 = vcmask 253952
        %6105 = vst.msk [vmem:[%s352] sm:$0x1] %vm6104, %v6101
        %6106 = vmatprep.subr.mxu0 0.0
        %6107 = vmatpush1.msra.mxu0 %v6017
        %6108 = vmatprep.subr.mxu0 0.0
        %6109 = vmatpush1.msra.mxu0 %v6018
        %6110 = vmatprep.subr.mxu0 0.0
        %6111 = vmatpush1.msra.mxu0 %v6019
        %6112 = vmatprep.subr.mxu0 0.0
        %6113 = vmatpush1.msra.mxu0 %v6020
        %6114 = vmatprep.subr.mxu0 0.0
        %6115 = vmatpush1.msra.mxu0 %v6021
        %6116 = vmatprep.subr.mxu0 0.0
        %6117 = vmatpush1.msra.mxu0 %v6022
        %6118 = vmatprep.subr.mxu0 0.0
        %6119 = vmatpush1.msra.mxu0 %v6023
        %6120 = vmatprep.subr.mxu0 0.0
        %6121 = vmatpush1.msra.mxu0 %v6024
        %6122 = vmatprep.subr.mxu0 0.0
        %6123 = vmatpush1.msra.mxu0 %v6025
        %6124 = vmatprep.subr.mxu0 0.0
        %6125 = vmatpush1.msra.mxu0 %v6026
        %6126 = vmatprep.subr.mxu0 0.0
        %6127 = vmatpush1.msra.mxu0 %v6027
        %6128 = vmatprep.subr.mxu0 0.0
        %6129 = vmatpush1.msra.mxu0 %v6028
        %6130 = vmatprep.subr.mxu0 0.0
        %6131 = vmatpush1.msra.mxu0 %v6029
        %6132 = vmatprep.subr.mxu0 0.0
        %6133 = vmatpush1.msra.mxu0 %v6030
        %6134 = vmatprep.subr.mxu0 0.0
        %6135 = vmatpush1.msra.mxu0 %v6031
        %6136 = vmatprep.subr.mxu0 0.0
        %6137 = vmatpush1.msra.mxu0 %v6032
        %6138 = vmatprep.subr.mxu0 0.0
        %6139 = vmatpush1.msra.mxu0 0.0
        %6140 = vmatprep.subr.mxu0 0.0
        %6141 = vmatpush1.msra.mxu0 0.0
        %6142 = vmatprep.subr.mxu0 0.0
        %6143 = vmatpush1.msra.mxu0 0.0
        %6144 = vmatprep.subr.mxu0 0.0
        %6145 = vmatpush1.msra.mxu0 0.0
        %6146 = vmatprep.subr.mxu0 0.0
        %6147 = vmatpush1.msra.mxu0 0.0
        %6148 = vmatprep.subr.mxu0 0.0
        %6149 = vmatpush1.msra.mxu0 0.0
        %6150 = vmatprep.subr.mxu0 0.0
        %6151 = vmatpush1.msra.mxu0 0.0
        %6152 = vmatprep.subr.mxu0 0.0
        %6153 = vmatpush1.msra.mxu0 0.0
        %6154 = vmatprep.subr.mxu0 0.0
        %6155 = vmatpush1.msra.mxu0 0.0
        %6156 = vmatprep.subr.mxu0 0.0
        %6157 = vmatpush1.msra.mxu0 0.0
        %6158 = vmatprep.subr.mxu0 0.0
        %6159 = vmatpush1.msra.mxu0 0.0
        %6160 = vmatprep.subr.mxu0 0.0
        %6161 = vmatpush1.msra.mxu0 0.0
        %6162 = vmatprep.subr.mxu0 0.0
        %6163 = vmatpush1.msra.mxu0 0.0
        %6164 = vmatprep.subr.mxu0 0.0
        %6165 = vmatpush1.msra.mxu0 0.0
        %6166 = vmatprep.subr.mxu0 0.0
        %6167 = vmatpush1.msra.mxu0 0.0
        %6168 = vmatprep.subr.mxu0 0.0
        %6169 = vmatpush1.msra.mxu0 0.0
        %6170 = vmatprep.mubr.f32.mxu0 0.0
        %6171 = vmatmul.mubr.f32.gmra.mrb[0].mxu0 %v6010
        %v6172 = vpop.f32.mrb[0].mxu0
        %v6173 = vadd.f32 %v6033, %v6172
        %v6174 = vpop.f32.mrb[0].mxu0
        %6175 = vdwg.mxu0
        %6176 = vst.msk [vmem:[%s352 + $0x1] sm:$0x1] %vm6104, %v6173
        %6177 = vmatprep.subr.mxu0 0.0
        %6178 = vmatpush1.msra.mxu0 %v6017
        %6179 = vmatprep.subr.mxu0 0.0
        %6180 = vmatpush1.msra.mxu0 %v6018
        %6181 = vmatprep.subr.mxu0 0.0
        %6182 = vmatpush1.msra.mxu0 %v6019
        %6183 = vmatprep.subr.mxu0 0.0
        %6184 = vmatpush1.msra.mxu0 %v6020
        %6185 = vmatprep.subr.mxu0 0.0
        %6186 = vmatpush1.msra.mxu0 %v6021
        %6187 = vmatprep.subr.mxu0 0.0
        %6188 = vmatpush1.msra.mxu0 %v6022
        %6189 = vmatprep.subr.mxu0 0.0
        %6190 = vmatpush1.msra.mxu0 %v6023
        %6191 = vmatprep.subr.mxu0 0.0
        %6192 = vmatpush1.msra.mxu0 %v6024
        %6193 = vmatprep.subr.mxu0 0.0
        %6194 = vmatpush1.msra.mxu0 %v6025
        %6195 = vmatprep.subr.mxu0 0.0
        %6196 = vmatpush1.msra.mxu0 %v6026
        %6197 = vmatprep.subr.mxu0 0.0
        %6198 = vmatpush1.msra.mxu0 %v6027
        %6199 = vmatprep.subr.mxu0 0.0
        %6200 = vmatpush1.msra.mxu0 %v6028
        %6201 = vmatprep.subr.mxu0 0.0
        %6202 = vmatpush1.msra.mxu0 %v6029
        %6203 = vmatprep.subr.mxu0 0.0
        %6204 = vmatpush1.msra.mxu0 %v6030
        %6205 = vmatprep.subr.mxu0 0.0
        %6206 = vmatpush1.msra.mxu0 %v6031
        %6207 = vmatprep.subr.mxu0 0.0
        %6208 = vmatpush1.msra.mxu0 %v6032
        %6209 = vmatprep.subr.mxu0 0.0
        %6210 = vmatpush1.msra.mxu0 0.0
        %6211 = vmatprep.subr.mxu0 0.0
        %6212 = vmatpush1.msra.mxu0 0.0
        %6213 = vmatprep.subr.mxu0 0.0
        %6214 = vmatpush1.msra.mxu0 0.0
        %6215 = vmatprep.subr.mxu0 0.0
        %6216 = vmatpush1.msra.mxu0 0.0
        %6217 = vmatprep.subr.mxu0 0.0
        %6218 = vmatpush1.msra.mxu0 0.0
        %6219 = vmatprep.subr.mxu0 0.0
        %6220 = vmatpush1.msra.mxu0 0.0
        %6221 = vmatprep.subr.mxu0 0.0
        %6222 = vmatpush1.msra.mxu0 0.0
        %6223 = vmatprep.subr.mxu0 0.0
        %6224 = vmatpush1.msra.mxu0 0.0
        %6225 = vmatprep.subr.mxu0 0.0
        %6226 = vmatpush1.msra.mxu0 0.0
        %6227 = vmatprep.subr.mxu0 0.0
        %6228 = vmatpush1.msra.mxu0 0.0
        %6229 = vmatprep.subr.mxu0 0.0
        %6230 = vmatpush1.msra.mxu0 0.0
        %6231 = vmatprep.subr.mxu0 0.0
        %6232 = vmatpush1.msra.mxu0 0.0
        %6233 = vmatprep.subr.mxu0 0.0
        %6234 = vmatpush1.msra.mxu0 0.0
        %6235 = vmatprep.subr.mxu0 0.0
        %6236 = vmatpush1.msra.mxu0 0.0
        %6237 = vmatprep.subr.mxu0 0.0
        %6238 = vmatpush1.msra.mxu0 0.0
        %6239 = vmatprep.subr.mxu0 0.0
        %6240 = vmatpush1.msra.mxu0 0.0
        %6241 = vmatprep.mubr.f32.mxu0 0.0
        %6242 = vmatmul.mubr.f32.gmra.mrb[0].mxu0 %v6011
        %v6243 = vpop.f32.mrb[0].mxu0
        %v6244 = vadd.f32 %v6033, %v6243
        %v6245 = vpop.f32.mrb[0].mxu0
        %6246 = vdwg.mxu0
        %6247 = vst.msk [vmem:[%s352 + $0x2] sm:$0x1] %vm6104, %v6244
        %6248 = vmatprep.subr.mxu0 0.0
        %6249 = vmatpush1.msra.mxu0 %v6017
        %6250 = vmatprep.subr.mxu0 0.0
        %6251 = vmatpush1.msra.mxu0 %v6018
        %6252 = vmatprep.subr.mxu0 0.0
        %6253 = vmatpush1.msra.mxu0 %v6019
        %6254 = vmatprep.subr.mxu0 0.0
        %6255 = vmatpush1.msra.mxu0 %v6020
        %6256 = vmatprep.subr.mxu0 0.0
        %6257 = vmatpush1.msra.mxu0 %v6021
        %6258 = vmatprep.subr.mxu0 0.0
        %6259 = vmatpush1.msra.mxu0 %v6022
        %6260 = vmatprep.subr.mxu0 0.0
        %6261 = vmatpush1.msra.mxu0 %v6023
        %6262 = vmatprep.subr.mxu0 0.0
        %6263 = vmatpush1.msra.mxu0 %v6024
        %6264 = vmatprep.subr.mxu0 0.0
        %6265 = vmatpush1.msra.mxu0 %v6025
        %6266 = vmatprep.subr.mxu0 0.0
        %6267 = vmatpush1.msra.mxu0 %v6026
        %6268 = vmatprep.subr.mxu0 0.0
        %6269 = vmatpush1.msra.mxu0 %v6027
        %6270 = vmatprep.subr.mxu0 0.0
        %6271 = vmatpush1.msra.mxu0 %v6028
        %6272 = vmatprep.subr.mxu0 0.0
        %6273 = vmatpush1.msra.mxu0 %v6029
        %6274 = vmatprep.subr.mxu0 0.0
        %6275 = vmatpush1.msra.mxu0 %v6030
        %6276 = vmatprep.subr.mxu0 0.0
        %6277 = vmatpush1.msra.mxu0 %v6031
        %6278 = vmatprep.subr.mxu0 0.0
        %6279 = vmatpush1.msra.mxu0 %v6032
        %6280 = vmatprep.subr.mxu0 0.0
        %6281 = vmatpush1.msra.mxu0 0.0
        %6282 = vmatprep.subr.mxu0 0.0
        %6283 = vmatpush1.msra.mxu0 0.0
        %6284 = vmatprep.subr.mxu0 0.0
        %6285 = vmatpush1.msra.mxu0 0.0
        %6286 = vmatprep.subr.mxu0 0.0
        %6287 = vmatpush1.msra.mxu0 0.0
        %6288 = vmatprep.subr.mxu0 0.0
        %6289 = vmatpush1.msra.mxu0 0.0
        %6290 = vmatprep.subr.mxu0 0.0
        %6291 = vmatpush1.msra.mxu0 0.0
        %6292 = vmatprep.subr.mxu0 0.0
        %6293 = vmatpush1.msra.mxu0 0.0
        %6294 = vmatprep.subr.mxu0 0.0
        %6295 = vmatpush1.msra.mxu0 0.0
        %6296 = vmatprep.subr.mxu0 0.0
        %6297 = vmatpush1.msra.mxu0 0.0
        %6298 = vmatprep.subr.mxu0 0.0
        %6299 = vmatpush1.msra.mxu0 0.0
        %6300 = vmatprep.subr.mxu0 0.0
        %6301 = vmatpush1.msra.mxu0 0.0
        %6302 = vmatprep.subr.mxu0 0.0
        %6303 = vmatpush1.msra.mxu0 0.0
        %6304 = vmatprep.subr.mxu0 0.0
        %6305 = vmatpush1.msra.mxu0 0.0
        %6306 = vmatprep.subr.mxu0 0.0
        %6307 = vmatpush1.msra.mxu0 0.0
        %6308 = vmatprep.subr.mxu0 0.0
        %6309 = vmatpush1.msra.mxu0 0.0
        %6310 = vmatprep.subr.mxu0 0.0
        %6311 = vmatpush1.msra.mxu0 0.0
        %6312 = vmatprep.mubr.f32.mxu0 0.0
        %6313 = vmatmul.mubr.f32.gmra.mrb[0].mxu0 %v6012
        %v6314 = vpop.f32.mrb[0].mxu0
        %v6315 = vadd.f32 %v6033, %v6314
        %v6316 = vpop.f32.mrb[0].mxu0
        %6317 = vdwg.mxu0
        %6318 = vst.msk [vmem:[%s352 + $0x3] sm:$0x1] %vm6104, %v6315
        %6319 = vmatprep.subr.mxu0 0.0
        %6320 = vmatpush1.msra.mxu0 %v6017
        %6321 = vmatprep.subr.mxu0 0.0
        %6322 = vmatpush1.msra.mxu0 %v6018
        %6323 = vmatprep.subr.mxu0 0.0
        %6324 = vmatpush1.msra.mxu0 %v6019
        %6325 = vmatprep.subr.mxu0 0.0
        %6326 = vmatpush1.msra.mxu0 %v6020
        %6327 = vmatprep.subr.mxu0 0.0
        %6328 = vmatpush1.msra.mxu0 %v6021
        %6329 = vmatprep.subr.mxu0 0.0
        %6330 = vmatpush1.msra.mxu0 %v6022
        %6331 = vmatprep.subr.mxu0 0.0
        %6332 = vmatpush1.msra.mxu0 %v6023
        %6333 = vmatprep.subr.mxu0 0.0
        %6334 = vmatpush1.msra.mxu0 %v6024
        %6335 = vmatprep.subr.mxu0 0.0
        %6336 = vmatpush1.msra.mxu0 %v6025
        %6337 = vmatprep.subr.mxu0 0.0
        %6338 = vmatpush1.msra.mxu0 %v6026
        %6339 = vmatprep.subr.mxu0 0.0
        %6340 = vmatpush1.msra.mxu0 %v6027
        %6341 = vmatprep.subr.mxu0 0.0
        %6342 = vmatpush1.msra.mxu0 %v6028
        %6343 = vmatprep.subr.mxu0 0.0
        %6344 = vmatpush1.msra.mxu0 %v6029
        %6345 = vmatprep.subr.mxu0 0.0
        %6346 = vmatpush1.msra.mxu0 %v6030
        %6347 = vmatprep.subr.mxu0 0.0
        %6348 = vmatpush1.msra.mxu0 %v6031
        %6349 = vmatprep.subr.mxu0 0.0
        %6350 = vmatpush1.msra.mxu0 %v6032
        %6351 = vmatprep.subr.mxu0 0.0
        %6352 = vmatpush1.msra.mxu0 0.0
        %6353 = vmatprep.subr.mxu0 0.0
        %6354 = vmatpush1.msra.mxu0 0.0
        %6355 = vmatprep.subr.mxu0 0.0
        %6356 = vmatpush1.msra.mxu0 0.0
        %6357 = vmatprep.subr.mxu0 0.0
        %6358 = vmatpush1.msra.mxu0 0.0
        %6359 = vmatprep.subr.mxu0 0.0
        %6360 = vmatpush1.msra.mxu0 0.0
        %6361 = vmatprep.subr.mxu0 0.0
        %6362 = vmatpush1.msra.mxu0 0.0
        %6363 = vmatprep.subr.mxu0 0.0
        %6364 = vmatpush1.msra.mxu0 0.0
        %6365 = vmatprep.subr.mxu0 0.0
        %6366 = vmatpush1.msra.mxu0 0.0
        %6367 = vmatprep.subr.mxu0 0.0
        %6368 = vmatpush1.msra.mxu0 0.0
        %6369 = vmatprep.subr.mxu0 0.0
        %6370 = vmatpush1.msra.mxu0 0.0
        %6371 = vmatprep.subr.mxu0 0.0
        %6372 = vmatpush1.msra.mxu0 0.0
        %6373 = vmatprep.subr.mxu0 0.0
        %6374 = vmatpush1.msra.mxu0 0.0
        %6375 = vmatprep.subr.mxu0 0.0
        %6376 = vmatpush1.msra.mxu0 0.0
        %6377 = vmatprep.subr.mxu0 0.0
        %6378 = vmatpush1.msra.mxu0 0.0
        %6379 = vmatprep.subr.mxu0 0.0
        %6380 = vmatpush1.msra.mxu0 0.0
        %6381 = vmatprep.subr.mxu0 0.0
        %6382 = vmatpush1.msra.mxu0 0.0
        %6383 = vmatprep.mubr.f32.mxu0 0.0
        %6384 = vmatmul.mubr.f32.gmra.mrb[0].mxu0 %v6013
        %v6385 = vpop.f32.mrb[0].mxu0
        %v6386 = vadd.f32 %v6033, %v6385
        %v6387 = vpop.f32.mrb[0].mxu0
        %6388 = vdwg.mxu0
        %6389 = vst.msk [vmem:[%s352 + $0x4] sm:$0x1] %vm6104, %v6386
        %6390 = vmatprep.subr.mxu0 0.0
        %6391 = vmatpush1.msra.mxu0 %v6017
        %6392 = vmatprep.subr.mxu0 0.0
        %6393 = vmatpush1.msra.mxu0 %v6018
        %6394 = vmatprep.subr.mxu0 0.0
        %6395 = vmatpush1.msra.mxu0 %v6019
        %6396 = vmatprep.subr.mxu0 0.0
        %6397 = vmatpush1.msra.mxu0 %v6020
        %6398 = vmatprep.subr.mxu0 0.0
        %6399 = vmatpush1.msra.mxu0 %v6021
        %6400 = vmatprep.subr.mxu0 0.0
        %6401 = vmatpush1.msra.mxu0 %v6022
        %6402 = vmatprep.subr.mxu0 0.0
        %6403 = vmatpush1.msra.mxu0 %v6023
        %6404 = vmatprep.subr.mxu0 0.0
        %6405 = vmatpush1.msra.mxu0 %v6024
        %6406 = vmatprep.subr.mxu0 0.0
        %6407 = vmatpush1.msra.mxu0 %v6025
        %6408 = vmatprep.subr.mxu0 0.0
        %6409 = vmatpush1.msra.mxu0 %v6026
        %6410 = vmatprep.subr.mxu0 0.0
        %6411 = vmatpush1.msra.mxu0 %v6027
        %6412 = vmatprep.subr.mxu0 0.0
        %6413 = vmatpush1.msra.mxu0 %v6028
        %6414 = vmatprep.subr.mxu0 0.0
        %6415 = vmatpush1.msra.mxu0 %v6029
        %6416 = vmatprep.subr.mxu0 0.0
        %6417 = vmatpush1.msra.mxu0 %v6030
        %6418 = vmatprep.subr.mxu0 0.0
        %6419 = vmatpush1.msra.mxu0 %v6031
        %6420 = vmatprep.subr.mxu0 0.0
        %6421 = vmatpush1.msra.mxu0 %v6032
        %6422 = vmatprep.subr.mxu0 0.0
        %6423 = vmatpush1.msra.mxu0 0.0
        %6424 = vmatprep.subr.mxu0 0.0
        %6425 = vmatpush1.msra.mxu0 0.0
        %6426 = vmatprep.subr.mxu0 0.0
        %6427 = vmatpush1.msra.mxu0 0.0
        %6428 = vmatprep.subr.mxu0 0.0
        %6429 = vmatpush1.msra.mxu0 0.0
        %6430 = vmatprep.subr.mxu0 0.0
        %6431 = vmatpush1.msra.mxu0 0.0
        %6432 = vmatprep.subr.mxu0 0.0
        %6433 = vmatpush1.msra.mxu0 0.0
        %6434 = vmatprep.subr.mxu0 0.0
        %6435 = vmatpush1.msra.mxu0 0.0
        %6436 = vmatprep.subr.mxu0 0.0
        %6437 = vmatpush1.msra.mxu0 0.0
        %6438 = vmatprep.subr.mxu0 0.0
        %6439 = vmatpush1.msra.mxu0 0.0
        %6440 = vmatprep.subr.mxu0 0.0
        %6441 = vmatpush1.msra.mxu0 0.0
        %6442 = vmatprep.subr.mxu0 0.0
        %6443 = vmatpush1.msra.mxu0 0.0
        %6444 = vmatprep.subr.mxu0 0.0
        %6445 = vmatpush1.msra.mxu0 0.0
        %6446 = vmatprep.subr.mxu0 0.0
        %6447 = vmatpush1.msra.mxu0 0.0
        %6448 = vmatprep.subr.mxu0 0.0
        %6449 = vmatpush1.msra.mxu0 0.0
        %6450 = vmatprep.subr.mxu0 0.0
        %6451 = vmatpush1.msra.mxu0 0.0
        %6452 = vmatprep.subr.mxu0 0.0
        %6453 = vmatpush1.msra.mxu0 0.0
        %6454 = vmatprep.mubr.f32.mxu0 0.0
        %6455 = vmatmul.mubr.f32.gmra.mrb[0].mxu0 %v6014
        %v6456 = vpop.f32.mrb[0].mxu0
        %v6457 = vadd.f32 %v6033, %v6456
        %v6458 = vpop.f32.mrb[0].mxu0
        %6459 = vdwg.mxu0
        %6460 = vst.msk [vmem:[%s352 + $0x5] sm:$0x1] %vm6104, %v6457
        %6461 = vmatprep.subr.mxu0 0.0
        %6462 = vmatpush1.msra.mxu0 %v6017
        %6463 = vmatprep.subr.mxu0 0.0
        %6464 = vmatpush1.msra.mxu0 %v6018
        %6465 = vmatprep.subr.mxu0 0.0
        %6466 = vmatpush1.msra.mxu0 %v6019
        %6467 = vmatprep.subr.mxu0 0.0
        %6468 = vmatpush1.msra.mxu0 %v6020
        %6469 = vmatprep.subr.mxu0 0.0
        %6470 = vmatpush1.msra.mxu0 %v6021
        %6471 = vmatprep.subr.mxu0 0.0
        %6472 = vmatpush1.msra.mxu0 %v6022
        %6473 = vmatprep.subr.mxu0 0.0
        %6474 = vmatpush1.msra.mxu0 %v6023
        %6475 = vmatprep.subr.mxu0 0.0
        %6476 = vmatpush1.msra.mxu0 %v6024
        %6477 = vmatprep.subr.mxu0 0.0
        %6478 = vmatpush1.msra.mxu0 %v6025
        %6479 = vmatprep.subr.mxu0 0.0
        %6480 = vmatpush1.msra.mxu0 %v6026
        %6481 = vmatprep.subr.mxu0 0.0
        %6482 = vmatpush1.msra.mxu0 %v6027
        %6483 = vmatprep.subr.mxu0 0.0
        %6484 = vmatpush1.msra.mxu0 %v6028
        %6485 = vmatprep.subr.mxu0 0.0
        %6486 = vmatpush1.msra.mxu0 %v6029
        %6487 = vmatprep.subr.mxu0 0.0
        %6488 = vmatpush1.msra.mxu0 %v6030
        %6489 = vmatprep.subr.mxu0 0.0
        %6490 = vmatpush1.msra.mxu0 %v6031
        %6491 = vmatprep.subr.mxu0 0.0
        %6492 = vmatpush1.msra.mxu0 %v6032
        %6493 = vmatprep.subr.mxu0 0.0
        %6494 = vmatpush1.msra.mxu0 0.0
        %6495 = vmatprep.subr.mxu0 0.0
        %6496 = vmatpush1.msra.mxu0 0.0
        %6497 = vmatprep.subr.mxu0 0.0
        %6498 = vmatpush1.msra.mxu0 0.0
        %6499 = vmatprep.subr.mxu0 0.0
        %6500 = vmatpush1.msra.mxu0 0.0
        %6501 = vmatprep.subr.mxu0 0.0
        %6502 = vmatpush1.msra.mxu0 0.0
        %6503 = vmatprep.subr.mxu0 0.0
        %6504 = vmatpush1.msra.mxu0 0.0
        %6505 = vmatprep.subr.mxu0 0.0
        %6506 = vmatpush1.msra.mxu0 0.0
        %6507 = vmatprep.subr.mxu0 0.0
        %6508 = vmatpush1.msra.mxu0 0.0
        %6509 = vmatprep.subr.mxu0 0.0
        %6510 = vmatpush1.msra.mxu0 0.0
        %6511 = vmatprep.subr.mxu0 0.0
        %6512 = vmatpush1.msra.mxu0 0.0
        %6513 = vmatprep.subr.mxu0 0.0
        %6514 = vmatpush1.msra.mxu0 0.0
        %6515 = vmatprep.subr.mxu0 0.0
        %6516 = vmatpush1.msra.mxu0 0.0
        %6517 = vmatprep.subr.mxu0 0.0
        %6518 = vmatpush1.msra.mxu0 0.0
        %6519 = vmatprep.subr.mxu0 0.0
        %6520 = vmatpush1.msra.mxu0 0.0
        %6521 = vmatprep.subr.mxu0 0.0
        %6522 = vmatpush1.msra.mxu0 0.0
        %6523 = vmatprep.subr.mxu0 0.0
        %6524 = vmatpush1.msra.mxu0 0.0
        %6525 = vmatprep.mubr.f32.mxu0 0.0
        %6526 = vmatmul.mubr.f32.gmra.mrb[0].mxu0 %v6015
        %v6527 = vpop.f32.mrb[0].mxu0
        %v6528 = vadd.f32 %v6033, %v6527
        %v6529 = vpop.f32.mrb[0].mxu0
        %6530 = vdwg.mxu0
        %6531 = vst.msk [vmem:[%s352 + $0x6] sm:$0x1] %vm6104, %v6528
        %6532 = vmatprep.subr.mxu0 0.0
        %6533 = vmatpush1.msra.mxu0 %v6017
        %6534 = vmatprep.subr.mxu0 0.0
        %6535 = vmatpush1.msra.mxu0 %v6018
        %6536 = vmatprep.subr.mxu0 0.0
        %6537 = vmatpush1.msra.mxu0 %v6019
        %6538 = vmatprep.subr.mxu0 0.0
        %6539 = vmatpush1.msra.mxu0 %v6020
        %6540 = vmatprep.subr.mxu0 0.0
        %6541 = vmatpush1.msra.mxu0 %v6021
        %6542 = vmatprep.subr.mxu0 0.0
        %6543 = vmatpush1.msra.mxu0 %v6022
        %6544 = vmatprep.subr.mxu0 0.0
        %6545 = vmatpush1.msra.mxu0 %v6023
        %6546 = vmatprep.subr.mxu0 0.0
        %6547 = vmatpush1.msra.mxu0 %v6024
        %6548 = vmatprep.subr.mxu0 0.0
        %6549 = vmatpush1.msra.mxu0 %v6025
        %6550 = vmatprep.subr.mxu0 0.0
        %6551 = vmatpush1.msra.mxu0 %v6026
        %6552 = vmatprep.subr.mxu0 0.0
        %6553 = vmatpush1.msra.mxu0 %v6027
        %6554 = vmatprep.subr.mxu0 0.0
        %6555 = vmatpush1.msra.mxu0 %v6028
        %6556 = vmatprep.subr.mxu0 0.0
        %6557 = vmatpush1.msra.mxu0 %v6029
        %6558 = vmatprep.subr.mxu0 0.0
        %6559 = vmatpush1.msra.mxu0 %v6030
        %6560 = vmatprep.subr.mxu0 0.0
        %6561 = vmatpush1.msra.mxu0 %v6031
        %6562 = vmatprep.subr.mxu0 0.0
        %6563 = vmatpush1.msra.mxu0 %v6032
        %6564 = vmatprep.subr.mxu0 0.0
        %6565 = vmatpush1.msra.mxu0 0.0
        %6566 = vmatprep.subr.mxu0 0.0
        %6567 = vmatpush1.msra.mxu0 0.0
        %6568 = vmatprep.subr.mxu0 0.0
        %6569 = vmatpush1.msra.mxu0 0.0
        %6570 = vmatprep.subr.mxu0 0.0
        %6571 = vmatpush1.msra.mxu0 0.0
        %6572 = vmatprep.subr.mxu0 0.0
        %6573 = vmatpush1.msra.mxu0 0.0
        %6574 = vmatprep.subr.mxu0 0.0
        %6575 = vmatpush1.msra.mxu0 0.0
        %6576 = vmatprep.subr.mxu0 0.0
        %6577 = vmatpush1.msra.mxu0 0.0
        %6578 = vmatprep.subr.mxu0 0.0
        %6579 = vmatpush1.msra.mxu0 0.0
        %6580 = vmatprep.subr.mxu0 0.0
        %6581 = vmatpush1.msra.mxu0 0.0
        %6582 = vmatprep.subr.mxu0 0.0
        %6583 = vmatpush1.msra.mxu0 0.0
        %6584 = vmatprep.subr.mxu0 0.0
        %6585 = vmatpush1.msra.mxu0 0.0
        %6586 = vmatprep.subr.mxu0 0.0
        %6587 = vmatpush1.msra.mxu0 0.0
        %6588 = vmatprep.subr.mxu0 0.0
        %6589 = vmatpush1.msra.mxu0 0.0
        %6590 = vmatprep.subr.mxu0 0.0
        %6591 = vmatpush1.msra.mxu0 0.0
        %6592 = vmatprep.subr.mxu0 0.0
        %6593 = vmatpush1.msra.mxu0 0.0
        %6594 = vmatprep.subr.mxu0 0.0
        %6595 = vmatpush1.msra.mxu0 0.0
        %6596 = vmatprep.mubr.f32.mxu0 0.0
        %6597 = vmatmul.mubr.f32.gmra.mrb[0].mxu0 %v6016
        %v6598 = vpop.f32.mrb[0].mxu0
        %v6599 = vadd.f32 %v6033, %v6598
        %v6600 = vpop.f32.mrb[0].mxu0
        %6601 = vdwg.mxu0
        %6602 = vst.msk [vmem:[%s352 + $0x7] sm:$0x1] %vm6104, %v6599
        %s6603 = sand.u32 %s249, 1
        %s6604 = scalar_lea.sflag [#allocation4], %s6603
        %s6605 = sand.u32 %s249, 1
        %s6606 = smul.addr %s6605, 8
        %s6607 = scalar_lea.vmem [#allocation3], %s6606
        // Predicated region
        $region61: #{tpu_custom_call.1} parent=59 // pred_check
          %p6608 = pneg %p259
        $region62: #{tpu_custom_call.1} parent=59 // pred_check_branch
          %6610 = sbr.rel (%p6608) target = $region64
        $region63: #{tpu_custom_call.1} parent=59 // pred_region
          %s6612 = ssub.s32 128, 128
          %6613 = vsyncadd %s6604, %s6612
          %s6614 = smul.addr %s26, 128
          %s6615 = scalar_lea.hbm %s10, %s6614
          %s6617 = sshll.u32 %s6607, 4
          %s6618 = int_to_ptr.vmem [resolvable:$true] %s6617
          %6620 = dma.vmem_to_hbm [thread:$0]  %s6618, 128, %s6615, %s6604
        $region64: #{tpu_custom_call.1} parent=59 // pred_fallthru
          _
      $region60: #{tpu_custom_call.1} parent=5 // pred_fallthru
        _
      %p6621 = scmp.le.s32.totalorder 2, %s21
      // Predicated region
      $region65: #{tpu_custom_call.1} parent=5 // pred_check
        %p6622 = pneg %p6621
      $region66: #{tpu_custom_call.1} parent=5 // pred_check_branch
        %6624 = sbr.rel (%p6622) target = $region68
      $region67: #{tpu_custom_call.1} parent=5 // pred_region
        %s6625 = ssub.s32 %s21, 2
        // Predicated region
        $region69: #{tpu_custom_call.1} parent=67 // pred_check
          %p6626 = pneg %p265
        $region70: #{tpu_custom_call.1} parent=67 // pred_check_branch
          %6628 = sbr.rel (%p6626) target = $region72
        $region71: #{tpu_custom_call.1} parent=67 // pred_region
          %s6629 = sand.u32 %s250, 1
          %s6630 = scalar_lea.sflag [#allocation4], %s6629
          %s6631 = sand.u32 %s250, 1
          %s6632 = smul.addr %s6631, 8
          %s6633 = scalar_lea.vmem [#allocation3], %s6632
          %6634 = dma.done %s6630, 128
        $region72: #{tpu_custom_call.1} parent=67 // pred_fallthru
          _
      $region68: #{tpu_custom_call.1} parent=5 // pred_fallthru
        _
    $region6: #{tpu_custom_call.1} parent=1 // loop_footer
      %s25 = sadd.s32 1, %s21
    $region7: #{tpu_custom_call.1} parent=1 // loop_footer_branch
      %20 = sbr.rel target = $region3
    $region8: #{tpu_custom_call.1} parent=1 // loop_exit
      _
    %6635 = vsyncpa [#allocation4], 1
    %s6636 = scalar_lea.sflag [#allocation4], 1
    %6637 = vsyncpa %s6636, 1

</llo_original>
